<compile_context>
chip_gen: v5e
topology: v5e:2x2
jax: 0.10.0
libtpu: 0.0.40
codegen_flags: <defaults>
</compile_context>

<pallas_src>
import functools

import jax
import jax.numpy as jnp
from jax.experimental import pallas as pl
from jax.experimental.pallas import tpu as pltpu

EPS = 1e-5


# ----------------------------------------------------------------------------
# Pallas kernels
# ----------------------------------------------------------------------------
def _conv3x3_kernel(x_ref, s_ref, t_ref, w_ref, o_ref, sum_ref, sq_ref,
                    xpad_ref, xstack_ref, *, apply_bn_relu):
    """(optional bn+relu) -> 3x3 conv (pad=1, stride=1) -> per-sample BN stats.

    x_ref:      (H, W, Cin)        f32 (conv1) / bf16 (conv2: raw conv1 output)
    s_ref:      (1, 1, Cin)        f32   per-channel scale (unused if no bn/relu)
    t_ref:      (1, 1, Cin)        f32   per-channel shift
    w_ref:      (9*Cin, Cout)      bf16  tap-major stacked weights
    o_ref:      (H, W, Cout)       bf16  conv output
    sum_ref:    (1, Cout)          f32   per-sample channel sum of conv output
    sq_ref:     (1, Cout)          f32   per-sample channel sum of squares
    xpad_ref:   (H+2, W+2, Cin)    f32   VMEM scratch (zero-padded input)
    xstack_ref: (H*W, 9*Cin)       bf16  VMEM scratch (stacked window operand)
    """
    h, w, cout = o_ref.shape
    cin = x_ref.shape[-1]

    x = x_ref[...].astype(jnp.float32)
    if apply_bn_relu:
        # Fused bn1 + ReLU on the VMEM tile (no y1 HBM roundtrip).
        x = jnp.maximum(x * s_ref[...] + t_ref[...], 0.0)

    # Zero only the 1-pixel halo; the interior is fully overwritten below.
    # Re-done every grid step so the kernel stays correct when the batch axis
    # is split across TensorCores (scratch is per-core).
    xpad_ref[0:1, :, :] = jnp.zeros((1, w + 2, cin), jnp.float32)
    xpad_ref[h + 1:h + 2, :, :] = jnp.zeros((1, w + 2, cin), jnp.float32)
    xpad_ref[:, 0:1, :] = jnp.zeros((h + 2, 1, cin), jnp.float32)
    xpad_ref[:, w + 1:w + 2, :] = jnp.zeros((h + 2, 1, cin), jnp.float32)
    xpad_ref[1:h + 1, 1:w + 1, :] = x

    # Stack the nine shifted windows along K -> one (H*W, 9*Cin) bf16 operand.
    for tap in range(9):
        dy, dx = divmod(tap, 3)
        win = xpad_ref[dy:dy + h, dx:dx + w, :].reshape(h * w, cin)
        xstack_ref[:, tap * cin:(tap + 1) * cin] = win.astype(jnp.bfloat16)

    # Single MXU matmul with K = 9*Cin: bf16 operands, f32 accumulation.
    acc = jnp.dot(xstack_ref[...], w_ref[...],
                  preferred_element_type=jnp.float32)

    o_ref[...] = acc.reshape(h, w, cout).astype(o_ref.dtype)
    # Fused BN partial statistics (per sample), computed from the f32 acc.
    sum_ref[...] = jnp.sum(acc, axis=0, keepdims=True)
    sq_ref[...] = jnp.sum(acc * acc, axis=0, keepdims=True)


def _bn_res_relu_kernel(y_ref, r_ref, s_ref, t_ref, o_ref):
    # o = relu(y * s + t + r)   (folded bn2 + residual + ReLU), y is bf16.
    y = y_ref[...].astype(jnp.float32)
    o_ref[...] = jnp.maximum(y * s_ref[...] + t_ref[...] + r_ref[...], 0.0)


# ----------------------------------------------------------------------------
# Pallas wrappers
# ----------------------------------------------------------------------------
def pallas_conv3x3(x_nhwc, scale, shift, w_stacked, *, apply_bn_relu):
    """3x3 / stride-1 / pad-1 conv over an NHWC batch with fused input BN+ReLU
    (optional) and fused per-sample BN statistics of the output.

    Returns (conv_out (N,H,W,Cout) bf16, sums (N,1,Cout) f32, sumsqs (N,1,Cout) f32).
    """
    n, h, w, cin = x_nhwc.shape
    kdim, cout = w_stacked.shape
    assert kdim == 9 * cin

    kernel = functools.partial(_conv3x3_kernel, apply_bn_relu=apply_bn_relu)
    return pl.pallas_call(
        kernel,
        out_shape=(
            jax.ShapeDtypeStruct((n, h, w, cout), jnp.bfloat16),
            jax.ShapeDtypeStruct((n, 1, cout), jnp.float32),
            jax.ShapeDtypeStruct((n, 1, cout), jnp.float32),
        ),
        grid_spec=pltpu.PrefetchScalarGridSpec(
            num_scalar_prefetch=0,
            grid=(n,),
            in_specs=[
                pl.BlockSpec((None, h, w, cin), lambda i: (i, 0, 0, 0)),
                pl.BlockSpec((1, 1, cin), lambda i: (0, 0, 0)),
                pl.BlockSpec((1, 1, cin), lambda i: (0, 0, 0)),
                pl.BlockSpec((9 * cin, cout), lambda i: (0, 0)),
            ],
            out_specs=(
                pl.BlockSpec((None, h, w, cout), lambda i: (i, 0, 0, 0)),
                pl.BlockSpec((None, 1, cout), lambda i: (i, 0, 0)),
                pl.BlockSpec((None, 1, cout), lambda i: (i, 0, 0)),
            ),
            scratch_shapes=[
                pltpu.VMEM((h + 2, w + 2, cin), jnp.float32),
                pltpu.VMEM((h * w, 9 * cin), jnp.bfloat16),
            ],
        ),
        compiler_params=pltpu.CompilerParams(dimension_semantics=("parallel",)),
    )(x_nhwc, scale.reshape(1, 1, cin), shift.reshape(1, 1, cin), w_stacked)


def pallas_bn_residual_relu(y_nhwc, res_nhwc, scale, shift):
    """relu(y * scale + shift + res), NHWC in/out (y is bf16, res/out f32).

    Flattens to a lane-dense (rows, width) layout with width up to 512 and a
    row tile that divides rows exactly (no wrapper-level padding pass).
    """
    n, h, w, c = y_nhwc.shape
    total = n * h * w * c

    width = c
    for cand in (512, 256, 128):
        if cand % c == 0 and total % cand == 0:
            width = cand
            break
    rows = total // width

    y2 = y_nhwc.reshape(rows, width)
    r2 = res_nhwc.reshape(rows, width)
    reps = width // c
    s_row = jnp.tile(scale, reps).reshape(1, width)
    t_row = jnp.tile(shift, reps).reshape(1, width)

    # Row tile: largest multiple of 8 (<= 1024) that divides rows; otherwise
    # process all rows in one block (full-dim blocks are always legal).
    tm = rows
    if rows > 1024:
        for cand in range(1024, 0, -8):
            if rows % cand == 0:
                tm = cand
                break

    out = pl.pallas_call(
        _bn_res_relu_kernel,
        out_shape=jax.ShapeDtypeStruct((rows, width), jnp.float32),
        grid_spec=pltpu.PrefetchScalarGridSpec(
            num_scalar_prefetch=0,
            grid=(rows // tm,),
            in_specs=[
                pl.BlockSpec((tm, width), lambda i: (i, 0)),
                pl.BlockSpec((tm, width), lambda i: (i, 0)),
                pl.BlockSpec((1, width), lambda i: (0, 0)),
                pl.BlockSpec((1, width), lambda i: (0, 0)),
            ],
            out_specs=pl.BlockSpec((tm, width), lambda i: (i, 0)),
        ),
        compiler_params=pltpu.CompilerParams(dimension_semantics=("parallel",)),
    )(y2, r2, s_row, t_row)
    return out.reshape(n, h, w, c)


# ----------------------------------------------------------------------------
# Glue: parameter handling, BN folding
# ----------------------------------------------------------------------------
def _weight_to_stacked(w_oihw):
    """Torch (Cout, Cin, 3, 3) -> (9*Cin, Cout) bf16, tap-major / channel-minor
    along K, matching the stacked (H*W, 9*Cin) operand layout."""
    cout, cin = w_oihw.shape[0], w_oihw.shape[1]
    return (jnp.transpose(w_oihw, (2, 3, 1, 0))      # (3, 3, Cin, Cout)
            .reshape(9 * cin, cout)
            .astype(jnp.bfloat16))


def _bn_scale_shift(sums, sumsqs, count, gamma, beta):
    """Training-mode BN (biased batch variance) folded into scale/shift vectors."""
    total = jnp.sum(sums, axis=(0, 1))         # (C,)
    total_sq = jnp.sum(sumsqs, axis=(0, 1))    # (C,)
    mean = total / count
    var = jnp.maximum(total_sq / count - mean * mean, 0.0)
    scale = gamma / jnp.sqrt(var + EPS)
    shift = beta - mean * scale
    return scale, shift


@functools.partial(jax.jit, static_argnames=("stride",))
def restnet_basic_block(x_nchw, params, stride=1):
    # The PyTorch module's residual add only works for stride == 1 (and
    # in_channels == out_channels); the kernels assume that.
    if stride != 1:
        raise NotImplementedError("RestNetBasicBlock residual requires stride == 1")

    x_nhwc = jnp.transpose(x_nchw, (0, 2, 3, 1)).astype(jnp.float32)
    n, h, w, c_in = x_nhwc.shape

    w1 = _weight_to_stacked(params["conv1_w"])
    w2 = _weight_to_stacked(params["conv2_w"])
    # NOTE: conv biases are intentionally dropped -- with training-mode
    # BatchNorm right after each conv, a per-channel bias is cancelled exactly
    # by the mean subtraction, so the block output is unchanged.

    # conv1 (+ fused per-sample BN statistics); output stored as bf16.
    one = jnp.ones((c_in,), jnp.float32)
    zero = jnp.zeros((c_in,), jnp.float32)
    c1, sum1, sq1 = pallas_conv3x3(x_nhwc, one, zero, w1, apply_bn_relu=False)
    s1, t1 = _bn_scale_shift(sum1, sq1, n * h * w, params["bn1_g"], params["bn1_b"])

    # conv2 with bn1 + ReLU fused into its input path (+ fused BN statistics).
    c2, sum2, sq2 = pallas_conv3x3(c1, s1, t1, w2, apply_bn_relu=True)
    s2, t2 = _bn_scale_shift(sum2, sq2, n * h * w, params["bn2_g"], params["bn2_b"])

    # bn2 + residual + ReLU, wide lane-dense elementwise pass.
    out_nhwc = pallas_bn_residual_relu(c2, x_nhwc, s2, t2)
    return jnp.transpose(out_nhwc, (0, 3, 1, 2))   # back to NCHW


# ----------------------------------------------------------------------------
if __name__ == "__main__":
    key = jax.random.PRNGKey(0)
    k_x, k_w1, k_b1, k_g1, k_be1, k_w2, k_b2, k_g2, k_be2 = jax.random.split(key, 9)

    N, C, H, W = 2, 8, 16, 16   # in_channels == out_channels, stride == 1
    x = jax.random.normal(k_x, (N, C, H, W), jnp.float32)

    params = {
        "conv1_w": 0.1 * jax.random.normal(k_w1, (C, C, 3, 3), jnp.float32),
        "conv1_b": 0.1 * jax.random.normal(k_b1, (C,), jnp.float32),  # cancelled by bn1
        "bn1_g": 1.0 + 0.1 * jax.random.normal(k_g1, (C,), jnp.float32),
        "bn1_b": 0.1 * jax.random.normal(k_be1, (C,), jnp.float32),
        "conv2_w": 0.1 * jax.random.normal(k_w2, (C, C, 3, 3), jnp.float32),
        "conv2_b": 0.1 * jax.random.normal(k_b2, (C,), jnp.float32),  # cancelled by bn2
        "bn2_g": 1.0 + 0.1 * jax.random.normal(k_g2, (C,), jnp.float32),
        "bn2_b": 0.1 * jax.random.normal(k_be2, (C,), jnp.float32),
    }

    out = restnet_basic_block(x, params, stride=1)
    jax.block_until_ready(out)
    assert out.shape == (N, C, H, W), out.shape
    print("KERNEL_OK")
</pallas_src>

<mosaic_0001>
module attributes {stable_mosaic.version = 11 : i64} {
  func.func @_conv3x3_kernel(%arg0: i32, %arg1: memref<1x16x16x8xf32, #tpu.memory_space<vmem>>, %arg2: memref<1x1x8xf32, #tpu.memory_space<vmem>>, %arg3: memref<1x1x8xf32, #tpu.memory_space<vmem>>, %arg4: memref<72x8xbf16, #tpu.memory_space<vmem>>, %arg5: memref<1x16x16x8xbf16, #tpu.memory_space<vmem>>, %arg6: memref<1x1x8xf32, #tpu.memory_space<vmem>>, %arg7: memref<1x1x8xf32, #tpu.memory_space<vmem>>, %arg8: memref<18x18x8xf32, #tpu.memory_space<vmem>>, %arg9: memref<256x72xbf16, #tpu.memory_space<vmem>>) attributes {dimension_semantics = [#tpu.dimension_semantics<parallel>], iteration_bounds = array<i64: 2>, scalar_prefetch = 0 : i64, scratch_operands = 2 : i64, tpu.core_type = #tpu.core_type<tc>, window_params = [{transform_indices = @transform_0, window_bounds = array<i64: 1, 16, 16, 8>}, {pipeline_mode = #tpu.pipeline_mode<synchronous>, transform_indices = @transform_1, window_bounds = array<i64: 1, 1, 8>}, {pipeline_mode = #tpu.pipeline_mode<synchronous>, transform_indices = @transform_2, window_bounds = array<i64: 1, 1, 8>}, {pipeline_mode = #tpu.pipeline_mode<synchronous>, transform_indices = @transform_3, window_bounds = array<i64: 72, 8>}, {transform_indices = @transform_4, window_bounds = array<i64: 1, 16, 16, 8>}, {transform_indices = @transform_5, window_bounds = array<i64: 1, 1, 8>}, {transform_indices = @transform_6, window_bounds = array<i64: 1, 1, 8>}]} {
    %c0 = arith.constant 0 : index
    %c0_0 = arith.constant 0 : index
    %c0_1 = arith.constant 0 : index
    %c0_2 = arith.constant 0 : index
    %0 = vector.load %arg1[%c0, %c0_0, %c0_1, %c0_2] : memref<1x16x16x8xf32, #tpu.memory_space<vmem>>, vector<1x16x16x8xf32>
    %1 = vector.shape_cast %0 : vector<1x16x16x8xf32> to vector<16x16x8xf32>
    %cst = arith.constant 0.000000e+00 : f32
    %2 = vector.broadcast %cst : f32 to vector<1x18x8xf32>
    %c0_3 = arith.constant 0 : index
    %c0_4 = arith.constant 0 : index
    %c0_5 = arith.constant 0 : index
    %3 = vector.load %arg8[%c0_3, %c0_4, %c0_5] : memref<18x18x8xf32, #tpu.memory_space<vmem>>, vector<1x18x8xf32>
    tpu.vector_store %arg8[%c0_3, %c0_4, %c0_5], %2 {strides = array<i32>} : memref<18x18x8xf32, #tpu.memory_space<vmem>>, vector<1x18x8xf32>,
    %cst_6 = arith.constant 0.000000e+00 : f32
    %4 = vector.broadcast %cst_6 : f32 to vector<1x18x8xf32>
    %c17 = arith.constant 17 : index
    %c0_7 = arith.constant 0 : index
    %c0_8 = arith.constant 0 : index
    %5 = vector.load %arg8[%c17, %c0_7, %c0_8] : memref<18x18x8xf32, #tpu.memory_space<vmem>>, vector<1x18x8xf32>
    tpu.vector_store %arg8[%c17, %c0_7, %c0_8], %4 {strides = array<i32>} : memref<18x18x8xf32, #tpu.memory_space<vmem>>, vector<1x18x8xf32>,
    %cst_9 = arith.constant 0.000000e+00 : f32
    %6 = vector.broadcast %cst_9 : f32 to vector<18x1x8xf32>
    %c0_10 = arith.constant 0 : index
    %c0_11 = arith.constant 0 : index
    %c0_12 = arith.constant 0 : index
    %7 = vector.load %arg8[%c0_10, %c0_11, %c0_12] : memref<18x18x8xf32, #tpu.memory_space<vmem>>, vector<18x1x8xf32>
    tpu.vector_store %arg8[%c0_10, %c0_11, %c0_12], %6 {strides = array<i32>} : memref<18x18x8xf32, #tpu.memory_space<vmem>>, vector<18x1x8xf32>,
    %cst_13 = arith.constant 0.000000e+00 : f32
    %8 = vector.broadcast %cst_13 : f32 to vector<18x1x8xf32>
    %c0_14 = arith.constant 0 : index
    %c17_15 = arith.constant 17 : index
    %c0_16 = arith.constant 0 : index
    %9 = vector.load %arg8[%c0_14, %c17_15, %c0_16] : memref<18x18x8xf32, #tpu.memory_space<vmem>>, vector<18x1x8xf32>
    tpu.vector_store %arg8[%c0_14, %c17_15, %c0_16], %8 {strides = array<i32>} : memref<18x18x8xf32, #tpu.memory_space<vmem>>, vector<18x1x8xf32>,
    %c1 = arith.constant 1 : index
    %c1_17 = arith.constant 1 : index
    %c0_18 = arith.constant 0 : index
    %10 = vector.load %arg8[%c1, %c1_17, %c0_18] : memref<18x18x8xf32, #tpu.memory_space<vmem>>, vector<16x16x8xf32>
    tpu.vector_store %arg8[%c1, %c1_17, %c0_18], %1 {strides = array<i32>} : memref<18x18x8xf32, #tpu.memory_space<vmem>>, vector<16x16x8xf32>,
    %c0_19 = arith.constant 0 : index
    %c0_20 = arith.constant 0 : index
    %c0_21 = arith.constant 0 : index
    %11 = vector.load %arg8[%c0_19, %c0_20, %c0_21] : memref<18x18x8xf32, #tpu.memory_space<vmem>>, vector<16x16x8xf32>
    %12 = vector.shape_cast %11 : vector<16x16x8xf32> to vector<256x8xf32>
    %13 = arith.truncf %12 : vector<256x8xf32> to vector<256x8xbf16>
    %c0_22 = arith.constant 0 : index
    %c0_23 = arith.constant 0 : index
    %14 = vector.load %arg9[%c0_22, %c0_23] : memref<256x72xbf16, #tpu.memory_space<vmem>>, vector<256x8xbf16>
    tpu.vector_store %arg9[%c0_22, %c0_23], %13 {strides = array<i32>} : memref<256x72xbf16, #tpu.memory_space<vmem>>, vector<256x8xbf16>,
    %c0_24 = arith.constant 0 : index
    %c1_25 = arith.constant 1 : index
    %c0_26 = arith.constant 0 : index
    %15 = vector.load %arg8[%c0_24, %c1_25, %c0_26] : memref<18x18x8xf32, #tpu.memory_space<vmem>>, vector<16x16x8xf32>
    %16 = vector.shape_cast %15 : vector<16x16x8xf32> to vector<256x8xf32>
    %17 = arith.truncf %16 : vector<256x8xf32> to vector<256x8xbf16>
    %c0_27 = arith.constant 0 : index
    %c8 = arith.constant 8 : index
    %18 = vector.load %arg9[%c0_27, %c8] : memref<256x72xbf16, #tpu.memory_space<vmem>>, vector<256x8xbf16>
    tpu.vector_store %arg9[%c0_27, %c8], %17 {strides = array<i32>} : memref<256x72xbf16, #tpu.memory_space<vmem>>, vector<256x8xbf16>,
    %c0_28 = arith.constant 0 : index
    %c2 = arith.constant 2 : index
    %c0_29 = arith.constant 0 : index
    %19 = vector.load %arg8[%c0_28, %c2, %c0_29] : memref<18x18x8xf32, #tpu.memory_space<vmem>>, vector<16x16x8xf32>
    %20 = vector.shape_cast %19 : vector<16x16x8xf32> to vector<256x8xf32>
    %21 = arith.truncf %20 : vector<256x8xf32> to vector<256x8xbf16>
    %c0_30 = arith.constant 0 : index
    %c16 = arith.constant 16 : index
    %22 = vector.load %arg9[%c0_30, %c16] : memref<256x72xbf16, #tpu.memory_space<vmem>>, vector<256x8xbf16>
    tpu.vector_store %arg9[%c0_30, %c16], %21 {strides = array<i32>} : memref<256x72xbf16, #tpu.memory_space<vmem>>, vector<256x8xbf16>,
    %c1_31 = arith.constant 1 : index
    %c0_32 = arith.constant 0 : index
    %c0_33 = arith.constant 0 : index
    %23 = vector.load %arg8[%c1_31, %c0_32, %c0_33] : memref<18x18x8xf32, #tpu.memory_space<vmem>>, vector<16x16x8xf32>
    %24 = vector.shape_cast %23 : vector<16x16x8xf32> to vector<256x8xf32>
    %25 = arith.truncf %24 : vector<256x8xf32> to vector<256x8xbf16>
    %c0_34 = arith.constant 0 : index
    %c24 = arith.constant 24 : index
    %26 = vector.load %arg9[%c0_34, %c24] : memref<256x72xbf16, #tpu.memory_space<vmem>>, vector<256x8xbf16>
    tpu.vector_store %arg9[%c0_34, %c24], %25 {strides = array<i32>} : memref<256x72xbf16, #tpu.memory_space<vmem>>, vector<256x8xbf16>,
    %c1_35 = arith.constant 1 : index
    %c1_36 = arith.constant 1 : index
    %c0_37 = arith.constant 0 : index
    %27 = vector.load %arg8[%c1_35, %c1_36, %c0_37] : memref<18x18x8xf32, #tpu.memory_space<vmem>>, vector<16x16x8xf32>
    %28 = vector.shape_cast %27 : vector<16x16x8xf32> to vector<256x8xf32>
    %29 = arith.truncf %28 : vector<256x8xf32> to vector<256x8xbf16>
    %c0_38 = arith.constant 0 : index
    %c32 = arith.constant 32 : index
    %30 = vector.load %arg9[%c0_38, %c32] : memref<256x72xbf16, #tpu.memory_space<vmem>>, vector<256x8xbf16>
    tpu.vector_store %arg9[%c0_38, %c32], %29 {strides = array<i32>} : memref<256x72xbf16, #tpu.memory_space<vmem>>, vector<256x8xbf16>,
    %c1_39 = arith.constant 1 : index
    %c2_40 = arith.constant 2 : index
    %c0_41 = arith.constant 0 : index
    %31 = vector.load %arg8[%c1_39, %c2_40, %c0_41] : memref<18x18x8xf32, #tpu.memory_space<vmem>>, vector<16x16x8xf32>
    %32 = vector.shape_cast %31 : vector<16x16x8xf32> to vector<256x8xf32>
    %33 = arith.truncf %32 : vector<256x8xf32> to vector<256x8xbf16>
    %c0_42 = arith.constant 0 : index
    %c40 = arith.constant 40 : index
    %34 = vector.load %arg9[%c0_42, %c40] : memref<256x72xbf16, #tpu.memory_space<vmem>>, vector<256x8xbf16>
    tpu.vector_store %arg9[%c0_42, %c40], %33 {strides = array<i32>} : memref<256x72xbf16, #tpu.memory_space<vmem>>, vector<256x8xbf16>,
    %c2_43 = arith.constant 2 : index
    %c0_44 = arith.constant 0 : index
    %c0_45 = arith.constant 0 : index
    %35 = vector.load %arg8[%c2_43, %c0_44, %c0_45] : memref<18x18x8xf32, #tpu.memory_space<vmem>>, vector<16x16x8xf32>
    %36 = vector.shape_cast %35 : vector<16x16x8xf32> to vector<256x8xf32>
    %37 = arith.truncf %36 : vector<256x8xf32> to vector<256x8xbf16>
    %c0_46 = arith.constant 0 : index
    %c48 = arith.constant 48 : index
    %38 = vector.load %arg9[%c0_46, %c48] : memref<256x72xbf16, #tpu.memory_space<vmem>>, vector<256x8xbf16>
    tpu.vector_store %arg9[%c0_46, %c48], %37 {strides = array<i32>} : memref<256x72xbf16, #tpu.memory_space<vmem>>, vector<256x8xbf16>,
    %c2_47 = arith.constant 2 : index
    %c1_48 = arith.constant 1 : index
    %c0_49 = arith.constant 0 : index
    %39 = vector.load %arg8[%c2_47, %c1_48, %c0_49] : memref<18x18x8xf32, #tpu.memory_space<vmem>>, vector<16x16x8xf32>
    %40 = vector.shape_cast %39 : vector<16x16x8xf32> to vector<256x8xf32>
    %41 = arith.truncf %40 : vector<256x8xf32> to vector<256x8xbf16>
    %c0_50 = arith.constant 0 : index
    %c56 = arith.constant 56 : index
    %42 = vector.load %arg9[%c0_50, %c56] : memref<256x72xbf16, #tpu.memory_space<vmem>>, vector<256x8xbf16>
    tpu.vector_store %arg9[%c0_50, %c56], %41 {strides = array<i32>} : memref<256x72xbf16, #tpu.memory_space<vmem>>, vector<256x8xbf16>,
    %c2_51 = arith.constant 2 : index
    %c2_52 = arith.constant 2 : index
    %c0_53 = arith.constant 0 : index
    %43 = vector.load %arg8[%c2_51, %c2_52, %c0_53] : memref<18x18x8xf32, #tpu.memory_space<vmem>>, vector<16x16x8xf32>
    %44 = vector.shape_cast %43 : vector<16x16x8xf32> to vector<256x8xf32>
    %45 = arith.truncf %44 : vector<256x8xf32> to vector<256x8xbf16>
    %c0_54 = arith.constant 0 : index
    %c64 = arith.constant 64 : index
    %46 = vector.load %arg9[%c0_54, %c64] : memref<256x72xbf16, #tpu.memory_space<vmem>>, vector<256x8xbf16>
    tpu.vector_store %arg9[%c0_54, %c64], %45 {strides = array<i32>} : memref<256x72xbf16, #tpu.memory_space<vmem>>, vector<256x8xbf16>,
    %c0_55 = arith.constant 0 : index
    %c0_56 = arith.constant 0 : index
    %47 = vector.load %arg9[%c0_55, %c0_56] : memref<256x72xbf16, #tpu.memory_space<vmem>>, vector<256x72xbf16>
    %c0_57 = arith.constant 0 : index
    %c0_58 = arith.constant 0 : index
    %48 = vector.load %arg4[%c0_57, %c0_58] : memref<72x8xbf16, #tpu.memory_space<vmem>>, vector<72x8xbf16>
    %cst_59 = arith.constant dense<0.000000e+00> : vector<256x8xf32>
    %49 = tpu.matmul %47, %48, %cst_59 {dimension_numbers = #tpu.dot_dimension_numbers<[1], [0], [0], [1], [0, 0, 1, 1], [], []>} : vector<256x72xbf16>, vector<72x8xbf16>, vector<256x8xf32> -> vector<256x8xf32>
    %50 = vector.shape_cast %49 : vector<256x8xf32> to vector<16x16x8xf32>
    %51 = arith.truncf %50 : vector<16x16x8xf32> to vector<16x16x8xbf16>
    %c0_60 = arith.constant 0 : index
    %c0_61 = arith.constant 0 : index
    %c0_62 = arith.constant 0 : index
    %c0_63 = arith.constant 0 : index
    %52 = vector.load %arg5[%c0_60, %c0_61, %c0_62, %c0_63] : memref<1x16x16x8xbf16, #tpu.memory_space<vmem>>, vector<1x16x16x8xbf16>
    %53 = vector.shape_cast %52 : vector<1x16x16x8xbf16> to vector<16x16x8xbf16>
    %54 = vector.shape_cast %51 : vector<16x16x8xbf16> to vector<1x16x16x8xbf16>
    tpu.vector_store %arg5[%c0_60, %c0_61, %c0_62, %c0_63], %54 {strides = array<i32>} : memref<1x16x16x8xbf16, #tpu.memory_space<vmem>>, vector<1x16x16x8xbf16>,
    %cst_64 = arith.constant dense<0.000000e+00> : vector<8xf32>
    %55 = vector.multi_reduction <add>, %49, %cst_64 [0] : vector<256x8xf32> to vector<8xf32>
    %56 = vector.shape_cast %55 : vector<8xf32> to vector<1x8xf32>
    %c0_65 = arith.constant 0 : index
    %c0_66 = arith.constant 0 : index
    %c0_67 = arith.constant 0 : index
    %57 = vector.load %arg6[%c0_65, %c0_66, %c0_67] : memref<1x1x8xf32, #tpu.memory_space<vmem>>, vector<1x1x8xf32>
    %58 = vector.shape_cast %57 : vector<1x1x8xf32> to vector<1x8xf32>
    %59 = vector.shape_cast %56 : vector<1x8xf32> to vector<1x1x8xf32>
    tpu.vector_store %arg6[%c0_65, %c0_66, %c0_67], %59 {strides = array<i32>} : memref<1x1x8xf32, #tpu.memory_space<vmem>>, vector<1x1x8xf32>,
    %60 = arith.mulf %49, %49 : vector<256x8xf32>
    %cst_68 = arith.constant dense<0.000000e+00> : vector<8xf32>
    %61 = vector.multi_reduction <add>, %60, %cst_68 [0] : vector<256x8xf32> to vector<8xf32>
    %62 = vector.shape_cast %61 : vector<8xf32> to vector<1x8xf32>
    %c0_69 = arith.constant 0 : index
    %c0_70 = arith.constant 0 : index
    %c0_71 = arith.constant 0 : index
    %63 = vector.load %arg7[%c0_69, %c0_70, %c0_71] : memref<1x1x8xf32, #tpu.memory_space<vmem>>, vector<1x1x8xf32>
    %64 = vector.shape_cast %63 : vector<1x1x8xf32> to vector<1x8xf32>
    %65 = vector.shape_cast %62 : vector<1x8xf32> to vector<1x1x8xf32>
    tpu.vector_store %arg7[%c0_69, %c0_70, %c0_71], %65 {strides = array<i32>} : memref<1x1x8xf32, #tpu.memory_space<vmem>>, vector<1x1x8xf32>,
    return
  }
  func.func @transform_0(%arg0: i32) -> (i32, i32, i32, i32) {
    %c0_i32 = arith.constant 0 : i32
    %c0_i32_0 = arith.constant 0 : i32
    %c0_i32_1 = arith.constant 0 : i32
    %c0_i32_2 = arith.constant 0 : i32
    return %arg0, %c0_i32, %c0_i32_0, %c0_i32_1 : i32, i32, i32, i32
  }
  func.func @transform_1(%arg0: i32) -> (i32, i32, i32) {
    %c0_i32 = arith.constant 0 : i32
    %c0_i32_0 = arith.constant 0 : i32
    %c0_i32_1 = arith.constant 0 : i32
    %c0_i32_2 = arith.constant 0 : i32
    return %c0_i32, %c0_i32_0, %c0_i32_1 : i32, i32, i32
  }
  func.func @transform_2(%arg0: i32) -> (i32, i32, i32) {
    %c0_i32 = arith.constant 0 : i32
    %c0_i32_0 = arith.constant 0 : i32
    %c0_i32_1 = arith.constant 0 : i32
    %c0_i32_2 = arith.constant 0 : i32
    return %c0_i32, %c0_i32_0, %c0_i32_1 : i32, i32, i32
  }
  func.func @transform_3(%arg0: i32) -> (i32, i32) {
    %c0_i32 = arith.constant 0 : i32
    %c0_i32_0 = arith.constant 0 : i32
    %c0_i32_1 = arith.constant 0 : i32
    return %c0_i32, %c0_i32_0 : i32, i32
  }
  func.func @transform_4(%arg0: i32) -> (i32, i32, i32, i32) {
    %c0_i32 = arith.constant 0 : i32
    %c0_i32_0 = arith.constant 0 : i32
    %c0_i32_1 = arith.constant 0 : i32
    %c0_i32_2 = arith.constant 0 : i32
    return %arg0, %c0_i32, %c0_i32_0, %c0_i32_1 : i32, i32, i32, i32
  }
  func.func @transform_5(%arg0: i32) -> (i32, i32, i32) {
    %c0_i32 = arith.constant 0 : i32
    %c0_i32_0 = arith.constant 0 : i32
    %c0_i32_1 = arith.constant 0 : i32
    return %arg0, %c0_i32, %c0_i32_0 : i32, i32, i32
  }
  func.func @transform_6(%arg0: i32) -> (i32, i32, i32) {
    %c0_i32 = arith.constant 0 : i32
    %c0_i32_0 = arith.constant 0 : i32
    %c0_i32_1 = arith.constant 0 : i32
    return %arg0, %c0_i32, %c0_i32_0 : i32, i32, i32
  }
}

module attributes {stable_mosaic.version = 11 : i64} {
  func.func @_conv3x3_kernel(%arg0: i32, %arg1: memref<1x16x16x8xbf16, #tpu.memory_space<vmem>>, %arg2: memref<1x1x8xf32, #tpu.memory_space<vmem>>, %arg3: memref<1x1x8xf32, #tpu.memory_space<vmem>>, %arg4: memref<72x8xbf16, #tpu.memory_space<vmem>>, %arg5: memref<1x16x16x8xbf16, #tpu.memory_space<vmem>>, %arg6: memref<1x1x8xf32, #tpu.memory_space<vmem>>, %arg7: memref<1x1x8xf32, #tpu.memory_space<vmem>>, %arg8: memref<18x18x8xf32, #tpu.memory_space<vmem>>, %arg9: memref<256x72xbf16, #tpu.memory_space<vmem>>) attributes {dimension_semantics = [#tpu.dimension_semantics<parallel>], iteration_bounds = array<i64: 2>, scalar_prefetch = 0 : i64, scratch_operands = 2 : i64, tpu.core_type = #tpu.core_type<tc>, window_params = [{transform_indices = @transform_0, window_bounds = array<i64: 1, 16, 16, 8>}, {pipeline_mode = #tpu.pipeline_mode<synchronous>, transform_indices = @transform_1, window_bounds = array<i64: 1, 1, 8>}, {pipeline_mode = #tpu.pipeline_mode<synchronous>, transform_indices = @transform_2, window_bounds = array<i64: 1, 1, 8>}, {pipeline_mode = #tpu.pipeline_mode<synchronous>, transform_indices = @transform_3, window_bounds = array<i64: 72, 8>}, {transform_indices = @transform_4, window_bounds = array<i64: 1, 16, 16, 8>}, {transform_indices = @transform_5, window_bounds = array<i64: 1, 1, 8>}, {transform_indices = @transform_6, window_bounds = array<i64: 1, 1, 8>}]} {
    %c0 = arith.constant 0 : index
    %c0_0 = arith.constant 0 : index
    %c0_1 = arith.constant 0 : index
    %c0_2 = arith.constant 0 : index
    %0 = vector.load %arg1[%c0, %c0_0, %c0_1, %c0_2] : memref<1x16x16x8xbf16, #tpu.memory_space<vmem>>, vector<1x16x16x8xbf16>
    %1 = vector.shape_cast %0 : vector<1x16x16x8xbf16> to vector<16x16x8xbf16>
    %2 = arith.extf %1 : vector<16x16x8xbf16> to vector<16x16x8xf32>
    %c0_3 = arith.constant 0 : index
    %c0_4 = arith.constant 0 : index
    %c0_5 = arith.constant 0 : index
    %3 = vector.load %arg2[%c0_3, %c0_4, %c0_5] : memref<1x1x8xf32, #tpu.memory_space<vmem>>, vector<1x1x8xf32>
    %4 = vector.broadcast %3 : vector<1x1x8xf32> to vector<16x16x8xf32>
    %5 = arith.mulf %2, %4 : vector<16x16x8xf32>
    %c0_6 = arith.constant 0 : index
    %c0_7 = arith.constant 0 : index
    %c0_8 = arith.constant 0 : index
    %6 = vector.load %arg3[%c0_6, %c0_7, %c0_8] : memref<1x1x8xf32, #tpu.memory_space<vmem>>, vector<1x1x8xf32>
    %7 = vector.broadcast %6 : vector<1x1x8xf32> to vector<16x16x8xf32>
    %8 = arith.addf %5, %7 : vector<16x16x8xf32>
    %cst = arith.constant 0.000000e+00 : f32
    %9 = vector.broadcast %cst : f32 to vector<16x16x8xf32>
    %10 = arith.maximumf %8, %9 : vector<16x16x8xf32>
    %cst_9 = arith.constant 0.000000e+00 : f32
    %11 = vector.broadcast %cst_9 : f32 to vector<1x18x8xf32>
    %c0_10 = arith.constant 0 : index
    %c0_11 = arith.constant 0 : index
    %c0_12 = arith.constant 0 : index
    %12 = vector.load %arg8[%c0_10, %c0_11, %c0_12] : memref<18x18x8xf32, #tpu.memory_space<vmem>>, vector<1x18x8xf32>
    tpu.vector_store %arg8[%c0_10, %c0_11, %c0_12], %11 {strides = array<i32>} : memref<18x18x8xf32, #tpu.memory_space<vmem>>, vector<1x18x8xf32>,
    %cst_13 = arith.constant 0.000000e+00 : f32
    %13 = vector.broadcast %cst_13 : f32 to vector<1x18x8xf32>
    %c17 = arith.constant 17 : index
    %c0_14 = arith.constant 0 : index
    %c0_15 = arith.constant 0 : index
    %14 = vector.load %arg8[%c17, %c0_14, %c0_15] : memref<18x18x8xf32, #tpu.memory_space<vmem>>, vector<1x18x8xf32>
    tpu.vector_store %arg8[%c17, %c0_14, %c0_15], %13 {strides = array<i32>} : memref<18x18x8xf32, #tpu.memory_space<vmem>>, vector<1x18x8xf32>,
    %cst_16 = arith.constant 0.000000e+00 : f32
    %15 = vector.broadcast %cst_16 : f32 to vector<18x1x8xf32>
    %c0_17 = arith.constant 0 : index
    %c0_18 = arith.constant 0 : index
    %c0_19 = arith.constant 0 : index
    %16 = vector.load %arg8[%c0_17, %c0_18, %c0_19] : memref<18x18x8xf32, #tpu.memory_space<vmem>>, vector<18x1x8xf32>
    tpu.vector_store %arg8[%c0_17, %c0_18, %c0_19], %15 {strides = array<i32>} : memref<18x18x8xf32, #tpu.memory_space<vmem>>, vector<18x1x8xf32>,
    %cst_20 = arith.constant 0.000000e+00 : f32
    %17 = vector.broadcast %cst_20 : f32 to vector<18x1x8xf32>
    %c0_21 = arith.constant 0 : index
    %c17_22 = arith.constant 17 : index
    %c0_23 = arith.constant 0 : index
    %18 = vector.load %arg8[%c0_21, %c17_22, %c0_23] : memref<18x18x8xf32, #tpu.memory_space<vmem>>, vector<18x1x8xf32>
    tpu.vector_store %arg8[%c0_21, %c17_22, %c0_23], %17 {strides = array<i32>} : memref<18x18x8xf32, #tpu.memory_space<vmem>>, vector<18x1x8xf32>,
    %c1 = arith.constant 1 : index
    %c1_24 = arith.constant 1 : index
    %c0_25 = arith.constant 0 : index
    %19 = vector.load %arg8[%c1, %c1_24, %c0_25] : memref<18x18x8xf32, #tpu.memory_space<vmem>>, vector<16x16x8xf32>
    tpu.vector_store %arg8[%c1, %c1_24, %c0_25], %10 {strides = array<i32>} : memref<18x18x8xf32, #tpu.memory_space<vmem>>, vector<16x16x8xf32>,
    %c0_26 = arith.constant 0 : index
    %c0_27 = arith.constant 0 : index
    %c0_28 = arith.constant 0 : index
    %20 = vector.load %arg8[%c0_26, %c0_27, %c0_28] : memref<18x18x8xf32, #tpu.memory_space<vmem>>, vector<16x16x8xf32>
    %21 = vector.shape_cast %20 : vector<16x16x8xf32> to vector<256x8xf32>
    %22 = arith.truncf %21 : vector<256x8xf32> to vector<256x8xbf16>
    %c0_29 = arith.constant 0 : index
    %c0_30 = arith.constant 0 : index
    %23 = vector.load %arg9[%c0_29, %c0_30] : memref<256x72xbf16, #tpu.memory_space<vmem>>, vector<256x8xbf16>
    tpu.vector_store %arg9[%c0_29, %c0_30], %22 {strides = array<i32>} : memref<256x72xbf16, #tpu.memory_space<vmem>>, vector<256x8xbf16>,
    %c0_31 = arith.constant 0 : index
    %c1_32 = arith.constant 1 : index
    %c0_33 = arith.constant 0 : index
    %24 = vector.load %arg8[%c0_31, %c1_32, %c0_33] : memref<18x18x8xf32, #tpu.memory_space<vmem>>, vector<16x16x8xf32>
    %25 = vector.shape_cast %24 : vector<16x16x8xf32> to vector<256x8xf32>
    %26 = arith.truncf %25 : vector<256x8xf32> to vector<256x8xbf16>
    %c0_34 = arith.constant 0 : index
    %c8 = arith.constant 8 : index
    %27 = vector.load %arg9[%c0_34, %c8] : memref<256x72xbf16, #tpu.memory_space<vmem>>, vector<256x8xbf16>
    tpu.vector_store %arg9[%c0_34, %c8], %26 {strides = array<i32>} : memref<256x72xbf16, #tpu.memory_space<vmem>>, vector<256x8xbf16>,
    %c0_35 = arith.constant 0 : index
    %c2 = arith.constant 2 : index
    %c0_36 = arith.constant 0 : index
    %28 = vector.load %arg8[%c0_35, %c2, %c0_36] : memref<18x18x8xf32, #tpu.memory_space<vmem>>, vector<16x16x8xf32>
    %29 = vector.shape_cast %28 : vector<16x16x8xf32> to vector<256x8xf32>
    %30 = arith.truncf %29 : vector<256x8xf32> to vector<256x8xbf16>
    %c0_37 = arith.constant 0 : index
    %c16 = arith.constant 16 : index
    %31 = vector.load %arg9[%c0_37, %c16] : memref<256x72xbf16, #tpu.memory_space<vmem>>, vector<256x8xbf16>
    tpu.vector_store %arg9[%c0_37, %c16], %30 {strides = array<i32>} : memref<256x72xbf16, #tpu.memory_space<vmem>>, vector<256x8xbf16>,
    %c1_38 = arith.constant 1 : index
    %c0_39 = arith.constant 0 : index
    %c0_40 = arith.constant 0 : index
    %32 = vector.load %arg8[%c1_38, %c0_39, %c0_40] : memref<18x18x8xf32, #tpu.memory_space<vmem>>, vector<16x16x8xf32>
    %33 = vector.shape_cast %32 : vector<16x16x8xf32> to vector<256x8xf32>
    %34 = arith.truncf %33 : vector<256x8xf32> to vector<256x8xbf16>
    %c0_41 = arith.constant 0 : index
    %c24 = arith.constant 24 : index
    %35 = vector.load %arg9[%c0_41, %c24] : memref<256x72xbf16, #tpu.memory_space<vmem>>, vector<256x8xbf16>
    tpu.vector_store %arg9[%c0_41, %c24], %34 {strides = array<i32>} : memref<256x72xbf16, #tpu.memory_space<vmem>>, vector<256x8xbf16>,
    %c1_42 = arith.constant 1 : index
    %c1_43 = arith.constant 1 : index
    %c0_44 = arith.constant 0 : index
    %36 = vector.load %arg8[%c1_42, %c1_43, %c0_44] : memref<18x18x8xf32, #tpu.memory_space<vmem>>, vector<16x16x8xf32>
    %37 = vector.shape_cast %36 : vector<16x16x8xf32> to vector<256x8xf32>
    %38 = arith.truncf %37 : vector<256x8xf32> to vector<256x8xbf16>
    %c0_45 = arith.constant 0 : index
    %c32 = arith.constant 32 : index
    %39 = vector.load %arg9[%c0_45, %c32] : memref<256x72xbf16, #tpu.memory_space<vmem>>, vector<256x8xbf16>
    tpu.vector_store %arg9[%c0_45, %c32], %38 {strides = array<i32>} : memref<256x72xbf16, #tpu.memory_space<vmem>>, vector<256x8xbf16>,
    %c1_46 = arith.constant 1 : index
    %c2_47 = arith.constant 2 : index
    %c0_48 = arith.constant 0 : index
    %40 = vector.load %arg8[%c1_46, %c2_47, %c0_48] : memref<18x18x8xf32, #tpu.memory_space<vmem>>, vector<16x16x8xf32>
    %41 = vector.shape_cast %40 : vector<16x16x8xf32> to vector<256x8xf32>
    %42 = arith.truncf %41 : vector<256x8xf32> to vector<256x8xbf16>
    %c0_49 = arith.constant 0 : index
    %c40 = arith.constant 40 : index
    %43 = vector.load %arg9[%c0_49, %c40] : memref<256x72xbf16, #tpu.memory_space<vmem>>, vector<256x8xbf16>
    tpu.vector_store %arg9[%c0_49, %c40], %42 {strides = array<i32>} : memref<256x72xbf16, #tpu.memory_space<vmem>>, vector<256x8xbf16>,
    %c2_50 = arith.constant 2 : index
    %c0_51 = arith.constant 0 : index
    %c0_52 = arith.constant 0 : index
    %44 = vector.load %arg8[%c2_50, %c0_51, %c0_52] : memref<18x18x8xf32, #tpu.memory_space<vmem>>, vector<16x16x8xf32>
    %45 = vector.shape_cast %44 : vector<16x16x8xf32> to vector<256x8xf32>
    %46 = arith.truncf %45 : vector<256x8xf32> to vector<256x8xbf16>
    %c0_53 = arith.constant 0 : index
    %c48 = arith.constant 48 : index
    %47 = vector.load %arg9[%c0_53, %c48] : memref<256x72xbf16, #tpu.memory_space<vmem>>, vector<256x8xbf16>
    tpu.vector_store %arg9[%c0_53, %c48], %46 {strides = array<i32>} : memref<256x72xbf16, #tpu.memory_space<vmem>>, vector<256x8xbf16>,
    %c2_54 = arith.constant 2 : index
    %c1_55 = arith.constant 1 : index
    %c0_56 = arith.constant 0 : index
    %48 = vector.load %arg8[%c2_54, %c1_55, %c0_56] : memref<18x18x8xf32, #tpu.memory_space<vmem>>, vector<16x16x8xf32>
    %49 = vector.shape_cast %48 : vector<16x16x8xf32> to vector<256x8xf32>
    %50 = arith.truncf %49 : vector<256x8xf32> to vector<256x8xbf16>
    %c0_57 = arith.constant 0 : index
    %c56 = arith.constant 56 : index
    %51 = vector.load %arg9[%c0_57, %c56] : memref<256x72xbf16, #tpu.memory_space<vmem>>, vector<256x8xbf16>
    tpu.vector_store %arg9[%c0_57, %c56], %50 {strides = array<i32>} : memref<256x72xbf16, #tpu.memory_space<vmem>>, vector<256x8xbf16>,
    %c2_58 = arith.constant 2 : index
    %c2_59 = arith.constant 2 : index
    %c0_60 = arith.constant 0 : index
    %52 = vector.load %arg8[%c2_58, %c2_59, %c0_60] : memref<18x18x8xf32, #tpu.memory_space<vmem>>, vector<16x16x8xf32>
    %53 = vector.shape_cast %52 : vector<16x16x8xf32> to vector<256x8xf32>
    %54 = arith.truncf %53 : vector<256x8xf32> to vector<256x8xbf16>
    %c0_61 = arith.constant 0 : index
    %c64 = arith.constant 64 : index
    %55 = vector.load %arg9[%c0_61, %c64] : memref<256x72xbf16, #tpu.memory_space<vmem>>, vector<256x8xbf16>
    tpu.vector_store %arg9[%c0_61, %c64], %54 {strides = array<i32>} : memref<256x72xbf16, #tpu.memory_space<vmem>>, vector<256x8xbf16>,
    %c0_62 = arith.constant 0 : index
    %c0_63 = arith.constant 0 : index
    %56 = vector.load %arg9[%c0_62, %c0_63] : memref<256x72xbf16, #tpu.memory_space<vmem>>, vector<256x72xbf16>
    %c0_64 = arith.constant 0 : index
    %c0_65 = arith.constant 0 : index
    %57 = vector.load %arg4[%c0_64, %c0_65] : memref<72x8xbf16, #tpu.memory_space<vmem>>, vector<72x8xbf16>
    %cst_66 = arith.constant dense<0.000000e+00> : vector<256x8xf32>
    %58 = tpu.matmul %56, %57, %cst_66 {dimension_numbers = #tpu.dot_dimension_numbers<[1], [0], [0], [1], [0, 0, 1, 1], [], []>} : vector<256x72xbf16>, vector<72x8xbf16>, vector<256x8xf32> -> vector<256x8xf32>
    %59 = vector.shape_cast %58 : vector<256x8xf32> to vector<16x16x8xf32>
    %60 = arith.truncf %59 : vector<16x16x8xf32> to vector<16x16x8xbf16>
    %c0_67 = arith.constant 0 : index
    %c0_68 = arith.constant 0 : index
    %c0_69 = arith.constant 0 : index
    %c0_70 = arith.constant 0 : index
    %61 = vector.load %arg5[%c0_67, %c0_68, %c0_69, %c0_70] : memref<1x16x16x8xbf16, #tpu.memory_space<vmem>>, vector<1x16x16x8xbf16>
    %62 = vector.shape_cast %61 : vector<1x16x16x8xbf16> to vector<16x16x8xbf16>
    %63 = vector.shape_cast %60 : vector<16x16x8xbf16> to vector<1x16x16x8xbf16>
    tpu.vector_store %arg5[%c0_67, %c0_68, %c0_69, %c0_70], %63 {strides = array<i32>} : memref<1x16x16x8xbf16, #tpu.memory_space<vmem>>, vector<1x16x16x8xbf16>,
    %cst_71 = arith.constant dense<0.000000e+00> : vector<8xf32>
    %64 = vector.multi_reduction <add>, %58, %cst_71 [0] : vector<256x8xf32> to vector<8xf32>
    %65 = vector.shape_cast %64 : vector<8xf32> to vector<1x8xf32>
    %c0_72 = arith.constant 0 : index
    %c0_73 = arith.constant 0 : index
    %c0_74 = arith.constant 0 : index
    %66 = vector.load %arg6[%c0_72, %c0_73, %c0_74] : memref<1x1x8xf32, #tpu.memory_space<vmem>>, vector<1x1x8xf32>
    %67 = vector.shape_cast %66 : vector<1x1x8xf32> to vector<1x8xf32>
    %68 = vector.shape_cast %65 : vector<1x8xf32> to vector<1x1x8xf32>
    tpu.vector_store %arg6[%c0_72, %c0_73, %c0_74], %68 {strides = array<i32>} : memref<1x1x8xf32, #tpu.memory_space<vmem>>, vector<1x1x8xf32>,
    %69 = arith.mulf %58, %58 : vector<256x8xf32>
    %cst_75 = arith.constant dense<0.000000e+00> : vector<8xf32>
    %70 = vector.multi_reduction <add>, %69, %cst_75 [0] : vector<256x8xf32> to vector<8xf32>
    %71 = vector.shape_cast %70 : vector<8xf32> to vector<1x8xf32>
    %c0_76 = arith.constant 0 : index
    %c0_77 = arith.constant 0 : index
    %c0_78 = arith.constant 0 : index
    %72 = vector.load %arg7[%c0_76, %c0_77, %c0_78] : memref<1x1x8xf32, #tpu.memory_space<vmem>>, vector<1x1x8xf32>
    %73 = vector.shape_cast %72 : vector<1x1x8xf32> to vector<1x8xf32>
    %74 = vector.shape_cast %71 : vector<1x8xf32> to vector<1x1x8xf32>
    tpu.vector_store %arg7[%c0_76, %c0_77, %c0_78], %74 {strides = array<i32>} : memref<1x1x8xf32, #tpu.memory_space<vmem>>, vector<1x1x8xf32>,
    return
  }
  func.func @transform_0(%arg0: i32) -> (i32, i32, i32, i32) {
    %c0_i32 = arith.constant 0 : i32
    %c0_i32_0 = arith.constant 0 : i32
    %c0_i32_1 = arith.constant 0 : i32
    %c0_i32_2 = arith.constant 0 : i32
    return %arg0, %c0_i32, %c0_i32_0, %c0_i32_1 : i32, i32, i32, i32
  }
  func.func @transform_1(%arg0: i32) -> (i32, i32, i32) {
    %c0_i32 = arith.constant 0 : i32
    %c0_i32_0 = arith.constant 0 : i32
    %c0_i32_1 = arith.constant 0 : i32
    %c0_i32_2 = arith.constant 0 : i32
    return %c0_i32, %c0_i32_0, %c0_i32_1 : i32, i32, i32
  }
  func.func @transform_2(%arg0: i32) -> (i32, i32, i32) {
    %c0_i32 = arith.constant 0 : i32
    %c0_i32_0 = arith.constant 0 : i32
    %c0_i32_1 = arith.constant 0 : i32
    %c0_i32_2 = arith.constant 0 : i32
    return %c0_i32, %c0_i32_0, %c0_i32_1 : i32, i32, i32
  }
  func.func @transform_3(%arg0: i32) -> (i32, i32) {
    %c0_i32 = arith.constant 0 : i32
    %c0_i32_0 = arith.constant 0 : i32
    %c0_i32_1 = arith.constant 0 : i32
    return %c0_i32, %c0_i32_0 : i32, i32
  }
  func.func @transform_4(%arg0: i32) -> (i32, i32, i32, i32) {
    %c0_i32 = arith.constant 0 : i32
    %c0_i32_0 = arith.constant 0 : i32
    %c0_i32_1 = arith.constant 0 : i32
    %c0_i32_2 = arith.constant 0 : i32
    return %arg0, %c0_i32, %c0_i32_0, %c0_i32_1 : i32, i32, i32, i32
  }
  func.func @transform_5(%arg0: i32) -> (i32, i32, i32) {
    %c0_i32 = arith.constant 0 : i32
    %c0_i32_0 = arith.constant 0 : i32
    %c0_i32_1 = arith.constant 0 : i32
    return %arg0, %c0_i32, %c0_i32_0 : i32, i32, i32
  }
  func.func @transform_6(%arg0: i32) -> (i32, i32, i32) {
    %c0_i32 = arith.constant 0 : i32
    %c0_i32_0 = arith.constant 0 : i32
    %c0_i32_1 = arith.constant 0 : i32
    return %arg0, %c0_i32, %c0_i32_0 : i32, i32, i32
  }
}

module attributes {stable_mosaic.version = 11 : i64} {
  func.func @_bn_res_relu_kernel(%arg0: i32, %arg1: memref<8x512xbf16, #tpu.memory_space<vmem>>, %arg2: memref<8x512xf32, #tpu.memory_space<vmem>>, %arg3: memref<1x512xf32, #tpu.memory_space<vmem>>, %arg4: memref<1x512xf32, #tpu.memory_space<vmem>>, %arg5: memref<8x512xf32, #tpu.memory_space<vmem>>) attributes {dimension_semantics = [#tpu.dimension_semantics<parallel>], iteration_bounds = array<i64: 1>, scalar_prefetch = 0 : i64, scratch_operands = 0 : i64, tpu.core_type = #tpu.core_type<tc>, window_params = [{transform_indices = @transform_0, window_bounds = array<i64: 8, 512>}, {transform_indices = @transform_1, window_bounds = array<i64: 8, 512>}, {pipeline_mode = #tpu.pipeline_mode<synchronous>, transform_indices = @transform_2, window_bounds = array<i64: 1, 512>}, {pipeline_mode = #tpu.pipeline_mode<synchronous>, transform_indices = @transform_3, window_bounds = array<i64: 1, 512>}, {transform_indices = @transform_4, window_bounds = array<i64: 8, 512>}]} {
    %c0 = arith.constant 0 : index
    %c0_0 = arith.constant 0 : index
    %0 = vector.load %arg1[%c0, %c0_0] : memref<8x512xbf16, #tpu.memory_space<vmem>>, vector<8x512xbf16>
    %1 = arith.extf %0 : vector<8x512xbf16> to vector<8x512xf32>
    %c0_1 = arith.constant 0 : index
    %c0_2 = arith.constant 0 : index
    %2 = vector.load %arg3[%c0_1, %c0_2] : memref<1x512xf32, #tpu.memory_space<vmem>>, vector<1x512xf32>
    %3 = vector.broadcast %2 : vector<1x512xf32> to vector<8x512xf32>
    %4 = arith.mulf %1, %3 : vector<8x512xf32>
    %c0_3 = arith.constant 0 : index
    %c0_4 = arith.constant 0 : index
    %5 = vector.load %arg4[%c0_3, %c0_4] : memref<1x512xf32, #tpu.memory_space<vmem>>, vector<1x512xf32>
    %6 = vector.broadcast %5 : vector<1x512xf32> to vector<8x512xf32>
    %7 = arith.addf %4, %6 : vector<8x512xf32>
    %c0_5 = arith.constant 0 : index
    %c0_6 = arith.constant 0 : index
    %8 = vector.load %arg2[%c0_5, %c0_6] : memref<8x512xf32, #tpu.memory_space<vmem>>, vector<8x512xf32>
    %9 = arith.addf %7, %8 : vector<8x512xf32>
    %cst = arith.constant 0.000000e+00 : f32
    %10 = vector.broadcast %cst : f32 to vector<8x512xf32>
    %11 = arith.maximumf %9, %10 : vector<8x512xf32>
    %c0_7 = arith.constant 0 : index
    %c0_8 = arith.constant 0 : index
    %12 = vector.load %arg5[%c0_7, %c0_8] : memref<8x512xf32, #tpu.memory_space<vmem>>, vector<8x512xf32>
    tpu.vector_store %arg5[%c0_7, %c0_8], %11 {strides = array<i32>} : memref<8x512xf32, #tpu.memory_space<vmem>>, vector<8x512xf32>,
    return
  }
  func.func @transform_0(%arg0: i32) -> (i32, i32) {
    %c0_i32 = arith.constant 0 : i32
    %c0_i32_0 = arith.constant 0 : i32
    return %arg0, %c0_i32 : i32, i32
  }
  func.func @transform_1(%arg0: i32) -> (i32, i32) {
    %c0_i32 = arith.constant 0 : i32
    %c0_i32_0 = arith.constant 0 : i32
    return %arg0, %c0_i32 : i32, i32
  }
  func.func @transform_2(%arg0: i32) -> (i32, i32) {
    %c0_i32 = arith.constant 0 : i32
    %c0_i32_0 = arith.constant 0 : i32
    %c0_i32_1 = arith.constant 0 : i32
    return %c0_i32, %c0_i32_0 : i32, i32
  }
  func.func @transform_3(%arg0: i32) -> (i32, i32) {
    %c0_i32 = arith.constant 0 : i32
    %c0_i32_0 = arith.constant 0 : i32
    %c0_i32_1 = arith.constant 0 : i32
    return %c0_i32, %c0_i32_0 : i32, i32
  }
  func.func @transform_4(%arg0: i32) -> (i32, i32) {
    %c0_i32 = arith.constant 0 : i32
    %c0_i32_0 = arith.constant 0 : i32
    return %arg0, %c0_i32 : i32, i32
  }
}

</mosaic_0001>

<llo_original>
// kernel: tile.18
$region0: #{tile.18}
  #allocation0 [shape = 's32[1]{0}', space=sflag, size = 0x4, scoped, tag = 'scoped memory for tile.18']
  %s0 = inlined_call_operand.vmem [shape: f32[8], index: 0, kind: input, shape index: {}]
  %s1 = inlined_call_operand.vmem [shape: f32[64,8], index: 1, kind: output, shape index: {}]
  // Predicated region
  $region2: #{tile.18} parent=0 // pred_check
    _
  $region3: #{tile.18} parent=0 // pred_check_branch
    %3 = sbr.rel (0) target = $region5
  $region4: #{tile.18} parent=0 // pred_region
    _
  $region5: #{tile.18} parent=0 // pred_fallthru
    _
  %v4 = vld [vmem:[%s0] ss:$0 sm:$0xff]
  %5 = vst [vmem:[%s1] sm:$0xff] %v4
  %s6 = scalar_lea.vmem %s1, 8
  %7 = vst [vmem:[%s6] sm:$0xff] %v4
  %s8 = scalar_lea.vmem %s1, 16
  %9 = vst [vmem:[%s8] sm:$0xff] %v4
  %s10 = scalar_lea.vmem %s1, 24
  %11 = vst [vmem:[%s10] sm:$0xff] %v4
  %s12 = scalar_lea.vmem %s1, 32
  %13 = vst [vmem:[%s12] sm:$0xff] %v4
  %s14 = scalar_lea.vmem %s1, 40
  %15 = vst [vmem:[%s14] sm:$0xff] %v4
  %s16 = scalar_lea.vmem %s1, 48
  %17 = vst [vmem:[%s16] sm:$0xff] %v4
  %s18 = scalar_lea.vmem %s1, 56
  %19 = vst [vmem:[%s18] sm:$0xff] %v4

// kernel: tile.19
$region0: #{tile.19}
  %s0 = inlined_call_operand.vmem [shape: f32[64,8], index: 0, kind: input, shape index: {}]
  %s1 = inlined_call_operand.vmem [shape: f32[1,512], index: 1, kind: output, shape index: {}]
  $region1: #{tile.19} parent=0
    #allocation0 [shape = 'u8[16384]{0}', space=vmem, size = 0x4000, scoped, tag = 'scoped mem for output reshape']
    %s2 = smov 3
    %v3 = vld [vmem:[%s0] ss:$16 sm:%s2]
    %s4 = smov 12
    %v5 = vld [vmem:[%s0] ss:$16 sm:%s4]
    %vm6 = vcmask 1043458
    %v7 = vsel %vm6, %v5, %v3
    %vm8 = vcmask 64512
    %9 = vst.msk [vmem:[#allocation0] ss:$8 sm:$0xf] %vm8, %v7
    %s10 = scalar_lea.vmem %s0, 15
    %s11 = smov 3
    %v12 = vld [vmem:[%s10] ss:$16 sm:%s11]
    %s13 = scalar_lea.vmem %s0, 15
    %s14 = smov 12
    %v15 = vld [vmem:[%s13] ss:$16 sm:%s14]
    %vm16 = vcmask 1043458
    %v17 = vsel %vm16, %v15, %v12
    %18 = vrot.lane.b32.xlu0 %v17, 120
    %v19 = vpop.permute.xlu0 %18
    %vm20 = vcmask 1048512
    %21 = vst.msk [vmem:[#allocation0] ss:$8 sm:$0xf] %vm20, %v19
    %s22 = scalar_lea.vmem %s0, 14
    %s23 = smov 3
    %v24 = vld [vmem:[%s22] ss:$16 sm:%s23]
    %s25 = scalar_lea.vmem %s0, 14
    %s26 = smov 12
    %v27 = vld [vmem:[%s25] ss:$16 sm:%s26]
    %vm28 = vcmask 1043458
    %v29 = vsel %vm28, %v27, %v24
    %30 = vrot.lane.b32.xlu0 %v29, 112
    %v31 = vpop.permute.xlu0 %30
    %vm32 = vcmask 982912
    %33 = vst.msk [vmem:[#allocation0] ss:$8 sm:$0xf] %vm32, %v31
    %s34 = scalar_lea.vmem %s0, 13
    %s35 = smov 3
    %v36 = vld [vmem:[%s34] ss:$16 sm:%s35]
    %s37 = scalar_lea.vmem %s0, 13
    %s38 = smov 12
    %v39 = vld [vmem:[%s37] ss:$16 sm:%s38]
    %vm40 = vcmask 1043458
    %v41 = vsel %vm40, %v39, %v36
    %42 = vrot.lane.b32.xlu0 %v41, 104
    %v43 = vpop.permute.xlu0 %42
    %vm44 = vcmask 917312
    %45 = vst.msk [vmem:[#allocation0] ss:$8 sm:$0xf] %vm44, %v43
    %s46 = scalar_lea.vmem %s0, 12
    %s47 = smov 3
    %v48 = vld [vmem:[%s46] ss:$16 sm:%s47]
    %s49 = scalar_lea.vmem %s0, 12
    %s50 = smov 12
    %v51 = vld [vmem:[%s49] ss:$16 sm:%s50]
    %vm52 = vcmask 1043458
    %v53 = vsel %vm52, %v51, %v48
    %54 = vrot.lane.b32.xlu0 %v53, 96
    %v55 = vpop.permute.xlu0 %54
    %vm56 = vcmask 851712
    %57 = vst.msk [vmem:[#allocation0] ss:$8 sm:$0xf] %vm56, %v55
    %s58 = scalar_lea.vmem %s0, 11
    %s59 = smov 3
    %v60 = vld [vmem:[%s58] ss:$16 sm:%s59]
    %s61 = scalar_lea.vmem %s0, 11
    %s62 = smov 12
    %v63 = vld [vmem:[%s61] ss:$16 sm:%s62]
    %vm64 = vcmask 1043458
    %v65 = vsel %vm64, %v63, %v60
    %66 = vrot.lane.b32.xlu0 %v65, 88
    %v67 = vpop.permute.xlu0 %66
    %vm68 = vcmask 786112
    %69 = vst.msk [vmem:[#allocation0] ss:$8 sm:$0xf] %vm68, %v67
    %s70 = scalar_lea.vmem %s0, 10
    %s71 = smov 3
    %v72 = vld [vmem:[%s70] ss:$16 sm:%s71]
    %s73 = scalar_lea.vmem %s0, 10
    %s74 = smov 12
    %v75 = vld [vmem:[%s73] ss:$16 sm:%s74]
    %vm76 = vcmask 1043458
    %v77 = vsel %vm76, %v75, %v72
    %78 = vrot.lane.b32.xlu0 %v77, 80
    %v79 = vpop.permute.xlu0 %78
    %vm80 = vcmask 720512
    %81 = vst.msk [vmem:[#allocation0] ss:$8 sm:$0xf] %vm80, %v79
    %s82 = scalar_lea.vmem %s0, 9
    %s83 = smov 3
    %v84 = vld [vmem:[%s82] ss:$16 sm:%s83]
    %s85 = scalar_lea.vmem %s0, 9
    %s86 = smov 12
    %v87 = vld [vmem:[%s85] ss:$16 sm:%s86]
    %vm88 = vcmask 1043458
    %v89 = vsel %vm88, %v87, %v84
    %90 = vrot.lane.b32.xlu0 %v89, 72
    %v91 = vpop.permute.xlu0 %90
    %vm92 = vcmask 654912
    %93 = vst.msk [vmem:[#allocation0] ss:$8 sm:$0xf] %vm92, %v91
    %s94 = scalar_lea.vmem %s0, 8
    %s95 = smov 3
    %v96 = vld [vmem:[%s94] ss:$16 sm:%s95]
    %s97 = scalar_lea.vmem %s0, 8
    %s98 = smov 12
    %v99 = vld [vmem:[%s97] ss:$16 sm:%s98]
    %vm100 = vcmask 1043458
    %v101 = vsel %vm100, %v99, %v96
    %102 = vrot.lane.b32.xlu0 %v101, 64
    %v103 = vpop.permute.xlu0 %102
    %vm104 = vcmask 589312
    %105 = vst.msk [vmem:[#allocation0] ss:$8 sm:$0xf] %vm104, %v103
    %s106 = scalar_lea.vmem %s0, 7
    %s107 = smov 3
    %v108 = vld [vmem:[%s106] ss:$16 sm:%s107]
    %s109 = scalar_lea.vmem %s0, 7
    %s110 = smov 12
    %v111 = vld [vmem:[%s109] ss:$16 sm:%s110]
    %vm112 = vcmask 1043458
    %v113 = vsel %vm112, %v111, %v108
    %114 = vrot.lane.b32.xlu0 %v113, 56
    %v115 = vpop.permute.xlu0 %114
    %vm116 = vcmask 523712
    %117 = vst.msk [vmem:[#allocation0] ss:$8 sm:$0xf] %vm116, %v115
    %s118 = scalar_lea.vmem %s0, 6
    %s119 = smov 3
    %v120 = vld [vmem:[%s118] ss:$16 sm:%s119]
    %s121 = scalar_lea.vmem %s0, 6
    %s122 = smov 12
    %v123 = vld [vmem:[%s121] ss:$16 sm:%s122]
    %vm124 = vcmask 1043458
    %v125 = vsel %vm124, %v123, %v120
    %126 = vrot.lane.b32.xlu0 %v125, 48
    %v127 = vpop.permute.xlu0 %126
    %vm128 = vcmask 458112
    %129 = vst.msk [vmem:[#allocation0] ss:$8 sm:$0xf] %vm128, %v127
    %s130 = scalar_lea.vmem %s0, 5
    %s131 = smov 3
    %v132 = vld [vmem:[%s130] ss:$16 sm:%s131]
    %s133 = scalar_lea.vmem %s0, 5
    %s134 = smov 12
    %v135 = vld [vmem:[%s133] ss:$16 sm:%s134]
    %vm136 = vcmask 1043458
    %v137 = vsel %vm136, %v135, %v132
    %138 = vrot.lane.b32.xlu0 %v137, 40
    %v139 = vpop.permute.xlu0 %138
    %vm140 = vcmask 392512
    %141 = vst.msk [vmem:[#allocation0] ss:$8 sm:$0xf] %vm140, %v139
    %s142 = scalar_lea.vmem %s0, 4
    %s143 = smov 3
    %v144 = vld [vmem:[%s142] ss:$16 sm:%s143]
    %s145 = scalar_lea.vmem %s0, 4
    %s146 = smov 12
    %v147 = vld [vmem:[%s145] ss:$16 sm:%s146]
    %vm148 = vcmask 1043458
    %v149 = vsel %vm148, %v147, %v144
    %150 = vrot.lane.b32.xlu0 %v149, 32
    %v151 = vpop.permute.xlu0 %150
    %vm152 = vcmask 326912
    %153 = vst.msk [vmem:[#allocation0] ss:$8 sm:$0xf] %vm152, %v151
    %s154 = scalar_lea.vmem %s0, 3
    %s155 = smov 3
    %v156 = vld [vmem:[%s154] ss:$16 sm:%s155]
    %s157 = scalar_lea.vmem %s0, 3
    %s158 = smov 12
    %v159 = vld [vmem:[%s157] ss:$16 sm:%s158]
    %vm160 = vcmask 1043458
    %v161 = vsel %vm160, %v159, %v156
    %162 = vrot.lane.b32.xlu0 %v161, 24
    %v163 = vpop.permute.xlu0 %162
    %vm164 = vcmask 261312
    %165 = vst.msk [vmem:[#allocation0] ss:$8 sm:$0xf] %vm164, %v163
    %s166 = scalar_lea.vmem %s0, 2
    %s167 = smov 3
    %v168 = vld [vmem:[%s166] ss:$16 sm:%s167]
    %s169 = scalar_lea.vmem %s0, 2
    %s170 = smov 12
    %v171 = vld [vmem:[%s169] ss:$16 sm:%s170]
    %vm172 = vcmask 1043458
    %v173 = vsel %vm172, %v171, %v168
    %174 = vrot.lane.b32.xlu0 %v173, 16
    %v175 = vpop.permute.xlu0 %174
    %vm176 = vcmask 195712
    %177 = vst.msk [vmem:[#allocation0] ss:$8 sm:$0xf] %vm176, %v175
    %s178 = scalar_lea.vmem %s0, 1
    %s179 = smov 3
    %v180 = vld [vmem:[%s178] ss:$16 sm:%s179]
    %s181 = scalar_lea.vmem %s0, 1
    %s182 = smov 12
    %v183 = vld [vmem:[%s181] ss:$16 sm:%s182]
    %vm184 = vcmask 1043458
    %v185 = vsel %vm184, %v183, %v180
    %186 = vrot.lane.b32.xlu0 %v185, 8
    %v187 = vpop.permute.xlu0 %186
    %vm188 = vcmask 130112
    %189 = vst.msk [vmem:[#allocation0] ss:$8 sm:$0xf] %vm188, %v187
    %s191 = ssub.s32 2, 1
    %v192 = vld [vmem:[#allocation0] sm:%s191]
    %s194 = ssub.s32 2, 1
    %195 = vst [vmem:[%s1] sm:%s194] %v192
    %s196 = scalar_lea.vmem [#allocation0], 8
    %v197 = vld [vmem:[%s196] sm:%s191]
    %s199 = ssub.s32 2, 1
    %s200 = scalar_lea.vmem %s1, 1
    %201 = vst [vmem:[%s200] sm:%s199] %v197
    %s202 = scalar_lea.vmem [#allocation0], 16
    %v203 = vld [vmem:[%s202] sm:%s191]
    %s205 = ssub.s32 2, 1
    %s206 = scalar_lea.vmem %s1, 2
    %207 = vst [vmem:[%s206] sm:%s205] %v203
    %s208 = scalar_lea.vmem [#allocation0], 24
    %v209 = vld [vmem:[%s208] sm:%s191]
    %s211 = ssub.s32 2, 1
    %s212 = scalar_lea.vmem %s1, 3
    %213 = vst [vmem:[%s212] sm:%s211] %v209

// kernel: restnet_basic_block.5
$region0: #{restnet_basic_block.5}
  #allocation0 [shape = 'u32[]', space=smem, size = 0x4, offset = 0x4, fixed_abs, tag = 'smem constant byte address 0x4 - core index']
  #allocation1 [shape = 'u32[72,128]{1,0:T(1,128)}', space=vmem, size = 0x9000, scoped, tag = 'internal scratch']
  %s0 = inlined_call_operand.vmem [shape: bf16[8,512], index: 0, kind: input, shape index: {}]
  %s1 = inlined_call_operand.vmem [shape: f32[8,512], index: 1, kind: input, shape index: {}]
  %s2 = inlined_call_operand.vmem [shape: f32[1,512], index: 2, kind: input, shape index: {}]
  %s3 = inlined_call_operand.vmem [shape: f32[1,512], index: 3, kind: input, shape index: {}]
  %s4 = inlined_call_operand.vmem [shape: f32[8,512], index: 4, kind: output, shape index: {}]
  %s5 = sld [smem:[#allocation0]]
  $region26: #{restnet_basic_block.5} parent=0
    _
  %s7 = ssub.s32 1, %s5
  %s8 = scalar_select 0, %s7, %s5
  // Predicated region
  $region2: #{restnet_basic_block.5} parent=0 // pred_check
    _
  $region3: #{restnet_basic_block.5} parent=0 // pred_check_branch
    %10 = sbr.rel (0) target = $region5
  $region4: #{restnet_basic_block.5} parent=0 // pred_region
    _
  $region5: #{restnet_basic_block.5} parent=0 // pred_fallthru
    _
  // Predicated region
  $region6: #{restnet_basic_block.5} parent=0 // pred_check
    _
  $region7: #{restnet_basic_block.5} parent=0 // pred_check_branch
    %12 = sbr.rel (0) target = $region9
  $region8: #{restnet_basic_block.5} parent=0 // pred_region
    _
  $region9: #{restnet_basic_block.5} parent=0 // pred_fallthru
    _
  // Predicated region
  $region10: #{restnet_basic_block.5} parent=0 // pred_check
    _
  $region11: #{restnet_basic_block.5} parent=0 // pred_check_branch
    %14 = sbr.rel (0) target = $region13
  $region12: #{restnet_basic_block.5} parent=0 // pred_region
    _
  $region13: #{restnet_basic_block.5} parent=0 // pred_fallthru
    _
  // Predicated region
  $region14: #{restnet_basic_block.5} parent=0 // pred_check
    _
  $region15: #{restnet_basic_block.5} parent=0 // pred_check_branch
    %16 = sbr.rel (0) target = $region17
  $region16: #{restnet_basic_block.5} parent=0 // pred_region
    _
  $region17: #{restnet_basic_block.5} parent=0 // pred_fallthru
    _
  %v17 = vld [vmem:[%s0] sm:$0xff]
  %v18 = vld [vmem:[%s0 + $0x8] sm:$0xff]
  %v19 = vunpack.c.l.bf16 %v17
  %v20 = vunpack.c.h.bf16 %v17
  %v21 = vunpack.c.l.bf16 %v18
  %v22 = vunpack.c.h.bf16 %v18
  %v23 = vld [vmem:[%s2] sm:$0xf]
  %v25 = vperm.slane %v23, 0
  %v26 = vperm.slane %v23, 1
  %v27 = vperm.slane %v23, 2
  %v28 = vperm.slane %v23, 3
  %v33 = vmul.f32 %v19, %v25
  %v34 = vmul.f32 %v20, %v26
  %v35 = vmul.f32 %v21, %v27
  %v36 = vmul.f32 %v22, %v28
  %v37 = vld [vmem:[%s3] sm:$0xf]
  %v39 = vperm.slane %v37, 0
  %v40 = vperm.slane %v37, 1
  %v41 = vperm.slane %v37, 2
  %v42 = vperm.slane %v37, 3
  %v47 = vadd.f32 %v33, %v39
  %v48 = vadd.f32 %v34, %v40
  %v49 = vadd.f32 %v35, %v41
  %v50 = vadd.f32 %v36, %v42
  %v51 = vld [vmem:[%s1] sm:$0xff]
  %v52 = vld [vmem:[%s1 + $0x8] sm:$0xff]
  %v53 = vld [vmem:[%s1 + $0x10] sm:$0xff]
  %v54 = vld [vmem:[%s1 + $0x18] sm:$0xff]
  %v55 = vadd.f32 %v47, %v51
  %v56 = vadd.f32 %v48, %v52
  %v57 = vadd.f32 %v49, %v53
  %v58 = vadd.f32 %v50, %v54
  %v59 = vmax.f32 %v55, 0.0
  %v60 = vmax.f32 %v56, 0.0
  %v61 = vmax.f32 %v57, 0.0
  %v62 = vmax.f32 %v58, 0.0
  %63 = vst [vmem:[%s4] sm:$0xff] %v59
  %64 = vst [vmem:[%s4 + $0x8] sm:$0xff] %v60
  %65 = vst [vmem:[%s4 + $0x10] sm:$0xff] %v61
  %66 = vst [vmem:[%s4 + $0x18] sm:$0xff] %v62
  // Predicated region
  $region18: #{restnet_basic_block.5} parent=0 // pred_check
    _
  $region19: #{restnet_basic_block.5} parent=0 // pred_check_branch
    %68 = sbr.rel (0) target = $region21
  $region20: #{restnet_basic_block.5} parent=0 // pred_region
    _
  $region21: #{restnet_basic_block.5} parent=0 // pred_fallthru
    _
  // Predicated region
  $region22: #{restnet_basic_block.5} parent=0 // pred_check
    _
  $region23: #{restnet_basic_block.5} parent=0 // pred_check_branch
    %70 = sbr.rel (0) target = $region25
  $region24: #{restnet_basic_block.5} parent=0 // pred_region
    _
  $region25: #{restnet_basic_block.5} parent=0 // pred_fallthru
    _

// kernel: restnet_basic_block.3
$region0: #{restnet_basic_block.3}
  #allocation0 [shape = 'u32[]', space=smem, size = 0x4, offset = 0x4, fixed_abs, tag = 'smem constant byte address 0x4 - core index']
  #allocation1 [shape = 'u32[72,128]{1,0:T(1,128)}', space=vmem, size = 0x9000, scoped, tag = 'internal scratch']
  #allocation2 [shape = 'f32[18,18,8]{2,1,0:T(8,128)}', space=vmem, size = 0x36000, scoped, tag = 'scratch operand']
  #allocation3 [shape = 'bf16[256,72]{1,0:T(8,128)(2,1)}', space=vmem, size = 0x10000, scoped, tag = 'scratch operand']
  %s0 = inlined_call_operand.vmem [shape: f32[2,16,16,8], index: 0, kind: input, shape index: {}]
  %s1 = inlined_call_operand.vmem [shape: f32[1,1,8], index: 1, kind: input, shape index: {}]
  %s2 = inlined_call_operand.vmem [shape: f32[1,1,8], index: 2, kind: input, shape index: {}]
  %s3 = inlined_call_operand.vmem [shape: bf16[72,8], index: 3, kind: input, shape index: {}]
  %s4 = inlined_call_operand.vmem [shape: bf16[2,16,16,8], index: 4, kind: output, shape index: {0}]
  %s5 = inlined_call_operand.vmem [shape: f32[2,1,8], index: 5, kind: output, shape index: {1}]
  %s6 = inlined_call_operand.vmem [shape: f32[2,1,8], index: 6, kind: output, shape index: {2}]
  %7 = xla_tuple %s4, %s5, %s6
  %s8 = sld [smem:[#allocation0]]
  $region65: #{restnet_basic_block.3} parent=0
    _
  %s10 = ssub.s32 1, %s8
  %s11 = scalar_select 0, %s10, %s8
  loop: start=0, step=1, limit=4
  $region2: #{restnet_basic_block.3} parent=0 // loop_pre_header
    _
  $region3: #{restnet_basic_block.3} parent=0 // loop_header
    %s13 = sphi 0, %s17
    %p14 = scmp.ge.s32.totalorder %s13, 4
    %s23 = sphi 0, %s25
    %s26 = sphi 0, %s23
    %s27 = sphi 0, %s26
    %s43 = sphi 0, %s27
    %s47 = sphi 0, %s47
    %s49 = sphi 0, %s47
    %s50 = sphi 0, %s49
    %s64 = sphi 0, %s50
    %s68 = sphi 0, %s68
    %s70 = sphi 0, %s68
    %s71 = sphi 0, %s70
    %s85 = sphi 0, %s71
    %s89 = sphi 0, %s89
    %s91 = sphi 0, %s89
    %s92 = sphi 0, %s91
    %s106 = sphi 0, %s92
    %s112 = sphi 0, %s114
    %s115 = sphi 0, %s112
    %s116 = sphi 0, %s115
    %s132 = sphi 0, %s116
    %s138 = sphi 0, %s140
    %s141 = sphi 0, %s138
    %s142 = sphi 0, %s141
    %s158 = sphi 0, %s142
    %s164 = sphi 0, %s166
    %s167 = sphi 0, %s164
    %s168 = sphi 0, %s167
    %s184 = sphi 0, %s168
  $region4: #{restnet_basic_block.3} parent=0 // loop_header_branch
    %16 = sbr.rel (%p14) target = $region8
  $region5: #{restnet_basic_block.3} parent=0 // loop_body
    %s18 = ssub.s32 %s13, 1
    %s19 = ssub.s32 %s13, 2
    %s20 = sadd.s32 %s13, 1
    %s21 = ssub.s32 %s13, %s20
    %p22 = scmp.eq.s32.totalorder %s21, 0
    %s24 = sadd.s32 %s23, 1
    %s25 = scalar_select %p22, %s23, %s24
    %p28 = pneg %p22
    %p29 = scmp.eq.s32.totalorder %s13, 1
    %p30 = por %p28, %p29
    %p31 = scmp.ne.s32.totalorder %s23, %s26
    %p32 = scmp.eq.s32.totalorder %s13, 0
    %p33 = por %p31, %p32
    %p34 = scmp.ne.s32.totalorder %s23, %s26
    %p35 = scmp.eq.s32.totalorder %s18, 1
    %p36 = por %p34, %p35
    %p37 = scmp.ne.s32.totalorder %s26, %s27
    %p38 = scmp.eq.s32.totalorder %s18, 0
    %p39 = por %p37, %p38
    %p40 = scmp.ne.s32.totalorder %s26, %s27
    %p41 = scmp.eq.s32.totalorder %s19, 1
    %p42 = por %p40, %p41
    %p44 = scmp.ne.s32.totalorder %s27, %s43
    %p45 = scmp.eq.s32.totalorder %s19, 0
    %p46 = por %p44, %p45
    %s48 = sadd.s32 %s47, 1
    %p51 = scmp.eq.s32.totalorder %s13, 1
    %p52 = scmp.ne.s32.totalorder %s47, %s49
    %p53 = scmp.eq.s32.totalorder %s13, 0
    %p54 = por %p52, %p53
    %p55 = scmp.ne.s32.totalorder %s47, %s49
    %p56 = scmp.eq.s32.totalorder %s18, 1
    %p57 = por %p55, %p56
    %p58 = scmp.ne.s32.totalorder %s49, %s50
    %p59 = scmp.eq.s32.totalorder %s18, 0
    %p60 = por %p58, %p59
    %p61 = scmp.ne.s32.totalorder %s49, %s50
    %p62 = scmp.eq.s32.totalorder %s19, 1
    %p63 = por %p61, %p62
    %p65 = scmp.ne.s32.totalorder %s50, %s64
    %p66 = scmp.eq.s32.totalorder %s19, 0
    %p67 = por %p65, %p66
    %s69 = sadd.s32 %s68, 1
    %p72 = scmp.eq.s32.totalorder %s13, 1
    %p73 = scmp.ne.s32.totalorder %s68, %s70
    %p74 = scmp.eq.s32.totalorder %s13, 0
    %p75 = por %p73, %p74
    %p76 = scmp.ne.s32.totalorder %s68, %s70
    %p77 = scmp.eq.s32.totalorder %s18, 1
    %p78 = por %p76, %p77
    %p79 = scmp.ne.s32.totalorder %s70, %s71
    %p80 = scmp.eq.s32.totalorder %s18, 0
    %p81 = por %p79, %p80
    %p82 = scmp.ne.s32.totalorder %s70, %s71
    %p83 = scmp.eq.s32.totalorder %s19, 1
    %p84 = por %p82, %p83
    %p86 = scmp.ne.s32.totalorder %s71, %s85
    %p87 = scmp.eq.s32.totalorder %s19, 0
    %p88 = por %p86, %p87
    %s90 = sadd.s32 %s89, 1
    %p93 = scmp.eq.s32.totalorder %s13, 1
    %p94 = scmp.ne.s32.totalorder %s89, %s91
    %p95 = scmp.eq.s32.totalorder %s13, 0
    %p96 = por %p94, %p95
    %p97 = scmp.ne.s32.totalorder %s89, %s91
    %p98 = scmp.eq.s32.totalorder %s18, 1
    %p99 = por %p97, %p98
    %p100 = scmp.ne.s32.totalorder %s91, %s92
    %p101 = scmp.eq.s32.totalorder %s18, 0
    %p102 = por %p100, %p101
    %p103 = scmp.ne.s32.totalorder %s91, %s92
    %p104 = scmp.eq.s32.totalorder %s19, 1
    %p105 = por %p103, %p104
    %p107 = scmp.ne.s32.totalorder %s92, %s106
    %p108 = scmp.eq.s32.totalorder %s19, 0
    %p109 = por %p107, %p108
    %s110 = ssub.s32 %s13, %s20
    %p111 = scmp.eq.s32.totalorder %s110, 0
    %s113 = sadd.s32 %s112, 1
    %s114 = scalar_select %p111, %s112, %s113
    %p117 = pneg %p111
    %p118 = scmp.eq.s32.totalorder %s13, 1
    %p119 = por %p117, %p118
    %p120 = scmp.ne.s32.totalorder %s112, %s115
    %p121 = scmp.eq.s32.totalorder %s13, 0
    %p122 = por %p120, %p121
    %p123 = scmp.ne.s32.totalorder %s112, %s115
    %p124 = scmp.eq.s32.totalorder %s18, 1
    %p125 = por %p123, %p124
    %p126 = scmp.ne.s32.totalorder %s115, %s116
    %p127 = scmp.eq.s32.totalorder %s18, 0
    %p128 = por %p126, %p127
    %p129 = scmp.ne.s32.totalorder %s115, %s116
    %p130 = scmp.eq.s32.totalorder %s19, 1
    %p131 = por %p129, %p130
    %p133 = scmp.ne.s32.totalorder %s116, %s132
    %p134 = scmp.eq.s32.totalorder %s19, 0
    %p135 = por %p133, %p134
    %s136 = ssub.s32 %s13, %s20
    %p137 = scmp.eq.s32.totalorder %s136, 0
    %s139 = sadd.s32 %s138, 1
    %s140 = scalar_select %p137, %s138, %s139
    %p143 = pneg %p137
    %p144 = scmp.eq.s32.totalorder %s13, 1
    %p145 = por %p143, %p144
    %p146 = scmp.ne.s32.totalorder %s138, %s141
    %p147 = scmp.eq.s32.totalorder %s13, 0
    %p148 = por %p146, %p147
    %p149 = scmp.ne.s32.totalorder %s138, %s141
    %p150 = scmp.eq.s32.totalorder %s18, 1
    %p151 = por %p149, %p150
    %p152 = scmp.ne.s32.totalorder %s141, %s142
    %p153 = scmp.eq.s32.totalorder %s18, 0
    %p154 = por %p152, %p153
    %p155 = scmp.ne.s32.totalorder %s141, %s142
    %p156 = scmp.eq.s32.totalorder %s19, 1
    %p157 = por %p155, %p156
    %p159 = scmp.ne.s32.totalorder %s142, %s158
    %p160 = scmp.eq.s32.totalorder %s19, 0
    %p161 = por %p159, %p160
    %s162 = ssub.s32 %s13, %s20
    %p163 = scmp.eq.s32.totalorder %s162, 0
    %s165 = sadd.s32 %s164, 1
    %s166 = scalar_select %p163, %s164, %s165
    %p169 = pneg %p163
    %p170 = scmp.eq.s32.totalorder %s13, 1
    %p171 = por %p169, %p170
    %p172 = scmp.ne.s32.totalorder %s164, %s167
    %p173 = scmp.eq.s32.totalorder %s13, 0
    %p174 = por %p172, %p173
    %p175 = scmp.ne.s32.totalorder %s164, %s167
    %p176 = scmp.eq.s32.totalorder %s18, 1
    %p177 = por %p175, %p176
    %p178 = scmp.ne.s32.totalorder %s167, %s168
    %p179 = scmp.eq.s32.totalorder %s18, 0
    %p180 = por %p178, %p179
    %p181 = scmp.ne.s32.totalorder %s167, %s168
    %p182 = scmp.eq.s32.totalorder %s19, 1
    %p183 = por %p181, %p182
    %p185 = scmp.ne.s32.totalorder %s168, %s184
    %p186 = scmp.eq.s32.totalorder %s19, 0
    %p187 = por %p185, %p186
    %p188 = scmp.le.s32.totalorder 1, %s13
    %p189 = scmp.lt.s32.totalorder %s13, 3
    %p190 = pnand %p188, %p189
    %p191 = pneg %p190
    // Predicated region
    $region9: #{restnet_basic_block.3} parent=5 // pred_check
      _
    $region10: #{restnet_basic_block.3} parent=5 // pred_check_branch
      %193 = sbr.rel (%p190) target = $region12
    $region11: #{restnet_basic_block.3} parent=5 // pred_region
      %s194 = ssub.s32 %s13, 1
      // Predicated region
      $region13: #{restnet_basic_block.3} parent=11 // pred_check
        %p195 = pneg %p60
      $region14: #{restnet_basic_block.3} parent=11 // pred_check_branch
        %197 = sbr.rel (%p195) target = $region16
      $region15: #{restnet_basic_block.3} parent=11 // pred_region
        _
      $region16: #{restnet_basic_block.3} parent=11 // pred_fallthru
        _
      // Predicated region
      $region17: #{restnet_basic_block.3} parent=11 // pred_check
        %p198 = pneg %p81
      $region18: #{restnet_basic_block.3} parent=11 // pred_check_branch
        %200 = sbr.rel (%p198) target = $region20
      $region19: #{restnet_basic_block.3} parent=11 // pred_region
        _
      $region20: #{restnet_basic_block.3} parent=11 // pred_fallthru
        _
      // Predicated region
      $region21: #{restnet_basic_block.3} parent=11 // pred_check
        %p201 = pneg %p102
      $region22: #{restnet_basic_block.3} parent=11 // pred_check_branch
        %203 = sbr.rel (%p201) target = $region24
      $region23: #{restnet_basic_block.3} parent=11 // pred_region
        _
      $region24: #{restnet_basic_block.3} parent=11 // pred_fallthru
        _
    $region12: #{restnet_basic_block.3} parent=5 // pred_fallthru
      _
    %p204 = scmp.lt.s32.totalorder %s13, 2
    // Predicated region
    $region25: #{restnet_basic_block.3} parent=5 // pred_check
      %p205 = pneg %p204
    $region26: #{restnet_basic_block.3} parent=5 // pred_check_branch
      %207 = sbr.rel (%p205) target = $region28
    $region27: #{restnet_basic_block.3} parent=5 // pred_region
      // Predicated region
      $region29: #{restnet_basic_block.3} parent=27 // pred_check
        %p208 = pneg %p33
      $region30: #{restnet_basic_block.3} parent=27 // pred_check_branch
        %210 = sbr.rel (%p208) target = $region32
      $region31: #{restnet_basic_block.3} parent=27 // pred_region
        %p211 = scmp.lt.s32.totalorder %s13, 1
        %s212 = scalar_select %p211, %s13, 1
        %s213 = smul.addr %s212, 32
        %s214 = smul.addr %s213, 8
        %s215 = scalar_lea.vmem %s0, %s214
      $region32: #{restnet_basic_block.3} parent=27 // pred_fallthru
        _
    $region28: #{restnet_basic_block.3} parent=5 // pred_fallthru
      _
    %p216 = scmp.le.s32.totalorder 1, %s13
    %p217 = scmp.lt.s32.totalorder %s13, 3
    %p218 = pnand %p216, %p217
    %p219 = pneg %p218
    // Predicated region
    $region33: #{restnet_basic_block.3} parent=5 // pred_check
      _
    $region34: #{restnet_basic_block.3} parent=5 // pred_check_branch
      %221 = sbr.rel (%p218) target = $region36
    $region35: #{restnet_basic_block.3} parent=5 // pred_region
      %s222 = ssub.s32 %s13, 1
      %p223 = scmp.lt.s32.totalorder %s18, 1
      %s224 = scalar_select %p223, %s18, 1
      %s225 = smul.addr %s224, 32
      %s226 = smul.addr %s225, 8
      %s227 = scalar_lea.vmem %s0, %s226
      %p228 = pneg %p39
      %p229 = pneg %p36
      %p230 = pneg %p60
      %p231 = pneg %p57
      %p232 = pneg %p81
      %p233 = pneg %p78
      %p234 = pneg %p102
      %p235 = pneg %p99
      %p236 = pneg %p128
      %p237 = pneg %p125
      %p238 = scmp.lt.s32.totalorder %s18, 1
      %s239 = scalar_select %p238, %s18, 1
      %s240 = smul.addr %s239, 32
      %s241 = smul.addr %s240, 4
      %s242 = scalar_lea.vmem %s4, %s241
      %p243 = pneg %p154
      %p244 = pneg %p151
      %p245 = scmp.lt.s32.totalorder %s18, 1
      %s246 = scalar_select %p245, %s18, 1
      %s247 = scalar_lea.vmem %s5, %s246
      %p248 = pneg %p180
      %p249 = pneg %p177
      %p250 = scmp.lt.s32.totalorder %s18, 1
      %s251 = scalar_select %p250, %s18, 1
      %s252 = scalar_lea.vmem %s6, %s251
      %p253 = scmp.lt.s32.totalorder %s18, 1
      %s254 = scalar_select %p253, %s18, 1
      %s255 = smul.addr %s254, 32
      %s256 = smul.addr %s255, 8
      %s257 = scalar_lea.vmem %s0, %s256
      %p258 = scmp.lt.s32.totalorder %s18, 1
      %s259 = scalar_select %p258, %s18, 1
      %s260 = smul.addr %s259, 32
      %s261 = smul.addr %s260, 4
      %s262 = scalar_lea.vmem %s4, %s261
      %p263 = scmp.lt.s32.totalorder %s18, 1
      %s264 = scalar_select %p263, %s18, 1
      %s265 = scalar_lea.vmem %s5, %s264
      %p266 = scmp.lt.s32.totalorder %s18, 1
      %s267 = scalar_select %p266, %s18, 1
      %s268 = scalar_lea.vmem %s6, %s267
      %v270 = vld [vmem:[%s257] sm:$0xff]
      %v271 = vld [vmem:[%s257 + $0x8] sm:$0xff]
      %v272 = vld [vmem:[%s257 + $0x10] sm:$0xff]
      %v273 = vld [vmem:[%s257 + $0x18] sm:$0xff]
      %v274 = vld [vmem:[%s257 + $0x20] sm:$0xff]
      %v275 = vld [vmem:[%s257 + $0x28] sm:$0xff]
      %v276 = vld [vmem:[%s257 + $0x30] sm:$0xff]
      %v277 = vld [vmem:[%s257 + $0x38] sm:$0xff]
      %v278 = vld [vmem:[%s257 + $0x40] sm:$0xff]
      %v279 = vld [vmem:[%s257 + $0x48] sm:$0xff]
      %v280 = vld [vmem:[%s257 + $0x50] sm:$0xff]
      %v281 = vld [vmem:[%s257 + $0x58] sm:$0xff]
      %v282 = vld [vmem:[%s257 + $0x60] sm:$0xff]
      %v283 = vld [vmem:[%s257 + $0x68] sm:$0xff]
      %v284 = vld [vmem:[%s257 + $0x70] sm:$0xff]
      %v285 = vld [vmem:[%s257 + $0x78] sm:$0xff]
      %v286 = vld [vmem:[%s257 + $0x80] sm:$0xff]
      %v287 = vld [vmem:[%s257 + $0x88] sm:$0xff]
      %v288 = vld [vmem:[%s257 + $0x90] sm:$0xff]
      %v289 = vld [vmem:[%s257 + $0x98] sm:$0xff]
      %v290 = vld [vmem:[%s257 + $0xa0] sm:$0xff]
      %v291 = vld [vmem:[%s257 + $0xa8] sm:$0xff]
      %v292 = vld [vmem:[%s257 + $0xb0] sm:$0xff]
      %v293 = vld [vmem:[%s257 + $0xb8] sm:$0xff]
      %v294 = vld [vmem:[%s257 + $0xc0] sm:$0xff]
      %v295 = vld [vmem:[%s257 + $0xc8] sm:$0xff]
      %v296 = vld [vmem:[%s257 + $0xd0] sm:$0xff]
      %v297 = vld [vmem:[%s257 + $0xd8] sm:$0xff]
      %v298 = vld [vmem:[%s257 + $0xe0] sm:$0xff]
      %v299 = vld [vmem:[%s257 + $0xe8] sm:$0xff]
      %v300 = vld [vmem:[%s257 + $0xf0] sm:$0xff]
      %v301 = vld [vmem:[%s257 + $0xf8] sm:$0xff]
      %vm302 = vcmask 64512
      %303 = vst.msk [vmem:[#allocation2] sm:$0xff] %vm302, 0.0
      %304 = vst.msk [vmem:[#allocation2 + $0x8] sm:$0xff] %vm302, 0.0
      %vm305 = vcmask 58368
      %306 = vst.msk [vmem:[#allocation2 + $0x10] sm:$0x3] %vm305, 0.0
      %s307 = scalar_lea.vmem [#allocation2], 408
      %308 = vst.msk [vmem:[%s307] sm:$0xff] %vm302, 0.0
      %309 = vst.msk [vmem:[%s307 + $0x8] sm:$0xff] %vm302, 0.0
      %310 = vst.msk [vmem:[%s307 + $0x10] sm:$0x3] %vm305, 0.0
      %vm311 = vcmask 57344
      %312 = vst.msk [vmem:[#allocation2] sm:$0x1] %vm311, 0.0
      %313 = vst.msk [vmem:[#allocation2 + $0x18] sm:$0x1] %vm311, 0.0
      %314 = vst.msk [vmem:[#allocation2 + $0x30] sm:$0x1] %vm311, 0.0
      %315 = vst.msk [vmem:[#allocation2 + $0x48] sm:$0x1] %vm311, 0.0
      %316 = vst.msk [vmem:[#allocation2 + $0x60] sm:$0x1] %vm311, 0.0
      %317 = vst.msk [vmem:[#allocation2 + $0x78] sm:$0x1] %vm311, 0.0
      %318 = vst.msk [vmem:[#allocation2 + $0x90] sm:$0x1] %vm311, 0.0
      %319 = vst.msk [vmem:[#allocation2 + $0xa8] sm:$0x1] %vm311, 0.0
      %320 = vst.msk [vmem:[#allocation2 + $0xc0] sm:$0x1] %vm311, 0.0
      %321 = vst.msk [vmem:[#allocation2 + $0xd8] sm:$0x1] %vm311, 0.0
      %322 = vst.msk [vmem:[#allocation2 + $0xf0] sm:$0x1] %vm311, 0.0
      %323 = vst.msk [vmem:[#allocation2 + $0x108] sm:$0x1] %vm311, 0.0
      %324 = vst.msk [vmem:[#allocation2 + $0x120] sm:$0x1] %vm311, 0.0
      %325 = vst.msk [vmem:[#allocation2 + $0x138] sm:$0x1] %vm311, 0.0
      %326 = vst.msk [vmem:[#allocation2 + $0x150] sm:$0x1] %vm311, 0.0
      %327 = vst.msk [vmem:[#allocation2 + $0x168] sm:$0x1] %vm311, 0.0
      %328 = vst.msk [vmem:[#allocation2 + $0x180] sm:$0x1] %vm311, 0.0
      %329 = vst.msk [vmem:[#allocation2 + $0x198] sm:$0x1] %vm311, 0.0
      %330 = vst.msk [vmem:[#allocation2 + $0x11] sm:$0x1] %vm311, 0.0
      %331 = vst.msk [vmem:[#allocation2 + $0x29] sm:$0x1] %vm311, 0.0
      %332 = vst.msk [vmem:[#allocation2 + $0x41] sm:$0x1] %vm311, 0.0
      %333 = vst.msk [vmem:[#allocation2 + $0x59] sm:$0x1] %vm311, 0.0
      %334 = vst.msk [vmem:[#allocation2 + $0x71] sm:$0x1] %vm311, 0.0
      %335 = vst.msk [vmem:[#allocation2 + $0x89] sm:$0x1] %vm311, 0.0
      %336 = vst.msk [vmem:[#allocation2 + $0xa1] sm:$0x1] %vm311, 0.0
      %337 = vst.msk [vmem:[#allocation2 + $0xb9] sm:$0x1] %vm311, 0.0
      %338 = vst.msk [vmem:[#allocation2 + $0xd1] sm:$0x1] %vm311, 0.0
      %339 = vst.msk [vmem:[#allocation2 + $0xe9] sm:$0x1] %vm311, 0.0
      %340 = vst.msk [vmem:[#allocation2 + $0x101] sm:$0x1] %vm311, 0.0
      %341 = vst.msk [vmem:[#allocation2 + $0x119] sm:$0x1] %vm311, 0.0
      %342 = vst.msk [vmem:[#allocation2 + $0x131] sm:$0x1] %vm311, 0.0
      %343 = vst.msk [vmem:[#allocation2 + $0x149] sm:$0x1] %vm311, 0.0
      %344 = vst.msk [vmem:[#allocation2 + $0x161] sm:$0x1] %vm311, 0.0
      %345 = vst.msk [vmem:[#allocation2 + $0x179] sm:$0x1] %vm311, 0.0
      %346 = vst.msk [vmem:[#allocation2 + $0x191] sm:$0x1] %vm311, 0.0
      %347 = vst.msk [vmem:[#allocation2 + $0x1a9] sm:$0x1] %vm311, 0.0
      %s348 = scalar_lea.vmem [#allocation2], 24
      %349 = vst.msk [vmem:[%s348 + $0x1] sm:$0xff] %vm302, %v270
      %350 = vst.msk [vmem:[%s348 + $0x9] sm:$0xff] %vm302, %v271
      %351 = vst.msk [vmem:[%s348 + $0x19] sm:$0xff] %vm302, %v272
      %352 = vst.msk [vmem:[%s348 + $0x21] sm:$0xff] %vm302, %v273
      %353 = vst.msk [vmem:[%s348 + $0x31] sm:$0xff] %vm302, %v274
      %354 = vst.msk [vmem:[%s348 + $0x39] sm:$0xff] %vm302, %v275
      %355 = vst.msk [vmem:[%s348 + $0x49] sm:$0xff] %vm302, %v276
      %356 = vst.msk [vmem:[%s348 + $0x51] sm:$0xff] %vm302, %v277
      %357 = vst.msk [vmem:[%s348 + $0x61] sm:$0xff] %vm302, %v278
      %358 = vst.msk [vmem:[%s348 + $0x69] sm:$0xff] %vm302, %v279
      %359 = vst.msk [vmem:[%s348 + $0x79] sm:$0xff] %vm302, %v280
      %360 = vst.msk [vmem:[%s348 + $0x81] sm:$0xff] %vm302, %v281
      %361 = vst.msk [vmem:[%s348 + $0x91] sm:$0xff] %vm302, %v282
      %362 = vst.msk [vmem:[%s348 + $0x99] sm:$0xff] %vm302, %v283
      %363 = vst.msk [vmem:[%s348 + $0xa9] sm:$0xff] %vm302, %v284
      %364 = vst.msk [vmem:[%s348 + $0xb1] sm:$0xff] %vm302, %v285
      %365 = vst.msk [vmem:[%s348 + $0xc1] sm:$0xff] %vm302, %v286
      %366 = vst.msk [vmem:[%s348 + $0xc9] sm:$0xff] %vm302, %v287
      %367 = vst.msk [vmem:[%s348 + $0xd9] sm:$0xff] %vm302, %v288
      %368 = vst.msk [vmem:[%s348 + $0xe1] sm:$0xff] %vm302, %v289
      %369 = vst.msk [vmem:[%s348 + $0xf1] sm:$0xff] %vm302, %v290
      %370 = vst.msk [vmem:[%s348 + $0xf9] sm:$0xff] %vm302, %v291
      %371 = vst.msk [vmem:[%s348 + $0x109] sm:$0xff] %vm302, %v292
      %372 = vst.msk [vmem:[%s348 + $0x111] sm:$0xff] %vm302, %v293
      %373 = vst.msk [vmem:[%s348 + $0x121] sm:$0xff] %vm302, %v294
      %374 = vst.msk [vmem:[%s348 + $0x129] sm:$0xff] %vm302, %v295
      %375 = vst.msk [vmem:[%s348 + $0x139] sm:$0xff] %vm302, %v296
      %376 = vst.msk [vmem:[%s348 + $0x141] sm:$0xff] %vm302, %v297
      %377 = vst.msk [vmem:[%s348 + $0x151] sm:$0xff] %vm302, %v298
      %378 = vst.msk [vmem:[%s348 + $0x159] sm:$0xff] %vm302, %v299
      %379 = vst.msk [vmem:[%s348 + $0x169] sm:$0xff] %vm302, %v300
      %380 = vst.msk [vmem:[%s348 + $0x171] sm:$0xff] %vm302, %v301
      %v381 = vld [vmem:[#allocation2] sm:$0xff]
      %v382 = vld [vmem:[#allocation2 + $0x8] sm:$0xff]
      %v383 = vld [vmem:[#allocation2 + $0x18] sm:$0xff]
      %v384 = vld [vmem:[#allocation2 + $0x20] sm:$0xff]
      %v385 = vld [vmem:[#allocation2 + $0x30] sm:$0xff]
      %v386 = vld [vmem:[#allocation2 + $0x38] sm:$0xff]
      %v387 = vld [vmem:[#allocation2 + $0x48] sm:$0xff]
      %v388 = vld [vmem:[#allocation2 + $0x50] sm:$0xff]
      %v389 = vld [vmem:[#allocation2 + $0x60] sm:$0xff]
      %v390 = vld [vmem:[#allocation2 + $0x68] sm:$0xff]
      %v391 = vld [vmem:[#allocation2 + $0x78] sm:$0xff]
      %v392 = vld [vmem:[#allocation2 + $0x80] sm:$0xff]
      %v393 = vld [vmem:[#allocation2 + $0x90] sm:$0xff]
      %v394 = vld [vmem:[#allocation2 + $0x98] sm:$0xff]
      %v395 = vld [vmem:[#allocation2 + $0xa8] sm:$0xff]
      %v396 = vld [vmem:[#allocation2 + $0xb0] sm:$0xff]
      %v397 = vld [vmem:[#allocation2 + $0xc0] sm:$0xff]
      %v398 = vld [vmem:[#allocation2 + $0xc8] sm:$0xff]
      %v399 = vld [vmem:[#allocation2 + $0xd8] sm:$0xff]
      %v400 = vld [vmem:[#allocation2 + $0xe0] sm:$0xff]
      %v401 = vld [vmem:[#allocation2 + $0xf0] sm:$0xff]
      %v402 = vld [vmem:[#allocation2 + $0xf8] sm:$0xff]
      %v403 = vld [vmem:[#allocation2 + $0x108] sm:$0xff]
      %v404 = vld [vmem:[#allocation2 + $0x110] sm:$0xff]
      %v405 = vld [vmem:[#allocation2 + $0x120] sm:$0xff]
      %v406 = vld [vmem:[#allocation2 + $0x128] sm:$0xff]
      %v407 = vld [vmem:[#allocation2 + $0x138] sm:$0xff]
      %v408 = vld [vmem:[#allocation2 + $0x140] sm:$0xff]
      %v409 = vld [vmem:[#allocation2 + $0x150] sm:$0xff]
      %v410 = vld [vmem:[#allocation2 + $0x158] sm:$0xff]
      %v411 = vld [vmem:[#allocation2 + $0x168] sm:$0xff]
      %v412 = vld [vmem:[#allocation2 + $0x170] sm:$0xff]
      %v413 = vpack.c.bf16 %v381, %v381
      %v414 = vpack.c.bf16 %v382, %v382
      %v415 = vpack.c.bf16 %v383, %v383
      %v416 = vpack.c.bf16 %v384, %v384
      %v417 = vpack.c.bf16 %v385, %v385
      %v418 = vpack.c.bf16 %v386, %v386
      %v419 = vpack.c.bf16 %v387, %v387
      %v420 = vpack.c.bf16 %v388, %v388
      %v421 = vpack.c.bf16 %v389, %v389
      %v422 = vpack.c.bf16 %v390, %v390
      %v423 = vpack.c.bf16 %v391, %v391
      %v424 = vpack.c.bf16 %v392, %v392
      %v425 = vpack.c.bf16 %v393, %v393
      %v426 = vpack.c.bf16 %v394, %v394
      %v427 = vpack.c.bf16 %v395, %v395
      %v428 = vpack.c.bf16 %v396, %v396
      %v429 = vpack.c.bf16 %v397, %v397
      %v430 = vpack.c.bf16 %v398, %v398
      %v431 = vpack.c.bf16 %v399, %v399
      %v432 = vpack.c.bf16 %v400, %v400
      %v433 = vpack.c.bf16 %v401, %v401
      %v434 = vpack.c.bf16 %v402, %v402
      %v435 = vpack.c.bf16 %v403, %v403
      %v436 = vpack.c.bf16 %v404, %v404
      %v437 = vpack.c.bf16 %v405, %v405
      %v438 = vpack.c.bf16 %v406, %v406
      %v439 = vpack.c.bf16 %v407, %v407
      %v440 = vpack.c.bf16 %v408, %v408
      %v441 = vpack.c.bf16 %v409, %v409
      %v442 = vpack.c.bf16 %v410, %v410
      %v443 = vpack.c.bf16 %v411, %v411
      %v444 = vpack.c.bf16 %v412, %v412
      %vm445 = vcmask 60416
      %446 = vst.msk [vmem:[#allocation3] sm:$0xf] %vm445, %v413
      %447 = vst.msk [vmem:[#allocation3 + $0x4] sm:$0xf] %vm445, %v414
      %448 = vst.msk [vmem:[#allocation3 + $0x8] sm:$0xf] %vm445, %v415
      %449 = vst.msk [vmem:[#allocation3 + $0xc] sm:$0xf] %vm445, %v416
      %450 = vst.msk [vmem:[#allocation3 + $0x10] sm:$0xf] %vm445, %v417
      %451 = vst.msk [vmem:[#allocation3 + $0x14] sm:$0xf] %vm445, %v418
      %452 = vst.msk [vmem:[#allocation3 + $0x18] sm:$0xf] %vm445, %v419
      %453 = vst.msk [vmem:[#allocation3 + $0x1c] sm:$0xf] %vm445, %v420
      %454 = vst.msk [vmem:[#allocation3 + $0x20] sm:$0xf] %vm445, %v421
      %455 = vst.msk [vmem:[#allocation3 + $0x24] sm:$0xf] %vm445, %v422
      %456 = vst.msk [vmem:[#allocation3 + $0x28] sm:$0xf] %vm445, %v423
      %457 = vst.msk [vmem:[#allocation3 + $0x2c] sm:$0xf] %vm445, %v424
      %458 = vst.msk [vmem:[#allocation3 + $0x30] sm:$0xf] %vm445, %v425
      %459 = vst.msk [vmem:[#allocation3 + $0x34] sm:$0xf] %vm445, %v426
      %460 = vst.msk [vmem:[#allocation3 + $0x38] sm:$0xf] %vm445, %v427
      %461 = vst.msk [vmem:[#allocation3 + $0x3c] sm:$0xf] %vm445, %v428
      %462 = vst.msk [vmem:[#allocation3 + $0x40] sm:$0xf] %vm445, %v429
      %463 = vst.msk [vmem:[#allocation3 + $0x44] sm:$0xf] %vm445, %v430
      %464 = vst.msk [vmem:[#allocation3 + $0x48] sm:$0xf] %vm445, %v431
      %465 = vst.msk [vmem:[#allocation3 + $0x4c] sm:$0xf] %vm445, %v432
      %466 = vst.msk [vmem:[#allocation3 + $0x50] sm:$0xf] %vm445, %v433
      %467 = vst.msk [vmem:[#allocation3 + $0x54] sm:$0xf] %vm445, %v434
      %468 = vst.msk [vmem:[#allocation3 + $0x58] sm:$0xf] %vm445, %v435
      %469 = vst.msk [vmem:[#allocation3 + $0x5c] sm:$0xf] %vm445, %v436
      %470 = vst.msk [vmem:[#allocation3 + $0x60] sm:$0xf] %vm445, %v437
      %471 = vst.msk [vmem:[#allocation3 + $0x64] sm:$0xf] %vm445, %v438
      %472 = vst.msk [vmem:[#allocation3 + $0x68] sm:$0xf] %vm445, %v439
      %473 = vst.msk [vmem:[#allocation3 + $0x6c] sm:$0xf] %vm445, %v440
      %474 = vst.msk [vmem:[#allocation3 + $0x70] sm:$0xf] %vm445, %v441
      %475 = vst.msk [vmem:[#allocation3 + $0x74] sm:$0xf] %vm445, %v442
      %476 = vst.msk [vmem:[#allocation3 + $0x78] sm:$0xf] %vm445, %v443
      %477 = vst.msk [vmem:[#allocation3 + $0x7c] sm:$0xf] %vm445, %v444
      %v478 = vld [vmem:[#allocation2 + $0x1] sm:$0xff]
      %v479 = vld [vmem:[#allocation2 + $0x9] sm:$0xff]
      %v480 = vld [vmem:[#allocation2 + $0x19] sm:$0xff]
      %v481 = vld [vmem:[#allocation2 + $0x21] sm:$0xff]
      %v482 = vld [vmem:[#allocation2 + $0x31] sm:$0xff]
      %v483 = vld [vmem:[#allocation2 + $0x39] sm:$0xff]
      %v484 = vld [vmem:[#allocation2 + $0x49] sm:$0xff]
      %v485 = vld [vmem:[#allocation2 + $0x51] sm:$0xff]
      %v486 = vld [vmem:[#allocation2 + $0x61] sm:$0xff]
      %v487 = vld [vmem:[#allocation2 + $0x69] sm:$0xff]
      %v488 = vld [vmem:[#allocation2 + $0x79] sm:$0xff]
      %v489 = vld [vmem:[#allocation2 + $0x81] sm:$0xff]
      %v490 = vld [vmem:[#allocation2 + $0x91] sm:$0xff]
      %v491 = vld [vmem:[#allocation2 + $0x99] sm:$0xff]
      %v492 = vld [vmem:[#allocation2 + $0xa9] sm:$0xff]
      %v493 = vld [vmem:[#allocation2 + $0xb1] sm:$0xff]
      %v494 = vld [vmem:[#allocation2 + $0xc1] sm:$0xff]
      %v495 = vld [vmem:[#allocation2 + $0xc9] sm:$0xff]
      %v496 = vld [vmem:[#allocation2 + $0xd9] sm:$0xff]
      %v497 = vld [vmem:[#allocation2 + $0xe1] sm:$0xff]
      %v498 = vld [vmem:[#allocation2 + $0xf1] sm:$0xff]
      %v499 = vld [vmem:[#allocation2 + $0xf9] sm:$0xff]
      %v500 = vld [vmem:[#allocation2 + $0x109] sm:$0xff]
      %v501 = vld [vmem:[#allocation2 + $0x111] sm:$0xff]
      %v502 = vld [vmem:[#allocation2 + $0x121] sm:$0xff]
      %v503 = vld [vmem:[#allocation2 + $0x129] sm:$0xff]
      %v504 = vld [vmem:[#allocation2 + $0x139] sm:$0xff]
      %v505 = vld [vmem:[#allocation2 + $0x141] sm:$0xff]
      %v506 = vld [vmem:[#allocation2 + $0x151] sm:$0xff]
      %v507 = vld [vmem:[#allocation2 + $0x159] sm:$0xff]
      %v508 = vld [vmem:[#allocation2 + $0x169] sm:$0xff]
      %v509 = vld [vmem:[#allocation2 + $0x171] sm:$0xff]
      %v510 = vpack.c.bf16 %v478, %v478
      %v511 = vpack.c.bf16 %v479, %v479
      %v512 = vpack.c.bf16 %v480, %v480
      %v513 = vpack.c.bf16 %v481, %v481
      %v514 = vpack.c.bf16 %v482, %v482
      %v515 = vpack.c.bf16 %v483, %v483
      %v516 = vpack.c.bf16 %v484, %v484
      %v517 = vpack.c.bf16 %v485, %v485
      %v518 = vpack.c.bf16 %v486, %v486
      %v519 = vpack.c.bf16 %v487, %v487
      %v520 = vpack.c.bf16 %v488, %v488
      %v521 = vpack.c.bf16 %v489, %v489
      %v522 = vpack.c.bf16 %v490, %v490
      %v523 = vpack.c.bf16 %v491, %v491
      %v524 = vpack.c.bf16 %v492, %v492
      %v525 = vpack.c.bf16 %v493, %v493
      %v526 = vpack.c.bf16 %v494, %v494
      %v527 = vpack.c.bf16 %v495, %v495
      %v528 = vpack.c.bf16 %v496, %v496
      %v529 = vpack.c.bf16 %v497, %v497
      %v530 = vpack.c.bf16 %v498, %v498
      %v531 = vpack.c.bf16 %v499, %v499
      %v532 = vpack.c.bf16 %v500, %v500
      %v533 = vpack.c.bf16 %v501, %v501
      %v534 = vpack.c.bf16 %v502, %v502
      %v535 = vpack.c.bf16 %v503, %v503
      %v536 = vpack.c.bf16 %v504, %v504
      %v537 = vpack.c.bf16 %v505, %v505
      %v538 = vpack.c.bf16 %v506, %v506
      %v539 = vpack.c.bf16 %v507, %v507
      %v540 = vpack.c.bf16 %v508, %v508
      %v541 = vpack.c.bf16 %v509, %v509
      %574 = vrot.lane.b32.xlu0 %v510, 8
      %v575 = vpop.permute.xlu0 %574
      %576 = vrot.lane.b32.xlu0 %v511, 8
      %v577 = vpop.permute.xlu0 %576
      %578 = vrot.lane.b32.xlu0 %v512, 8
      %v579 = vpop.permute.xlu0 %578
      %580 = vrot.lane.b32.xlu0 %v513, 8
      %v581 = vpop.permute.xlu0 %580
      %582 = vrot.lane.b32.xlu0 %v514, 8
      %v583 = vpop.permute.xlu0 %582
      %584 = vrot.lane.b32.xlu0 %v515, 8
      %v585 = vpop.permute.xlu0 %584
      %586 = vrot.lane.b32.xlu0 %v516, 8
      %v587 = vpop.permute.xlu0 %586
      %588 = vrot.lane.b32.xlu0 %v517, 8
      %v589 = vpop.permute.xlu0 %588
      %590 = vrot.lane.b32.xlu0 %v518, 8
      %v591 = vpop.permute.xlu0 %590
      %592 = vrot.lane.b32.xlu0 %v519, 8
      %v593 = vpop.permute.xlu0 %592
      %594 = vrot.lane.b32.xlu0 %v520, 8
      %v595 = vpop.permute.xlu0 %594
      %596 = vrot.lane.b32.xlu0 %v521, 8
      %v597 = vpop.permute.xlu0 %596
      %598 = vrot.lane.b32.xlu0 %v522, 8
      %v599 = vpop.permute.xlu0 %598
      %600 = vrot.lane.b32.xlu0 %v523, 8
      %v601 = vpop.permute.xlu0 %600
      %602 = vrot.lane.b32.xlu0 %v524, 8
      %v603 = vpop.permute.xlu0 %602
      %604 = vrot.lane.b32.xlu0 %v525, 8
      %v605 = vpop.permute.xlu0 %604
      %606 = vrot.lane.b32.xlu0 %v526, 8
      %v607 = vpop.permute.xlu0 %606
      %608 = vrot.lane.b32.xlu0 %v527, 8
      %v609 = vpop.permute.xlu0 %608
      %610 = vrot.lane.b32.xlu0 %v528, 8
      %v611 = vpop.permute.xlu0 %610
      %612 = vrot.lane.b32.xlu0 %v529, 8
      %v613 = vpop.permute.xlu0 %612
      %614 = vrot.lane.b32.xlu0 %v530, 8
      %v615 = vpop.permute.xlu0 %614
      %616 = vrot.lane.b32.xlu0 %v531, 8
      %v617 = vpop.permute.xlu0 %616
      %618 = vrot.lane.b32.xlu0 %v532, 8
      %v619 = vpop.permute.xlu0 %618
      %620 = vrot.lane.b32.xlu0 %v533, 8
      %v621 = vpop.permute.xlu0 %620
      %622 = vrot.lane.b32.xlu0 %v534, 8
      %v623 = vpop.permute.xlu0 %622
      %624 = vrot.lane.b32.xlu0 %v535, 8
      %v625 = vpop.permute.xlu0 %624
      %626 = vrot.lane.b32.xlu0 %v536, 8
      %v627 = vpop.permute.xlu0 %626
      %628 = vrot.lane.b32.xlu0 %v537, 8
      %v629 = vpop.permute.xlu0 %628
      %630 = vrot.lane.b32.xlu0 %v538, 8
      %v631 = vpop.permute.xlu0 %630
      %632 = vrot.lane.b32.xlu0 %v539, 8
      %v633 = vpop.permute.xlu0 %632
      %634 = vrot.lane.b32.xlu0 %v540, 8
      %v635 = vpop.permute.xlu0 %634
      %636 = vrot.lane.b32.xlu0 %v541, 8
      %v637 = vpop.permute.xlu0 %636
      %vm670 = vcmask 126016
      %671 = vst.msk [vmem:[#allocation3] sm:$0xf] %vm670, %v575
      %672 = vst.msk [vmem:[#allocation3 + $0x4] sm:$0xf] %vm670, %v577
      %673 = vst.msk [vmem:[#allocation3 + $0x8] sm:$0xf] %vm670, %v579
      %674 = vst.msk [vmem:[#allocation3 + $0xc] sm:$0xf] %vm670, %v581
      %675 = vst.msk [vmem:[#allocation3 + $0x10] sm:$0xf] %vm670, %v583
      %676 = vst.msk [vmem:[#allocation3 + $0x14] sm:$0xf] %vm670, %v585
      %677 = vst.msk [vmem:[#allocation3 + $0x18] sm:$0xf] %vm670, %v587
      %678 = vst.msk [vmem:[#allocation3 + $0x1c] sm:$0xf] %vm670, %v589
      %679 = vst.msk [vmem:[#allocation3 + $0x20] sm:$0xf] %vm670, %v591
      %680 = vst.msk [vmem:[#allocation3 + $0x24] sm:$0xf] %vm670, %v593
      %681 = vst.msk [vmem:[#allocation3 + $0x28] sm:$0xf] %vm670, %v595
      %682 = vst.msk [vmem:[#allocation3 + $0x2c] sm:$0xf] %vm670, %v597
      %683 = vst.msk [vmem:[#allocation3 + $0x30] sm:$0xf] %vm670, %v599
      %684 = vst.msk [vmem:[#allocation3 + $0x34] sm:$0xf] %vm670, %v601
      %685 = vst.msk [vmem:[#allocation3 + $0x38] sm:$0xf] %vm670, %v603
      %686 = vst.msk [vmem:[#allocation3 + $0x3c] sm:$0xf] %vm670, %v605
      %687 = vst.msk [vmem:[#allocation3 + $0x40] sm:$0xf] %vm670, %v607
      %688 = vst.msk [vmem:[#allocation3 + $0x44] sm:$0xf] %vm670, %v609
      %689 = vst.msk [vmem:[#allocation3 + $0x48] sm:$0xf] %vm670, %v611
      %690 = vst.msk [vmem:[#allocation3 + $0x4c] sm:$0xf] %vm670, %v613
      %691 = vst.msk [vmem:[#allocation3 + $0x50] sm:$0xf] %vm670, %v615
      %692 = vst.msk [vmem:[#allocation3 + $0x54] sm:$0xf] %vm670, %v617
      %693 = vst.msk [vmem:[#allocation3 + $0x58] sm:$0xf] %vm670, %v619
      %694 = vst.msk [vmem:[#allocation3 + $0x5c] sm:$0xf] %vm670, %v621
      %695 = vst.msk [vmem:[#allocation3 + $0x60] sm:$0xf] %vm670, %v623
      %696 = vst.msk [vmem:[#allocation3 + $0x64] sm:$0xf] %vm670, %v625
      %697 = vst.msk [vmem:[#allocation3 + $0x68] sm:$0xf] %vm670, %v627
      %698 = vst.msk [vmem:[#allocation3 + $0x6c] sm:$0xf] %vm670, %v629
      %699 = vst.msk [vmem:[#allocation3 + $0x70] sm:$0xf] %vm670, %v631
      %700 = vst.msk [vmem:[#allocation3 + $0x74] sm:$0xf] %vm670, %v633
      %701 = vst.msk [vmem:[#allocation3 + $0x78] sm:$0xf] %vm670, %v635
      %702 = vst.msk [vmem:[#allocation3 + $0x7c] sm:$0xf] %vm670, %v637
      %v703 = vld [vmem:[#allocation2 + $0x2] sm:$0xff]
      %v704 = vld [vmem:[#allocation2 + $0xa] sm:$0xff]
      %v705 = vld [vmem:[#allocation2 + $0x1a] sm:$0xff]
      %v706 = vld [vmem:[#allocation2 + $0x22] sm:$0xff]
      %v707 = vld [vmem:[#allocation2 + $0x32] sm:$0xff]
      %v708 = vld [vmem:[#allocation2 + $0x3a] sm:$0xff]
      %v709 = vld [vmem:[#allocation2 + $0x4a] sm:$0xff]
      %v710 = vld [vmem:[#allocation2 + $0x52] sm:$0xff]
      %v711 = vld [vmem:[#allocation2 + $0x62] sm:$0xff]
      %v712 = vld [vmem:[#allocation2 + $0x6a] sm:$0xff]
      %v713 = vld [vmem:[#allocation2 + $0x7a] sm:$0xff]
      %v714 = vld [vmem:[#allocation2 + $0x82] sm:$0xff]
      %v715 = vld [vmem:[#allocation2 + $0x92] sm:$0xff]
      %v716 = vld [vmem:[#allocation2 + $0x9a] sm:$0xff]
      %v717 = vld [vmem:[#allocation2 + $0xaa] sm:$0xff]
      %v718 = vld [vmem:[#allocation2 + $0xb2] sm:$0xff]
      %v719 = vld [vmem:[#allocation2 + $0xc2] sm:$0xff]
      %v720 = vld [vmem:[#allocation2 + $0xca] sm:$0xff]
      %v721 = vld [vmem:[#allocation2 + $0xda] sm:$0xff]
      %v722 = vld [vmem:[#allocation2 + $0xe2] sm:$0xff]
      %v723 = vld [vmem:[#allocation2 + $0xf2] sm:$0xff]
      %v724 = vld [vmem:[#allocation2 + $0xfa] sm:$0xff]
      %v725 = vld [vmem:[#allocation2 + $0x10a] sm:$0xff]
      %v726 = vld [vmem:[#allocation2 + $0x112] sm:$0xff]
      %v727 = vld [vmem:[#allocation2 + $0x122] sm:$0xff]
      %v728 = vld [vmem:[#allocation2 + $0x12a] sm:$0xff]
      %v729 = vld [vmem:[#allocation2 + $0x13a] sm:$0xff]
      %v730 = vld [vmem:[#allocation2 + $0x142] sm:$0xff]
      %v731 = vld [vmem:[#allocation2 + $0x152] sm:$0xff]
      %v732 = vld [vmem:[#allocation2 + $0x15a] sm:$0xff]
      %v733 = vld [vmem:[#allocation2 + $0x16a] sm:$0xff]
      %v734 = vld [vmem:[#allocation2 + $0x172] sm:$0xff]
      %v735 = vpack.c.bf16 %v703, %v703
      %v736 = vpack.c.bf16 %v704, %v704
      %v737 = vpack.c.bf16 %v705, %v705
      %v738 = vpack.c.bf16 %v706, %v706
      %v739 = vpack.c.bf16 %v707, %v707
      %v740 = vpack.c.bf16 %v708, %v708
      %v741 = vpack.c.bf16 %v709, %v709
      %v742 = vpack.c.bf16 %v710, %v710
      %v743 = vpack.c.bf16 %v711, %v711
      %v744 = vpack.c.bf16 %v712, %v712
      %v745 = vpack.c.bf16 %v713, %v713
      %v746 = vpack.c.bf16 %v714, %v714
      %v747 = vpack.c.bf16 %v715, %v715
      %v748 = vpack.c.bf16 %v716, %v716
      %v749 = vpack.c.bf16 %v717, %v717
      %v750 = vpack.c.bf16 %v718, %v718
      %v751 = vpack.c.bf16 %v719, %v719
      %v752 = vpack.c.bf16 %v720, %v720
      %v753 = vpack.c.bf16 %v721, %v721
      %v754 = vpack.c.bf16 %v722, %v722
      %v755 = vpack.c.bf16 %v723, %v723
      %v756 = vpack.c.bf16 %v724, %v724
      %v757 = vpack.c.bf16 %v725, %v725
      %v758 = vpack.c.bf16 %v726, %v726
      %v759 = vpack.c.bf16 %v727, %v727
      %v760 = vpack.c.bf16 %v728, %v728
      %v761 = vpack.c.bf16 %v729, %v729
      %v762 = vpack.c.bf16 %v730, %v730
      %v763 = vpack.c.bf16 %v731, %v731
      %v764 = vpack.c.bf16 %v732, %v732
      %v765 = vpack.c.bf16 %v733, %v733
      %v766 = vpack.c.bf16 %v734, %v734
      %799 = vrot.lane.b32.xlu0 %v735, 16
      %v800 = vpop.permute.xlu0 %799
      %801 = vrot.lane.b32.xlu0 %v736, 16
      %v802 = vpop.permute.xlu0 %801
      %803 = vrot.lane.b32.xlu0 %v737, 16
      %v804 = vpop.permute.xlu0 %803
      %805 = vrot.lane.b32.xlu0 %v738, 16
      %v806 = vpop.permute.xlu0 %805
      %807 = vrot.lane.b32.xlu0 %v739, 16
      %v808 = vpop.permute.xlu0 %807
      %809 = vrot.lane.b32.xlu0 %v740, 16
      %v810 = vpop.permute.xlu0 %809
      %811 = vrot.lane.b32.xlu0 %v741, 16
      %v812 = vpop.permute.xlu0 %811
      %813 = vrot.lane.b32.xlu0 %v742, 16
      %v814 = vpop.permute.xlu0 %813
      %815 = vrot.lane.b32.xlu0 %v743, 16
      %v816 = vpop.permute.xlu0 %815
      %817 = vrot.lane.b32.xlu0 %v744, 16
      %v818 = vpop.permute.xlu0 %817
      %819 = vrot.lane.b32.xlu0 %v745, 16
      %v820 = vpop.permute.xlu0 %819
      %821 = vrot.lane.b32.xlu0 %v746, 16
      %v822 = vpop.permute.xlu0 %821
      %823 = vrot.lane.b32.xlu0 %v747, 16
      %v824 = vpop.permute.xlu0 %823
      %825 = vrot.lane.b32.xlu0 %v748, 16
      %v826 = vpop.permute.xlu0 %825
      %827 = vrot.lane.b32.xlu0 %v749, 16
      %v828 = vpop.permute.xlu0 %827
      %829 = vrot.lane.b32.xlu0 %v750, 16
      %v830 = vpop.permute.xlu0 %829
      %831 = vrot.lane.b32.xlu0 %v751, 16
      %v832 = vpop.permute.xlu0 %831
      %833 = vrot.lane.b32.xlu0 %v752, 16
      %v834 = vpop.permute.xlu0 %833
      %835 = vrot.lane.b32.xlu0 %v753, 16
      %v836 = vpop.permute.xlu0 %835
      %837 = vrot.lane.b32.xlu0 %v754, 16
      %v838 = vpop.permute.xlu0 %837
      %839 = vrot.lane.b32.xlu0 %v755, 16
      %v840 = vpop.permute.xlu0 %839
      %841 = vrot.lane.b32.xlu0 %v756, 16
      %v842 = vpop.permute.xlu0 %841
      %843 = vrot.lane.b32.xlu0 %v757, 16
      %v844 = vpop.permute.xlu0 %843
      %845 = vrot.lane.b32.xlu0 %v758, 16
      %v846 = vpop.permute.xlu0 %845
      %847 = vrot.lane.b32.xlu0 %v759, 16
      %v848 = vpop.permute.xlu0 %847
      %849 = vrot.lane.b32.xlu0 %v760, 16
      %v850 = vpop.permute.xlu0 %849
      %851 = vrot.lane.b32.xlu0 %v761, 16
      %v852 = vpop.permute.xlu0 %851
      %853 = vrot.lane.b32.xlu0 %v762, 16
      %v854 = vpop.permute.xlu0 %853
      %855 = vrot.lane.b32.xlu0 %v763, 16
      %v856 = vpop.permute.xlu0 %855
      %857 = vrot.lane.b32.xlu0 %v764, 16
      %v858 = vpop.permute.xlu0 %857
      %859 = vrot.lane.b32.xlu0 %v765, 16
      %v860 = vpop.permute.xlu0 %859
      %861 = vrot.lane.b32.xlu0 %v766, 16
      %v862 = vpop.permute.xlu0 %861
      %vm895 = vcmask 191616
      %896 = vst.msk [vmem:[#allocation3] sm:$0xf] %vm895, %v800
      %897 = vst.msk [vmem:[#allocation3 + $0x4] sm:$0xf] %vm895, %v802
      %898 = vst.msk [vmem:[#allocation3 + $0x8] sm:$0xf] %vm895, %v804
      %899 = vst.msk [vmem:[#allocation3 + $0xc] sm:$0xf] %vm895, %v806
      %900 = vst.msk [vmem:[#allocation3 + $0x10] sm:$0xf] %vm895, %v808
      %901 = vst.msk [vmem:[#allocation3 + $0x14] sm:$0xf] %vm895, %v810
      %902 = vst.msk [vmem:[#allocation3 + $0x18] sm:$0xf] %vm895, %v812
      %903 = vst.msk [vmem:[#allocation3 + $0x1c] sm:$0xf] %vm895, %v814
      %904 = vst.msk [vmem:[#allocation3 + $0x20] sm:$0xf] %vm895, %v816
      %905 = vst.msk [vmem:[#allocation3 + $0x24] sm:$0xf] %vm895, %v818
      %906 = vst.msk [vmem:[#allocation3 + $0x28] sm:$0xf] %vm895, %v820
      %907 = vst.msk [vmem:[#allocation3 + $0x2c] sm:$0xf] %vm895, %v822
      %908 = vst.msk [vmem:[#allocation3 + $0x30] sm:$0xf] %vm895, %v824
      %909 = vst.msk [vmem:[#allocation3 + $0x34] sm:$0xf] %vm895, %v826
      %910 = vst.msk [vmem:[#allocation3 + $0x38] sm:$0xf] %vm895, %v828
      %911 = vst.msk [vmem:[#allocation3 + $0x3c] sm:$0xf] %vm895, %v830
      %912 = vst.msk [vmem:[#allocation3 + $0x40] sm:$0xf] %vm895, %v832
      %913 = vst.msk [vmem:[#allocation3 + $0x44] sm:$0xf] %vm895, %v834
      %914 = vst.msk [vmem:[#allocation3 + $0x48] sm:$0xf] %vm895, %v836
      %915 = vst.msk [vmem:[#allocation3 + $0x4c] sm:$0xf] %vm895, %v838
      %916 = vst.msk [vmem:[#allocation3 + $0x50] sm:$0xf] %vm895, %v840
      %917 = vst.msk [vmem:[#allocation3 + $0x54] sm:$0xf] %vm895, %v842
      %918 = vst.msk [vmem:[#allocation3 + $0x58] sm:$0xf] %vm895, %v844
      %919 = vst.msk [vmem:[#allocation3 + $0x5c] sm:$0xf] %vm895, %v846
      %920 = vst.msk [vmem:[#allocation3 + $0x60] sm:$0xf] %vm895, %v848
      %921 = vst.msk [vmem:[#allocation3 + $0x64] sm:$0xf] %vm895, %v850
      %922 = vst.msk [vmem:[#allocation3 + $0x68] sm:$0xf] %vm895, %v852
      %923 = vst.msk [vmem:[#allocation3 + $0x6c] sm:$0xf] %vm895, %v854
      %924 = vst.msk [vmem:[#allocation3 + $0x70] sm:$0xf] %vm895, %v856
      %925 = vst.msk [vmem:[#allocation3 + $0x74] sm:$0xf] %vm895, %v858
      %926 = vst.msk [vmem:[#allocation3 + $0x78] sm:$0xf] %vm895, %v860
      %927 = vst.msk [vmem:[#allocation3 + $0x7c] sm:$0xf] %vm895, %v862
      %v928 = vld [vmem:[%s348] sm:$0xff]
      %v929 = vld [vmem:[%s348 + $0x8] sm:$0xff]
      %v930 = vld [vmem:[%s348 + $0x18] sm:$0xff]
      %v931 = vld [vmem:[%s348 + $0x20] sm:$0xff]
      %v932 = vld [vmem:[%s348 + $0x30] sm:$0xff]
      %v933 = vld [vmem:[%s348 + $0x38] sm:$0xff]
      %v934 = vld [vmem:[%s348 + $0x48] sm:$0xff]
      %v935 = vld [vmem:[%s348 + $0x50] sm:$0xff]
      %v936 = vld [vmem:[%s348 + $0x60] sm:$0xff]
      %v937 = vld [vmem:[%s348 + $0x68] sm:$0xff]
      %v938 = vld [vmem:[%s348 + $0x78] sm:$0xff]
      %v939 = vld [vmem:[%s348 + $0x80] sm:$0xff]
      %v940 = vld [vmem:[%s348 + $0x90] sm:$0xff]
      %v941 = vld [vmem:[%s348 + $0x98] sm:$0xff]
      %v942 = vld [vmem:[%s348 + $0xa8] sm:$0xff]
      %v943 = vld [vmem:[%s348 + $0xb0] sm:$0xff]
      %v944 = vld [vmem:[%s348 + $0xc0] sm:$0xff]
      %v945 = vld [vmem:[%s348 + $0xc8] sm:$0xff]
      %v946 = vld [vmem:[%s348 + $0xd8] sm:$0xff]
      %v947 = vld [vmem:[%s348 + $0xe0] sm:$0xff]
      %v948 = vld [vmem:[%s348 + $0xf0] sm:$0xff]
      %v949 = vld [vmem:[%s348 + $0xf8] sm:$0xff]
      %v950 = vld [vmem:[%s348 + $0x108] sm:$0xff]
      %v951 = vld [vmem:[%s348 + $0x110] sm:$0xff]
      %v952 = vld [vmem:[%s348 + $0x120] sm:$0xff]
      %v953 = vld [vmem:[%s348 + $0x128] sm:$0xff]
      %v954 = vld [vmem:[%s348 + $0x138] sm:$0xff]
      %v955 = vld [vmem:[%s348 + $0x140] sm:$0xff]
      %v956 = vld [vmem:[%s348 + $0x150] sm:$0xff]
      %v957 = vld [vmem:[%s348 + $0x158] sm:$0xff]
      %v958 = vld [vmem:[%s348 + $0x168] sm:$0xff]
      %v959 = vld [vmem:[%s348 + $0x170] sm:$0xff]
      %v960 = vpack.c.bf16 %v928, %v928
      %v961 = vpack.c.bf16 %v929, %v929
      %v962 = vpack.c.bf16 %v930, %v930
      %v963 = vpack.c.bf16 %v931, %v931
      %v964 = vpack.c.bf16 %v932, %v932
      %v965 = vpack.c.bf16 %v933, %v933
      %v966 = vpack.c.bf16 %v934, %v934
      %v967 = vpack.c.bf16 %v935, %v935
      %v968 = vpack.c.bf16 %v936, %v936
      %v969 = vpack.c.bf16 %v937, %v937
      %v970 = vpack.c.bf16 %v938, %v938
      %v971 = vpack.c.bf16 %v939, %v939
      %v972 = vpack.c.bf16 %v940, %v940
      %v973 = vpack.c.bf16 %v941, %v941
      %v974 = vpack.c.bf16 %v942, %v942
      %v975 = vpack.c.bf16 %v943, %v943
      %v976 = vpack.c.bf16 %v944, %v944
      %v977 = vpack.c.bf16 %v945, %v945
      %v978 = vpack.c.bf16 %v946, %v946
      %v979 = vpack.c.bf16 %v947, %v947
      %v980 = vpack.c.bf16 %v948, %v948
      %v981 = vpack.c.bf16 %v949, %v949
      %v982 = vpack.c.bf16 %v950, %v950
      %v983 = vpack.c.bf16 %v951, %v951
      %v984 = vpack.c.bf16 %v952, %v952
      %v985 = vpack.c.bf16 %v953, %v953
      %v986 = vpack.c.bf16 %v954, %v954
      %v987 = vpack.c.bf16 %v955, %v955
      %v988 = vpack.c.bf16 %v956, %v956
      %v989 = vpack.c.bf16 %v957, %v957
      %v990 = vpack.c.bf16 %v958, %v958
      %v991 = vpack.c.bf16 %v959, %v959
      %1024 = vrot.lane.b32.xlu0 %v960, 24
      %v1025 = vpop.permute.xlu0 %1024
      %1026 = vrot.lane.b32.xlu0 %v961, 24
      %v1027 = vpop.permute.xlu0 %1026
      %1028 = vrot.lane.b32.xlu0 %v962, 24
      %v1029 = vpop.permute.xlu0 %1028
      %1030 = vrot.lane.b32.xlu0 %v963, 24
      %v1031 = vpop.permute.xlu0 %1030
      %1032 = vrot.lane.b32.xlu0 %v964, 24
      %v1033 = vpop.permute.xlu0 %1032
      %1034 = vrot.lane.b32.xlu0 %v965, 24
      %v1035 = vpop.permute.xlu0 %1034
      %1036 = vrot.lane.b32.xlu0 %v966, 24
      %v1037 = vpop.permute.xlu0 %1036
      %1038 = vrot.lane.b32.xlu0 %v967, 24
      %v1039 = vpop.permute.xlu0 %1038
      %1040 = vrot.lane.b32.xlu0 %v968, 24
      %v1041 = vpop.permute.xlu0 %1040
      %1042 = vrot.lane.b32.xlu0 %v969, 24
      %v1043 = vpop.permute.xlu0 %1042
      %1044 = vrot.lane.b32.xlu0 %v970, 24
      %v1045 = vpop.permute.xlu0 %1044
      %1046 = vrot.lane.b32.xlu0 %v971, 24
      %v1047 = vpop.permute.xlu0 %1046
      %1048 = vrot.lane.b32.xlu0 %v972, 24
      %v1049 = vpop.permute.xlu0 %1048
      %1050 = vrot.lane.b32.xlu0 %v973, 24
      %v1051 = vpop.permute.xlu0 %1050
      %1052 = vrot.lane.b32.xlu0 %v974, 24
      %v1053 = vpop.permute.xlu0 %1052
      %1054 = vrot.lane.b32.xlu0 %v975, 24
      %v1055 = vpop.permute.xlu0 %1054
      %1056 = vrot.lane.b32.xlu0 %v976, 24
      %v1057 = vpop.permute.xlu0 %1056
      %1058 = vrot.lane.b32.xlu0 %v977, 24
      %v1059 = vpop.permute.xlu0 %1058
      %1060 = vrot.lane.b32.xlu0 %v978, 24
      %v1061 = vpop.permute.xlu0 %1060
      %1062 = vrot.lane.b32.xlu0 %v979, 24
      %v1063 = vpop.permute.xlu0 %1062
      %1064 = vrot.lane.b32.xlu0 %v980, 24
      %v1065 = vpop.permute.xlu0 %1064
      %1066 = vrot.lane.b32.xlu0 %v981, 24
      %v1067 = vpop.permute.xlu0 %1066
      %1068 = vrot.lane.b32.xlu0 %v982, 24
      %v1069 = vpop.permute.xlu0 %1068
      %1070 = vrot.lane.b32.xlu0 %v983, 24
      %v1071 = vpop.permute.xlu0 %1070
      %1072 = vrot.lane.b32.xlu0 %v984, 24
      %v1073 = vpop.permute.xlu0 %1072
      %1074 = vrot.lane.b32.xlu0 %v985, 24
      %v1075 = vpop.permute.xlu0 %1074
      %1076 = vrot.lane.b32.xlu0 %v986, 24
      %v1077 = vpop.permute.xlu0 %1076
      %1078 = vrot.lane.b32.xlu0 %v987, 24
      %v1079 = vpop.permute.xlu0 %1078
      %1080 = vrot.lane.b32.xlu0 %v988, 24
      %v1081 = vpop.permute.xlu0 %1080
      %1082 = vrot.lane.b32.xlu0 %v989, 24
      %v1083 = vpop.permute.xlu0 %1082
      %1084 = vrot.lane.b32.xlu0 %v990, 24
      %v1085 = vpop.permute.xlu0 %1084
      %1086 = vrot.lane.b32.xlu0 %v991, 24
      %v1087 = vpop.permute.xlu0 %1086
      %vm1120 = vcmask 257216
      %1121 = vst.msk [vmem:[#allocation3] sm:$0xf] %vm1120, %v1025
      %1122 = vst.msk [vmem:[#allocation3 + $0x4] sm:$0xf] %vm1120, %v1027
      %1123 = vst.msk [vmem:[#allocation3 + $0x8] sm:$0xf] %vm1120, %v1029
      %1124 = vst.msk [vmem:[#allocation3 + $0xc] sm:$0xf] %vm1120, %v1031
      %1125 = vst.msk [vmem:[#allocation3 + $0x10] sm:$0xf] %vm1120, %v1033
      %1126 = vst.msk [vmem:[#allocation3 + $0x14] sm:$0xf] %vm1120, %v1035
      %1127 = vst.msk [vmem:[#allocation3 + $0x18] sm:$0xf] %vm1120, %v1037
      %1128 = vst.msk [vmem:[#allocation3 + $0x1c] sm:$0xf] %vm1120, %v1039
      %1129 = vst.msk [vmem:[#allocation3 + $0x20] sm:$0xf] %vm1120, %v1041
      %1130 = vst.msk [vmem:[#allocation3 + $0x24] sm:$0xf] %vm1120, %v1043
      %1131 = vst.msk [vmem:[#allocation3 + $0x28] sm:$0xf] %vm1120, %v1045
      %1132 = vst.msk [vmem:[#allocation3 + $0x2c] sm:$0xf] %vm1120, %v1047
      %1133 = vst.msk [vmem:[#allocation3 + $0x30] sm:$0xf] %vm1120, %v1049
      %1134 = vst.msk [vmem:[#allocation3 + $0x34] sm:$0xf] %vm1120, %v1051
      %1135 = vst.msk [vmem:[#allocation3 + $0x38] sm:$0xf] %vm1120, %v1053
      %1136 = vst.msk [vmem:[#allocation3 + $0x3c] sm:$0xf] %vm1120, %v1055
      %1137 = vst.msk [vmem:[#allocation3 + $0x40] sm:$0xf] %vm1120, %v1057
      %1138 = vst.msk [vmem:[#allocation3 + $0x44] sm:$0xf] %vm1120, %v1059
      %1139 = vst.msk [vmem:[#allocation3 + $0x48] sm:$0xf] %vm1120, %v1061
      %1140 = vst.msk [vmem:[#allocation3 + $0x4c] sm:$0xf] %vm1120, %v1063
      %1141 = vst.msk [vmem:[#allocation3 + $0x50] sm:$0xf] %vm1120, %v1065
      %1142 = vst.msk [vmem:[#allocation3 + $0x54] sm:$0xf] %vm1120, %v1067
      %1143 = vst.msk [vmem:[#allocation3 + $0x58] sm:$0xf] %vm1120, %v1069
      %1144 = vst.msk [vmem:[#allocation3 + $0x5c] sm:$0xf] %vm1120, %v1071
      %1145 = vst.msk [vmem:[#allocation3 + $0x60] sm:$0xf] %vm1120, %v1073
      %1146 = vst.msk [vmem:[#allocation3 + $0x64] sm:$0xf] %vm1120, %v1075
      %1147 = vst.msk [vmem:[#allocation3 + $0x68] sm:$0xf] %vm1120, %v1077
      %1148 = vst.msk [vmem:[#allocation3 + $0x6c] sm:$0xf] %vm1120, %v1079
      %1149 = vst.msk [vmem:[#allocation3 + $0x70] sm:$0xf] %vm1120, %v1081
      %1150 = vst.msk [vmem:[#allocation3 + $0x74] sm:$0xf] %vm1120, %v1083
      %1151 = vst.msk [vmem:[#allocation3 + $0x78] sm:$0xf] %vm1120, %v1085
      %1152 = vst.msk [vmem:[#allocation3 + $0x7c] sm:$0xf] %vm1120, %v1087
      %v1153 = vld [vmem:[%s348 + $0x1] sm:$0xff]
      %v1154 = vld [vmem:[%s348 + $0x9] sm:$0xff]
      %v1155 = vld [vmem:[%s348 + $0x19] sm:$0xff]
      %v1156 = vld [vmem:[%s348 + $0x21] sm:$0xff]
      %v1157 = vld [vmem:[%s348 + $0x31] sm:$0xff]
      %v1158 = vld [vmem:[%s348 + $0x39] sm:$0xff]
      %v1159 = vld [vmem:[%s348 + $0x49] sm:$0xff]
      %v1160 = vld [vmem:[%s348 + $0x51] sm:$0xff]
      %v1161 = vld [vmem:[%s348 + $0x61] sm:$0xff]
      %v1162 = vld [vmem:[%s348 + $0x69] sm:$0xff]
      %v1163 = vld [vmem:[%s348 + $0x79] sm:$0xff]
      %v1164 = vld [vmem:[%s348 + $0x81] sm:$0xff]
      %v1165 = vld [vmem:[%s348 + $0x91] sm:$0xff]
      %v1166 = vld [vmem:[%s348 + $0x99] sm:$0xff]
      %v1167 = vld [vmem:[%s348 + $0xa9] sm:$0xff]
      %v1168 = vld [vmem:[%s348 + $0xb1] sm:$0xff]
      %v1169 = vld [vmem:[%s348 + $0xc1] sm:$0xff]
      %v1170 = vld [vmem:[%s348 + $0xc9] sm:$0xff]
      %v1171 = vld [vmem:[%s348 + $0xd9] sm:$0xff]
      %v1172 = vld [vmem:[%s348 + $0xe1] sm:$0xff]
      %v1173 = vld [vmem:[%s348 + $0xf1] sm:$0xff]
      %v1174 = vld [vmem:[%s348 + $0xf9] sm:$0xff]
      %v1175 = vld [vmem:[%s348 + $0x109] sm:$0xff]
      %v1176 = vld [vmem:[%s348 + $0x111] sm:$0xff]
      %v1177 = vld [vmem:[%s348 + $0x121] sm:$0xff]
      %v1178 = vld [vmem:[%s348 + $0x129] sm:$0xff]
      %v1179 = vld [vmem:[%s348 + $0x139] sm:$0xff]
      %v1180 = vld [vmem:[%s348 + $0x141] sm:$0xff]
      %v1181 = vld [vmem:[%s348 + $0x151] sm:$0xff]
      %v1182 = vld [vmem:[%s348 + $0x159] sm:$0xff]
      %v1183 = vld [vmem:[%s348 + $0x169] sm:$0xff]
      %v1184 = vld [vmem:[%s348 + $0x171] sm:$0xff]
      %v1185 = vpack.c.bf16 %v1153, %v1153
      %v1186 = vpack.c.bf16 %v1154, %v1154
      %v1187 = vpack.c.bf16 %v1155, %v1155
      %v1188 = vpack.c.bf16 %v1156, %v1156
      %v1189 = vpack.c.bf16 %v1157, %v1157
      %v1190 = vpack.c.bf16 %v1158, %v1158
      %v1191 = vpack.c.bf16 %v1159, %v1159
      %v1192 = vpack.c.bf16 %v1160, %v1160
      %v1193 = vpack.c.bf16 %v1161, %v1161
      %v1194 = vpack.c.bf16 %v1162, %v1162
      %v1195 = vpack.c.bf16 %v1163, %v1163
      %v1196 = vpack.c.bf16 %v1164, %v1164
      %v1197 = vpack.c.bf16 %v1165, %v1165
      %v1198 = vpack.c.bf16 %v1166, %v1166
      %v1199 = vpack.c.bf16 %v1167, %v1167
      %v1200 = vpack.c.bf16 %v1168, %v1168
      %v1201 = vpack.c.bf16 %v1169, %v1169
      %v1202 = vpack.c.bf16 %v1170, %v1170
      %v1203 = vpack.c.bf16 %v1171, %v1171
      %v1204 = vpack.c.bf16 %v1172, %v1172
      %v1205 = vpack.c.bf16 %v1173, %v1173
      %v1206 = vpack.c.bf16 %v1174, %v1174
      %v1207 = vpack.c.bf16 %v1175, %v1175
      %v1208 = vpack.c.bf16 %v1176, %v1176
      %v1209 = vpack.c.bf16 %v1177, %v1177
      %v1210 = vpack.c.bf16 %v1178, %v1178
      %v1211 = vpack.c.bf16 %v1179, %v1179
      %v1212 = vpack.c.bf16 %v1180, %v1180
      %v1213 = vpack.c.bf16 %v1181, %v1181
      %v1214 = vpack.c.bf16 %v1182, %v1182
      %v1215 = vpack.c.bf16 %v1183, %v1183
      %v1216 = vpack.c.bf16 %v1184, %v1184
      %1249 = vrot.lane.b32.xlu0 %v1185, 32
      %v1250 = vpop.permute.xlu0 %1249
      %1251 = vrot.lane.b32.xlu0 %v1186, 32
      %v1252 = vpop.permute.xlu0 %1251
      %1253 = vrot.lane.b32.xlu0 %v1187, 32
      %v1254 = vpop.permute.xlu0 %1253
      %1255 = vrot.lane.b32.xlu0 %v1188, 32
      %v1256 = vpop.permute.xlu0 %1255
      %1257 = vrot.lane.b32.xlu0 %v1189, 32
      %v1258 = vpop.permute.xlu0 %1257
      %1259 = vrot.lane.b32.xlu0 %v1190, 32
      %v1260 = vpop.permute.xlu0 %1259
      %1261 = vrot.lane.b32.xlu0 %v1191, 32
      %v1262 = vpop.permute.xlu0 %1261
      %1263 = vrot.lane.b32.xlu0 %v1192, 32
      %v1264 = vpop.permute.xlu0 %1263
      %1265 = vrot.lane.b32.xlu0 %v1193, 32
      %v1266 = vpop.permute.xlu0 %1265
      %1267 = vrot.lane.b32.xlu0 %v1194, 32
      %v1268 = vpop.permute.xlu0 %1267
      %1269 = vrot.lane.b32.xlu0 %v1195, 32
      %v1270 = vpop.permute.xlu0 %1269
      %1271 = vrot.lane.b32.xlu0 %v1196, 32
      %v1272 = vpop.permute.xlu0 %1271
      %1273 = vrot.lane.b32.xlu0 %v1197, 32
      %v1274 = vpop.permute.xlu0 %1273
      %1275 = vrot.lane.b32.xlu0 %v1198, 32
      %v1276 = vpop.permute.xlu0 %1275
      %1277 = vrot.lane.b32.xlu0 %v1199, 32
      %v1278 = vpop.permute.xlu0 %1277
      %1279 = vrot.lane.b32.xlu0 %v1200, 32
      %v1280 = vpop.permute.xlu0 %1279
      %1281 = vrot.lane.b32.xlu0 %v1201, 32
      %v1282 = vpop.permute.xlu0 %1281
      %1283 = vrot.lane.b32.xlu0 %v1202, 32
      %v1284 = vpop.permute.xlu0 %1283
      %1285 = vrot.lane.b32.xlu0 %v1203, 32
      %v1286 = vpop.permute.xlu0 %1285
      %1287 = vrot.lane.b32.xlu0 %v1204, 32
      %v1288 = vpop.permute.xlu0 %1287
      %1289 = vrot.lane.b32.xlu0 %v1205, 32
      %v1290 = vpop.permute.xlu0 %1289
      %1291 = vrot.lane.b32.xlu0 %v1206, 32
      %v1292 = vpop.permute.xlu0 %1291
      %1293 = vrot.lane.b32.xlu0 %v1207, 32
      %v1294 = vpop.permute.xlu0 %1293
      %1295 = vrot.lane.b32.xlu0 %v1208, 32
      %v1296 = vpop.permute.xlu0 %1295
      %1297 = vrot.lane.b32.xlu0 %v1209, 32
      %v1298 = vpop.permute.xlu0 %1297
      %1299 = vrot.lane.b32.xlu0 %v1210, 32
      %v1300 = vpop.permute.xlu0 %1299
      %1301 = vrot.lane.b32.xlu0 %v1211, 32
      %v1302 = vpop.permute.xlu0 %1301
      %1303 = vrot.lane.b32.xlu0 %v1212, 32
      %v1304 = vpop.permute.xlu0 %1303
      %1305 = vrot.lane.b32.xlu0 %v1213, 32
      %v1306 = vpop.permute.xlu0 %1305
      %1307 = vrot.lane.b32.xlu0 %v1214, 32
      %v1308 = vpop.permute.xlu0 %1307
      %1309 = vrot.lane.b32.xlu0 %v1215, 32
      %v1310 = vpop.permute.xlu0 %1309
      %1311 = vrot.lane.b32.xlu0 %v1216, 32
      %v1312 = vpop.permute.xlu0 %1311
      %vm1345 = vcmask 322816
      %1346 = vst.msk [vmem:[#allocation3] sm:$0xf] %vm1345, %v1250
      %1347 = vst.msk [vmem:[#allocation3 + $0x4] sm:$0xf] %vm1345, %v1252
      %1348 = vst.msk [vmem:[#allocation3 + $0x8] sm:$0xf] %vm1345, %v1254
      %1349 = vst.msk [vmem:[#allocation3 + $0xc] sm:$0xf] %vm1345, %v1256
      %1350 = vst.msk [vmem:[#allocation3 + $0x10] sm:$0xf] %vm1345, %v1258
      %1351 = vst.msk [vmem:[#allocation3 + $0x14] sm:$0xf] %vm1345, %v1260
      %1352 = vst.msk [vmem:[#allocation3 + $0x18] sm:$0xf] %vm1345, %v1262
      %1353 = vst.msk [vmem:[#allocation3 + $0x1c] sm:$0xf] %vm1345, %v1264
      %1354 = vst.msk [vmem:[#allocation3 + $0x20] sm:$0xf] %vm1345, %v1266
      %1355 = vst.msk [vmem:[#allocation3 + $0x24] sm:$0xf] %vm1345, %v1268
      %1356 = vst.msk [vmem:[#allocation3 + $0x28] sm:$0xf] %vm1345, %v1270
      %1357 = vst.msk [vmem:[#allocation3 + $0x2c] sm:$0xf] %vm1345, %v1272
      %1358 = vst.msk [vmem:[#allocation3 + $0x30] sm:$0xf] %vm1345, %v1274
      %1359 = vst.msk [vmem:[#allocation3 + $0x34] sm:$0xf] %vm1345, %v1276
      %1360 = vst.msk [vmem:[#allocation3 + $0x38] sm:$0xf] %vm1345, %v1278
      %1361 = vst.msk [vmem:[#allocation3 + $0x3c] sm:$0xf] %vm1345, %v1280
      %1362 = vst.msk [vmem:[#allocation3 + $0x40] sm:$0xf] %vm1345, %v1282
      %1363 = vst.msk [vmem:[#allocation3 + $0x44] sm:$0xf] %vm1345, %v1284
      %1364 = vst.msk [vmem:[#allocation3 + $0x48] sm:$0xf] %vm1345, %v1286
      %1365 = vst.msk [vmem:[#allocation3 + $0x4c] sm:$0xf] %vm1345, %v1288
      %1366 = vst.msk [vmem:[#allocation3 + $0x50] sm:$0xf] %vm1345, %v1290
      %1367 = vst.msk [vmem:[#allocation3 + $0x54] sm:$0xf] %vm1345, %v1292
      %1368 = vst.msk [vmem:[#allocation3 + $0x58] sm:$0xf] %vm1345, %v1294
      %1369 = vst.msk [vmem:[#allocation3 + $0x5c] sm:$0xf] %vm1345, %v1296
      %1370 = vst.msk [vmem:[#allocation3 + $0x60] sm:$0xf] %vm1345, %v1298
      %1371 = vst.msk [vmem:[#allocation3 + $0x64] sm:$0xf] %vm1345, %v1300
      %1372 = vst.msk [vmem:[#allocation3 + $0x68] sm:$0xf] %vm1345, %v1302
      %1373 = vst.msk [vmem:[#allocation3 + $0x6c] sm:$0xf] %vm1345, %v1304
      %1374 = vst.msk [vmem:[#allocation3 + $0x70] sm:$0xf] %vm1345, %v1306
      %1375 = vst.msk [vmem:[#allocation3 + $0x74] sm:$0xf] %vm1345, %v1308
      %1376 = vst.msk [vmem:[#allocation3 + $0x78] sm:$0xf] %vm1345, %v1310
      %1377 = vst.msk [vmem:[#allocation3 + $0x7c] sm:$0xf] %vm1345, %v1312
      %v1378 = vld [vmem:[%s348 + $0x2] sm:$0xff]
      %v1379 = vld [vmem:[%s348 + $0xa] sm:$0xff]
      %v1380 = vld [vmem:[%s348 + $0x1a] sm:$0xff]
      %v1381 = vld [vmem:[%s348 + $0x22] sm:$0xff]
      %v1382 = vld [vmem:[%s348 + $0x32] sm:$0xff]
      %v1383 = vld [vmem:[%s348 + $0x3a] sm:$0xff]
      %v1384 = vld [vmem:[%s348 + $0x4a] sm:$0xff]
      %v1385 = vld [vmem:[%s348 + $0x52] sm:$0xff]
      %v1386 = vld [vmem:[%s348 + $0x62] sm:$0xff]
      %v1387 = vld [vmem:[%s348 + $0x6a] sm:$0xff]
      %v1388 = vld [vmem:[%s348 + $0x7a] sm:$0xff]
      %v1389 = vld [vmem:[%s348 + $0x82] sm:$0xff]
      %v1390 = vld [vmem:[%s348 + $0x92] sm:$0xff]
      %v1391 = vld [vmem:[%s348 + $0x9a] sm:$0xff]
      %v1392 = vld [vmem:[%s348 + $0xaa] sm:$0xff]
      %v1393 = vld [vmem:[%s348 + $0xb2] sm:$0xff]
      %v1394 = vld [vmem:[%s348 + $0xc2] sm:$0xff]
      %v1395 = vld [vmem:[%s348 + $0xca] sm:$0xff]
      %v1396 = vld [vmem:[%s348 + $0xda] sm:$0xff]
      %v1397 = vld [vmem:[%s348 + $0xe2] sm:$0xff]
      %v1398 = vld [vmem:[%s348 + $0xf2] sm:$0xff]
      %v1399 = vld [vmem:[%s348 + $0xfa] sm:$0xff]
      %v1400 = vld [vmem:[%s348 + $0x10a] sm:$0xff]
      %v1401 = vld [vmem:[%s348 + $0x112] sm:$0xff]
      %v1402 = vld [vmem:[%s348 + $0x122] sm:$0xff]
      %v1403 = vld [vmem:[%s348 + $0x12a] sm:$0xff]
      %v1404 = vld [vmem:[%s348 + $0x13a] sm:$0xff]
      %v1405 = vld [vmem:[%s348 + $0x142] sm:$0xff]
      %v1406 = vld [vmem:[%s348 + $0x152] sm:$0xff]
      %v1407 = vld [vmem:[%s348 + $0x15a] sm:$0xff]
      %v1408 = vld [vmem:[%s348 + $0x16a] sm:$0xff]
      %v1409 = vld [vmem:[%s348 + $0x172] sm:$0xff]
      %v1410 = vpack.c.bf16 %v1378, %v1378
      %v1411 = vpack.c.bf16 %v1379, %v1379
      %v1412 = vpack.c.bf16 %v1380, %v1380
      %v1413 = vpack.c.bf16 %v1381, %v1381
      %v1414 = vpack.c.bf16 %v1382, %v1382
      %v1415 = vpack.c.bf16 %v1383, %v1383
      %v1416 = vpack.c.bf16 %v1384, %v1384
      %v1417 = vpack.c.bf16 %v1385, %v1385
      %v1418 = vpack.c.bf16 %v1386, %v1386
      %v1419 = vpack.c.bf16 %v1387, %v1387
      %v1420 = vpack.c.bf16 %v1388, %v1388
      %v1421 = vpack.c.bf16 %v1389, %v1389
      %v1422 = vpack.c.bf16 %v1390, %v1390
      %v1423 = vpack.c.bf16 %v1391, %v1391
      %v1424 = vpack.c.bf16 %v1392, %v1392
      %v1425 = vpack.c.bf16 %v1393, %v1393
      %v1426 = vpack.c.bf16 %v1394, %v1394
      %v1427 = vpack.c.bf16 %v1395, %v1395
      %v1428 = vpack.c.bf16 %v1396, %v1396
      %v1429 = vpack.c.bf16 %v1397, %v1397
      %v1430 = vpack.c.bf16 %v1398, %v1398
      %v1431 = vpack.c.bf16 %v1399, %v1399
      %v1432 = vpack.c.bf16 %v1400, %v1400
      %v1433 = vpack.c.bf16 %v1401, %v1401
      %v1434 = vpack.c.bf16 %v1402, %v1402
      %v1435 = vpack.c.bf16 %v1403, %v1403
      %v1436 = vpack.c.bf16 %v1404, %v1404
      %v1437 = vpack.c.bf16 %v1405, %v1405
      %v1438 = vpack.c.bf16 %v1406, %v1406
      %v1439 = vpack.c.bf16 %v1407, %v1407
      %v1440 = vpack.c.bf16 %v1408, %v1408
      %v1441 = vpack.c.bf16 %v1409, %v1409
      %1474 = vrot.lane.b32.xlu0 %v1410, 40
      %v1475 = vpop.permute.xlu0 %1474
      %1476 = vrot.lane.b32.xlu0 %v1411, 40
      %v1477 = vpop.permute.xlu0 %1476
      %1478 = vrot.lane.b32.xlu0 %v1412, 40
      %v1479 = vpop.permute.xlu0 %1478
      %1480 = vrot.lane.b32.xlu0 %v1413, 40
      %v1481 = vpop.permute.xlu0 %1480
      %1482 = vrot.lane.b32.xlu0 %v1414, 40
      %v1483 = vpop.permute.xlu0 %1482
      %1484 = vrot.lane.b32.xlu0 %v1415, 40
      %v1485 = vpop.permute.xlu0 %1484
      %1486 = vrot.lane.b32.xlu0 %v1416, 40
      %v1487 = vpop.permute.xlu0 %1486
      %1488 = vrot.lane.b32.xlu0 %v1417, 40
      %v1489 = vpop.permute.xlu0 %1488
      %1490 = vrot.lane.b32.xlu0 %v1418, 40
      %v1491 = vpop.permute.xlu0 %1490
      %1492 = vrot.lane.b32.xlu0 %v1419, 40
      %v1493 = vpop.permute.xlu0 %1492
      %1494 = vrot.lane.b32.xlu0 %v1420, 40
      %v1495 = vpop.permute.xlu0 %1494
      %1496 = vrot.lane.b32.xlu0 %v1421, 40
      %v1497 = vpop.permute.xlu0 %1496
      %1498 = vrot.lane.b32.xlu0 %v1422, 40
      %v1499 = vpop.permute.xlu0 %1498
      %1500 = vrot.lane.b32.xlu0 %v1423, 40
      %v1501 = vpop.permute.xlu0 %1500
      %1502 = vrot.lane.b32.xlu0 %v1424, 40
      %v1503 = vpop.permute.xlu0 %1502
      %1504 = vrot.lane.b32.xlu0 %v1425, 40
      %v1505 = vpop.permute.xlu0 %1504
      %1506 = vrot.lane.b32.xlu0 %v1426, 40
      %v1507 = vpop.permute.xlu0 %1506
      %1508 = vrot.lane.b32.xlu0 %v1427, 40
      %v1509 = vpop.permute.xlu0 %1508
      %1510 = vrot.lane.b32.xlu0 %v1428, 40
      %v1511 = vpop.permute.xlu0 %1510
      %1512 = vrot.lane.b32.xlu0 %v1429, 40
      %v1513 = vpop.permute.xlu0 %1512
      %1514 = vrot.lane.b32.xlu0 %v1430, 40
      %v1515 = vpop.permute.xlu0 %1514
      %1516 = vrot.lane.b32.xlu0 %v1431, 40
      %v1517 = vpop.permute.xlu0 %1516
      %1518 = vrot.lane.b32.xlu0 %v1432, 40
      %v1519 = vpop.permute.xlu0 %1518
      %1520 = vrot.lane.b32.xlu0 %v1433, 40
      %v1521 = vpop.permute.xlu0 %1520
      %1522 = vrot.lane.b32.xlu0 %v1434, 40
      %v1523 = vpop.permute.xlu0 %1522
      %1524 = vrot.lane.b32.xlu0 %v1435, 40
      %v1525 = vpop.permute.xlu0 %1524
      %1526 = vrot.lane.b32.xlu0 %v1436, 40
      %v1527 = vpop.permute.xlu0 %1526
      %1528 = vrot.lane.b32.xlu0 %v1437, 40
      %v1529 = vpop.permute.xlu0 %1528
      %1530 = vrot.lane.b32.xlu0 %v1438, 40
      %v1531 = vpop.permute.xlu0 %1530
      %1532 = vrot.lane.b32.xlu0 %v1439, 40
      %v1533 = vpop.permute.xlu0 %1532
      %1534 = vrot.lane.b32.xlu0 %v1440, 40
      %v1535 = vpop.permute.xlu0 %1534
      %1536 = vrot.lane.b32.xlu0 %v1441, 40
      %v1537 = vpop.permute.xlu0 %1536
      %vm1570 = vcmask 388416
      %1571 = vst.msk [vmem:[#allocation3] sm:$0xf] %vm1570, %v1475
      %1572 = vst.msk [vmem:[#allocation3 + $0x4] sm:$0xf] %vm1570, %v1477
      %1573 = vst.msk [vmem:[#allocation3 + $0x8] sm:$0xf] %vm1570, %v1479
      %1574 = vst.msk [vmem:[#allocation3 + $0xc] sm:$0xf] %vm1570, %v1481
      %1575 = vst.msk [vmem:[#allocation3 + $0x10] sm:$0xf] %vm1570, %v1483
      %1576 = vst.msk [vmem:[#allocation3 + $0x14] sm:$0xf] %vm1570, %v1485
      %1577 = vst.msk [vmem:[#allocation3 + $0x18] sm:$0xf] %vm1570, %v1487
      %1578 = vst.msk [vmem:[#allocation3 + $0x1c] sm:$0xf] %vm1570, %v1489
      %1579 = vst.msk [vmem:[#allocation3 + $0x20] sm:$0xf] %vm1570, %v1491
      %1580 = vst.msk [vmem:[#allocation3 + $0x24] sm:$0xf] %vm1570, %v1493
      %1581 = vst.msk [vmem:[#allocation3 + $0x28] sm:$0xf] %vm1570, %v1495
      %1582 = vst.msk [vmem:[#allocation3 + $0x2c] sm:$0xf] %vm1570, %v1497
      %1583 = vst.msk [vmem:[#allocation3 + $0x30] sm:$0xf] %vm1570, %v1499
      %1584 = vst.msk [vmem:[#allocation3 + $0x34] sm:$0xf] %vm1570, %v1501
      %1585 = vst.msk [vmem:[#allocation3 + $0x38] sm:$0xf] %vm1570, %v1503
      %1586 = vst.msk [vmem:[#allocation3 + $0x3c] sm:$0xf] %vm1570, %v1505
      %1587 = vst.msk [vmem:[#allocation3 + $0x40] sm:$0xf] %vm1570, %v1507
      %1588 = vst.msk [vmem:[#allocation3 + $0x44] sm:$0xf] %vm1570, %v1509
      %1589 = vst.msk [vmem:[#allocation3 + $0x48] sm:$0xf] %vm1570, %v1511
      %1590 = vst.msk [vmem:[#allocation3 + $0x4c] sm:$0xf] %vm1570, %v1513
      %1591 = vst.msk [vmem:[#allocation3 + $0x50] sm:$0xf] %vm1570, %v1515
      %1592 = vst.msk [vmem:[#allocation3 + $0x54] sm:$0xf] %vm1570, %v1517
      %1593 = vst.msk [vmem:[#allocation3 + $0x58] sm:$0xf] %vm1570, %v1519
      %1594 = vst.msk [vmem:[#allocation3 + $0x5c] sm:$0xf] %vm1570, %v1521
      %1595 = vst.msk [vmem:[#allocation3 + $0x60] sm:$0xf] %vm1570, %v1523
      %1596 = vst.msk [vmem:[#allocation3 + $0x64] sm:$0xf] %vm1570, %v1525
      %1597 = vst.msk [vmem:[#allocation3 + $0x68] sm:$0xf] %vm1570, %v1527
      %1598 = vst.msk [vmem:[#allocation3 + $0x6c] sm:$0xf] %vm1570, %v1529
      %1599 = vst.msk [vmem:[#allocation3 + $0x70] sm:$0xf] %vm1570, %v1531
      %1600 = vst.msk [vmem:[#allocation3 + $0x74] sm:$0xf] %vm1570, %v1533
      %1601 = vst.msk [vmem:[#allocation3 + $0x78] sm:$0xf] %vm1570, %v1535
      %1602 = vst.msk [vmem:[#allocation3 + $0x7c] sm:$0xf] %vm1570, %v1537
      %s1603 = scalar_lea.vmem [#allocation2], 48
      %v1604 = vld [vmem:[%s1603] sm:$0xff]
      %v1605 = vld [vmem:[%s1603 + $0x8] sm:$0xff]
      %v1606 = vld [vmem:[%s1603 + $0x18] sm:$0xff]
      %v1607 = vld [vmem:[%s1603 + $0x20] sm:$0xff]
      %v1608 = vld [vmem:[%s1603 + $0x30] sm:$0xff]
      %v1609 = vld [vmem:[%s1603 + $0x38] sm:$0xff]
      %v1610 = vld [vmem:[%s1603 + $0x48] sm:$0xff]
      %v1611 = vld [vmem:[%s1603 + $0x50] sm:$0xff]
      %v1612 = vld [vmem:[%s1603 + $0x60] sm:$0xff]
      %v1613 = vld [vmem:[%s1603 + $0x68] sm:$0xff]
      %v1614 = vld [vmem:[%s1603 + $0x78] sm:$0xff]
      %v1615 = vld [vmem:[%s1603 + $0x80] sm:$0xff]
      %v1616 = vld [vmem:[%s1603 + $0x90] sm:$0xff]
      %v1617 = vld [vmem:[%s1603 + $0x98] sm:$0xff]
      %v1618 = vld [vmem:[%s1603 + $0xa8] sm:$0xff]
      %v1619 = vld [vmem:[%s1603 + $0xb0] sm:$0xff]
      %v1620 = vld [vmem:[%s1603 + $0xc0] sm:$0xff]
      %v1621 = vld [vmem:[%s1603 + $0xc8] sm:$0xff]
      %v1622 = vld [vmem:[%s1603 + $0xd8] sm:$0xff]
      %v1623 = vld [vmem:[%s1603 + $0xe0] sm:$0xff]
      %v1624 = vld [vmem:[%s1603 + $0xf0] sm:$0xff]
      %v1625 = vld [vmem:[%s1603 + $0xf8] sm:$0xff]
      %v1626 = vld [vmem:[%s1603 + $0x108] sm:$0xff]
      %v1627 = vld [vmem:[%s1603 + $0x110] sm:$0xff]
      %v1628 = vld [vmem:[%s1603 + $0x120] sm:$0xff]
      %v1629 = vld [vmem:[%s1603 + $0x128] sm:$0xff]
      %v1630 = vld [vmem:[%s1603 + $0x138] sm:$0xff]
      %v1631 = vld [vmem:[%s1603 + $0x140] sm:$0xff]
      %v1632 = vld [vmem:[%s1603 + $0x150] sm:$0xff]
      %v1633 = vld [vmem:[%s1603 + $0x158] sm:$0xff]
      %v1634 = vld [vmem:[%s1603 + $0x168] sm:$0xff]
      %v1635 = vld [vmem:[%s1603 + $0x170] sm:$0xff]
      %v1636 = vpack.c.bf16 %v1604, %v1604
      %v1637 = vpack.c.bf16 %v1605, %v1605
      %v1638 = vpack.c.bf16 %v1606, %v1606
      %v1639 = vpack.c.bf16 %v1607, %v1607
      %v1640 = vpack.c.bf16 %v1608, %v1608
      %v1641 = vpack.c.bf16 %v1609, %v1609
      %v1642 = vpack.c.bf16 %v1610, %v1610
      %v1643 = vpack.c.bf16 %v1611, %v1611
      %v1644 = vpack.c.bf16 %v1612, %v1612
      %v1645 = vpack.c.bf16 %v1613, %v1613
      %v1646 = vpack.c.bf16 %v1614, %v1614
      %v1647 = vpack.c.bf16 %v1615, %v1615
      %v1648 = vpack.c.bf16 %v1616, %v1616
      %v1649 = vpack.c.bf16 %v1617, %v1617
      %v1650 = vpack.c.bf16 %v1618, %v1618
      %v1651 = vpack.c.bf16 %v1619, %v1619
      %v1652 = vpack.c.bf16 %v1620, %v1620
      %v1653 = vpack.c.bf16 %v1621, %v1621
      %v1654 = vpack.c.bf16 %v1622, %v1622
      %v1655 = vpack.c.bf16 %v1623, %v1623
      %v1656 = vpack.c.bf16 %v1624, %v1624
      %v1657 = vpack.c.bf16 %v1625, %v1625
      %v1658 = vpack.c.bf16 %v1626, %v1626
      %v1659 = vpack.c.bf16 %v1627, %v1627
      %v1660 = vpack.c.bf16 %v1628, %v1628
      %v1661 = vpack.c.bf16 %v1629, %v1629
      %v1662 = vpack.c.bf16 %v1630, %v1630
      %v1663 = vpack.c.bf16 %v1631, %v1631
      %v1664 = vpack.c.bf16 %v1632, %v1632
      %v1665 = vpack.c.bf16 %v1633, %v1633
      %v1666 = vpack.c.bf16 %v1634, %v1634
      %v1667 = vpack.c.bf16 %v1635, %v1635
      %1700 = vrot.lane.b32.xlu0 %v1636, 48
      %v1701 = vpop.permute.xlu0 %1700
      %1702 = vrot.lane.b32.xlu0 %v1637, 48
      %v1703 = vpop.permute.xlu0 %1702
      %1704 = vrot.lane.b32.xlu0 %v1638, 48
      %v1705 = vpop.permute.xlu0 %1704
      %1706 = vrot.lane.b32.xlu0 %v1639, 48
      %v1707 = vpop.permute.xlu0 %1706
      %1708 = vrot.lane.b32.xlu0 %v1640, 48
      %v1709 = vpop.permute.xlu0 %1708
      %1710 = vrot.lane.b32.xlu0 %v1641, 48
      %v1711 = vpop.permute.xlu0 %1710
      %1712 = vrot.lane.b32.xlu0 %v1642, 48
      %v1713 = vpop.permute.xlu0 %1712
      %1714 = vrot.lane.b32.xlu0 %v1643, 48
      %v1715 = vpop.permute.xlu0 %1714
      %1716 = vrot.lane.b32.xlu0 %v1644, 48
      %v1717 = vpop.permute.xlu0 %1716
      %1718 = vrot.lane.b32.xlu0 %v1645, 48
      %v1719 = vpop.permute.xlu0 %1718
      %1720 = vrot.lane.b32.xlu0 %v1646, 48
      %v1721 = vpop.permute.xlu0 %1720
      %1722 = vrot.lane.b32.xlu0 %v1647, 48
      %v1723 = vpop.permute.xlu0 %1722
      %1724 = vrot.lane.b32.xlu0 %v1648, 48
      %v1725 = vpop.permute.xlu0 %1724
      %1726 = vrot.lane.b32.xlu0 %v1649, 48
      %v1727 = vpop.permute.xlu0 %1726
      %1728 = vrot.lane.b32.xlu0 %v1650, 48
      %v1729 = vpop.permute.xlu0 %1728
      %1730 = vrot.lane.b32.xlu0 %v1651, 48
      %v1731 = vpop.permute.xlu0 %1730
      %1732 = vrot.lane.b32.xlu0 %v1652, 48
      %v1733 = vpop.permute.xlu0 %1732
      %1734 = vrot.lane.b32.xlu0 %v1653, 48
      %v1735 = vpop.permute.xlu0 %1734
      %1736 = vrot.lane.b32.xlu0 %v1654, 48
      %v1737 = vpop.permute.xlu0 %1736
      %1738 = vrot.lane.b32.xlu0 %v1655, 48
      %v1739 = vpop.permute.xlu0 %1738
      %1740 = vrot.lane.b32.xlu0 %v1656, 48
      %v1741 = vpop.permute.xlu0 %1740
      %1742 = vrot.lane.b32.xlu0 %v1657, 48
      %v1743 = vpop.permute.xlu0 %1742
      %1744 = vrot.lane.b32.xlu0 %v1658, 48
      %v1745 = vpop.permute.xlu0 %1744
      %1746 = vrot.lane.b32.xlu0 %v1659, 48
      %v1747 = vpop.permute.xlu0 %1746
      %1748 = vrot.lane.b32.xlu0 %v1660, 48
      %v1749 = vpop.permute.xlu0 %1748
      %1750 = vrot.lane.b32.xlu0 %v1661, 48
      %v1751 = vpop.permute.xlu0 %1750
      %1752 = vrot.lane.b32.xlu0 %v1662, 48
      %v1753 = vpop.permute.xlu0 %1752
      %1754 = vrot.lane.b32.xlu0 %v1663, 48
      %v1755 = vpop.permute.xlu0 %1754
      %1756 = vrot.lane.b32.xlu0 %v1664, 48
      %v1757 = vpop.permute.xlu0 %1756
      %1758 = vrot.lane.b32.xlu0 %v1665, 48
      %v1759 = vpop.permute.xlu0 %1758
      %1760 = vrot.lane.b32.xlu0 %v1666, 48
      %v1761 = vpop.permute.xlu0 %1760
      %1762 = vrot.lane.b32.xlu0 %v1667, 48
      %v1763 = vpop.permute.xlu0 %1762
      %vm1796 = vcmask 454016
      %1797 = vst.msk [vmem:[#allocation3] sm:$0xf] %vm1796, %v1701
      %1798 = vst.msk [vmem:[#allocation3 + $0x4] sm:$0xf] %vm1796, %v1703
      %1799 = vst.msk [vmem:[#allocation3 + $0x8] sm:$0xf] %vm1796, %v1705
      %1800 = vst.msk [vmem:[#allocation3 + $0xc] sm:$0xf] %vm1796, %v1707
      %1801 = vst.msk [vmem:[#allocation3 + $0x10] sm:$0xf] %vm1796, %v1709
      %1802 = vst.msk [vmem:[#allocation3 + $0x14] sm:$0xf] %vm1796, %v1711
      %1803 = vst.msk [vmem:[#allocation3 + $0x18] sm:$0xf] %vm1796, %v1713
      %1804 = vst.msk [vmem:[#allocation3 + $0x1c] sm:$0xf] %vm1796, %v1715
      %1805 = vst.msk [vmem:[#allocation3 + $0x20] sm:$0xf] %vm1796, %v1717
      %1806 = vst.msk [vmem:[#allocation3 + $0x24] sm:$0xf] %vm1796, %v1719
      %1807 = vst.msk [vmem:[#allocation3 + $0x28] sm:$0xf] %vm1796, %v1721
      %1808 = vst.msk [vmem:[#allocation3 + $0x2c] sm:$0xf] %vm1796, %v1723
      %1809 = vst.msk [vmem:[#allocation3 + $0x30] sm:$0xf] %vm1796, %v1725
      %1810 = vst.msk [vmem:[#allocation3 + $0x34] sm:$0xf] %vm1796, %v1727
      %1811 = vst.msk [vmem:[#allocation3 + $0x38] sm:$0xf] %vm1796, %v1729
      %1812 = vst.msk [vmem:[#allocation3 + $0x3c] sm:$0xf] %vm1796, %v1731
      %1813 = vst.msk [vmem:[#allocation3 + $0x40] sm:$0xf] %vm1796, %v1733
      %1814 = vst.msk [vmem:[#allocation3 + $0x44] sm:$0xf] %vm1796, %v1735
      %1815 = vst.msk [vmem:[#allocation3 + $0x48] sm:$0xf] %vm1796, %v1737
      %1816 = vst.msk [vmem:[#allocation3 + $0x4c] sm:$0xf] %vm1796, %v1739
      %1817 = vst.msk [vmem:[#allocation3 + $0x50] sm:$0xf] %vm1796, %v1741
      %1818 = vst.msk [vmem:[#allocation3 + $0x54] sm:$0xf] %vm1796, %v1743
      %1819 = vst.msk [vmem:[#allocation3 + $0x58] sm:$0xf] %vm1796, %v1745
      %1820 = vst.msk [vmem:[#allocation3 + $0x5c] sm:$0xf] %vm1796, %v1747
      %1821 = vst.msk [vmem:[#allocation3 + $0x60] sm:$0xf] %vm1796, %v1749
      %1822 = vst.msk [vmem:[#allocation3 + $0x64] sm:$0xf] %vm1796, %v1751
      %1823 = vst.msk [vmem:[#allocation3 + $0x68] sm:$0xf] %vm1796, %v1753
      %1824 = vst.msk [vmem:[#allocation3 + $0x6c] sm:$0xf] %vm1796, %v1755
      %1825 = vst.msk [vmem:[#allocation3 + $0x70] sm:$0xf] %vm1796, %v1757
      %1826 = vst.msk [vmem:[#allocation3 + $0x74] sm:$0xf] %vm1796, %v1759
      %1827 = vst.msk [vmem:[#allocation3 + $0x78] sm:$0xf] %vm1796, %v1761
      %1828 = vst.msk [vmem:[#allocation3 + $0x7c] sm:$0xf] %vm1796, %v1763
      %v1829 = vld [vmem:[%s1603 + $0x1] sm:$0xff]
      %v1830 = vld [vmem:[%s1603 + $0x9] sm:$0xff]
      %v1831 = vld [vmem:[%s1603 + $0x19] sm:$0xff]
      %v1832 = vld [vmem:[%s1603 + $0x21] sm:$0xff]
      %v1833 = vld [vmem:[%s1603 + $0x31] sm:$0xff]
      %v1834 = vld [vmem:[%s1603 + $0x39] sm:$0xff]
      %v1835 = vld [vmem:[%s1603 + $0x49] sm:$0xff]
      %v1836 = vld [vmem:[%s1603 + $0x51] sm:$0xff]
      %v1837 = vld [vmem:[%s1603 + $0x61] sm:$0xff]
      %v1838 = vld [vmem:[%s1603 + $0x69] sm:$0xff]
      %v1839 = vld [vmem:[%s1603 + $0x79] sm:$0xff]
      %v1840 = vld [vmem:[%s1603 + $0x81] sm:$0xff]
      %v1841 = vld [vmem:[%s1603 + $0x91] sm:$0xff]
      %v1842 = vld [vmem:[%s1603 + $0x99] sm:$0xff]
      %v1843 = vld [vmem:[%s1603 + $0xa9] sm:$0xff]
      %v1844 = vld [vmem:[%s1603 + $0xb1] sm:$0xff]
      %v1845 = vld [vmem:[%s1603 + $0xc1] sm:$0xff]
      %v1846 = vld [vmem:[%s1603 + $0xc9] sm:$0xff]
      %v1847 = vld [vmem:[%s1603 + $0xd9] sm:$0xff]
      %v1848 = vld [vmem:[%s1603 + $0xe1] sm:$0xff]
      %v1849 = vld [vmem:[%s1603 + $0xf1] sm:$0xff]
      %v1850 = vld [vmem:[%s1603 + $0xf9] sm:$0xff]
      %v1851 = vld [vmem:[%s1603 + $0x109] sm:$0xff]
      %v1852 = vld [vmem:[%s1603 + $0x111] sm:$0xff]
      %v1853 = vld [vmem:[%s1603 + $0x121] sm:$0xff]
      %v1854 = vld [vmem:[%s1603 + $0x129] sm:$0xff]
      %v1855 = vld [vmem:[%s1603 + $0x139] sm:$0xff]
      %v1856 = vld [vmem:[%s1603 + $0x141] sm:$0xff]
      %v1857 = vld [vmem:[%s1603 + $0x151] sm:$0xff]
      %v1858 = vld [vmem:[%s1603 + $0x159] sm:$0xff]
      %v1859 = vld [vmem:[%s1603 + $0x169] sm:$0xff]
      %v1860 = vld [vmem:[%s1603 + $0x171] sm:$0xff]
      %v1861 = vpack.c.bf16 %v1829, %v1829
      %v1862 = vpack.c.bf16 %v1830, %v1830
      %v1863 = vpack.c.bf16 %v1831, %v1831
      %v1864 = vpack.c.bf16 %v1832, %v1832
      %v1865 = vpack.c.bf16 %v1833, %v1833
      %v1866 = vpack.c.bf16 %v1834, %v1834
      %v1867 = vpack.c.bf16 %v1835, %v1835
      %v1868 = vpack.c.bf16 %v1836, %v1836
      %v1869 = vpack.c.bf16 %v1837, %v1837
      %v1870 = vpack.c.bf16 %v1838, %v1838
      %v1871 = vpack.c.bf16 %v1839, %v1839
      %v1872 = vpack.c.bf16 %v1840, %v1840
      %v1873 = vpack.c.bf16 %v1841, %v1841
      %v1874 = vpack.c.bf16 %v1842, %v1842
      %v1875 = vpack.c.bf16 %v1843, %v1843
      %v1876 = vpack.c.bf16 %v1844, %v1844
      %v1877 = vpack.c.bf16 %v1845, %v1845
      %v1878 = vpack.c.bf16 %v1846, %v1846
      %v1879 = vpack.c.bf16 %v1847, %v1847
      %v1880 = vpack.c.bf16 %v1848, %v1848
      %v1881 = vpack.c.bf16 %v1849, %v1849
      %v1882 = vpack.c.bf16 %v1850, %v1850
      %v1883 = vpack.c.bf16 %v1851, %v1851
      %v1884 = vpack.c.bf16 %v1852, %v1852
      %v1885 = vpack.c.bf16 %v1853, %v1853
      %v1886 = vpack.c.bf16 %v1854, %v1854
      %v1887 = vpack.c.bf16 %v1855, %v1855
      %v1888 = vpack.c.bf16 %v1856, %v1856
      %v1889 = vpack.c.bf16 %v1857, %v1857
      %v1890 = vpack.c.bf16 %v1858, %v1858
      %v1891 = vpack.c.bf16 %v1859, %v1859
      %v1892 = vpack.c.bf16 %v1860, %v1860
      %1925 = vrot.lane.b32.xlu0 %v1861, 56
      %v1926 = vpop.permute.xlu0 %1925
      %1927 = vrot.lane.b32.xlu0 %v1862, 56
      %v1928 = vpop.permute.xlu0 %1927
      %1929 = vrot.lane.b32.xlu0 %v1863, 56
      %v1930 = vpop.permute.xlu0 %1929
      %1931 = vrot.lane.b32.xlu0 %v1864, 56
      %v1932 = vpop.permute.xlu0 %1931
      %1933 = vrot.lane.b32.xlu0 %v1865, 56
      %v1934 = vpop.permute.xlu0 %1933
      %1935 = vrot.lane.b32.xlu0 %v1866, 56
      %v1936 = vpop.permute.xlu0 %1935
      %1937 = vrot.lane.b32.xlu0 %v1867, 56
      %v1938 = vpop.permute.xlu0 %1937
      %1939 = vrot.lane.b32.xlu0 %v1868, 56
      %v1940 = vpop.permute.xlu0 %1939
      %1941 = vrot.lane.b32.xlu0 %v1869, 56
      %v1942 = vpop.permute.xlu0 %1941
      %1943 = vrot.lane.b32.xlu0 %v1870, 56
      %v1944 = vpop.permute.xlu0 %1943
      %1945 = vrot.lane.b32.xlu0 %v1871, 56
      %v1946 = vpop.permute.xlu0 %1945
      %1947 = vrot.lane.b32.xlu0 %v1872, 56
      %v1948 = vpop.permute.xlu0 %1947
      %1949 = vrot.lane.b32.xlu0 %v1873, 56
      %v1950 = vpop.permute.xlu0 %1949
      %1951 = vrot.lane.b32.xlu0 %v1874, 56
      %v1952 = vpop.permute.xlu0 %1951
      %1953 = vrot.lane.b32.xlu0 %v1875, 56
      %v1954 = vpop.permute.xlu0 %1953
      %1955 = vrot.lane.b32.xlu0 %v1876, 56
      %v1956 = vpop.permute.xlu0 %1955
      %1957 = vrot.lane.b32.xlu0 %v1877, 56
      %v1958 = vpop.permute.xlu0 %1957
      %1959 = vrot.lane.b32.xlu0 %v1878, 56
      %v1960 = vpop.permute.xlu0 %1959
      %1961 = vrot.lane.b32.xlu0 %v1879, 56
      %v1962 = vpop.permute.xlu0 %1961
      %1963 = vrot.lane.b32.xlu0 %v1880, 56
      %v1964 = vpop.permute.xlu0 %1963
      %1965 = vrot.lane.b32.xlu0 %v1881, 56
      %v1966 = vpop.permute.xlu0 %1965
      %1967 = vrot.lane.b32.xlu0 %v1882, 56
      %v1968 = vpop.permute.xlu0 %1967
      %1969 = vrot.lane.b32.xlu0 %v1883, 56
      %v1970 = vpop.permute.xlu0 %1969
      %1971 = vrot.lane.b32.xlu0 %v1884, 56
      %v1972 = vpop.permute.xlu0 %1971
      %1973 = vrot.lane.b32.xlu0 %v1885, 56
      %v1974 = vpop.permute.xlu0 %1973
      %1975 = vrot.lane.b32.xlu0 %v1886, 56
      %v1976 = vpop.permute.xlu0 %1975
      %1977 = vrot.lane.b32.xlu0 %v1887, 56
      %v1978 = vpop.permute.xlu0 %1977
      %1979 = vrot.lane.b32.xlu0 %v1888, 56
      %v1980 = vpop.permute.xlu0 %1979
      %1981 = vrot.lane.b32.xlu0 %v1889, 56
      %v1982 = vpop.permute.xlu0 %1981
      %1983 = vrot.lane.b32.xlu0 %v1890, 56
      %v1984 = vpop.permute.xlu0 %1983
      %1985 = vrot.lane.b32.xlu0 %v1891, 56
      %v1986 = vpop.permute.xlu0 %1985
      %1987 = vrot.lane.b32.xlu0 %v1892, 56
      %v1988 = vpop.permute.xlu0 %1987
      %vm2021 = vcmask 519616
      %2022 = vst.msk [vmem:[#allocation3] sm:$0xf] %vm2021, %v1926
      %2023 = vst.msk [vmem:[#allocation3 + $0x4] sm:$0xf] %vm2021, %v1928
      %2024 = vst.msk [vmem:[#allocation3 + $0x8] sm:$0xf] %vm2021, %v1930
      %2025 = vst.msk [vmem:[#allocation3 + $0xc] sm:$0xf] %vm2021, %v1932
      %2026 = vst.msk [vmem:[#allocation3 + $0x10] sm:$0xf] %vm2021, %v1934
      %2027 = vst.msk [vmem:[#allocation3 + $0x14] sm:$0xf] %vm2021, %v1936
      %2028 = vst.msk [vmem:[#allocation3 + $0x18] sm:$0xf] %vm2021, %v1938
      %2029 = vst.msk [vmem:[#allocation3 + $0x1c] sm:$0xf] %vm2021, %v1940
      %2030 = vst.msk [vmem:[#allocation3 + $0x20] sm:$0xf] %vm2021, %v1942
      %2031 = vst.msk [vmem:[#allocation3 + $0x24] sm:$0xf] %vm2021, %v1944
      %2032 = vst.msk [vmem:[#allocation3 + $0x28] sm:$0xf] %vm2021, %v1946
      %2033 = vst.msk [vmem:[#allocation3 + $0x2c] sm:$0xf] %vm2021, %v1948
      %2034 = vst.msk [vmem:[#allocation3 + $0x30] sm:$0xf] %vm2021, %v1950
      %2035 = vst.msk [vmem:[#allocation3 + $0x34] sm:$0xf] %vm2021, %v1952
      %2036 = vst.msk [vmem:[#allocation3 + $0x38] sm:$0xf] %vm2021, %v1954
      %2037 = vst.msk [vmem:[#allocation3 + $0x3c] sm:$0xf] %vm2021, %v1956
      %2038 = vst.msk [vmem:[#allocation3 + $0x40] sm:$0xf] %vm2021, %v1958
      %2039 = vst.msk [vmem:[#allocation3 + $0x44] sm:$0xf] %vm2021, %v1960
      %2040 = vst.msk [vmem:[#allocation3 + $0x48] sm:$0xf] %vm2021, %v1962
      %2041 = vst.msk [vmem:[#allocation3 + $0x4c] sm:$0xf] %vm2021, %v1964
      %2042 = vst.msk [vmem:[#allocation3 + $0x50] sm:$0xf] %vm2021, %v1966
      %2043 = vst.msk [vmem:[#allocation3 + $0x54] sm:$0xf] %vm2021, %v1968
      %2044 = vst.msk [vmem:[#allocation3 + $0x58] sm:$0xf] %vm2021, %v1970
      %2045 = vst.msk [vmem:[#allocation3 + $0x5c] sm:$0xf] %vm2021, %v1972
      %2046 = vst.msk [vmem:[#allocation3 + $0x60] sm:$0xf] %vm2021, %v1974
      %2047 = vst.msk [vmem:[#allocation3 + $0x64] sm:$0xf] %vm2021, %v1976
      %2048 = vst.msk [vmem:[#allocation3 + $0x68] sm:$0xf] %vm2021, %v1978
      %2049 = vst.msk [vmem:[#allocation3 + $0x6c] sm:$0xf] %vm2021, %v1980
      %2050 = vst.msk [vmem:[#allocation3 + $0x70] sm:$0xf] %vm2021, %v1982
      %2051 = vst.msk [vmem:[#allocation3 + $0x74] sm:$0xf] %vm2021, %v1984
      %2052 = vst.msk [vmem:[#allocation3 + $0x78] sm:$0xf] %vm2021, %v1986
      %2053 = vst.msk [vmem:[#allocation3 + $0x7c] sm:$0xf] %vm2021, %v1988
      %v2054 = vld [vmem:[%s1603 + $0x2] sm:$0xff]
      %v2055 = vld [vmem:[%s1603 + $0xa] sm:$0xff]
      %v2056 = vld [vmem:[%s1603 + $0x1a] sm:$0xff]
      %v2057 = vld [vmem:[%s1603 + $0x22] sm:$0xff]
      %v2058 = vld [vmem:[%s1603 + $0x32] sm:$0xff]
      %v2059 = vld [vmem:[%s1603 + $0x3a] sm:$0xff]
      %v2060 = vld [vmem:[%s1603 + $0x4a] sm:$0xff]
      %v2061 = vld [vmem:[%s1603 + $0x52] sm:$0xff]
      %v2062 = vld [vmem:[%s1603 + $0x62] sm:$0xff]
      %v2063 = vld [vmem:[%s1603 + $0x6a] sm:$0xff]
      %v2064 = vld [vmem:[%s1603 + $0x7a] sm:$0xff]
      %v2065 = vld [vmem:[%s1603 + $0x82] sm:$0xff]
      %v2066 = vld [vmem:[%s1603 + $0x92] sm:$0xff]
      %v2067 = vld [vmem:[%s1603 + $0x9a] sm:$0xff]
      %v2068 = vld [vmem:[%s1603 + $0xaa] sm:$0xff]
      %v2069 = vld [vmem:[%s1603 + $0xb2] sm:$0xff]
      %v2070 = vld [vmem:[%s1603 + $0xc2] sm:$0xff]
      %v2071 = vld [vmem:[%s1603 + $0xca] sm:$0xff]
      %v2072 = vld [vmem:[%s1603 + $0xda] sm:$0xff]
      %v2073 = vld [vmem:[%s1603 + $0xe2] sm:$0xff]
      %v2074 = vld [vmem:[%s1603 + $0xf2] sm:$0xff]
      %v2075 = vld [vmem:[%s1603 + $0xfa] sm:$0xff]
      %v2076 = vld [vmem:[%s1603 + $0x10a] sm:$0xff]
      %v2077 = vld [vmem:[%s1603 + $0x112] sm:$0xff]
      %v2078 = vld [vmem:[%s1603 + $0x122] sm:$0xff]
      %v2079 = vld [vmem:[%s1603 + $0x12a] sm:$0xff]
      %v2080 = vld [vmem:[%s1603 + $0x13a] sm:$0xff]
      %v2081 = vld [vmem:[%s1603 + $0x142] sm:$0xff]
      %v2082 = vld [vmem:[%s1603 + $0x152] sm:$0xff]
      %v2083 = vld [vmem:[%s1603 + $0x15a] sm:$0xff]
      %v2084 = vld [vmem:[%s1603 + $0x16a] sm:$0xff]
      %v2085 = vld [vmem:[%s1603 + $0x172] sm:$0xff]
      %v2086 = vpack.c.bf16 %v2054, %v2054
      %v2087 = vpack.c.bf16 %v2055, %v2055
      %v2088 = vpack.c.bf16 %v2056, %v2056
      %v2089 = vpack.c.bf16 %v2057, %v2057
      %v2090 = vpack.c.bf16 %v2058, %v2058
      %v2091 = vpack.c.bf16 %v2059, %v2059
      %v2092 = vpack.c.bf16 %v2060, %v2060
      %v2093 = vpack.c.bf16 %v2061, %v2061
      %v2094 = vpack.c.bf16 %v2062, %v2062
      %v2095 = vpack.c.bf16 %v2063, %v2063
      %v2096 = vpack.c.bf16 %v2064, %v2064
      %v2097 = vpack.c.bf16 %v2065, %v2065
      %v2098 = vpack.c.bf16 %v2066, %v2066
      %v2099 = vpack.c.bf16 %v2067, %v2067
      %v2100 = vpack.c.bf16 %v2068, %v2068
      %v2101 = vpack.c.bf16 %v2069, %v2069
      %v2102 = vpack.c.bf16 %v2070, %v2070
      %v2103 = vpack.c.bf16 %v2071, %v2071
      %v2104 = vpack.c.bf16 %v2072, %v2072
      %v2105 = vpack.c.bf16 %v2073, %v2073
      %v2106 = vpack.c.bf16 %v2074, %v2074
      %v2107 = vpack.c.bf16 %v2075, %v2075
      %v2108 = vpack.c.bf16 %v2076, %v2076
      %v2109 = vpack.c.bf16 %v2077, %v2077
      %v2110 = vpack.c.bf16 %v2078, %v2078
      %v2111 = vpack.c.bf16 %v2079, %v2079
      %v2112 = vpack.c.bf16 %v2080, %v2080
      %v2113 = vpack.c.bf16 %v2081, %v2081
      %v2114 = vpack.c.bf16 %v2082, %v2082
      %v2115 = vpack.c.bf16 %v2083, %v2083
      %v2116 = vpack.c.bf16 %v2084, %v2084
      %v2117 = vpack.c.bf16 %v2085, %v2085
      %2150 = vrot.lane.b32.xlu0 %v2086, 64
      %v2151 = vpop.permute.xlu0 %2150
      %2152 = vrot.lane.b32.xlu0 %v2087, 64
      %v2153 = vpop.permute.xlu0 %2152
      %2154 = vrot.lane.b32.xlu0 %v2088, 64
      %v2155 = vpop.permute.xlu0 %2154
      %2156 = vrot.lane.b32.xlu0 %v2089, 64
      %v2157 = vpop.permute.xlu0 %2156
      %2158 = vrot.lane.b32.xlu0 %v2090, 64
      %v2159 = vpop.permute.xlu0 %2158
      %2160 = vrot.lane.b32.xlu0 %v2091, 64
      %v2161 = vpop.permute.xlu0 %2160
      %2162 = vrot.lane.b32.xlu0 %v2092, 64
      %v2163 = vpop.permute.xlu0 %2162
      %2164 = vrot.lane.b32.xlu0 %v2093, 64
      %v2165 = vpop.permute.xlu0 %2164
      %2166 = vrot.lane.b32.xlu0 %v2094, 64
      %v2167 = vpop.permute.xlu0 %2166
      %2168 = vrot.lane.b32.xlu0 %v2095, 64
      %v2169 = vpop.permute.xlu0 %2168
      %2170 = vrot.lane.b32.xlu0 %v2096, 64
      %v2171 = vpop.permute.xlu0 %2170
      %2172 = vrot.lane.b32.xlu0 %v2097, 64
      %v2173 = vpop.permute.xlu0 %2172
      %2174 = vrot.lane.b32.xlu0 %v2098, 64
      %v2175 = vpop.permute.xlu0 %2174
      %2176 = vrot.lane.b32.xlu0 %v2099, 64
      %v2177 = vpop.permute.xlu0 %2176
      %2178 = vrot.lane.b32.xlu0 %v2100, 64
      %v2179 = vpop.permute.xlu0 %2178
      %2180 = vrot.lane.b32.xlu0 %v2101, 64
      %v2181 = vpop.permute.xlu0 %2180
      %2182 = vrot.lane.b32.xlu0 %v2102, 64
      %v2183 = vpop.permute.xlu0 %2182
      %2184 = vrot.lane.b32.xlu0 %v2103, 64
      %v2185 = vpop.permute.xlu0 %2184
      %2186 = vrot.lane.b32.xlu0 %v2104, 64
      %v2187 = vpop.permute.xlu0 %2186
      %2188 = vrot.lane.b32.xlu0 %v2105, 64
      %v2189 = vpop.permute.xlu0 %2188
      %2190 = vrot.lane.b32.xlu0 %v2106, 64
      %v2191 = vpop.permute.xlu0 %2190
      %2192 = vrot.lane.b32.xlu0 %v2107, 64
      %v2193 = vpop.permute.xlu0 %2192
      %2194 = vrot.lane.b32.xlu0 %v2108, 64
      %v2195 = vpop.permute.xlu0 %2194
      %2196 = vrot.lane.b32.xlu0 %v2109, 64
      %v2197 = vpop.permute.xlu0 %2196
      %2198 = vrot.lane.b32.xlu0 %v2110, 64
      %v2199 = vpop.permute.xlu0 %2198
      %2200 = vrot.lane.b32.xlu0 %v2111, 64
      %v2201 = vpop.permute.xlu0 %2200
      %2202 = vrot.lane.b32.xlu0 %v2112, 64
      %v2203 = vpop.permute.xlu0 %2202
      %2204 = vrot.lane.b32.xlu0 %v2113, 64
      %v2205 = vpop.permute.xlu0 %2204
      %2206 = vrot.lane.b32.xlu0 %v2114, 64
      %v2207 = vpop.permute.xlu0 %2206
      %2208 = vrot.lane.b32.xlu0 %v2115, 64
      %v2209 = vpop.permute.xlu0 %2208
      %2210 = vrot.lane.b32.xlu0 %v2116, 64
      %v2211 = vpop.permute.xlu0 %2210
      %2212 = vrot.lane.b32.xlu0 %v2117, 64
      %v2213 = vpop.permute.xlu0 %2212
      %vm2246 = vcmask 585216
      %2247 = vst.msk [vmem:[#allocation3] sm:$0xf] %vm2246, %v2151
      %2248 = vst.msk [vmem:[#allocation3 + $0x4] sm:$0xf] %vm2246, %v2153
      %2249 = vst.msk [vmem:[#allocation3 + $0x8] sm:$0xf] %vm2246, %v2155
      %2250 = vst.msk [vmem:[#allocation3 + $0xc] sm:$0xf] %vm2246, %v2157
      %2251 = vst.msk [vmem:[#allocation3 + $0x10] sm:$0xf] %vm2246, %v2159
      %2252 = vst.msk [vmem:[#allocation3 + $0x14] sm:$0xf] %vm2246, %v2161
      %2253 = vst.msk [vmem:[#allocation3 + $0x18] sm:$0xf] %vm2246, %v2163
      %2254 = vst.msk [vmem:[#allocation3 + $0x1c] sm:$0xf] %vm2246, %v2165
      %2255 = vst.msk [vmem:[#allocation3 + $0x20] sm:$0xf] %vm2246, %v2167
      %2256 = vst.msk [vmem:[#allocation3 + $0x24] sm:$0xf] %vm2246, %v2169
      %2257 = vst.msk [vmem:[#allocation3 + $0x28] sm:$0xf] %vm2246, %v2171
      %2258 = vst.msk [vmem:[#allocation3 + $0x2c] sm:$0xf] %vm2246, %v2173
      %2259 = vst.msk [vmem:[#allocation3 + $0x30] sm:$0xf] %vm2246, %v2175
      %2260 = vst.msk [vmem:[#allocation3 + $0x34] sm:$0xf] %vm2246, %v2177
      %2261 = vst.msk [vmem:[#allocation3 + $0x38] sm:$0xf] %vm2246, %v2179
      %2262 = vst.msk [vmem:[#allocation3 + $0x3c] sm:$0xf] %vm2246, %v2181
      %2263 = vst.msk [vmem:[#allocation3 + $0x40] sm:$0xf] %vm2246, %v2183
      %2264 = vst.msk [vmem:[#allocation3 + $0x44] sm:$0xf] %vm2246, %v2185
      %2265 = vst.msk [vmem:[#allocation3 + $0x48] sm:$0xf] %vm2246, %v2187
      %2266 = vst.msk [vmem:[#allocation3 + $0x4c] sm:$0xf] %vm2246, %v2189
      %2267 = vst.msk [vmem:[#allocation3 + $0x50] sm:$0xf] %vm2246, %v2191
      %2268 = vst.msk [vmem:[#allocation3 + $0x54] sm:$0xf] %vm2246, %v2193
      %2269 = vst.msk [vmem:[#allocation3 + $0x58] sm:$0xf] %vm2246, %v2195
      %2270 = vst.msk [vmem:[#allocation3 + $0x5c] sm:$0xf] %vm2246, %v2197
      %2271 = vst.msk [vmem:[#allocation3 + $0x60] sm:$0xf] %vm2246, %v2199
      %2272 = vst.msk [vmem:[#allocation3 + $0x64] sm:$0xf] %vm2246, %v2201
      %2273 = vst.msk [vmem:[#allocation3 + $0x68] sm:$0xf] %vm2246, %v2203
      %2274 = vst.msk [vmem:[#allocation3 + $0x6c] sm:$0xf] %vm2246, %v2205
      %2275 = vst.msk [vmem:[#allocation3 + $0x70] sm:$0xf] %vm2246, %v2207
      %2276 = vst.msk [vmem:[#allocation3 + $0x74] sm:$0xf] %vm2246, %v2209
      %2277 = vst.msk [vmem:[#allocation3 + $0x78] sm:$0xf] %vm2246, %v2211
      %2278 = vst.msk [vmem:[#allocation3 + $0x7c] sm:$0xf] %vm2246, %v2213
      %v2279 = vld [vmem:[#allocation3] sm:$0xf]
      %v2280 = vld [vmem:[#allocation3 + $0x4] sm:$0xf]
      %v2281 = vld [vmem:[#allocation3 + $0x8] sm:$0xf]
      %v2282 = vld [vmem:[#allocation3 + $0xc] sm:$0xf]
      %v2283 = vld [vmem:[#allocation3 + $0x10] sm:$0xf]
      %v2284 = vld [vmem:[#allocation3 + $0x14] sm:$0xf]
      %v2285 = vld [vmem:[#allocation3 + $0x18] sm:$0xf]
      %v2286 = vld [vmem:[#allocation3 + $0x1c] sm:$0xf]
      %v2287 = vld [vmem:[#allocation3 + $0x20] sm:$0xf]
      %v2288 = vld [vmem:[#allocation3 + $0x24] sm:$0xf]
      %v2289 = vld [vmem:[#allocation3 + $0x28] sm:$0xf]
      %v2290 = vld [vmem:[#allocation3 + $0x2c] sm:$0xf]
      %v2291 = vld [vmem:[#allocation3 + $0x30] sm:$0xf]
      %v2292 = vld [vmem:[#allocation3 + $0x34] sm:$0xf]
      %v2293 = vld [vmem:[#allocation3 + $0x38] sm:$0xf]
      %v2294 = vld [vmem:[#allocation3 + $0x3c] sm:$0xf]
      %v2295 = vld [vmem:[#allocation3 + $0x40] sm:$0xf]
      %v2296 = vld [vmem:[#allocation3 + $0x44] sm:$0xf]
      %v2297 = vld [vmem:[#allocation3 + $0x48] sm:$0xf]
      %v2298 = vld [vmem:[#allocation3 + $0x4c] sm:$0xf]
      %v2299 = vld [vmem:[#allocation3 + $0x50] sm:$0xf]
      %v2300 = vld [vmem:[#allocation3 + $0x54] sm:$0xf]
      %v2301 = vld [vmem:[#allocation3 + $0x58] sm:$0xf]
      %v2302 = vld [vmem:[#allocation3 + $0x5c] sm:$0xf]
      %v2303 = vld [vmem:[#allocation3 + $0x60] sm:$0xf]
      %v2304 = vld [vmem:[#allocation3 + $0x64] sm:$0xf]
      %v2305 = vld [vmem:[#allocation3 + $0x68] sm:$0xf]
      %v2306 = vld [vmem:[#allocation3 + $0x6c] sm:$0xf]
      %v2307 = vld [vmem:[#allocation3 + $0x70] sm:$0xf]
      %v2308 = vld [vmem:[#allocation3 + $0x74] sm:$0xf]
      %v2309 = vld [vmem:[#allocation3 + $0x78] sm:$0xf]
      %v2310 = vld [vmem:[#allocation3 + $0x7c] sm:$0xf]
      %v2311 = vld [vmem:[%s3] sm:$0xf]
      %v2312 = vld [vmem:[%s3 + $0x4] sm:$0xf]
      %v2313 = vld [vmem:[%s3 + $0x8] sm:$0xf]
      %v2314 = vld [vmem:[%s3 + $0xc] sm:$0xf]
      %v2315 = vld [vmem:[%s3 + $0x10] sm:$0xf]
      %v2316 = vld [vmem:[%s3 + $0x14] sm:$0xf]
      %v2317 = vld [vmem:[%s3 + $0x18] sm:$0xf]
      %v2318 = vld [vmem:[%s3 + $0x1c] sm:$0xf]
      %v2319 = vld [vmem:[%s3 + $0x20] sm:$0xf]
      %v2352 = vunpack.c.l.b16 %v2279
      %v2353 = vunpack.c.l.b16 %v2280
      %v2354 = vunpack.c.l.b16 %v2281
      %v2355 = vunpack.c.l.b16 %v2282
      %v2356 = vunpack.c.l.b16 %v2283
      %v2357 = vunpack.c.l.b16 %v2284
      %v2358 = vunpack.c.l.b16 %v2285
      %v2359 = vunpack.c.l.b16 %v2286
      %v2360 = vunpack.c.l.b16 %v2287
      %v2361 = vunpack.c.l.b16 %v2288
      %v2362 = vunpack.c.l.b16 %v2289
      %v2363 = vunpack.c.l.b16 %v2290
      %v2364 = vunpack.c.l.b16 %v2291
      %v2365 = vunpack.c.l.b16 %v2292
      %v2366 = vunpack.c.l.b16 %v2293
      %v2367 = vunpack.c.l.b16 %v2294
      %v2368 = vunpack.c.l.b16 %v2295
      %v2369 = vunpack.c.l.b16 %v2296
      %v2370 = vunpack.c.l.b16 %v2297
      %v2371 = vunpack.c.l.b16 %v2298
      %v2372 = vunpack.c.l.b16 %v2299
      %v2373 = vunpack.c.l.b16 %v2300
      %v2374 = vunpack.c.l.b16 %v2301
      %v2375 = vunpack.c.l.b16 %v2302
      %v2376 = vunpack.c.l.b16 %v2303
      %v2377 = vunpack.c.l.b16 %v2304
      %v2378 = vunpack.c.l.b16 %v2305
      %v2379 = vunpack.c.l.b16 %v2306
      %v2380 = vunpack.c.l.b16 %v2307
      %v2381 = vunpack.c.l.b16 %v2308
      %v2382 = vunpack.c.l.b16 %v2309
      %v2383 = vunpack.c.l.b16 %v2310
      %v2384 = vpack.c.b16 %v2353, %v2352
      %v2385 = vpack.c.b16 %v2355, %v2354
      %v2386 = vpack.c.b16 %v2357, %v2356
      %v2387 = vpack.c.b16 %v2359, %v2358
      %v2388 = vpack.c.b16 %v2361, %v2360
      %v2389 = vpack.c.b16 %v2363, %v2362
      %v2390 = vpack.c.b16 %v2365, %v2364
      %v2391 = vpack.c.b16 %v2367, %v2366
      %v2392 = vpack.c.b16 %v2369, %v2368
      %v2393 = vpack.c.b16 %v2371, %v2370
      %v2394 = vpack.c.b16 %v2373, %v2372
      %v2395 = vpack.c.b16 %v2375, %v2374
      %v2396 = vpack.c.b16 %v2377, %v2376
      %v2397 = vpack.c.b16 %v2379, %v2378
      %v2398 = vpack.c.b16 %v2381, %v2380
      %v2399 = vpack.c.b16 %v2383, %v2382
      %v2409 = vunpack.c.l.b16 %v2311
      %v2410 = vunpack.c.l.b16 %v2312
      %v2411 = vunpack.c.l.b16 %v2313
      %v2412 = vunpack.c.l.b16 %v2314
      %v2413 = vunpack.c.l.b16 %v2315
      %v2414 = vunpack.c.l.b16 %v2316
      %v2415 = vunpack.c.l.b16 %v2317
      %v2416 = vunpack.c.l.b16 %v2318
      %v2417 = vunpack.c.l.b16 %v2319
      %v2418 = vpack.c.b16 %v2410, %v2409
      %v2419 = vpack.c.b16 %v2412, %v2411
      %v2420 = vpack.c.b16 %v2414, %v2413
      %v2421 = vpack.c.b16 %v2416, %v2415
      %v2422 = vpack.c.b16 %v2417, %v2417
      %vm2427 = vcmask 588800
      %v2429 = vsel %vm2427, %v2384, 0
      %v2432 = vsel %vm2427, %v2385, 0
      %v2435 = vsel %vm2427, %v2386, 0
      %v2438 = vsel %vm2427, %v2387, 0
      %v2441 = vsel %vm2427, %v2388, 0
      %v2444 = vsel %vm2427, %v2389, 0
      %v2447 = vsel %vm2427, %v2390, 0
      %v2450 = vsel %vm2427, %v2391, 0
      %v2453 = vsel %vm2427, %v2392, 0
      %v2456 = vsel %vm2427, %v2393, 0
      %v2459 = vsel %vm2427, %v2394, 0
      %v2462 = vsel %vm2427, %v2395, 0
      %v2465 = vsel %vm2427, %v2396, 0
      %v2468 = vsel %vm2427, %v2397, 0
      %v2471 = vsel %vm2427, %v2398, 0
      %v2474 = vsel %vm2427, %v2399, 0
      %vm2476 = vcmask 1043456
      %v2478 = vsel %vm2476, %v2422, 0
      %2480 = vmatpush.bf16.msra.mxu0 0
      %2481 = vmatpush.bf16.msra.mxu0 0
      %2482 = vmatpush.bf16.msra.mxu0 0
      %2483 = vmatpush.bf16.msra.mxu0 %v2478
      %2484 = vmatpush.bf16.msra.mxu0 %v2421
      %2485 = vmatpush.bf16.msra.mxu0 %v2420
      %2486 = vmatpush.bf16.msra.mxu0 %v2419
      %2487 = vmatpush.bf16.msra.mxu0 %v2418
      %2488 = vmatmul.bf16.gmra.mxu0 %v2429
      %v2489 = vpop.f32.mrf.mxu0
      %v2490 = vadd.f32 0.0, %v2489
      %v2491 = vpop.f32.mrf.mxu0
      %v2492 = vadd.f32 0.0, %v2491
      %2493 = vmatmul.bf16.gmra.mxu0 %v2432
      %v2494 = vpop.f32.mrf.mxu0
      %v2495 = vadd.f32 0.0, %v2494
      %v2496 = vpop.f32.mrf.mxu0
      %v2497 = vadd.f32 0.0, %v2496
      %2498 = vmatmul.bf16.gmra.mxu0 %v2435
      %v2499 = vpop.f32.mrf.mxu0
      %v2500 = vadd.f32 0.0, %v2499
      %v2501 = vpop.f32.mrf.mxu0
      %v2502 = vadd.f32 0.0, %v2501
      %2503 = vmatmul.bf16.gmra.mxu0 %v2438
      %v2504 = vpop.f32.mrf.mxu0
      %v2505 = vadd.f32 0.0, %v2504
      %v2506 = vpop.f32.mrf.mxu0
      %v2507 = vadd.f32 0.0, %v2506
      %2508 = vmatmul.bf16.gmra.mxu0 %v2441
      %v2509 = vpop.f32.mrf.mxu0
      %v2510 = vadd.f32 0.0, %v2509
      %v2511 = vpop.f32.mrf.mxu0
      %v2512 = vadd.f32 0.0, %v2511
      %2513 = vmatmul.bf16.gmra.mxu0 %v2444
      %v2514 = vpop.f32.mrf.mxu0
      %v2515 = vadd.f32 0.0, %v2514
      %v2516 = vpop.f32.mrf.mxu0
      %v2517 = vadd.f32 0.0, %v2516
      %2518 = vmatmul.bf16.gmra.mxu0 %v2447
      %v2519 = vpop.f32.mrf.mxu0
      %v2520 = vadd.f32 0.0, %v2519
      %v2521 = vpop.f32.mrf.mxu0
      %v2522 = vadd.f32 0.0, %v2521
      %2523 = vmatmul.bf16.gmra.mxu0 %v2450
      %v2524 = vpop.f32.mrf.mxu0
      %v2525 = vadd.f32 0.0, %v2524
      %v2526 = vpop.f32.mrf.mxu0
      %v2527 = vadd.f32 0.0, %v2526
      %2528 = vmatmul.bf16.gmra.mxu0 %v2453
      %v2529 = vpop.f32.mrf.mxu0
      %v2530 = vadd.f32 0.0, %v2529
      %v2531 = vpop.f32.mrf.mxu0
      %v2532 = vadd.f32 0.0, %v2531
      %2533 = vmatmul.bf16.gmra.mxu0 %v2456
      %v2534 = vpop.f32.mrf.mxu0
      %v2535 = vadd.f32 0.0, %v2534
      %v2536 = vpop.f32.mrf.mxu0
      %v2537 = vadd.f32 0.0, %v2536
      %2538 = vmatmul.bf16.gmra.mxu0 %v2459
      %v2539 = vpop.f32.mrf.mxu0
      %v2540 = vadd.f32 0.0, %v2539
      %v2541 = vpop.f32.mrf.mxu0
      %v2542 = vadd.f32 0.0, %v2541
      %2543 = vmatmul.bf16.gmra.mxu0 %v2462
      %v2544 = vpop.f32.mrf.mxu0
      %v2545 = vadd.f32 0.0, %v2544
      %v2546 = vpop.f32.mrf.mxu0
      %v2547 = vadd.f32 0.0, %v2546
      %2548 = vmatmul.bf16.gmra.mxu0 %v2465
      %v2549 = vpop.f32.mrf.mxu0
      %v2550 = vadd.f32 0.0, %v2549
      %v2551 = vpop.f32.mrf.mxu0
      %v2552 = vadd.f32 0.0, %v2551
      %2553 = vmatmul.bf16.gmra.mxu0 %v2468
      %v2554 = vpop.f32.mrf.mxu0
      %v2555 = vadd.f32 0.0, %v2554
      %v2556 = vpop.f32.mrf.mxu0
      %v2557 = vadd.f32 0.0, %v2556
      %2558 = vmatmul.bf16.gmra.mxu0 %v2471
      %v2559 = vpop.f32.mrf.mxu0
      %v2560 = vadd.f32 0.0, %v2559
      %v2561 = vpop.f32.mrf.mxu0
      %v2562 = vadd.f32 0.0, %v2561
      %2563 = vmatmul.bf16.gmra.mxu0 %v2474
      %v2564 = vpop.f32.mrf.mxu0
      %v2565 = vadd.f32 0.0, %v2564
      %v2566 = vpop.f32.mrf.mxu0
      %v2567 = vadd.f32 0.0, %v2566
      %2568 = vdwg.mxu0
      %v2569 = vpack.c.bf16 %v2490, %v2490
      %v2570 = vpack.c.bf16 %v2492, %v2492
      %v2571 = vpack.c.bf16 %v2495, %v2495
      %v2572 = vpack.c.bf16 %v2497, %v2497
      %v2573 = vpack.c.bf16 %v2500, %v2500
      %v2574 = vpack.c.bf16 %v2502, %v2502
      %v2575 = vpack.c.bf16 %v2505, %v2505
      %v2576 = vpack.c.bf16 %v2507, %v2507
      %v2577 = vpack.c.bf16 %v2510, %v2510
      %v2578 = vpack.c.bf16 %v2512, %v2512
      %v2579 = vpack.c.bf16 %v2515, %v2515
      %v2580 = vpack.c.bf16 %v2517, %v2517
      %v2581 = vpack.c.bf16 %v2520, %v2520
      %v2582 = vpack.c.bf16 %v2522, %v2522
      %v2583 = vpack.c.bf16 %v2525, %v2525
      %v2584 = vpack.c.bf16 %v2527, %v2527
      %v2585 = vpack.c.bf16 %v2530, %v2530
      %v2586 = vpack.c.bf16 %v2532, %v2532
      %v2587 = vpack.c.bf16 %v2535, %v2535
      %v2588 = vpack.c.bf16 %v2537, %v2537
      %v2589 = vpack.c.bf16 %v2540, %v2540
      %v2590 = vpack.c.bf16 %v2542, %v2542
      %v2591 = vpack.c.bf16 %v2545, %v2545
      %v2592 = vpack.c.bf16 %v2547, %v2547
      %v2593 = vpack.c.bf16 %v2550, %v2550
      %v2594 = vpack.c.bf16 %v2552, %v2552
      %v2595 = vpack.c.bf16 %v2555, %v2555
      %v2596 = vpack.c.bf16 %v2557, %v2557
      %v2597 = vpack.c.bf16 %v2560, %v2560
      %v2598 = vpack.c.bf16 %v2562, %v2562
      %v2599 = vpack.c.bf16 %v2565, %v2565
      %v2600 = vpack.c.bf16 %v2567, %v2567
      %2601 = vst.msk [vmem:[%s262] sm:$0xf] %vm445, %v2569
      %2602 = vst.msk [vmem:[%s262 + $0x4] sm:$0xf] %vm445, %v2570
      %2603 = vst.msk [vmem:[%s262 + $0x8] sm:$0xf] %vm445, %v2571
      %2604 = vst.msk [vmem:[%s262 + $0xc] sm:$0xf] %vm445, %v2572
      %2605 = vst.msk [vmem:[%s262 + $0x10] sm:$0xf] %vm445, %v2573
      %2606 = vst.msk [vmem:[%s262 + $0x14] sm:$0xf] %vm445, %v2574
      %2607 = vst.msk [vmem:[%s262 + $0x18] sm:$0xf] %vm445, %v2575
      %2608 = vst.msk [vmem:[%s262 + $0x1c] sm:$0xf] %vm445, %v2576
      %2609 = vst.msk [vmem:[%s262 + $0x20] sm:$0xf] %vm445, %v2577
      %2610 = vst.msk [vmem:[%s262 + $0x24] sm:$0xf] %vm445, %v2578
      %2611 = vst.msk [vmem:[%s262 + $0x28] sm:$0xf] %vm445, %v2579
      %2612 = vst.msk [vmem:[%s262 + $0x2c] sm:$0xf] %vm445, %v2580
      %2613 = vst.msk [vmem:[%s262 + $0x30] sm:$0xf] %vm445, %v2581
      %2614 = vst.msk [vmem:[%s262 + $0x34] sm:$0xf] %vm445, %v2582
      %2615 = vst.msk [vmem:[%s262 + $0x38] sm:$0xf] %vm445, %v2583
      %2616 = vst.msk [vmem:[%s262 + $0x3c] sm:$0xf] %vm445, %v2584
      %2617 = vst.msk [vmem:[%s262 + $0x40] sm:$0xf] %vm445, %v2585
      %2618 = vst.msk [vmem:[%s262 + $0x44] sm:$0xf] %vm445, %v2586
      %2619 = vst.msk [vmem:[%s262 + $0x48] sm:$0xf] %vm445, %v2587
      %2620 = vst.msk [vmem:[%s262 + $0x4c] sm:$0xf] %vm445, %v2588
      %2621 = vst.msk [vmem:[%s262 + $0x50] sm:$0xf] %vm445, %v2589
      %2622 = vst.msk [vmem:[%s262 + $0x54] sm:$0xf] %vm445, %v2590
      %2623 = vst.msk [vmem:[%s262 + $0x58] sm:$0xf] %vm445, %v2591
      %2624 = vst.msk [vmem:[%s262 + $0x5c] sm:$0xf] %vm445, %v2592
      %2625 = vst.msk [vmem:[%s262 + $0x60] sm:$0xf] %vm445, %v2593
      %2626 = vst.msk [vmem:[%s262 + $0x64] sm:$0xf] %vm445, %v2594
      %2627 = vst.msk [vmem:[%s262 + $0x68] sm:$0xf] %vm445, %v2595
      %2628 = vst.msk [vmem:[%s262 + $0x6c] sm:$0xf] %vm445, %v2596
      %2629 = vst.msk [vmem:[%s262 + $0x70] sm:$0xf] %vm445, %v2597
      %2630 = vst.msk [vmem:[%s262 + $0x74] sm:$0xf] %vm445, %v2598
      %2631 = vst.msk [vmem:[%s262 + $0x78] sm:$0xf] %vm445, %v2599
      %2632 = vst.msk [vmem:[%s262 + $0x7c] sm:$0xf] %vm445, %v2600
      %v2633 = vsel %vm302, %v2490, 0.0
      %v2634 = vsel %vm302, %v2492, 0.0
      %v2635 = vadd.f32 %v2633, %v2634
      %v2636 = vsel %vm302, %v2495, 0.0
      %v2637 = vadd.f32 %v2635, %v2636
      %v2638 = vsel %vm302, %v2497, 0.0
      %v2639 = vadd.f32 %v2637, %v2638
      %v2640 = vsel %vm302, %v2500, 0.0
      %v2641 = vadd.f32 %v2639, %v2640
      %v2642 = vsel %vm302, %v2502, 0.0
      %v2643 = vadd.f32 %v2641, %v2642
      %v2644 = vsel %vm302, %v2505, 0.0
      %v2645 = vadd.f32 %v2643, %v2644
      %v2646 = vsel %vm302, %v2507, 0.0
      %v2647 = vadd.f32 %v2645, %v2646
      %v2648 = vsel %vm302, %v2510, 0.0
      %v2649 = vadd.f32 %v2647, %v2648
      %v2650 = vsel %vm302, %v2512, 0.0
      %v2651 = vadd.f32 %v2649, %v2650
      %v2652 = vsel %vm302, %v2515, 0.0
      %v2653 = vadd.f32 %v2651, %v2652
      %v2654 = vsel %vm302, %v2517, 0.0
      %v2655 = vadd.f32 %v2653, %v2654
      %v2656 = vsel %vm302, %v2520, 0.0
      %v2657 = vadd.f32 %v2655, %v2656
      %v2658 = vsel %vm302, %v2522, 0.0
      %v2659 = vadd.f32 %v2657, %v2658
      %v2660 = vsel %vm302, %v2525, 0.0
      %v2661 = vadd.f32 %v2659, %v2660
      %v2662 = vsel %vm302, %v2527, 0.0
      %v2663 = vadd.f32 %v2661, %v2662
      %v2664 = vsel %vm302, %v2530, 0.0
      %v2665 = vadd.f32 %v2663, %v2664
      %v2666 = vsel %vm302, %v2532, 0.0
      %v2667 = vadd.f32 %v2665, %v2666
      %v2668 = vsel %vm302, %v2535, 0.0
      %v2669 = vadd.f32 %v2667, %v2668
      %v2670 = vsel %vm302, %v2537, 0.0
      %v2671 = vadd.f32 %v2669, %v2670
      %v2672 = vsel %vm302, %v2540, 0.0
      %v2673 = vadd.f32 %v2671, %v2672
      %v2674 = vsel %vm302, %v2542, 0.0
      %v2675 = vadd.f32 %v2673, %v2674
      %v2676 = vsel %vm302, %v2545, 0.0
      %v2677 = vadd.f32 %v2675, %v2676
      %v2678 = vsel %vm302, %v2547, 0.0
      %v2679 = vadd.f32 %v2677, %v2678
      %v2680 = vsel %vm302, %v2550, 0.0
      %v2681 = vadd.f32 %v2679, %v2680
      %v2682 = vsel %vm302, %v2552, 0.0
      %v2683 = vadd.f32 %v2681, %v2682
      %v2684 = vsel %vm302, %v2555, 0.0
      %v2685 = vadd.f32 %v2683, %v2684
      %v2686 = vsel %vm302, %v2557, 0.0
      %v2687 = vadd.f32 %v2685, %v2686
      %v2688 = vsel %vm302, %v2560, 0.0
      %v2689 = vadd.f32 %v2687, %v2688
      %v2690 = vsel %vm302, %v2562, 0.0
      %v2691 = vadd.f32 %v2689, %v2690
      %v2692 = vsel %vm302, %v2565, 0.0
      %v2693 = vadd.f32 %v2691, %v2692
      %v2694 = vsel %vm302, %v2567, 0.0
      %v2695 = vadd.f32 %v2693, %v2694
      %v2696 = vrot.slane %v2695, 4
      %v2697 = vadd.f32 %v2695, %v2696
      %v2698 = vrot.slane %v2697, 2
      %v2699 = vadd.f32 %v2697, %v2698
      %v2700 = vrot.slane %v2699, 1
      %v2701 = vadd.f32 %v2699, %v2700
      %2702 = vst.msk [vmem:[%s265] sm:$0x1] %vm311, %v2701
      %v2703 = vmul.f32 %v2490, %v2490
      %v2704 = vmul.f32 %v2492, %v2492
      %v2705 = vmul.f32 %v2495, %v2495
      %v2706 = vmul.f32 %v2497, %v2497
      %v2707 = vmul.f32 %v2500, %v2500
      %v2708 = vmul.f32 %v2502, %v2502
      %v2709 = vmul.f32 %v2505, %v2505
      %v2710 = vmul.f32 %v2507, %v2507
      %v2711 = vmul.f32 %v2510, %v2510
      %v2712 = vmul.f32 %v2512, %v2512
      %v2713 = vmul.f32 %v2515, %v2515
      %v2714 = vmul.f32 %v2517, %v2517
      %v2715 = vmul.f32 %v2520, %v2520
      %v2716 = vmul.f32 %v2522, %v2522
      %v2717 = vmul.f32 %v2525, %v2525
      %v2718 = vmul.f32 %v2527, %v2527
      %v2719 = vmul.f32 %v2530, %v2530
      %v2720 = vmul.f32 %v2532, %v2532
      %v2721 = vmul.f32 %v2535, %v2535
      %v2722 = vmul.f32 %v2537, %v2537
      %v2723 = vmul.f32 %v2540, %v2540
      %v2724 = vmul.f32 %v2542, %v2542
      %v2725 = vmul.f32 %v2545, %v2545
      %v2726 = vmul.f32 %v2547, %v2547
      %v2727 = vmul.f32 %v2550, %v2550
      %v2728 = vmul.f32 %v2552, %v2552
      %v2729 = vmul.f32 %v2555, %v2555
      %v2730 = vmul.f32 %v2557, %v2557
      %v2731 = vmul.f32 %v2560, %v2560
      %v2732 = vmul.f32 %v2562, %v2562
      %v2733 = vmul.f32 %v2565, %v2565
      %v2734 = vmul.f32 %v2567, %v2567
      %v2735 = vsel %vm302, %v2703, 0.0
      %v2736 = vsel %vm302, %v2704, 0.0
      %v2737 = vadd.f32 %v2735, %v2736
      %v2738 = vsel %vm302, %v2705, 0.0
      %v2739 = vadd.f32 %v2737, %v2738
      %v2740 = vsel %vm302, %v2706, 0.0
      %v2741 = vadd.f32 %v2739, %v2740
      %v2742 = vsel %vm302, %v2707, 0.0
      %v2743 = vadd.f32 %v2741, %v2742
      %v2744 = vsel %vm302, %v2708, 0.0
      %v2745 = vadd.f32 %v2743, %v2744
      %v2746 = vsel %vm302, %v2709, 0.0
      %v2747 = vadd.f32 %v2745, %v2746
      %v2748 = vsel %vm302, %v2710, 0.0
      %v2749 = vadd.f32 %v2747, %v2748
      %v2750 = vsel %vm302, %v2711, 0.0
      %v2751 = vadd.f32 %v2749, %v2750
      %v2752 = vsel %vm302, %v2712, 0.0
      %v2753 = vadd.f32 %v2751, %v2752
      %v2754 = vsel %vm302, %v2713, 0.0
      %v2755 = vadd.f32 %v2753, %v2754
      %v2756 = vsel %vm302, %v2714, 0.0
      %v2757 = vadd.f32 %v2755, %v2756
      %v2758 = vsel %vm302, %v2715, 0.0
      %v2759 = vadd.f32 %v2757, %v2758
      %v2760 = vsel %vm302, %v2716, 0.0
      %v2761 = vadd.f32 %v2759, %v2760
      %v2762 = vsel %vm302, %v2717, 0.0
      %v2763 = vadd.f32 %v2761, %v2762
      %v2764 = vsel %vm302, %v2718, 0.0
      %v2765 = vadd.f32 %v2763, %v2764
      %v2766 = vsel %vm302, %v2719, 0.0
      %v2767 = vadd.f32 %v2765, %v2766
      %v2768 = vsel %vm302, %v2720, 0.0
      %v2769 = vadd.f32 %v2767, %v2768
      %v2770 = vsel %vm302, %v2721, 0.0
      %v2771 = vadd.f32 %v2769, %v2770
      %v2772 = vsel %vm302, %v2722, 0.0
      %v2773 = vadd.f32 %v2771, %v2772
      %v2774 = vsel %vm302, %v2723, 0.0
      %v2775 = vadd.f32 %v2773, %v2774
      %v2776 = vsel %vm302, %v2724, 0.0
      %v2777 = vadd.f32 %v2775, %v2776
      %v2778 = vsel %vm302, %v2725, 0.0
      %v2779 = vadd.f32 %v2777, %v2778
      %v2780 = vsel %vm302, %v2726, 0.0
      %v2781 = vadd.f32 %v2779, %v2780
      %v2782 = vsel %vm302, %v2727, 0.0
      %v2783 = vadd.f32 %v2781, %v2782
      %v2784 = vsel %vm302, %v2728, 0.0
      %v2785 = vadd.f32 %v2783, %v2784
      %v2786 = vsel %vm302, %v2729, 0.0
      %v2787 = vadd.f32 %v2785, %v2786
      %v2788 = vsel %vm302, %v2730, 0.0
      %v2789 = vadd.f32 %v2787, %v2788
      %v2790 = vsel %vm302, %v2731, 0.0
      %v2791 = vadd.f32 %v2789, %v2790
      %v2792 = vsel %vm302, %v2732, 0.0
      %v2793 = vadd.f32 %v2791, %v2792
      %v2794 = vsel %vm302, %v2733, 0.0
      %v2795 = vadd.f32 %v2793, %v2794
      %v2796 = vsel %vm302, %v2734, 0.0
      %v2797 = vadd.f32 %v2795, %v2796
      %v2798 = vrot.slane %v2797, 4
      %v2799 = vadd.f32 %v2797, %v2798
      %v2800 = vrot.slane %v2799, 2
      %v2801 = vadd.f32 %v2799, %v2800
      %v2802 = vrot.slane %v2801, 1
      %v2803 = vadd.f32 %v2801, %v2802
      %2804 = vst.msk [vmem:[%s268] sm:$0x1] %vm311, %v2803
      %p2805 = scmp.lt.s32.totalorder %s18, 1
      %s2806 = scalar_select %p2805, %s18, 1
      %s2807 = smul.addr %s2806, 32
      %s2808 = smul.addr %s2807, 4
      %s2809 = scalar_lea.vmem %s4, %s2808
      %p2810 = scmp.lt.s32.totalorder %s18, 1
      %s2811 = scalar_select %p2810, %s18, 1
      %s2812 = scalar_lea.vmem %s5, %s2811
      %p2813 = scmp.lt.s32.totalorder %s18, 1
      %s2814 = scalar_select %p2813, %s18, 1
      %s2815 = scalar_lea.vmem %s6, %s2814
      // Predicated region
      $region37: #{restnet_basic_block.3} parent=35 // pred_check
        %p2816 = pneg %p125
      $region38: #{restnet_basic_block.3} parent=35 // pred_check_branch
        %2818 = sbr.rel (%p2816) target = $region40
      $region39: #{restnet_basic_block.3} parent=35 // pred_region
        _
      $region40: #{restnet_basic_block.3} parent=35 // pred_fallthru
        _
      // Predicated region
      $region41: #{restnet_basic_block.3} parent=35 // pred_check
        %p2819 = pneg %p151
      $region42: #{restnet_basic_block.3} parent=35 // pred_check_branch
        %2821 = sbr.rel (%p2819) target = $region44
      $region43: #{restnet_basic_block.3} parent=35 // pred_region
        _
      $region44: #{restnet_basic_block.3} parent=35 // pred_fallthru
        _
      // Predicated region
      $region45: #{restnet_basic_block.3} parent=35 // pred_check
        %p2822 = pneg %p177
      $region46: #{restnet_basic_block.3} parent=35 // pred_check_branch
        %2824 = sbr.rel (%p2822) target = $region48
      $region47: #{restnet_basic_block.3} parent=35 // pred_region
        _
      $region48: #{restnet_basic_block.3} parent=35 // pred_fallthru
        _
    $region36: #{restnet_basic_block.3} parent=5 // pred_fallthru
      _
    %p2825 = scmp.le.s32.totalorder 2, %s13
    // Predicated region
    $region49: #{restnet_basic_block.3} parent=5 // pred_check
      %p2826 = pneg %p2825
    $region50: #{restnet_basic_block.3} parent=5 // pred_check_branch
      %2828 = sbr.rel (%p2826) target = $region52
    $region51: #{restnet_basic_block.3} parent=5 // pred_region
      %s2829 = ssub.s32 %s13, 2
      // Predicated region
      $region53: #{restnet_basic_block.3} parent=51 // pred_check
        %p2830 = pneg %p131
      $region54: #{restnet_basic_block.3} parent=51 // pred_check_branch
        %2832 = sbr.rel (%p2830) target = $region56
      $region55: #{restnet_basic_block.3} parent=51 // pred_region
        %p2833 = scmp.lt.s32.totalorder %s19, 1
        %s2834 = scalar_select %p2833, %s19, 1
        %s2835 = smul.addr %s2834, 32
        %s2836 = smul.addr %s2835, 4
        %s2837 = scalar_lea.vmem %s4, %s2836
      $region56: #{restnet_basic_block.3} parent=51 // pred_fallthru
        _
      // Predicated region
      $region57: #{restnet_basic_block.3} parent=51 // pred_check
        %p2838 = pneg %p157
      $region58: #{restnet_basic_block.3} parent=51 // pred_check_branch
        %2840 = sbr.rel (%p2838) target = $region60
      $region59: #{restnet_basic_block.3} parent=51 // pred_region
        %p2841 = scmp.lt.s32.totalorder %s19, 1
        %s2842 = scalar_select %p2841, %s19, 1
        %s2843 = scalar_lea.vmem %s5, %s2842
      $region60: #{restnet_basic_block.3} parent=51 // pred_fallthru
        _
      // Predicated region
      $region61: #{restnet_basic_block.3} parent=51 // pred_check
        %p2844 = pneg %p183
      $region62: #{restnet_basic_block.3} parent=51 // pred_check_branch
        %2846 = sbr.rel (%p2844) target = $region64
      $region63: #{restnet_basic_block.3} parent=51 // pred_region
        %p2847 = scmp.lt.s32.totalorder %s19, 1
        %s2848 = scalar_select %p2847, %s19, 1
        %s2849 = scalar_lea.vmem %s6, %s2848
      $region64: #{restnet_basic_block.3} parent=51 // pred_fallthru
        _
    $region52: #{restnet_basic_block.3} parent=5 // pred_fallthru
      _
  $region6: #{restnet_basic_block.3} parent=0 // loop_footer
    %s17 = sadd.s32 1, %s13
  $region7: #{restnet_basic_block.3} parent=0 // loop_footer_branch
    %12 = sbr.rel target = $region3
  $region8: #{restnet_basic_block.3} parent=0 // loop_exit
    _

// kernel: restnet_basic_block.4
$region0: #{restnet_basic_block.4}
  #allocation0 [shape = 'u32[]', space=smem, size = 0x4, offset = 0x4, fixed_abs, tag = 'smem constant byte address 0x4 - core index']
  #allocation1 [shape = 'u32[72,128]{1,0:T(1,128)}', space=vmem, size = 0x9000, scoped, tag = 'internal scratch']
  #allocation2 [shape = 'f32[18,18,8]{2,1,0:T(8,128)}', space=vmem, size = 0x36000, scoped, tag = 'scratch operand']
  #allocation3 [shape = 'bf16[256,72]{1,0:T(8,128)(2,1)}', space=vmem, size = 0x10000, scoped, tag = 'scratch operand']
  %s0 = inlined_call_operand.vmem [shape: bf16[2,16,16,8], index: 0, kind: input, shape index: {}]
  %s1 = inlined_call_operand.vmem [shape: f32[1,1,8], index: 1, kind: input, shape index: {}]
  %s2 = inlined_call_operand.vmem [shape: f32[1,1,8], index: 2, kind: input, shape index: {}]
  %s3 = inlined_call_operand.vmem [shape: bf16[72,8], index: 3, kind: input, shape index: {}]
  %s4 = inlined_call_operand.vmem [shape: bf16[2,16,16,8], index: 4, kind: output, shape index: {0}]
  %s5 = inlined_call_operand.vmem [shape: f32[2,1,8], index: 5, kind: output, shape index: {1}]
  %s6 = inlined_call_operand.vmem [shape: f32[2,1,8], index: 6, kind: output, shape index: {2}]
  %7 = xla_tuple %s4, %s5, %s6
  %s8 = sld [smem:[#allocation0]]
  $region65: #{restnet_basic_block.4} parent=0
    _
  %s10 = ssub.s32 1, %s8
  %s11 = scalar_select 0, %s10, %s8
  loop: start=0, step=1, limit=4
  $region2: #{restnet_basic_block.4} parent=0 // loop_pre_header
    _
  $region3: #{restnet_basic_block.4} parent=0 // loop_header
    %s13 = sphi 0, %s17
    %p14 = scmp.ge.s32.totalorder %s13, 4
    %s23 = sphi 0, %s25
    %s26 = sphi 0, %s23
    %s27 = sphi 0, %s26
    %s43 = sphi 0, %s27
    %s47 = sphi 0, %s47
    %s49 = sphi 0, %s47
    %s50 = sphi 0, %s49
    %s64 = sphi 0, %s50
    %s68 = sphi 0, %s68
    %s70 = sphi 0, %s68
    %s71 = sphi 0, %s70
    %s85 = sphi 0, %s71
    %s89 = sphi 0, %s89
    %s91 = sphi 0, %s89
    %s92 = sphi 0, %s91
    %s106 = sphi 0, %s92
    %s112 = sphi 0, %s114
    %s115 = sphi 0, %s112
    %s116 = sphi 0, %s115
    %s132 = sphi 0, %s116
    %s138 = sphi 0, %s140
    %s141 = sphi 0, %s138
    %s142 = sphi 0, %s141
    %s158 = sphi 0, %s142
    %s164 = sphi 0, %s166
    %s167 = sphi 0, %s164
    %s168 = sphi 0, %s167
    %s184 = sphi 0, %s168
  $region4: #{restnet_basic_block.4} parent=0 // loop_header_branch
    %16 = sbr.rel (%p14) target = $region8
  $region5: #{restnet_basic_block.4} parent=0 // loop_body
    %s18 = ssub.s32 %s13, 1
    %s19 = ssub.s32 %s13, 2
    %s20 = sadd.s32 %s13, 1
    %s21 = ssub.s32 %s13, %s20
    %p22 = scmp.eq.s32.totalorder %s21, 0
    %s24 = sadd.s32 %s23, 1
    %s25 = scalar_select %p22, %s23, %s24
    %p28 = pneg %p22
    %p29 = scmp.eq.s32.totalorder %s13, 1
    %p30 = por %p28, %p29
    %p31 = scmp.ne.s32.totalorder %s23, %s26
    %p32 = scmp.eq.s32.totalorder %s13, 0
    %p33 = por %p31, %p32
    %p34 = scmp.ne.s32.totalorder %s23, %s26
    %p35 = scmp.eq.s32.totalorder %s18, 1
    %p36 = por %p34, %p35
    %p37 = scmp.ne.s32.totalorder %s26, %s27
    %p38 = scmp.eq.s32.totalorder %s18, 0
    %p39 = por %p37, %p38
    %p40 = scmp.ne.s32.totalorder %s26, %s27
    %p41 = scmp.eq.s32.totalorder %s19, 1
    %p42 = por %p40, %p41
    %p44 = scmp.ne.s32.totalorder %s27, %s43
    %p45 = scmp.eq.s32.totalorder %s19, 0
    %p46 = por %p44, %p45
    %s48 = sadd.s32 %s47, 1
    %p51 = scmp.eq.s32.totalorder %s13, 1
    %p52 = scmp.ne.s32.totalorder %s47, %s49
    %p53 = scmp.eq.s32.totalorder %s13, 0
    %p54 = por %p52, %p53
    %p55 = scmp.ne.s32.totalorder %s47, %s49
    %p56 = scmp.eq.s32.totalorder %s18, 1
    %p57 = por %p55, %p56
    %p58 = scmp.ne.s32.totalorder %s49, %s50
    %p59 = scmp.eq.s32.totalorder %s18, 0
    %p60 = por %p58, %p59
    %p61 = scmp.ne.s32.totalorder %s49, %s50
    %p62 = scmp.eq.s32.totalorder %s19, 1
    %p63 = por %p61, %p62
    %p65 = scmp.ne.s32.totalorder %s50, %s64
    %p66 = scmp.eq.s32.totalorder %s19, 0
    %p67 = por %p65, %p66
    %s69 = sadd.s32 %s68, 1
    %p72 = scmp.eq.s32.totalorder %s13, 1
    %p73 = scmp.ne.s32.totalorder %s68, %s70
    %p74 = scmp.eq.s32.totalorder %s13, 0
    %p75 = por %p73, %p74
    %p76 = scmp.ne.s32.totalorder %s68, %s70
    %p77 = scmp.eq.s32.totalorder %s18, 1
    %p78 = por %p76, %p77
    %p79 = scmp.ne.s32.totalorder %s70, %s71
    %p80 = scmp.eq.s32.totalorder %s18, 0
    %p81 = por %p79, %p80
    %p82 = scmp.ne.s32.totalorder %s70, %s71
    %p83 = scmp.eq.s32.totalorder %s19, 1
    %p84 = por %p82, %p83
    %p86 = scmp.ne.s32.totalorder %s71, %s85
    %p87 = scmp.eq.s32.totalorder %s19, 0
    %p88 = por %p86, %p87
    %s90 = sadd.s32 %s89, 1
    %p93 = scmp.eq.s32.totalorder %s13, 1
    %p94 = scmp.ne.s32.totalorder %s89, %s91
    %p95 = scmp.eq.s32.totalorder %s13, 0
    %p96 = por %p94, %p95
    %p97 = scmp.ne.s32.totalorder %s89, %s91
    %p98 = scmp.eq.s32.totalorder %s18, 1
    %p99 = por %p97, %p98
    %p100 = scmp.ne.s32.totalorder %s91, %s92
    %p101 = scmp.eq.s32.totalorder %s18, 0
    %p102 = por %p100, %p101
    %p103 = scmp.ne.s32.totalorder %s91, %s92
    %p104 = scmp.eq.s32.totalorder %s19, 1
    %p105 = por %p103, %p104
    %p107 = scmp.ne.s32.totalorder %s92, %s106
    %p108 = scmp.eq.s32.totalorder %s19, 0
    %p109 = por %p107, %p108
    %s110 = ssub.s32 %s13, %s20
    %p111 = scmp.eq.s32.totalorder %s110, 0
    %s113 = sadd.s32 %s112, 1
    %s114 = scalar_select %p111, %s112, %s113
    %p117 = pneg %p111
    %p118 = scmp.eq.s32.totalorder %s13, 1
    %p119 = por %p117, %p118
    %p120 = scmp.ne.s32.totalorder %s112, %s115
    %p121 = scmp.eq.s32.totalorder %s13, 0
    %p122 = por %p120, %p121
    %p123 = scmp.ne.s32.totalorder %s112, %s115
    %p124 = scmp.eq.s32.totalorder %s18, 1
    %p125 = por %p123, %p124
    %p126 = scmp.ne.s32.totalorder %s115, %s116
    %p127 = scmp.eq.s32.totalorder %s18, 0
    %p128 = por %p126, %p127
    %p129 = scmp.ne.s32.totalorder %s115, %s116
    %p130 = scmp.eq.s32.totalorder %s19, 1
    %p131 = por %p129, %p130
    %p133 = scmp.ne.s32.totalorder %s116, %s132
    %p134 = scmp.eq.s32.totalorder %s19, 0
    %p135 = por %p133, %p134
    %s136 = ssub.s32 %s13, %s20
    %p137 = scmp.eq.s32.totalorder %s136, 0
    %s139 = sadd.s32 %s138, 1
    %s140 = scalar_select %p137, %s138, %s139
    %p143 = pneg %p137
    %p144 = scmp.eq.s32.totalorder %s13, 1
    %p145 = por %p143, %p144
    %p146 = scmp.ne.s32.totalorder %s138, %s141
    %p147 = scmp.eq.s32.totalorder %s13, 0
    %p148 = por %p146, %p147
    %p149 = scmp.ne.s32.totalorder %s138, %s141
    %p150 = scmp.eq.s32.totalorder %s18, 1
    %p151 = por %p149, %p150
    %p152 = scmp.ne.s32.totalorder %s141, %s142
    %p153 = scmp.eq.s32.totalorder %s18, 0
    %p154 = por %p152, %p153
    %p155 = scmp.ne.s32.totalorder %s141, %s142
    %p156 = scmp.eq.s32.totalorder %s19, 1
    %p157 = por %p155, %p156
    %p159 = scmp.ne.s32.totalorder %s142, %s158
    %p160 = scmp.eq.s32.totalorder %s19, 0
    %p161 = por %p159, %p160
    %s162 = ssub.s32 %s13, %s20
    %p163 = scmp.eq.s32.totalorder %s162, 0
    %s165 = sadd.s32 %s164, 1
    %s166 = scalar_select %p163, %s164, %s165
    %p169 = pneg %p163
    %p170 = scmp.eq.s32.totalorder %s13, 1
    %p171 = por %p169, %p170
    %p172 = scmp.ne.s32.totalorder %s164, %s167
    %p173 = scmp.eq.s32.totalorder %s13, 0
    %p174 = por %p172, %p173
    %p175 = scmp.ne.s32.totalorder %s164, %s167
    %p176 = scmp.eq.s32.totalorder %s18, 1
    %p177 = por %p175, %p176
    %p178 = scmp.ne.s32.totalorder %s167, %s168
    %p179 = scmp.eq.s32.totalorder %s18, 0
    %p180 = por %p178, %p179
    %p181 = scmp.ne.s32.totalorder %s167, %s168
    %p182 = scmp.eq.s32.totalorder %s19, 1
    %p183 = por %p181, %p182
    %p185 = scmp.ne.s32.totalorder %s168, %s184
    %p186 = scmp.eq.s32.totalorder %s19, 0
    %p187 = por %p185, %p186
    %p188 = scmp.le.s32.totalorder 1, %s13
    %p189 = scmp.lt.s32.totalorder %s13, 3
    %p190 = pnand %p188, %p189
    %p191 = pneg %p190
    // Predicated region
    $region9: #{restnet_basic_block.4} parent=5 // pred_check
      _
    $region10: #{restnet_basic_block.4} parent=5 // pred_check_branch
      %193 = sbr.rel (%p190) target = $region12
    $region11: #{restnet_basic_block.4} parent=5 // pred_region
      %s194 = ssub.s32 %s13, 1
      // Predicated region
      $region13: #{restnet_basic_block.4} parent=11 // pred_check
        %p195 = pneg %p60
      $region14: #{restnet_basic_block.4} parent=11 // pred_check_branch
        %197 = sbr.rel (%p195) target = $region16
      $region15: #{restnet_basic_block.4} parent=11 // pred_region
        _
      $region16: #{restnet_basic_block.4} parent=11 // pred_fallthru
        _
      // Predicated region
      $region17: #{restnet_basic_block.4} parent=11 // pred_check
        %p198 = pneg %p81
      $region18: #{restnet_basic_block.4} parent=11 // pred_check_branch
        %200 = sbr.rel (%p198) target = $region20
      $region19: #{restnet_basic_block.4} parent=11 // pred_region
        _
      $region20: #{restnet_basic_block.4} parent=11 // pred_fallthru
        _
      // Predicated region
      $region21: #{restnet_basic_block.4} parent=11 // pred_check
        %p201 = pneg %p102
      $region22: #{restnet_basic_block.4} parent=11 // pred_check_branch
        %203 = sbr.rel (%p201) target = $region24
      $region23: #{restnet_basic_block.4} parent=11 // pred_region
        _
      $region24: #{restnet_basic_block.4} parent=11 // pred_fallthru
        _
    $region12: #{restnet_basic_block.4} parent=5 // pred_fallthru
      _
    %p204 = scmp.lt.s32.totalorder %s13, 2
    // Predicated region
    $region25: #{restnet_basic_block.4} parent=5 // pred_check
      %p205 = pneg %p204
    $region26: #{restnet_basic_block.4} parent=5 // pred_check_branch
      %207 = sbr.rel (%p205) target = $region28
    $region27: #{restnet_basic_block.4} parent=5 // pred_region
      // Predicated region
      $region29: #{restnet_basic_block.4} parent=27 // pred_check
        %p208 = pneg %p33
      $region30: #{restnet_basic_block.4} parent=27 // pred_check_branch
        %210 = sbr.rel (%p208) target = $region32
      $region31: #{restnet_basic_block.4} parent=27 // pred_region
        %p211 = scmp.lt.s32.totalorder %s13, 1
        %s212 = scalar_select %p211, %s13, 1
        %s213 = smul.addr %s212, 32
        %s214 = smul.addr %s213, 4
        %s215 = scalar_lea.vmem %s0, %s214
      $region32: #{restnet_basic_block.4} parent=27 // pred_fallthru
        _
    $region28: #{restnet_basic_block.4} parent=5 // pred_fallthru
      _
    %p216 = scmp.le.s32.totalorder 1, %s13
    %p217 = scmp.lt.s32.totalorder %s13, 3
    %p218 = pnand %p216, %p217
    %p219 = pneg %p218
    // Predicated region
    $region33: #{restnet_basic_block.4} parent=5 // pred_check
      _
    $region34: #{restnet_basic_block.4} parent=5 // pred_check_branch
      %221 = sbr.rel (%p218) target = $region36
    $region35: #{restnet_basic_block.4} parent=5 // pred_region
      %s222 = ssub.s32 %s13, 1
      %p223 = scmp.lt.s32.totalorder %s18, 1
      %s224 = scalar_select %p223, %s18, 1
      %s225 = smul.addr %s224, 32
      %s226 = smul.addr %s225, 4
      %s227 = scalar_lea.vmem %s0, %s226
      %p228 = pneg %p39
      %p229 = pneg %p36
      %p230 = pneg %p60
      %p231 = pneg %p57
      %p232 = pneg %p81
      %p233 = pneg %p78
      %p234 = pneg %p102
      %p235 = pneg %p99
      %p236 = pneg %p128
      %p237 = pneg %p125
      %p238 = scmp.lt.s32.totalorder %s18, 1
      %s239 = scalar_select %p238, %s18, 1
      %s240 = smul.addr %s239, 32
      %s241 = smul.addr %s240, 4
      %s242 = scalar_lea.vmem %s4, %s241
      %p243 = pneg %p154
      %p244 = pneg %p151
      %p245 = scmp.lt.s32.totalorder %s18, 1
      %s246 = scalar_select %p245, %s18, 1
      %s247 = scalar_lea.vmem %s5, %s246
      %p248 = pneg %p180
      %p249 = pneg %p177
      %p250 = scmp.lt.s32.totalorder %s18, 1
      %s251 = scalar_select %p250, %s18, 1
      %s252 = scalar_lea.vmem %s6, %s251
      %p253 = scmp.lt.s32.totalorder %s18, 1
      %s254 = scalar_select %p253, %s18, 1
      %s255 = smul.addr %s254, 32
      %s256 = smul.addr %s255, 4
      %s257 = scalar_lea.vmem %s0, %s256
      %p258 = scmp.lt.s32.totalorder %s18, 1
      %s259 = scalar_select %p258, %s18, 1
      %s260 = smul.addr %s259, 32
      %s261 = smul.addr %s260, 4
      %s262 = scalar_lea.vmem %s4, %s261
      %p263 = scmp.lt.s32.totalorder %s18, 1
      %s264 = scalar_select %p263, %s18, 1
      %s265 = scalar_lea.vmem %s5, %s264
      %p266 = scmp.lt.s32.totalorder %s18, 1
      %s267 = scalar_select %p266, %s18, 1
      %s268 = scalar_lea.vmem %s6, %s267
      %v270 = vld [vmem:[%s257] sm:$0xf]
      %v271 = vld [vmem:[%s257 + $0x4] sm:$0xf]
      %v272 = vld [vmem:[%s257 + $0x8] sm:$0xf]
      %v273 = vld [vmem:[%s257 + $0xc] sm:$0xf]
      %v274 = vld [vmem:[%s257 + $0x10] sm:$0xf]
      %v275 = vld [vmem:[%s257 + $0x14] sm:$0xf]
      %v276 = vld [vmem:[%s257 + $0x18] sm:$0xf]
      %v277 = vld [vmem:[%s257 + $0x1c] sm:$0xf]
      %v278 = vld [vmem:[%s257 + $0x20] sm:$0xf]
      %v279 = vld [vmem:[%s257 + $0x24] sm:$0xf]
      %v280 = vld [vmem:[%s257 + $0x28] sm:$0xf]
      %v281 = vld [vmem:[%s257 + $0x2c] sm:$0xf]
      %v282 = vld [vmem:[%s257 + $0x30] sm:$0xf]
      %v283 = vld [vmem:[%s257 + $0x34] sm:$0xf]
      %v284 = vld [vmem:[%s257 + $0x38] sm:$0xf]
      %v285 = vld [vmem:[%s257 + $0x3c] sm:$0xf]
      %v286 = vld [vmem:[%s257 + $0x40] sm:$0xf]
      %v287 = vld [vmem:[%s257 + $0x44] sm:$0xf]
      %v288 = vld [vmem:[%s257 + $0x48] sm:$0xf]
      %v289 = vld [vmem:[%s257 + $0x4c] sm:$0xf]
      %v290 = vld [vmem:[%s257 + $0x50] sm:$0xf]
      %v291 = vld [vmem:[%s257 + $0x54] sm:$0xf]
      %v292 = vld [vmem:[%s257 + $0x58] sm:$0xf]
      %v293 = vld [vmem:[%s257 + $0x5c] sm:$0xf]
      %v294 = vld [vmem:[%s257 + $0x60] sm:$0xf]
      %v295 = vld [vmem:[%s257 + $0x64] sm:$0xf]
      %v296 = vld [vmem:[%s257 + $0x68] sm:$0xf]
      %v297 = vld [vmem:[%s257 + $0x6c] sm:$0xf]
      %v298 = vld [vmem:[%s257 + $0x70] sm:$0xf]
      %v299 = vld [vmem:[%s257 + $0x74] sm:$0xf]
      %v300 = vld [vmem:[%s257 + $0x78] sm:$0xf]
      %v301 = vld [vmem:[%s257 + $0x7c] sm:$0xf]
      %v302 = vunpack.c.l.bf16 %v270
      %v303 = vunpack.c.l.bf16 %v271
      %v304 = vunpack.c.l.bf16 %v272
      %v305 = vunpack.c.l.bf16 %v273
      %v306 = vunpack.c.l.bf16 %v274
      %v307 = vunpack.c.l.bf16 %v275
      %v308 = vunpack.c.l.bf16 %v276
      %v309 = vunpack.c.l.bf16 %v277
      %v310 = vunpack.c.l.bf16 %v278
      %v311 = vunpack.c.l.bf16 %v279
      %v312 = vunpack.c.l.bf16 %v280
      %v313 = vunpack.c.l.bf16 %v281
      %v314 = vunpack.c.l.bf16 %v282
      %v315 = vunpack.c.l.bf16 %v283
      %v316 = vunpack.c.l.bf16 %v284
      %v317 = vunpack.c.l.bf16 %v285
      %v318 = vunpack.c.l.bf16 %v286
      %v319 = vunpack.c.l.bf16 %v287
      %v320 = vunpack.c.l.bf16 %v288
      %v321 = vunpack.c.l.bf16 %v289
      %v322 = vunpack.c.l.bf16 %v290
      %v323 = vunpack.c.l.bf16 %v291
      %v324 = vunpack.c.l.bf16 %v292
      %v325 = vunpack.c.l.bf16 %v293
      %v326 = vunpack.c.l.bf16 %v294
      %v327 = vunpack.c.l.bf16 %v295
      %v328 = vunpack.c.l.bf16 %v296
      %v329 = vunpack.c.l.bf16 %v297
      %v330 = vunpack.c.l.bf16 %v298
      %v331 = vunpack.c.l.bf16 %v299
      %v332 = vunpack.c.l.bf16 %v300
      %v333 = vunpack.c.l.bf16 %v301
      %v334 = vld [vmem:[%s1] sm:$0x1]
      %v336 = vperm.slane %v334, 0
      %v338 = vmul.f32 %v302, %v336
      %v339 = vmul.f32 %v303, %v336
      %v340 = vmul.f32 %v304, %v336
      %v341 = vmul.f32 %v305, %v336
      %v342 = vmul.f32 %v306, %v336
      %v343 = vmul.f32 %v307, %v336
      %v344 = vmul.f32 %v308, %v336
      %v345 = vmul.f32 %v309, %v336
      %v346 = vmul.f32 %v310, %v336
      %v347 = vmul.f32 %v311, %v336
      %v348 = vmul.f32 %v312, %v336
      %v349 = vmul.f32 %v313, %v336
      %v350 = vmul.f32 %v314, %v336
      %v351 = vmul.f32 %v315, %v336
      %v352 = vmul.f32 %v316, %v336
      %v353 = vmul.f32 %v317, %v336
      %v354 = vmul.f32 %v318, %v336
      %v355 = vmul.f32 %v319, %v336
      %v356 = vmul.f32 %v320, %v336
      %v357 = vmul.f32 %v321, %v336
      %v358 = vmul.f32 %v322, %v336
      %v359 = vmul.f32 %v323, %v336
      %v360 = vmul.f32 %v324, %v336
      %v361 = vmul.f32 %v325, %v336
      %v362 = vmul.f32 %v326, %v336
      %v363 = vmul.f32 %v327, %v336
      %v364 = vmul.f32 %v328, %v336
      %v365 = vmul.f32 %v329, %v336
      %v366 = vmul.f32 %v330, %v336
      %v367 = vmul.f32 %v331, %v336
      %v368 = vmul.f32 %v332, %v336
      %v369 = vmul.f32 %v333, %v336
      %v370 = vld [vmem:[%s2] sm:$0x1]
      %v372 = vperm.slane %v370, 0
      %v374 = vadd.f32 %v338, %v372
      %v375 = vadd.f32 %v339, %v372
      %v376 = vadd.f32 %v340, %v372
      %v377 = vadd.f32 %v341, %v372
      %v378 = vadd.f32 %v342, %v372
      %v379 = vadd.f32 %v343, %v372
      %v380 = vadd.f32 %v344, %v372
      %v381 = vadd.f32 %v345, %v372
      %v382 = vadd.f32 %v346, %v372
      %v383 = vadd.f32 %v347, %v372
      %v384 = vadd.f32 %v348, %v372
      %v385 = vadd.f32 %v349, %v372
      %v386 = vadd.f32 %v350, %v372
      %v387 = vadd.f32 %v351, %v372
      %v388 = vadd.f32 %v352, %v372
      %v389 = vadd.f32 %v353, %v372
      %v390 = vadd.f32 %v354, %v372
      %v391 = vadd.f32 %v355, %v372
      %v392 = vadd.f32 %v356, %v372
      %v393 = vadd.f32 %v357, %v372
      %v394 = vadd.f32 %v358, %v372
      %v395 = vadd.f32 %v359, %v372
      %v396 = vadd.f32 %v360, %v372
      %v397 = vadd.f32 %v361, %v372
      %v398 = vadd.f32 %v362, %v372
      %v399 = vadd.f32 %v363, %v372
      %v400 = vadd.f32 %v364, %v372
      %v401 = vadd.f32 %v365, %v372
      %v402 = vadd.f32 %v366, %v372
      %v403 = vadd.f32 %v367, %v372
      %v404 = vadd.f32 %v368, %v372
      %v405 = vadd.f32 %v369, %v372
      %v406 = vmax.f32 %v374, 0.0
      %v407 = vmax.f32 %v375, 0.0
      %v408 = vmax.f32 %v376, 0.0
      %v409 = vmax.f32 %v377, 0.0
      %v410 = vmax.f32 %v378, 0.0
      %v411 = vmax.f32 %v379, 0.0
      %v412 = vmax.f32 %v380, 0.0
      %v413 = vmax.f32 %v381, 0.0
      %v414 = vmax.f32 %v382, 0.0
      %v415 = vmax.f32 %v383, 0.0
      %v416 = vmax.f32 %v384, 0.0
      %v417 = vmax.f32 %v385, 0.0
      %v418 = vmax.f32 %v386, 0.0
      %v419 = vmax.f32 %v387, 0.0
      %v420 = vmax.f32 %v388, 0.0
      %v421 = vmax.f32 %v389, 0.0
      %v422 = vmax.f32 %v390, 0.0
      %v423 = vmax.f32 %v391, 0.0
      %v424 = vmax.f32 %v392, 0.0
      %v425 = vmax.f32 %v393, 0.0
      %v426 = vmax.f32 %v394, 0.0
      %v427 = vmax.f32 %v395, 0.0
      %v428 = vmax.f32 %v396, 0.0
      %v429 = vmax.f32 %v397, 0.0
      %v430 = vmax.f32 %v398, 0.0
      %v431 = vmax.f32 %v399, 0.0
      %v432 = vmax.f32 %v400, 0.0
      %v433 = vmax.f32 %v401, 0.0
      %v434 = vmax.f32 %v402, 0.0
      %v435 = vmax.f32 %v403, 0.0
      %v436 = vmax.f32 %v404, 0.0
      %v437 = vmax.f32 %v405, 0.0
      %vm438 = vcmask 64512
      %439 = vst.msk [vmem:[#allocation2] sm:$0xff] %vm438, 0.0
      %440 = vst.msk [vmem:[#allocation2 + $0x8] sm:$0xff] %vm438, 0.0
      %vm441 = vcmask 58368
      %442 = vst.msk [vmem:[#allocation2 + $0x10] sm:$0x3] %vm441, 0.0
      %s443 = scalar_lea.vmem [#allocation2], 408
      %444 = vst.msk [vmem:[%s443] sm:$0xff] %vm438, 0.0
      %445 = vst.msk [vmem:[%s443 + $0x8] sm:$0xff] %vm438, 0.0
      %446 = vst.msk [vmem:[%s443 + $0x10] sm:$0x3] %vm441, 0.0
      %vm447 = vcmask 57344
      %448 = vst.msk [vmem:[#allocation2] sm:$0x1] %vm447, 0.0
      %449 = vst.msk [vmem:[#allocation2 + $0x18] sm:$0x1] %vm447, 0.0
      %450 = vst.msk [vmem:[#allocation2 + $0x30] sm:$0x1] %vm447, 0.0
      %451 = vst.msk [vmem:[#allocation2 + $0x48] sm:$0x1] %vm447, 0.0
      %452 = vst.msk [vmem:[#allocation2 + $0x60] sm:$0x1] %vm447, 0.0
      %453 = vst.msk [vmem:[#allocation2 + $0x78] sm:$0x1] %vm447, 0.0
      %454 = vst.msk [vmem:[#allocation2 + $0x90] sm:$0x1] %vm447, 0.0
      %455 = vst.msk [vmem:[#allocation2 + $0xa8] sm:$0x1] %vm447, 0.0
      %456 = vst.msk [vmem:[#allocation2 + $0xc0] sm:$0x1] %vm447, 0.0
      %457 = vst.msk [vmem:[#allocation2 + $0xd8] sm:$0x1] %vm447, 0.0
      %458 = vst.msk [vmem:[#allocation2 + $0xf0] sm:$0x1] %vm447, 0.0
      %459 = vst.msk [vmem:[#allocation2 + $0x108] sm:$0x1] %vm447, 0.0
      %460 = vst.msk [vmem:[#allocation2 + $0x120] sm:$0x1] %vm447, 0.0
      %461 = vst.msk [vmem:[#allocation2 + $0x138] sm:$0x1] %vm447, 0.0
      %462 = vst.msk [vmem:[#allocation2 + $0x150] sm:$0x1] %vm447, 0.0
      %463 = vst.msk [vmem:[#allocation2 + $0x168] sm:$0x1] %vm447, 0.0
      %464 = vst.msk [vmem:[#allocation2 + $0x180] sm:$0x1] %vm447, 0.0
      %465 = vst.msk [vmem:[#allocation2 + $0x198] sm:$0x1] %vm447, 0.0
      %466 = vst.msk [vmem:[#allocation2 + $0x11] sm:$0x1] %vm447, 0.0
      %467 = vst.msk [vmem:[#allocation2 + $0x29] sm:$0x1] %vm447, 0.0
      %468 = vst.msk [vmem:[#allocation2 + $0x41] sm:$0x1] %vm447, 0.0
      %469 = vst.msk [vmem:[#allocation2 + $0x59] sm:$0x1] %vm447, 0.0
      %470 = vst.msk [vmem:[#allocation2 + $0x71] sm:$0x1] %vm447, 0.0
      %471 = vst.msk [vmem:[#allocation2 + $0x89] sm:$0x1] %vm447, 0.0
      %472 = vst.msk [vmem:[#allocation2 + $0xa1] sm:$0x1] %vm447, 0.0
      %473 = vst.msk [vmem:[#allocation2 + $0xb9] sm:$0x1] %vm447, 0.0
      %474 = vst.msk [vmem:[#allocation2 + $0xd1] sm:$0x1] %vm447, 0.0
      %475 = vst.msk [vmem:[#allocation2 + $0xe9] sm:$0x1] %vm447, 0.0
      %476 = vst.msk [vmem:[#allocation2 + $0x101] sm:$0x1] %vm447, 0.0
      %477 = vst.msk [vmem:[#allocation2 + $0x119] sm:$0x1] %vm447, 0.0
      %478 = vst.msk [vmem:[#allocation2 + $0x131] sm:$0x1] %vm447, 0.0
      %479 = vst.msk [vmem:[#allocation2 + $0x149] sm:$0x1] %vm447, 0.0
      %480 = vst.msk [vmem:[#allocation2 + $0x161] sm:$0x1] %vm447, 0.0
      %481 = vst.msk [vmem:[#allocation2 + $0x179] sm:$0x1] %vm447, 0.0
      %482 = vst.msk [vmem:[#allocation2 + $0x191] sm:$0x1] %vm447, 0.0
      %483 = vst.msk [vmem:[#allocation2 + $0x1a9] sm:$0x1] %vm447, 0.0
      %s484 = scalar_lea.vmem [#allocation2], 24
      %485 = vst.msk [vmem:[%s484 + $0x1] sm:$0xff] %vm438, %v406
      %486 = vst.msk [vmem:[%s484 + $0x9] sm:$0xff] %vm438, %v407
      %487 = vst.msk [vmem:[%s484 + $0x19] sm:$0xff] %vm438, %v408
      %488 = vst.msk [vmem:[%s484 + $0x21] sm:$0xff] %vm438, %v409
      %489 = vst.msk [vmem:[%s484 + $0x31] sm:$0xff] %vm438, %v410
      %490 = vst.msk [vmem:[%s484 + $0x39] sm:$0xff] %vm438, %v411
      %491 = vst.msk [vmem:[%s484 + $0x49] sm:$0xff] %vm438, %v412
      %492 = vst.msk [vmem:[%s484 + $0x51] sm:$0xff] %vm438, %v413
      %493 = vst.msk [vmem:[%s484 + $0x61] sm:$0xff] %vm438, %v414
      %494 = vst.msk [vmem:[%s484 + $0x69] sm:$0xff] %vm438, %v415
      %495 = vst.msk [vmem:[%s484 + $0x79] sm:$0xff] %vm438, %v416
      %496 = vst.msk [vmem:[%s484 + $0x81] sm:$0xff] %vm438, %v417
      %497 = vst.msk [vmem:[%s484 + $0x91] sm:$0xff] %vm438, %v418
      %498 = vst.msk [vmem:[%s484 + $0x99] sm:$0xff] %vm438, %v419
      %499 = vst.msk [vmem:[%s484 + $0xa9] sm:$0xff] %vm438, %v420
      %500 = vst.msk [vmem:[%s484 + $0xb1] sm:$0xff] %vm438, %v421
      %501 = vst.msk [vmem:[%s484 + $0xc1] sm:$0xff] %vm438, %v422
      %502 = vst.msk [vmem:[%s484 + $0xc9] sm:$0xff] %vm438, %v423
      %503 = vst.msk [vmem:[%s484 + $0xd9] sm:$0xff] %vm438, %v424
      %504 = vst.msk [vmem:[%s484 + $0xe1] sm:$0xff] %vm438, %v425
      %505 = vst.msk [vmem:[%s484 + $0xf1] sm:$0xff] %vm438, %v426
      %506 = vst.msk [vmem:[%s484 + $0xf9] sm:$0xff] %vm438, %v427
      %507 = vst.msk [vmem:[%s484 + $0x109] sm:$0xff] %vm438, %v428
      %508 = vst.msk [vmem:[%s484 + $0x111] sm:$0xff] %vm438, %v429
      %509 = vst.msk [vmem:[%s484 + $0x121] sm:$0xff] %vm438, %v430
      %510 = vst.msk [vmem:[%s484 + $0x129] sm:$0xff] %vm438, %v431
      %511 = vst.msk [vmem:[%s484 + $0x139] sm:$0xff] %vm438, %v432
      %512 = vst.msk [vmem:[%s484 + $0x141] sm:$0xff] %vm438, %v433
      %513 = vst.msk [vmem:[%s484 + $0x151] sm:$0xff] %vm438, %v434
      %514 = vst.msk [vmem:[%s484 + $0x159] sm:$0xff] %vm438, %v435
      %515 = vst.msk [vmem:[%s484 + $0x169] sm:$0xff] %vm438, %v436
      %516 = vst.msk [vmem:[%s484 + $0x171] sm:$0xff] %vm438, %v437
      %v517 = vld [vmem:[#allocation2] sm:$0xff]
      %v518 = vld [vmem:[#allocation2 + $0x8] sm:$0xff]
      %v519 = vld [vmem:[#allocation2 + $0x18] sm:$0xff]
      %v520 = vld [vmem:[#allocation2 + $0x20] sm:$0xff]
      %v521 = vld [vmem:[#allocation2 + $0x30] sm:$0xff]
      %v522 = vld [vmem:[#allocation2 + $0x38] sm:$0xff]
      %v523 = vld [vmem:[#allocation2 + $0x48] sm:$0xff]
      %v524 = vld [vmem:[#allocation2 + $0x50] sm:$0xff]
      %v525 = vld [vmem:[#allocation2 + $0x60] sm:$0xff]
      %v526 = vld [vmem:[#allocation2 + $0x68] sm:$0xff]
      %v527 = vld [vmem:[#allocation2 + $0x78] sm:$0xff]
      %v528 = vld [vmem:[#allocation2 + $0x80] sm:$0xff]
      %v529 = vld [vmem:[#allocation2 + $0x90] sm:$0xff]
      %v530 = vld [vmem:[#allocation2 + $0x98] sm:$0xff]
      %v531 = vld [vmem:[#allocation2 + $0xa8] sm:$0xff]
      %v532 = vld [vmem:[#allocation2 + $0xb0] sm:$0xff]
      %v533 = vld [vmem:[#allocation2 + $0xc0] sm:$0xff]
      %v534 = vld [vmem:[#allocation2 + $0xc8] sm:$0xff]
      %v535 = vld [vmem:[#allocation2 + $0xd8] sm:$0xff]
      %v536 = vld [vmem:[#allocation2 + $0xe0] sm:$0xff]
      %v537 = vld [vmem:[#allocation2 + $0xf0] sm:$0xff]
      %v538 = vld [vmem:[#allocation2 + $0xf8] sm:$0xff]
      %v539 = vld [vmem:[#allocation2 + $0x108] sm:$0xff]
      %v540 = vld [vmem:[#allocation2 + $0x110] sm:$0xff]
      %v541 = vld [vmem:[#allocation2 + $0x120] sm:$0xff]
      %v542 = vld [vmem:[#allocation2 + $0x128] sm:$0xff]
      %v543 = vld [vmem:[#allocation2 + $0x138] sm:$0xff]
      %v544 = vld [vmem:[#allocation2 + $0x140] sm:$0xff]
      %v545 = vld [vmem:[#allocation2 + $0x150] sm:$0xff]
      %v546 = vld [vmem:[#allocation2 + $0x158] sm:$0xff]
      %v547 = vld [vmem:[#allocation2 + $0x168] sm:$0xff]
      %v548 = vld [vmem:[#allocation2 + $0x170] sm:$0xff]
      %v549 = vpack.c.bf16 %v517, %v517
      %v550 = vpack.c.bf16 %v518, %v518
      %v551 = vpack.c.bf16 %v519, %v519
      %v552 = vpack.c.bf16 %v520, %v520
      %v553 = vpack.c.bf16 %v521, %v521
      %v554 = vpack.c.bf16 %v522, %v522
      %v555 = vpack.c.bf16 %v523, %v523
      %v556 = vpack.c.bf16 %v524, %v524
      %v557 = vpack.c.bf16 %v525, %v525
      %v558 = vpack.c.bf16 %v526, %v526
      %v559 = vpack.c.bf16 %v527, %v527
      %v560 = vpack.c.bf16 %v528, %v528
      %v561 = vpack.c.bf16 %v529, %v529
      %v562 = vpack.c.bf16 %v530, %v530
      %v563 = vpack.c.bf16 %v531, %v531
      %v564 = vpack.c.bf16 %v532, %v532
      %v565 = vpack.c.bf16 %v533, %v533
      %v566 = vpack.c.bf16 %v534, %v534
      %v567 = vpack.c.bf16 %v535, %v535
      %v568 = vpack.c.bf16 %v536, %v536
      %v569 = vpack.c.bf16 %v537, %v537
      %v570 = vpack.c.bf16 %v538, %v538
      %v571 = vpack.c.bf16 %v539, %v539
      %v572 = vpack.c.bf16 %v540, %v540
      %v573 = vpack.c.bf16 %v541, %v541
      %v574 = vpack.c.bf16 %v542, %v542
      %v575 = vpack.c.bf16 %v543, %v543
      %v576 = vpack.c.bf16 %v544, %v544
      %v577 = vpack.c.bf16 %v545, %v545
      %v578 = vpack.c.bf16 %v546, %v546
      %v579 = vpack.c.bf16 %v547, %v547
      %v580 = vpack.c.bf16 %v548, %v548
      %vm581 = vcmask 60416
      %582 = vst.msk [vmem:[#allocation3] sm:$0xf] %vm581, %v549
      %583 = vst.msk [vmem:[#allocation3 + $0x4] sm:$0xf] %vm581, %v550
      %584 = vst.msk [vmem:[#allocation3 + $0x8] sm:$0xf] %vm581, %v551
      %585 = vst.msk [vmem:[#allocation3 + $0xc] sm:$0xf] %vm581, %v552
      %586 = vst.msk [vmem:[#allocation3 + $0x10] sm:$0xf] %vm581, %v553
      %587 = vst.msk [vmem:[#allocation3 + $0x14] sm:$0xf] %vm581, %v554
      %588 = vst.msk [vmem:[#allocation3 + $0x18] sm:$0xf] %vm581, %v555
      %589 = vst.msk [vmem:[#allocation3 + $0x1c] sm:$0xf] %vm581, %v556
      %590 = vst.msk [vmem:[#allocation3 + $0x20] sm:$0xf] %vm581, %v557
      %591 = vst.msk [vmem:[#allocation3 + $0x24] sm:$0xf] %vm581, %v558
      %592 = vst.msk [vmem:[#allocation3 + $0x28] sm:$0xf] %vm581, %v559
      %593 = vst.msk [vmem:[#allocation3 + $0x2c] sm:$0xf] %vm581, %v560
      %594 = vst.msk [vmem:[#allocation3 + $0x30] sm:$0xf] %vm581, %v561
      %595 = vst.msk [vmem:[#allocation3 + $0x34] sm:$0xf] %vm581, %v562
      %596 = vst.msk [vmem:[#allocation3 + $0x38] sm:$0xf] %vm581, %v563
      %597 = vst.msk [vmem:[#allocation3 + $0x3c] sm:$0xf] %vm581, %v564
      %598 = vst.msk [vmem:[#allocation3 + $0x40] sm:$0xf] %vm581, %v565
      %599 = vst.msk [vmem:[#allocation3 + $0x44] sm:$0xf] %vm581, %v566
      %600 = vst.msk [vmem:[#allocation3 + $0x48] sm:$0xf] %vm581, %v567
      %601 = vst.msk [vmem:[#allocation3 + $0x4c] sm:$0xf] %vm581, %v568
      %602 = vst.msk [vmem:[#allocation3 + $0x50] sm:$0xf] %vm581, %v569
      %603 = vst.msk [vmem:[#allocation3 + $0x54] sm:$0xf] %vm581, %v570
      %604 = vst.msk [vmem:[#allocation3 + $0x58] sm:$0xf] %vm581, %v571
      %605 = vst.msk [vmem:[#allocation3 + $0x5c] sm:$0xf] %vm581, %v572
      %606 = vst.msk [vmem:[#allocation3 + $0x60] sm:$0xf] %vm581, %v573
      %607 = vst.msk [vmem:[#allocation3 + $0x64] sm:$0xf] %vm581, %v574
      %608 = vst.msk [vmem:[#allocation3 + $0x68] sm:$0xf] %vm581, %v575
      %609 = vst.msk [vmem:[#allocation3 + $0x6c] sm:$0xf] %vm581, %v576
      %610 = vst.msk [vmem:[#allocation3 + $0x70] sm:$0xf] %vm581, %v577
      %611 = vst.msk [vmem:[#allocation3 + $0x74] sm:$0xf] %vm581, %v578
      %612 = vst.msk [vmem:[#allocation3 + $0x78] sm:$0xf] %vm581, %v579
      %613 = vst.msk [vmem:[#allocation3 + $0x7c] sm:$0xf] %vm581, %v580
      %v614 = vld [vmem:[#allocation2 + $0x1] sm:$0xff]
      %v615 = vld [vmem:[#allocation2 + $0x9] sm:$0xff]
      %v616 = vld [vmem:[#allocation2 + $0x19] sm:$0xff]
      %v617 = vld [vmem:[#allocation2 + $0x21] sm:$0xff]
      %v618 = vld [vmem:[#allocation2 + $0x31] sm:$0xff]
      %v619 = vld [vmem:[#allocation2 + $0x39] sm:$0xff]
      %v620 = vld [vmem:[#allocation2 + $0x49] sm:$0xff]
      %v621 = vld [vmem:[#allocation2 + $0x51] sm:$0xff]
      %v622 = vld [vmem:[#allocation2 + $0x61] sm:$0xff]
      %v623 = vld [vmem:[#allocation2 + $0x69] sm:$0xff]
      %v624 = vld [vmem:[#allocation2 + $0x79] sm:$0xff]
      %v625 = vld [vmem:[#allocation2 + $0x81] sm:$0xff]
      %v626 = vld [vmem:[#allocation2 + $0x91] sm:$0xff]
      %v627 = vld [vmem:[#allocation2 + $0x99] sm:$0xff]
      %v628 = vld [vmem:[#allocation2 + $0xa9] sm:$0xff]
      %v629 = vld [vmem:[#allocation2 + $0xb1] sm:$0xff]
      %v630 = vld [vmem:[#allocation2 + $0xc1] sm:$0xff]
      %v631 = vld [vmem:[#allocation2 + $0xc9] sm:$0xff]
      %v632 = vld [vmem:[#allocation2 + $0xd9] sm:$0xff]
      %v633 = vld [vmem:[#allocation2 + $0xe1] sm:$0xff]
      %v634 = vld [vmem:[#allocation2 + $0xf1] sm:$0xff]
      %v635 = vld [vmem:[#allocation2 + $0xf9] sm:$0xff]
      %v636 = vld [vmem:[#allocation2 + $0x109] sm:$0xff]
      %v637 = vld [vmem:[#allocation2 + $0x111] sm:$0xff]
      %v638 = vld [vmem:[#allocation2 + $0x121] sm:$0xff]
      %v639 = vld [vmem:[#allocation2 + $0x129] sm:$0xff]
      %v640 = vld [vmem:[#allocation2 + $0x139] sm:$0xff]
      %v641 = vld [vmem:[#allocation2 + $0x141] sm:$0xff]
      %v642 = vld [vmem:[#allocation2 + $0x151] sm:$0xff]
      %v643 = vld [vmem:[#allocation2 + $0x159] sm:$0xff]
      %v644 = vld [vmem:[#allocation2 + $0x169] sm:$0xff]
      %v645 = vld [vmem:[#allocation2 + $0x171] sm:$0xff]
      %v646 = vpack.c.bf16 %v614, %v614
      %v647 = vpack.c.bf16 %v615, %v615
      %v648 = vpack.c.bf16 %v616, %v616
      %v649 = vpack.c.bf16 %v617, %v617
      %v650 = vpack.c.bf16 %v618, %v618
      %v651 = vpack.c.bf16 %v619, %v619
      %v652 = vpack.c.bf16 %v620, %v620
      %v653 = vpack.c.bf16 %v621, %v621
      %v654 = vpack.c.bf16 %v622, %v622
      %v655 = vpack.c.bf16 %v623, %v623
      %v656 = vpack.c.bf16 %v624, %v624
      %v657 = vpack.c.bf16 %v625, %v625
      %v658 = vpack.c.bf16 %v626, %v626
      %v659 = vpack.c.bf16 %v627, %v627
      %v660 = vpack.c.bf16 %v628, %v628
      %v661 = vpack.c.bf16 %v629, %v629
      %v662 = vpack.c.bf16 %v630, %v630
      %v663 = vpack.c.bf16 %v631, %v631
      %v664 = vpack.c.bf16 %v632, %v632
      %v665 = vpack.c.bf16 %v633, %v633
      %v666 = vpack.c.bf16 %v634, %v634
      %v667 = vpack.c.bf16 %v635, %v635
      %v668 = vpack.c.bf16 %v636, %v636
      %v669 = vpack.c.bf16 %v637, %v637
      %v670 = vpack.c.bf16 %v638, %v638
      %v671 = vpack.c.bf16 %v639, %v639
      %v672 = vpack.c.bf16 %v640, %v640
      %v673 = vpack.c.bf16 %v641, %v641
      %v674 = vpack.c.bf16 %v642, %v642
      %v675 = vpack.c.bf16 %v643, %v643
      %v676 = vpack.c.bf16 %v644, %v644
      %v677 = vpack.c.bf16 %v645, %v645
      %710 = vrot.lane.b32.xlu0 %v646, 8
      %v711 = vpop.permute.xlu0 %710
      %712 = vrot.lane.b32.xlu0 %v647, 8
      %v713 = vpop.permute.xlu0 %712
      %714 = vrot.lane.b32.xlu0 %v648, 8
      %v715 = vpop.permute.xlu0 %714
      %716 = vrot.lane.b32.xlu0 %v649, 8
      %v717 = vpop.permute.xlu0 %716
      %718 = vrot.lane.b32.xlu0 %v650, 8
      %v719 = vpop.permute.xlu0 %718
      %720 = vrot.lane.b32.xlu0 %v651, 8
      %v721 = vpop.permute.xlu0 %720
      %722 = vrot.lane.b32.xlu0 %v652, 8
      %v723 = vpop.permute.xlu0 %722
      %724 = vrot.lane.b32.xlu0 %v653, 8
      %v725 = vpop.permute.xlu0 %724
      %726 = vrot.lane.b32.xlu0 %v654, 8
      %v727 = vpop.permute.xlu0 %726
      %728 = vrot.lane.b32.xlu0 %v655, 8
      %v729 = vpop.permute.xlu0 %728
      %730 = vrot.lane.b32.xlu0 %v656, 8
      %v731 = vpop.permute.xlu0 %730
      %732 = vrot.lane.b32.xlu0 %v657, 8
      %v733 = vpop.permute.xlu0 %732
      %734 = vrot.lane.b32.xlu0 %v658, 8
      %v735 = vpop.permute.xlu0 %734
      %736 = vrot.lane.b32.xlu0 %v659, 8
      %v737 = vpop.permute.xlu0 %736
      %738 = vrot.lane.b32.xlu0 %v660, 8
      %v739 = vpop.permute.xlu0 %738
      %740 = vrot.lane.b32.xlu0 %v661, 8
      %v741 = vpop.permute.xlu0 %740
      %742 = vrot.lane.b32.xlu0 %v662, 8
      %v743 = vpop.permute.xlu0 %742
      %744 = vrot.lane.b32.xlu0 %v663, 8
      %v745 = vpop.permute.xlu0 %744
      %746 = vrot.lane.b32.xlu0 %v664, 8
      %v747 = vpop.permute.xlu0 %746
      %748 = vrot.lane.b32.xlu0 %v665, 8
      %v749 = vpop.permute.xlu0 %748
      %750 = vrot.lane.b32.xlu0 %v666, 8
      %v751 = vpop.permute.xlu0 %750
      %752 = vrot.lane.b32.xlu0 %v667, 8
      %v753 = vpop.permute.xlu0 %752
      %754 = vrot.lane.b32.xlu0 %v668, 8
      %v755 = vpop.permute.xlu0 %754
      %756 = vrot.lane.b32.xlu0 %v669, 8
      %v757 = vpop.permute.xlu0 %756
      %758 = vrot.lane.b32.xlu0 %v670, 8
      %v759 = vpop.permute.xlu0 %758
      %760 = vrot.lane.b32.xlu0 %v671, 8
      %v761 = vpop.permute.xlu0 %760
      %762 = vrot.lane.b32.xlu0 %v672, 8
      %v763 = vpop.permute.xlu0 %762
      %764 = vrot.lane.b32.xlu0 %v673, 8
      %v765 = vpop.permute.xlu0 %764
      %766 = vrot.lane.b32.xlu0 %v674, 8
      %v767 = vpop.permute.xlu0 %766
      %768 = vrot.lane.b32.xlu0 %v675, 8
      %v769 = vpop.permute.xlu0 %768
      %770 = vrot.lane.b32.xlu0 %v676, 8
      %v771 = vpop.permute.xlu0 %770
      %772 = vrot.lane.b32.xlu0 %v677, 8
      %v773 = vpop.permute.xlu0 %772
      %vm806 = vcmask 126016
      %807 = vst.msk [vmem:[#allocation3] sm:$0xf] %vm806, %v711
      %808 = vst.msk [vmem:[#allocation3 + $0x4] sm:$0xf] %vm806, %v713
      %809 = vst.msk [vmem:[#allocation3 + $0x8] sm:$0xf] %vm806, %v715
      %810 = vst.msk [vmem:[#allocation3 + $0xc] sm:$0xf] %vm806, %v717
      %811 = vst.msk [vmem:[#allocation3 + $0x10] sm:$0xf] %vm806, %v719
      %812 = vst.msk [vmem:[#allocation3 + $0x14] sm:$0xf] %vm806, %v721
      %813 = vst.msk [vmem:[#allocation3 + $0x18] sm:$0xf] %vm806, %v723
      %814 = vst.msk [vmem:[#allocation3 + $0x1c] sm:$0xf] %vm806, %v725
      %815 = vst.msk [vmem:[#allocation3 + $0x20] sm:$0xf] %vm806, %v727
      %816 = vst.msk [vmem:[#allocation3 + $0x24] sm:$0xf] %vm806, %v729
      %817 = vst.msk [vmem:[#allocation3 + $0x28] sm:$0xf] %vm806, %v731
      %818 = vst.msk [vmem:[#allocation3 + $0x2c] sm:$0xf] %vm806, %v733
      %819 = vst.msk [vmem:[#allocation3 + $0x30] sm:$0xf] %vm806, %v735
      %820 = vst.msk [vmem:[#allocation3 + $0x34] sm:$0xf] %vm806, %v737
      %821 = vst.msk [vmem:[#allocation3 + $0x38] sm:$0xf] %vm806, %v739
      %822 = vst.msk [vmem:[#allocation3 + $0x3c] sm:$0xf] %vm806, %v741
      %823 = vst.msk [vmem:[#allocation3 + $0x40] sm:$0xf] %vm806, %v743
      %824 = vst.msk [vmem:[#allocation3 + $0x44] sm:$0xf] %vm806, %v745
      %825 = vst.msk [vmem:[#allocation3 + $0x48] sm:$0xf] %vm806, %v747
      %826 = vst.msk [vmem:[#allocation3 + $0x4c] sm:$0xf] %vm806, %v749
      %827 = vst.msk [vmem:[#allocation3 + $0x50] sm:$0xf] %vm806, %v751
      %828 = vst.msk [vmem:[#allocation3 + $0x54] sm:$0xf] %vm806, %v753
      %829 = vst.msk [vmem:[#allocation3 + $0x58] sm:$0xf] %vm806, %v755
      %830 = vst.msk [vmem:[#allocation3 + $0x5c] sm:$0xf] %vm806, %v757
      %831 = vst.msk [vmem:[#allocation3 + $0x60] sm:$0xf] %vm806, %v759
      %832 = vst.msk [vmem:[#allocation3 + $0x64] sm:$0xf] %vm806, %v761
      %833 = vst.msk [vmem:[#allocation3 + $0x68] sm:$0xf] %vm806, %v763
      %834 = vst.msk [vmem:[#allocation3 + $0x6c] sm:$0xf] %vm806, %v765
      %835 = vst.msk [vmem:[#allocation3 + $0x70] sm:$0xf] %vm806, %v767
      %836 = vst.msk [vmem:[#allocation3 + $0x74] sm:$0xf] %vm806, %v769
      %837 = vst.msk [vmem:[#allocation3 + $0x78] sm:$0xf] %vm806, %v771
      %838 = vst.msk [vmem:[#allocation3 + $0x7c] sm:$0xf] %vm806, %v773
      %v839 = vld [vmem:[#allocation2 + $0x2] sm:$0xff]
      %v840 = vld [vmem:[#allocation2 + $0xa] sm:$0xff]
      %v841 = vld [vmem:[#allocation2 + $0x1a] sm:$0xff]
      %v842 = vld [vmem:[#allocation2 + $0x22] sm:$0xff]
      %v843 = vld [vmem:[#allocation2 + $0x32] sm:$0xff]
      %v844 = vld [vmem:[#allocation2 + $0x3a] sm:$0xff]
      %v845 = vld [vmem:[#allocation2 + $0x4a] sm:$0xff]
      %v846 = vld [vmem:[#allocation2 + $0x52] sm:$0xff]
      %v847 = vld [vmem:[#allocation2 + $0x62] sm:$0xff]
      %v848 = vld [vmem:[#allocation2 + $0x6a] sm:$0xff]
      %v849 = vld [vmem:[#allocation2 + $0x7a] sm:$0xff]
      %v850 = vld [vmem:[#allocation2 + $0x82] sm:$0xff]
      %v851 = vld [vmem:[#allocation2 + $0x92] sm:$0xff]
      %v852 = vld [vmem:[#allocation2 + $0x9a] sm:$0xff]
      %v853 = vld [vmem:[#allocation2 + $0xaa] sm:$0xff]
      %v854 = vld [vmem:[#allocation2 + $0xb2] sm:$0xff]
      %v855 = vld [vmem:[#allocation2 + $0xc2] sm:$0xff]
      %v856 = vld [vmem:[#allocation2 + $0xca] sm:$0xff]
      %v857 = vld [vmem:[#allocation2 + $0xda] sm:$0xff]
      %v858 = vld [vmem:[#allocation2 + $0xe2] sm:$0xff]
      %v859 = vld [vmem:[#allocation2 + $0xf2] sm:$0xff]
      %v860 = vld [vmem:[#allocation2 + $0xfa] sm:$0xff]
      %v861 = vld [vmem:[#allocation2 + $0x10a] sm:$0xff]
      %v862 = vld [vmem:[#allocation2 + $0x112] sm:$0xff]
      %v863 = vld [vmem:[#allocation2 + $0x122] sm:$0xff]
      %v864 = vld [vmem:[#allocation2 + $0x12a] sm:$0xff]
      %v865 = vld [vmem:[#allocation2 + $0x13a] sm:$0xff]
      %v866 = vld [vmem:[#allocation2 + $0x142] sm:$0xff]
      %v867 = vld [vmem:[#allocation2 + $0x152] sm:$0xff]
      %v868 = vld [vmem:[#allocation2 + $0x15a] sm:$0xff]
      %v869 = vld [vmem:[#allocation2 + $0x16a] sm:$0xff]
      %v870 = vld [vmem:[#allocation2 + $0x172] sm:$0xff]
      %v871 = vpack.c.bf16 %v839, %v839
      %v872 = vpack.c.bf16 %v840, %v840
      %v873 = vpack.c.bf16 %v841, %v841
      %v874 = vpack.c.bf16 %v842, %v842
      %v875 = vpack.c.bf16 %v843, %v843
      %v876 = vpack.c.bf16 %v844, %v844
      %v877 = vpack.c.bf16 %v845, %v845
      %v878 = vpack.c.bf16 %v846, %v846
      %v879 = vpack.c.bf16 %v847, %v847
      %v880 = vpack.c.bf16 %v848, %v848
      %v881 = vpack.c.bf16 %v849, %v849
      %v882 = vpack.c.bf16 %v850, %v850
      %v883 = vpack.c.bf16 %v851, %v851
      %v884 = vpack.c.bf16 %v852, %v852
      %v885 = vpack.c.bf16 %v853, %v853
      %v886 = vpack.c.bf16 %v854, %v854
      %v887 = vpack.c.bf16 %v855, %v855
      %v888 = vpack.c.bf16 %v856, %v856
      %v889 = vpack.c.bf16 %v857, %v857
      %v890 = vpack.c.bf16 %v858, %v858
      %v891 = vpack.c.bf16 %v859, %v859
      %v892 = vpack.c.bf16 %v860, %v860
      %v893 = vpack.c.bf16 %v861, %v861
      %v894 = vpack.c.bf16 %v862, %v862
      %v895 = vpack.c.bf16 %v863, %v863
      %v896 = vpack.c.bf16 %v864, %v864
      %v897 = vpack.c.bf16 %v865, %v865
      %v898 = vpack.c.bf16 %v866, %v866
      %v899 = vpack.c.bf16 %v867, %v867
      %v900 = vpack.c.bf16 %v868, %v868
      %v901 = vpack.c.bf16 %v869, %v869
      %v902 = vpack.c.bf16 %v870, %v870
      %935 = vrot.lane.b32.xlu0 %v871, 16
      %v936 = vpop.permute.xlu0 %935
      %937 = vrot.lane.b32.xlu0 %v872, 16
      %v938 = vpop.permute.xlu0 %937
      %939 = vrot.lane.b32.xlu0 %v873, 16
      %v940 = vpop.permute.xlu0 %939
      %941 = vrot.lane.b32.xlu0 %v874, 16
      %v942 = vpop.permute.xlu0 %941
      %943 = vrot.lane.b32.xlu0 %v875, 16
      %v944 = vpop.permute.xlu0 %943
      %945 = vrot.lane.b32.xlu0 %v876, 16
      %v946 = vpop.permute.xlu0 %945
      %947 = vrot.lane.b32.xlu0 %v877, 16
      %v948 = vpop.permute.xlu0 %947
      %949 = vrot.lane.b32.xlu0 %v878, 16
      %v950 = vpop.permute.xlu0 %949
      %951 = vrot.lane.b32.xlu0 %v879, 16
      %v952 = vpop.permute.xlu0 %951
      %953 = vrot.lane.b32.xlu0 %v880, 16
      %v954 = vpop.permute.xlu0 %953
      %955 = vrot.lane.b32.xlu0 %v881, 16
      %v956 = vpop.permute.xlu0 %955
      %957 = vrot.lane.b32.xlu0 %v882, 16
      %v958 = vpop.permute.xlu0 %957
      %959 = vrot.lane.b32.xlu0 %v883, 16
      %v960 = vpop.permute.xlu0 %959
      %961 = vrot.lane.b32.xlu0 %v884, 16
      %v962 = vpop.permute.xlu0 %961
      %963 = vrot.lane.b32.xlu0 %v885, 16
      %v964 = vpop.permute.xlu0 %963
      %965 = vrot.lane.b32.xlu0 %v886, 16
      %v966 = vpop.permute.xlu0 %965
      %967 = vrot.lane.b32.xlu0 %v887, 16
      %v968 = vpop.permute.xlu0 %967
      %969 = vrot.lane.b32.xlu0 %v888, 16
      %v970 = vpop.permute.xlu0 %969
      %971 = vrot.lane.b32.xlu0 %v889, 16
      %v972 = vpop.permute.xlu0 %971
      %973 = vrot.lane.b32.xlu0 %v890, 16
      %v974 = vpop.permute.xlu0 %973
      %975 = vrot.lane.b32.xlu0 %v891, 16
      %v976 = vpop.permute.xlu0 %975
      %977 = vrot.lane.b32.xlu0 %v892, 16
      %v978 = vpop.permute.xlu0 %977
      %979 = vrot.lane.b32.xlu0 %v893, 16
      %v980 = vpop.permute.xlu0 %979
      %981 = vrot.lane.b32.xlu0 %v894, 16
      %v982 = vpop.permute.xlu0 %981
      %983 = vrot.lane.b32.xlu0 %v895, 16
      %v984 = vpop.permute.xlu0 %983
      %985 = vrot.lane.b32.xlu0 %v896, 16
      %v986 = vpop.permute.xlu0 %985
      %987 = vrot.lane.b32.xlu0 %v897, 16
      %v988 = vpop.permute.xlu0 %987
      %989 = vrot.lane.b32.xlu0 %v898, 16
      %v990 = vpop.permute.xlu0 %989
      %991 = vrot.lane.b32.xlu0 %v899, 16
      %v992 = vpop.permute.xlu0 %991
      %993 = vrot.lane.b32.xlu0 %v900, 16
      %v994 = vpop.permute.xlu0 %993
      %995 = vrot.lane.b32.xlu0 %v901, 16
      %v996 = vpop.permute.xlu0 %995
      %997 = vrot.lane.b32.xlu0 %v902, 16
      %v998 = vpop.permute.xlu0 %997
      %vm1031 = vcmask 191616
      %1032 = vst.msk [vmem:[#allocation3] sm:$0xf] %vm1031, %v936
      %1033 = vst.msk [vmem:[#allocation3 + $0x4] sm:$0xf] %vm1031, %v938
      %1034 = vst.msk [vmem:[#allocation3 + $0x8] sm:$0xf] %vm1031, %v940
      %1035 = vst.msk [vmem:[#allocation3 + $0xc] sm:$0xf] %vm1031, %v942
      %1036 = vst.msk [vmem:[#allocation3 + $0x10] sm:$0xf] %vm1031, %v944
      %1037 = vst.msk [vmem:[#allocation3 + $0x14] sm:$0xf] %vm1031, %v946
      %1038 = vst.msk [vmem:[#allocation3 + $0x18] sm:$0xf] %vm1031, %v948
      %1039 = vst.msk [vmem:[#allocation3 + $0x1c] sm:$0xf] %vm1031, %v950
      %1040 = vst.msk [vmem:[#allocation3 + $0x20] sm:$0xf] %vm1031, %v952
      %1041 = vst.msk [vmem:[#allocation3 + $0x24] sm:$0xf] %vm1031, %v954
      %1042 = vst.msk [vmem:[#allocation3 + $0x28] sm:$0xf] %vm1031, %v956
      %1043 = vst.msk [vmem:[#allocation3 + $0x2c] sm:$0xf] %vm1031, %v958
      %1044 = vst.msk [vmem:[#allocation3 + $0x30] sm:$0xf] %vm1031, %v960
      %1045 = vst.msk [vmem:[#allocation3 + $0x34] sm:$0xf] %vm1031, %v962
      %1046 = vst.msk [vmem:[#allocation3 + $0x38] sm:$0xf] %vm1031, %v964
      %1047 = vst.msk [vmem:[#allocation3 + $0x3c] sm:$0xf] %vm1031, %v966
      %1048 = vst.msk [vmem:[#allocation3 + $0x40] sm:$0xf] %vm1031, %v968
      %1049 = vst.msk [vmem:[#allocation3 + $0x44] sm:$0xf] %vm1031, %v970
      %1050 = vst.msk [vmem:[#allocation3 + $0x48] sm:$0xf] %vm1031, %v972
      %1051 = vst.msk [vmem:[#allocation3 + $0x4c] sm:$0xf] %vm1031, %v974
      %1052 = vst.msk [vmem:[#allocation3 + $0x50] sm:$0xf] %vm1031, %v976
      %1053 = vst.msk [vmem:[#allocation3 + $0x54] sm:$0xf] %vm1031, %v978
      %1054 = vst.msk [vmem:[#allocation3 + $0x58] sm:$0xf] %vm1031, %v980
      %1055 = vst.msk [vmem:[#allocation3 + $0x5c] sm:$0xf] %vm1031, %v982
      %1056 = vst.msk [vmem:[#allocation3 + $0x60] sm:$0xf] %vm1031, %v984
      %1057 = vst.msk [vmem:[#allocation3 + $0x64] sm:$0xf] %vm1031, %v986
      %1058 = vst.msk [vmem:[#allocation3 + $0x68] sm:$0xf] %vm1031, %v988
      %1059 = vst.msk [vmem:[#allocation3 + $0x6c] sm:$0xf] %vm1031, %v990
      %1060 = vst.msk [vmem:[#allocation3 + $0x70] sm:$0xf] %vm1031, %v992
      %1061 = vst.msk [vmem:[#allocation3 + $0x74] sm:$0xf] %vm1031, %v994
      %1062 = vst.msk [vmem:[#allocation3 + $0x78] sm:$0xf] %vm1031, %v996
      %1063 = vst.msk [vmem:[#allocation3 + $0x7c] sm:$0xf] %vm1031, %v998
      %v1064 = vld [vmem:[%s484] sm:$0xff]
      %v1065 = vld [vmem:[%s484 + $0x8] sm:$0xff]
      %v1066 = vld [vmem:[%s484 + $0x18] sm:$0xff]
      %v1067 = vld [vmem:[%s484 + $0x20] sm:$0xff]
      %v1068 = vld [vmem:[%s484 + $0x30] sm:$0xff]
      %v1069 = vld [vmem:[%s484 + $0x38] sm:$0xff]
      %v1070 = vld [vmem:[%s484 + $0x48] sm:$0xff]
      %v1071 = vld [vmem:[%s484 + $0x50] sm:$0xff]
      %v1072 = vld [vmem:[%s484 + $0x60] sm:$0xff]
      %v1073 = vld [vmem:[%s484 + $0x68] sm:$0xff]
      %v1074 = vld [vmem:[%s484 + $0x78] sm:$0xff]
      %v1075 = vld [vmem:[%s484 + $0x80] sm:$0xff]
      %v1076 = vld [vmem:[%s484 + $0x90] sm:$0xff]
      %v1077 = vld [vmem:[%s484 + $0x98] sm:$0xff]
      %v1078 = vld [vmem:[%s484 + $0xa8] sm:$0xff]
      %v1079 = vld [vmem:[%s484 + $0xb0] sm:$0xff]
      %v1080 = vld [vmem:[%s484 + $0xc0] sm:$0xff]
      %v1081 = vld [vmem:[%s484 + $0xc8] sm:$0xff]
      %v1082 = vld [vmem:[%s484 + $0xd8] sm:$0xff]
      %v1083 = vld [vmem:[%s484 + $0xe0] sm:$0xff]
      %v1084 = vld [vmem:[%s484 + $0xf0] sm:$0xff]
      %v1085 = vld [vmem:[%s484 + $0xf8] sm:$0xff]
      %v1086 = vld [vmem:[%s484 + $0x108] sm:$0xff]
      %v1087 = vld [vmem:[%s484 + $0x110] sm:$0xff]
      %v1088 = vld [vmem:[%s484 + $0x120] sm:$0xff]
      %v1089 = vld [vmem:[%s484 + $0x128] sm:$0xff]
      %v1090 = vld [vmem:[%s484 + $0x138] sm:$0xff]
      %v1091 = vld [vmem:[%s484 + $0x140] sm:$0xff]
      %v1092 = vld [vmem:[%s484 + $0x150] sm:$0xff]
      %v1093 = vld [vmem:[%s484 + $0x158] sm:$0xff]
      %v1094 = vld [vmem:[%s484 + $0x168] sm:$0xff]
      %v1095 = vld [vmem:[%s484 + $0x170] sm:$0xff]
      %v1096 = vpack.c.bf16 %v1064, %v1064
      %v1097 = vpack.c.bf16 %v1065, %v1065
      %v1098 = vpack.c.bf16 %v1066, %v1066
      %v1099 = vpack.c.bf16 %v1067, %v1067
      %v1100 = vpack.c.bf16 %v1068, %v1068
      %v1101 = vpack.c.bf16 %v1069, %v1069
      %v1102 = vpack.c.bf16 %v1070, %v1070
      %v1103 = vpack.c.bf16 %v1071, %v1071
      %v1104 = vpack.c.bf16 %v1072, %v1072
      %v1105 = vpack.c.bf16 %v1073, %v1073
      %v1106 = vpack.c.bf16 %v1074, %v1074
      %v1107 = vpack.c.bf16 %v1075, %v1075
      %v1108 = vpack.c.bf16 %v1076, %v1076
      %v1109 = vpack.c.bf16 %v1077, %v1077
      %v1110 = vpack.c.bf16 %v1078, %v1078
      %v1111 = vpack.c.bf16 %v1079, %v1079
      %v1112 = vpack.c.bf16 %v1080, %v1080
      %v1113 = vpack.c.bf16 %v1081, %v1081
      %v1114 = vpack.c.bf16 %v1082, %v1082
      %v1115 = vpack.c.bf16 %v1083, %v1083
      %v1116 = vpack.c.bf16 %v1084, %v1084
      %v1117 = vpack.c.bf16 %v1085, %v1085
      %v1118 = vpack.c.bf16 %v1086, %v1086
      %v1119 = vpack.c.bf16 %v1087, %v1087
      %v1120 = vpack.c.bf16 %v1088, %v1088
      %v1121 = vpack.c.bf16 %v1089, %v1089
      %v1122 = vpack.c.bf16 %v1090, %v1090
      %v1123 = vpack.c.bf16 %v1091, %v1091
      %v1124 = vpack.c.bf16 %v1092, %v1092
      %v1125 = vpack.c.bf16 %v1093, %v1093
      %v1126 = vpack.c.bf16 %v1094, %v1094
      %v1127 = vpack.c.bf16 %v1095, %v1095
      %1160 = vrot.lane.b32.xlu0 %v1096, 24
      %v1161 = vpop.permute.xlu0 %1160
      %1162 = vrot.lane.b32.xlu0 %v1097, 24
      %v1163 = vpop.permute.xlu0 %1162
      %1164 = vrot.lane.b32.xlu0 %v1098, 24
      %v1165 = vpop.permute.xlu0 %1164
      %1166 = vrot.lane.b32.xlu0 %v1099, 24
      %v1167 = vpop.permute.xlu0 %1166
      %1168 = vrot.lane.b32.xlu0 %v1100, 24
      %v1169 = vpop.permute.xlu0 %1168
      %1170 = vrot.lane.b32.xlu0 %v1101, 24
      %v1171 = vpop.permute.xlu0 %1170
      %1172 = vrot.lane.b32.xlu0 %v1102, 24
      %v1173 = vpop.permute.xlu0 %1172
      %1174 = vrot.lane.b32.xlu0 %v1103, 24
      %v1175 = vpop.permute.xlu0 %1174
      %1176 = vrot.lane.b32.xlu0 %v1104, 24
      %v1177 = vpop.permute.xlu0 %1176
      %1178 = vrot.lane.b32.xlu0 %v1105, 24
      %v1179 = vpop.permute.xlu0 %1178
      %1180 = vrot.lane.b32.xlu0 %v1106, 24
      %v1181 = vpop.permute.xlu0 %1180
      %1182 = vrot.lane.b32.xlu0 %v1107, 24
      %v1183 = vpop.permute.xlu0 %1182
      %1184 = vrot.lane.b32.xlu0 %v1108, 24
      %v1185 = vpop.permute.xlu0 %1184
      %1186 = vrot.lane.b32.xlu0 %v1109, 24
      %v1187 = vpop.permute.xlu0 %1186
      %1188 = vrot.lane.b32.xlu0 %v1110, 24
      %v1189 = vpop.permute.xlu0 %1188
      %1190 = vrot.lane.b32.xlu0 %v1111, 24
      %v1191 = vpop.permute.xlu0 %1190
      %1192 = vrot.lane.b32.xlu0 %v1112, 24
      %v1193 = vpop.permute.xlu0 %1192
      %1194 = vrot.lane.b32.xlu0 %v1113, 24
      %v1195 = vpop.permute.xlu0 %1194
      %1196 = vrot.lane.b32.xlu0 %v1114, 24
      %v1197 = vpop.permute.xlu0 %1196
      %1198 = vrot.lane.b32.xlu0 %v1115, 24
      %v1199 = vpop.permute.xlu0 %1198
      %1200 = vrot.lane.b32.xlu0 %v1116, 24
      %v1201 = vpop.permute.xlu0 %1200
      %1202 = vrot.lane.b32.xlu0 %v1117, 24
      %v1203 = vpop.permute.xlu0 %1202
      %1204 = vrot.lane.b32.xlu0 %v1118, 24
      %v1205 = vpop.permute.xlu0 %1204
      %1206 = vrot.lane.b32.xlu0 %v1119, 24
      %v1207 = vpop.permute.xlu0 %1206
      %1208 = vrot.lane.b32.xlu0 %v1120, 24
      %v1209 = vpop.permute.xlu0 %1208
      %1210 = vrot.lane.b32.xlu0 %v1121, 24
      %v1211 = vpop.permute.xlu0 %1210
      %1212 = vrot.lane.b32.xlu0 %v1122, 24
      %v1213 = vpop.permute.xlu0 %1212
      %1214 = vrot.lane.b32.xlu0 %v1123, 24
      %v1215 = vpop.permute.xlu0 %1214
      %1216 = vrot.lane.b32.xlu0 %v1124, 24
      %v1217 = vpop.permute.xlu0 %1216
      %1218 = vrot.lane.b32.xlu0 %v1125, 24
      %v1219 = vpop.permute.xlu0 %1218
      %1220 = vrot.lane.b32.xlu0 %v1126, 24
      %v1221 = vpop.permute.xlu0 %1220
      %1222 = vrot.lane.b32.xlu0 %v1127, 24
      %v1223 = vpop.permute.xlu0 %1222
      %vm1256 = vcmask 257216
      %1257 = vst.msk [vmem:[#allocation3] sm:$0xf] %vm1256, %v1161
      %1258 = vst.msk [vmem:[#allocation3 + $0x4] sm:$0xf] %vm1256, %v1163
      %1259 = vst.msk [vmem:[#allocation3 + $0x8] sm:$0xf] %vm1256, %v1165
      %1260 = vst.msk [vmem:[#allocation3 + $0xc] sm:$0xf] %vm1256, %v1167
      %1261 = vst.msk [vmem:[#allocation3 + $0x10] sm:$0xf] %vm1256, %v1169
      %1262 = vst.msk [vmem:[#allocation3 + $0x14] sm:$0xf] %vm1256, %v1171
      %1263 = vst.msk [vmem:[#allocation3 + $0x18] sm:$0xf] %vm1256, %v1173
      %1264 = vst.msk [vmem:[#allocation3 + $0x1c] sm:$0xf] %vm1256, %v1175
      %1265 = vst.msk [vmem:[#allocation3 + $0x20] sm:$0xf] %vm1256, %v1177
      %1266 = vst.msk [vmem:[#allocation3 + $0x24] sm:$0xf] %vm1256, %v1179
      %1267 = vst.msk [vmem:[#allocation3 + $0x28] sm:$0xf] %vm1256, %v1181
      %1268 = vst.msk [vmem:[#allocation3 + $0x2c] sm:$0xf] %vm1256, %v1183
      %1269 = vst.msk [vmem:[#allocation3 + $0x30] sm:$0xf] %vm1256, %v1185
      %1270 = vst.msk [vmem:[#allocation3 + $0x34] sm:$0xf] %vm1256, %v1187
      %1271 = vst.msk [vmem:[#allocation3 + $0x38] sm:$0xf] %vm1256, %v1189
      %1272 = vst.msk [vmem:[#allocation3 + $0x3c] sm:$0xf] %vm1256, %v1191
      %1273 = vst.msk [vmem:[#allocation3 + $0x40] sm:$0xf] %vm1256, %v1193
      %1274 = vst.msk [vmem:[#allocation3 + $0x44] sm:$0xf] %vm1256, %v1195
      %1275 = vst.msk [vmem:[#allocation3 + $0x48] sm:$0xf] %vm1256, %v1197
      %1276 = vst.msk [vmem:[#allocation3 + $0x4c] sm:$0xf] %vm1256, %v1199
      %1277 = vst.msk [vmem:[#allocation3 + $0x50] sm:$0xf] %vm1256, %v1201
      %1278 = vst.msk [vmem:[#allocation3 + $0x54] sm:$0xf] %vm1256, %v1203
      %1279 = vst.msk [vmem:[#allocation3 + $0x58] sm:$0xf] %vm1256, %v1205
      %1280 = vst.msk [vmem:[#allocation3 + $0x5c] sm:$0xf] %vm1256, %v1207
      %1281 = vst.msk [vmem:[#allocation3 + $0x60] sm:$0xf] %vm1256, %v1209
      %1282 = vst.msk [vmem:[#allocation3 + $0x64] sm:$0xf] %vm1256, %v1211
      %1283 = vst.msk [vmem:[#allocation3 + $0x68] sm:$0xf] %vm1256, %v1213
      %1284 = vst.msk [vmem:[#allocation3 + $0x6c] sm:$0xf] %vm1256, %v1215
      %1285 = vst.msk [vmem:[#allocation3 + $0x70] sm:$0xf] %vm1256, %v1217
      %1286 = vst.msk [vmem:[#allocation3 + $0x74] sm:$0xf] %vm1256, %v1219
      %1287 = vst.msk [vmem:[#allocation3 + $0x78] sm:$0xf] %vm1256, %v1221
      %1288 = vst.msk [vmem:[#allocation3 + $0x7c] sm:$0xf] %vm1256, %v1223
      %v1289 = vld [vmem:[%s484 + $0x1] sm:$0xff]
      %v1290 = vld [vmem:[%s484 + $0x9] sm:$0xff]
      %v1291 = vld [vmem:[%s484 + $0x19] sm:$0xff]
      %v1292 = vld [vmem:[%s484 + $0x21] sm:$0xff]
      %v1293 = vld [vmem:[%s484 + $0x31] sm:$0xff]
      %v1294 = vld [vmem:[%s484 + $0x39] sm:$0xff]
      %v1295 = vld [vmem:[%s484 + $0x49] sm:$0xff]
      %v1296 = vld [vmem:[%s484 + $0x51] sm:$0xff]
      %v1297 = vld [vmem:[%s484 + $0x61] sm:$0xff]
      %v1298 = vld [vmem:[%s484 + $0x69] sm:$0xff]
      %v1299 = vld [vmem:[%s484 + $0x79] sm:$0xff]
      %v1300 = vld [vmem:[%s484 + $0x81] sm:$0xff]
      %v1301 = vld [vmem:[%s484 + $0x91] sm:$0xff]
      %v1302 = vld [vmem:[%s484 + $0x99] sm:$0xff]
      %v1303 = vld [vmem:[%s484 + $0xa9] sm:$0xff]
      %v1304 = vld [vmem:[%s484 + $0xb1] sm:$0xff]
      %v1305 = vld [vmem:[%s484 + $0xc1] sm:$0xff]
      %v1306 = vld [vmem:[%s484 + $0xc9] sm:$0xff]
      %v1307 = vld [vmem:[%s484 + $0xd9] sm:$0xff]
      %v1308 = vld [vmem:[%s484 + $0xe1] sm:$0xff]
      %v1309 = vld [vmem:[%s484 + $0xf1] sm:$0xff]
      %v1310 = vld [vmem:[%s484 + $0xf9] sm:$0xff]
      %v1311 = vld [vmem:[%s484 + $0x109] sm:$0xff]
      %v1312 = vld [vmem:[%s484 + $0x111] sm:$0xff]
      %v1313 = vld [vmem:[%s484 + $0x121] sm:$0xff]
      %v1314 = vld [vmem:[%s484 + $0x129] sm:$0xff]
      %v1315 = vld [vmem:[%s484 + $0x139] sm:$0xff]
      %v1316 = vld [vmem:[%s484 + $0x141] sm:$0xff]
      %v1317 = vld [vmem:[%s484 + $0x151] sm:$0xff]
      %v1318 = vld [vmem:[%s484 + $0x159] sm:$0xff]
      %v1319 = vld [vmem:[%s484 + $0x169] sm:$0xff]
      %v1320 = vld [vmem:[%s484 + $0x171] sm:$0xff]
      %v1321 = vpack.c.bf16 %v1289, %v1289
      %v1322 = vpack.c.bf16 %v1290, %v1290
      %v1323 = vpack.c.bf16 %v1291, %v1291
      %v1324 = vpack.c.bf16 %v1292, %v1292
      %v1325 = vpack.c.bf16 %v1293, %v1293
      %v1326 = vpack.c.bf16 %v1294, %v1294
      %v1327 = vpack.c.bf16 %v1295, %v1295
      %v1328 = vpack.c.bf16 %v1296, %v1296
      %v1329 = vpack.c.bf16 %v1297, %v1297
      %v1330 = vpack.c.bf16 %v1298, %v1298
      %v1331 = vpack.c.bf16 %v1299, %v1299
      %v1332 = vpack.c.bf16 %v1300, %v1300
      %v1333 = vpack.c.bf16 %v1301, %v1301
      %v1334 = vpack.c.bf16 %v1302, %v1302
      %v1335 = vpack.c.bf16 %v1303, %v1303
      %v1336 = vpack.c.bf16 %v1304, %v1304
      %v1337 = vpack.c.bf16 %v1305, %v1305
      %v1338 = vpack.c.bf16 %v1306, %v1306
      %v1339 = vpack.c.bf16 %v1307, %v1307
      %v1340 = vpack.c.bf16 %v1308, %v1308
      %v1341 = vpack.c.bf16 %v1309, %v1309
      %v1342 = vpack.c.bf16 %v1310, %v1310
      %v1343 = vpack.c.bf16 %v1311, %v1311
      %v1344 = vpack.c.bf16 %v1312, %v1312
      %v1345 = vpack.c.bf16 %v1313, %v1313
      %v1346 = vpack.c.bf16 %v1314, %v1314
      %v1347 = vpack.c.bf16 %v1315, %v1315
      %v1348 = vpack.c.bf16 %v1316, %v1316
      %v1349 = vpack.c.bf16 %v1317, %v1317
      %v1350 = vpack.c.bf16 %v1318, %v1318
      %v1351 = vpack.c.bf16 %v1319, %v1319
      %v1352 = vpack.c.bf16 %v1320, %v1320
      %1385 = vrot.lane.b32.xlu0 %v1321, 32
      %v1386 = vpop.permute.xlu0 %1385
      %1387 = vrot.lane.b32.xlu0 %v1322, 32
      %v1388 = vpop.permute.xlu0 %1387
      %1389 = vrot.lane.b32.xlu0 %v1323, 32
      %v1390 = vpop.permute.xlu0 %1389
      %1391 = vrot.lane.b32.xlu0 %v1324, 32
      %v1392 = vpop.permute.xlu0 %1391
      %1393 = vrot.lane.b32.xlu0 %v1325, 32
      %v1394 = vpop.permute.xlu0 %1393
      %1395 = vrot.lane.b32.xlu0 %v1326, 32
      %v1396 = vpop.permute.xlu0 %1395
      %1397 = vrot.lane.b32.xlu0 %v1327, 32
      %v1398 = vpop.permute.xlu0 %1397
      %1399 = vrot.lane.b32.xlu0 %v1328, 32
      %v1400 = vpop.permute.xlu0 %1399
      %1401 = vrot.lane.b32.xlu0 %v1329, 32
      %v1402 = vpop.permute.xlu0 %1401
      %1403 = vrot.lane.b32.xlu0 %v1330, 32
      %v1404 = vpop.permute.xlu0 %1403
      %1405 = vrot.lane.b32.xlu0 %v1331, 32
      %v1406 = vpop.permute.xlu0 %1405
      %1407 = vrot.lane.b32.xlu0 %v1332, 32
      %v1408 = vpop.permute.xlu0 %1407
      %1409 = vrot.lane.b32.xlu0 %v1333, 32
      %v1410 = vpop.permute.xlu0 %1409
      %1411 = vrot.lane.b32.xlu0 %v1334, 32
      %v1412 = vpop.permute.xlu0 %1411
      %1413 = vrot.lane.b32.xlu0 %v1335, 32
      %v1414 = vpop.permute.xlu0 %1413
      %1415 = vrot.lane.b32.xlu0 %v1336, 32
      %v1416 = vpop.permute.xlu0 %1415
      %1417 = vrot.lane.b32.xlu0 %v1337, 32
      %v1418 = vpop.permute.xlu0 %1417
      %1419 = vrot.lane.b32.xlu0 %v1338, 32
      %v1420 = vpop.permute.xlu0 %1419
      %1421 = vrot.lane.b32.xlu0 %v1339, 32
      %v1422 = vpop.permute.xlu0 %1421
      %1423 = vrot.lane.b32.xlu0 %v1340, 32
      %v1424 = vpop.permute.xlu0 %1423
      %1425 = vrot.lane.b32.xlu0 %v1341, 32
      %v1426 = vpop.permute.xlu0 %1425
      %1427 = vrot.lane.b32.xlu0 %v1342, 32
      %v1428 = vpop.permute.xlu0 %1427
      %1429 = vrot.lane.b32.xlu0 %v1343, 32
      %v1430 = vpop.permute.xlu0 %1429
      %1431 = vrot.lane.b32.xlu0 %v1344, 32
      %v1432 = vpop.permute.xlu0 %1431
      %1433 = vrot.lane.b32.xlu0 %v1345, 32
      %v1434 = vpop.permute.xlu0 %1433
      %1435 = vrot.lane.b32.xlu0 %v1346, 32
      %v1436 = vpop.permute.xlu0 %1435
      %1437 = vrot.lane.b32.xlu0 %v1347, 32
      %v1438 = vpop.permute.xlu0 %1437
      %1439 = vrot.lane.b32.xlu0 %v1348, 32
      %v1440 = vpop.permute.xlu0 %1439
      %1441 = vrot.lane.b32.xlu0 %v1349, 32
      %v1442 = vpop.permute.xlu0 %1441
      %1443 = vrot.lane.b32.xlu0 %v1350, 32
      %v1444 = vpop.permute.xlu0 %1443
      %1445 = vrot.lane.b32.xlu0 %v1351, 32
      %v1446 = vpop.permute.xlu0 %1445
      %1447 = vrot.lane.b32.xlu0 %v1352, 32
      %v1448 = vpop.permute.xlu0 %1447
      %vm1481 = vcmask 322816
      %1482 = vst.msk [vmem:[#allocation3] sm:$0xf] %vm1481, %v1386
      %1483 = vst.msk [vmem:[#allocation3 + $0x4] sm:$0xf] %vm1481, %v1388
      %1484 = vst.msk [vmem:[#allocation3 + $0x8] sm:$0xf] %vm1481, %v1390
      %1485 = vst.msk [vmem:[#allocation3 + $0xc] sm:$0xf] %vm1481, %v1392
      %1486 = vst.msk [vmem:[#allocation3 + $0x10] sm:$0xf] %vm1481, %v1394
      %1487 = vst.msk [vmem:[#allocation3 + $0x14] sm:$0xf] %vm1481, %v1396
      %1488 = vst.msk [vmem:[#allocation3 + $0x18] sm:$0xf] %vm1481, %v1398
      %1489 = vst.msk [vmem:[#allocation3 + $0x1c] sm:$0xf] %vm1481, %v1400
      %1490 = vst.msk [vmem:[#allocation3 + $0x20] sm:$0xf] %vm1481, %v1402
      %1491 = vst.msk [vmem:[#allocation3 + $0x24] sm:$0xf] %vm1481, %v1404
      %1492 = vst.msk [vmem:[#allocation3 + $0x28] sm:$0xf] %vm1481, %v1406
      %1493 = vst.msk [vmem:[#allocation3 + $0x2c] sm:$0xf] %vm1481, %v1408
      %1494 = vst.msk [vmem:[#allocation3 + $0x30] sm:$0xf] %vm1481, %v1410
      %1495 = vst.msk [vmem:[#allocation3 + $0x34] sm:$0xf] %vm1481, %v1412
      %1496 = vst.msk [vmem:[#allocation3 + $0x38] sm:$0xf] %vm1481, %v1414
      %1497 = vst.msk [vmem:[#allocation3 + $0x3c] sm:$0xf] %vm1481, %v1416
      %1498 = vst.msk [vmem:[#allocation3 + $0x40] sm:$0xf] %vm1481, %v1418
      %1499 = vst.msk [vmem:[#allocation3 + $0x44] sm:$0xf] %vm1481, %v1420
      %1500 = vst.msk [vmem:[#allocation3 + $0x48] sm:$0xf] %vm1481, %v1422
      %1501 = vst.msk [vmem:[#allocation3 + $0x4c] sm:$0xf] %vm1481, %v1424
      %1502 = vst.msk [vmem:[#allocation3 + $0x50] sm:$0xf] %vm1481, %v1426
      %1503 = vst.msk [vmem:[#allocation3 + $0x54] sm:$0xf] %vm1481, %v1428
      %1504 = vst.msk [vmem:[#allocation3 + $0x58] sm:$0xf] %vm1481, %v1430
      %1505 = vst.msk [vmem:[#allocation3 + $0x5c] sm:$0xf] %vm1481, %v1432
      %1506 = vst.msk [vmem:[#allocation3 + $0x60] sm:$0xf] %vm1481, %v1434
      %1507 = vst.msk [vmem:[#allocation3 + $0x64] sm:$0xf] %vm1481, %v1436
      %1508 = vst.msk [vmem:[#allocation3 + $0x68] sm:$0xf] %vm1481, %v1438
      %1509 = vst.msk [vmem:[#allocation3 + $0x6c] sm:$0xf] %vm1481, %v1440
      %1510 = vst.msk [vmem:[#allocation3 + $0x70] sm:$0xf] %vm1481, %v1442
      %1511 = vst.msk [vmem:[#allocation3 + $0x74] sm:$0xf] %vm1481, %v1444
      %1512 = vst.msk [vmem:[#allocation3 + $0x78] sm:$0xf] %vm1481, %v1446
      %1513 = vst.msk [vmem:[#allocation3 + $0x7c] sm:$0xf] %vm1481, %v1448
      %v1514 = vld [vmem:[%s484 + $0x2] sm:$0xff]
      %v1515 = vld [vmem:[%s484 + $0xa] sm:$0xff]
      %v1516 = vld [vmem:[%s484 + $0x1a] sm:$0xff]
      %v1517 = vld [vmem:[%s484 + $0x22] sm:$0xff]
      %v1518 = vld [vmem:[%s484 + $0x32] sm:$0xff]
      %v1519 = vld [vmem:[%s484 + $0x3a] sm:$0xff]
      %v1520 = vld [vmem:[%s484 + $0x4a] sm:$0xff]
      %v1521 = vld [vmem:[%s484 + $0x52] sm:$0xff]
      %v1522 = vld [vmem:[%s484 + $0x62] sm:$0xff]
      %v1523 = vld [vmem:[%s484 + $0x6a] sm:$0xff]
      %v1524 = vld [vmem:[%s484 + $0x7a] sm:$0xff]
      %v1525 = vld [vmem:[%s484 + $0x82] sm:$0xff]
      %v1526 = vld [vmem:[%s484 + $0x92] sm:$0xff]
      %v1527 = vld [vmem:[%s484 + $0x9a] sm:$0xff]
      %v1528 = vld [vmem:[%s484 + $0xaa] sm:$0xff]
      %v1529 = vld [vmem:[%s484 + $0xb2] sm:$0xff]
      %v1530 = vld [vmem:[%s484 + $0xc2] sm:$0xff]
      %v1531 = vld [vmem:[%s484 + $0xca] sm:$0xff]
      %v1532 = vld [vmem:[%s484 + $0xda] sm:$0xff]
      %v1533 = vld [vmem:[%s484 + $0xe2] sm:$0xff]
      %v1534 = vld [vmem:[%s484 + $0xf2] sm:$0xff]
      %v1535 = vld [vmem:[%s484 + $0xfa] sm:$0xff]
      %v1536 = vld [vmem:[%s484 + $0x10a] sm:$0xff]
      %v1537 = vld [vmem:[%s484 + $0x112] sm:$0xff]
      %v1538 = vld [vmem:[%s484 + $0x122] sm:$0xff]
      %v1539 = vld [vmem:[%s484 + $0x12a] sm:$0xff]
      %v1540 = vld [vmem:[%s484 + $0x13a] sm:$0xff]
      %v1541 = vld [vmem:[%s484 + $0x142] sm:$0xff]
      %v1542 = vld [vmem:[%s484 + $0x152] sm:$0xff]
      %v1543 = vld [vmem:[%s484 + $0x15a] sm:$0xff]
      %v1544 = vld [vmem:[%s484 + $0x16a] sm:$0xff]
      %v1545 = vld [vmem:[%s484 + $0x172] sm:$0xff]
      %v1546 = vpack.c.bf16 %v1514, %v1514
      %v1547 = vpack.c.bf16 %v1515, %v1515
      %v1548 = vpack.c.bf16 %v1516, %v1516
      %v1549 = vpack.c.bf16 %v1517, %v1517
      %v1550 = vpack.c.bf16 %v1518, %v1518
      %v1551 = vpack.c.bf16 %v1519, %v1519
      %v1552 = vpack.c.bf16 %v1520, %v1520
      %v1553 = vpack.c.bf16 %v1521, %v1521
      %v1554 = vpack.c.bf16 %v1522, %v1522
      %v1555 = vpack.c.bf16 %v1523, %v1523
      %v1556 = vpack.c.bf16 %v1524, %v1524
      %v1557 = vpack.c.bf16 %v1525, %v1525
      %v1558 = vpack.c.bf16 %v1526, %v1526
      %v1559 = vpack.c.bf16 %v1527, %v1527
      %v1560 = vpack.c.bf16 %v1528, %v1528
      %v1561 = vpack.c.bf16 %v1529, %v1529
      %v1562 = vpack.c.bf16 %v1530, %v1530
      %v1563 = vpack.c.bf16 %v1531, %v1531
      %v1564 = vpack.c.bf16 %v1532, %v1532
      %v1565 = vpack.c.bf16 %v1533, %v1533
      %v1566 = vpack.c.bf16 %v1534, %v1534
      %v1567 = vpack.c.bf16 %v1535, %v1535
      %v1568 = vpack.c.bf16 %v1536, %v1536
      %v1569 = vpack.c.bf16 %v1537, %v1537
      %v1570 = vpack.c.bf16 %v1538, %v1538
      %v1571 = vpack.c.bf16 %v1539, %v1539
      %v1572 = vpack.c.bf16 %v1540, %v1540
      %v1573 = vpack.c.bf16 %v1541, %v1541
      %v1574 = vpack.c.bf16 %v1542, %v1542
      %v1575 = vpack.c.bf16 %v1543, %v1543
      %v1576 = vpack.c.bf16 %v1544, %v1544
      %v1577 = vpack.c.bf16 %v1545, %v1545
      %1610 = vrot.lane.b32.xlu0 %v1546, 40
      %v1611 = vpop.permute.xlu0 %1610
      %1612 = vrot.lane.b32.xlu0 %v1547, 40
      %v1613 = vpop.permute.xlu0 %1612
      %1614 = vrot.lane.b32.xlu0 %v1548, 40
      %v1615 = vpop.permute.xlu0 %1614
      %1616 = vrot.lane.b32.xlu0 %v1549, 40
      %v1617 = vpop.permute.xlu0 %1616
      %1618 = vrot.lane.b32.xlu0 %v1550, 40
      %v1619 = vpop.permute.xlu0 %1618
      %1620 = vrot.lane.b32.xlu0 %v1551, 40
      %v1621 = vpop.permute.xlu0 %1620
      %1622 = vrot.lane.b32.xlu0 %v1552, 40
      %v1623 = vpop.permute.xlu0 %1622
      %1624 = vrot.lane.b32.xlu0 %v1553, 40
      %v1625 = vpop.permute.xlu0 %1624
      %1626 = vrot.lane.b32.xlu0 %v1554, 40
      %v1627 = vpop.permute.xlu0 %1626
      %1628 = vrot.lane.b32.xlu0 %v1555, 40
      %v1629 = vpop.permute.xlu0 %1628
      %1630 = vrot.lane.b32.xlu0 %v1556, 40
      %v1631 = vpop.permute.xlu0 %1630
      %1632 = vrot.lane.b32.xlu0 %v1557, 40
      %v1633 = vpop.permute.xlu0 %1632
      %1634 = vrot.lane.b32.xlu0 %v1558, 40
      %v1635 = vpop.permute.xlu0 %1634
      %1636 = vrot.lane.b32.xlu0 %v1559, 40
      %v1637 = vpop.permute.xlu0 %1636
      %1638 = vrot.lane.b32.xlu0 %v1560, 40
      %v1639 = vpop.permute.xlu0 %1638
      %1640 = vrot.lane.b32.xlu0 %v1561, 40
      %v1641 = vpop.permute.xlu0 %1640
      %1642 = vrot.lane.b32.xlu0 %v1562, 40
      %v1643 = vpop.permute.xlu0 %1642
      %1644 = vrot.lane.b32.xlu0 %v1563, 40
      %v1645 = vpop.permute.xlu0 %1644
      %1646 = vrot.lane.b32.xlu0 %v1564, 40
      %v1647 = vpop.permute.xlu0 %1646
      %1648 = vrot.lane.b32.xlu0 %v1565, 40
      %v1649 = vpop.permute.xlu0 %1648
      %1650 = vrot.lane.b32.xlu0 %v1566, 40
      %v1651 = vpop.permute.xlu0 %1650
      %1652 = vrot.lane.b32.xlu0 %v1567, 40
      %v1653 = vpop.permute.xlu0 %1652
      %1654 = vrot.lane.b32.xlu0 %v1568, 40
      %v1655 = vpop.permute.xlu0 %1654
      %1656 = vrot.lane.b32.xlu0 %v1569, 40
      %v1657 = vpop.permute.xlu0 %1656
      %1658 = vrot.lane.b32.xlu0 %v1570, 40
      %v1659 = vpop.permute.xlu0 %1658
      %1660 = vrot.lane.b32.xlu0 %v1571, 40
      %v1661 = vpop.permute.xlu0 %1660
      %1662 = vrot.lane.b32.xlu0 %v1572, 40
      %v1663 = vpop.permute.xlu0 %1662
      %1664 = vrot.lane.b32.xlu0 %v1573, 40
      %v1665 = vpop.permute.xlu0 %1664
      %1666 = vrot.lane.b32.xlu0 %v1574, 40
      %v1667 = vpop.permute.xlu0 %1666
      %1668 = vrot.lane.b32.xlu0 %v1575, 40
      %v1669 = vpop.permute.xlu0 %1668
      %1670 = vrot.lane.b32.xlu0 %v1576, 40
      %v1671 = vpop.permute.xlu0 %1670
      %1672 = vrot.lane.b32.xlu0 %v1577, 40
      %v1673 = vpop.permute.xlu0 %1672
      %vm1706 = vcmask 388416
      %1707 = vst.msk [vmem:[#allocation3] sm:$0xf] %vm1706, %v1611
      %1708 = vst.msk [vmem:[#allocation3 + $0x4] sm:$0xf] %vm1706, %v1613
      %1709 = vst.msk [vmem:[#allocation3 + $0x8] sm:$0xf] %vm1706, %v1615
      %1710 = vst.msk [vmem:[#allocation3 + $0xc] sm:$0xf] %vm1706, %v1617
      %1711 = vst.msk [vmem:[#allocation3 + $0x10] sm:$0xf] %vm1706, %v1619
      %1712 = vst.msk [vmem:[#allocation3 + $0x14] sm:$0xf] %vm1706, %v1621
      %1713 = vst.msk [vmem:[#allocation3 + $0x18] sm:$0xf] %vm1706, %v1623
      %1714 = vst.msk [vmem:[#allocation3 + $0x1c] sm:$0xf] %vm1706, %v1625
      %1715 = vst.msk [vmem:[#allocation3 + $0x20] sm:$0xf] %vm1706, %v1627
      %1716 = vst.msk [vmem:[#allocation3 + $0x24] sm:$0xf] %vm1706, %v1629
      %1717 = vst.msk [vmem:[#allocation3 + $0x28] sm:$0xf] %vm1706, %v1631
      %1718 = vst.msk [vmem:[#allocation3 + $0x2c] sm:$0xf] %vm1706, %v1633
      %1719 = vst.msk [vmem:[#allocation3 + $0x30] sm:$0xf] %vm1706, %v1635
      %1720 = vst.msk [vmem:[#allocation3 + $0x34] sm:$0xf] %vm1706, %v1637
      %1721 = vst.msk [vmem:[#allocation3 + $0x38] sm:$0xf] %vm1706, %v1639
      %1722 = vst.msk [vmem:[#allocation3 + $0x3c] sm:$0xf] %vm1706, %v1641
      %1723 = vst.msk [vmem:[#allocation3 + $0x40] sm:$0xf] %vm1706, %v1643
      %1724 = vst.msk [vmem:[#allocation3 + $0x44] sm:$0xf] %vm1706, %v1645
      %1725 = vst.msk [vmem:[#allocation3 + $0x48] sm:$0xf] %vm1706, %v1647
      %1726 = vst.msk [vmem:[#allocation3 + $0x4c] sm:$0xf] %vm1706, %v1649
      %1727 = vst.msk [vmem:[#allocation3 + $0x50] sm:$0xf] %vm1706, %v1651
      %1728 = vst.msk [vmem:[#allocation3 + $0x54] sm:$0xf] %vm1706, %v1653
      %1729 = vst.msk [vmem:[#allocation3 + $0x58] sm:$0xf] %vm1706, %v1655
      %1730 = vst.msk [vmem:[#allocation3 + $0x5c] sm:$0xf] %vm1706, %v1657
      %1731 = vst.msk [vmem:[#allocation3 + $0x60] sm:$0xf] %vm1706, %v1659
      %1732 = vst.msk [vmem:[#allocation3 + $0x64] sm:$0xf] %vm1706, %v1661
      %1733 = vst.msk [vmem:[#allocation3 + $0x68] sm:$0xf] %vm1706, %v1663
      %1734 = vst.msk [vmem:[#allocation3 + $0x6c] sm:$0xf] %vm1706, %v1665
      %1735 = vst.msk [vmem:[#allocation3 + $0x70] sm:$0xf] %vm1706, %v1667
      %1736 = vst.msk [vmem:[#allocation3 + $0x74] sm:$0xf] %vm1706, %v1669
      %1737 = vst.msk [vmem:[#allocation3 + $0x78] sm:$0xf] %vm1706, %v1671
      %1738 = vst.msk [vmem:[#allocation3 + $0x7c] sm:$0xf] %vm1706, %v1673
      %s1739 = scalar_lea.vmem [#allocation2], 48
      %v1740 = vld [vmem:[%s1739] sm:$0xff]
      %v1741 = vld [vmem:[%s1739 + $0x8] sm:$0xff]
      %v1742 = vld [vmem:[%s1739 + $0x18] sm:$0xff]
      %v1743 = vld [vmem:[%s1739 + $0x20] sm:$0xff]
      %v1744 = vld [vmem:[%s1739 + $0x30] sm:$0xff]
      %v1745 = vld [vmem:[%s1739 + $0x38] sm:$0xff]
      %v1746 = vld [vmem:[%s1739 + $0x48] sm:$0xff]
      %v1747 = vld [vmem:[%s1739 + $0x50] sm:$0xff]
      %v1748 = vld [vmem:[%s1739 + $0x60] sm:$0xff]
      %v1749 = vld [vmem:[%s1739 + $0x68] sm:$0xff]
      %v1750 = vld [vmem:[%s1739 + $0x78] sm:$0xff]
      %v1751 = vld [vmem:[%s1739 + $0x80] sm:$0xff]
      %v1752 = vld [vmem:[%s1739 + $0x90] sm:$0xff]
      %v1753 = vld [vmem:[%s1739 + $0x98] sm:$0xff]
      %v1754 = vld [vmem:[%s1739 + $0xa8] sm:$0xff]
      %v1755 = vld [vmem:[%s1739 + $0xb0] sm:$0xff]
      %v1756 = vld [vmem:[%s1739 + $0xc0] sm:$0xff]
      %v1757 = vld [vmem:[%s1739 + $0xc8] sm:$0xff]
      %v1758 = vld [vmem:[%s1739 + $0xd8] sm:$0xff]
      %v1759 = vld [vmem:[%s1739 + $0xe0] sm:$0xff]
      %v1760 = vld [vmem:[%s1739 + $0xf0] sm:$0xff]
      %v1761 = vld [vmem:[%s1739 + $0xf8] sm:$0xff]
      %v1762 = vld [vmem:[%s1739 + $0x108] sm:$0xff]
      %v1763 = vld [vmem:[%s1739 + $0x110] sm:$0xff]
      %v1764 = vld [vmem:[%s1739 + $0x120] sm:$0xff]
      %v1765 = vld [vmem:[%s1739 + $0x128] sm:$0xff]
      %v1766 = vld [vmem:[%s1739 + $0x138] sm:$0xff]
      %v1767 = vld [vmem:[%s1739 + $0x140] sm:$0xff]
      %v1768 = vld [vmem:[%s1739 + $0x150] sm:$0xff]
      %v1769 = vld [vmem:[%s1739 + $0x158] sm:$0xff]
      %v1770 = vld [vmem:[%s1739 + $0x168] sm:$0xff]
      %v1771 = vld [vmem:[%s1739 + $0x170] sm:$0xff]
      %v1772 = vpack.c.bf16 %v1740, %v1740
      %v1773 = vpack.c.bf16 %v1741, %v1741
      %v1774 = vpack.c.bf16 %v1742, %v1742
      %v1775 = vpack.c.bf16 %v1743, %v1743
      %v1776 = vpack.c.bf16 %v1744, %v1744
      %v1777 = vpack.c.bf16 %v1745, %v1745
      %v1778 = vpack.c.bf16 %v1746, %v1746
      %v1779 = vpack.c.bf16 %v1747, %v1747
      %v1780 = vpack.c.bf16 %v1748, %v1748
      %v1781 = vpack.c.bf16 %v1749, %v1749
      %v1782 = vpack.c.bf16 %v1750, %v1750
      %v1783 = vpack.c.bf16 %v1751, %v1751
      %v1784 = vpack.c.bf16 %v1752, %v1752
      %v1785 = vpack.c.bf16 %v1753, %v1753
      %v1786 = vpack.c.bf16 %v1754, %v1754
      %v1787 = vpack.c.bf16 %v1755, %v1755
      %v1788 = vpack.c.bf16 %v1756, %v1756
      %v1789 = vpack.c.bf16 %v1757, %v1757
      %v1790 = vpack.c.bf16 %v1758, %v1758
      %v1791 = vpack.c.bf16 %v1759, %v1759
      %v1792 = vpack.c.bf16 %v1760, %v1760
      %v1793 = vpack.c.bf16 %v1761, %v1761
      %v1794 = vpack.c.bf16 %v1762, %v1762
      %v1795 = vpack.c.bf16 %v1763, %v1763
      %v1796 = vpack.c.bf16 %v1764, %v1764
      %v1797 = vpack.c.bf16 %v1765, %v1765
      %v1798 = vpack.c.bf16 %v1766, %v1766
      %v1799 = vpack.c.bf16 %v1767, %v1767
      %v1800 = vpack.c.bf16 %v1768, %v1768
      %v1801 = vpack.c.bf16 %v1769, %v1769
      %v1802 = vpack.c.bf16 %v1770, %v1770
      %v1803 = vpack.c.bf16 %v1771, %v1771
      %1836 = vrot.lane.b32.xlu0 %v1772, 48
      %v1837 = vpop.permute.xlu0 %1836
      %1838 = vrot.lane.b32.xlu0 %v1773, 48
      %v1839 = vpop.permute.xlu0 %1838
      %1840 = vrot.lane.b32.xlu0 %v1774, 48
      %v1841 = vpop.permute.xlu0 %1840
      %1842 = vrot.lane.b32.xlu0 %v1775, 48
      %v1843 = vpop.permute.xlu0 %1842
      %1844 = vrot.lane.b32.xlu0 %v1776, 48
      %v1845 = vpop.permute.xlu0 %1844
      %1846 = vrot.lane.b32.xlu0 %v1777, 48
      %v1847 = vpop.permute.xlu0 %1846
      %1848 = vrot.lane.b32.xlu0 %v1778, 48
      %v1849 = vpop.permute.xlu0 %1848
      %1850 = vrot.lane.b32.xlu0 %v1779, 48
      %v1851 = vpop.permute.xlu0 %1850
      %1852 = vrot.lane.b32.xlu0 %v1780, 48
      %v1853 = vpop.permute.xlu0 %1852
      %1854 = vrot.lane.b32.xlu0 %v1781, 48
      %v1855 = vpop.permute.xlu0 %1854
      %1856 = vrot.lane.b32.xlu0 %v1782, 48
      %v1857 = vpop.permute.xlu0 %1856
      %1858 = vrot.lane.b32.xlu0 %v1783, 48
      %v1859 = vpop.permute.xlu0 %1858
      %1860 = vrot.lane.b32.xlu0 %v1784, 48
      %v1861 = vpop.permute.xlu0 %1860
      %1862 = vrot.lane.b32.xlu0 %v1785, 48
      %v1863 = vpop.permute.xlu0 %1862
      %1864 = vrot.lane.b32.xlu0 %v1786, 48
      %v1865 = vpop.permute.xlu0 %1864
      %1866 = vrot.lane.b32.xlu0 %v1787, 48
      %v1867 = vpop.permute.xlu0 %1866
      %1868 = vrot.lane.b32.xlu0 %v1788, 48
      %v1869 = vpop.permute.xlu0 %1868
      %1870 = vrot.lane.b32.xlu0 %v1789, 48
      %v1871 = vpop.permute.xlu0 %1870
      %1872 = vrot.lane.b32.xlu0 %v1790, 48
      %v1873 = vpop.permute.xlu0 %1872
      %1874 = vrot.lane.b32.xlu0 %v1791, 48
      %v1875 = vpop.permute.xlu0 %1874
      %1876 = vrot.lane.b32.xlu0 %v1792, 48
      %v1877 = vpop.permute.xlu0 %1876
      %1878 = vrot.lane.b32.xlu0 %v1793, 48
      %v1879 = vpop.permute.xlu0 %1878
      %1880 = vrot.lane.b32.xlu0 %v1794, 48
      %v1881 = vpop.permute.xlu0 %1880
      %1882 = vrot.lane.b32.xlu0 %v1795, 48
      %v1883 = vpop.permute.xlu0 %1882
      %1884 = vrot.lane.b32.xlu0 %v1796, 48
      %v1885 = vpop.permute.xlu0 %1884
      %1886 = vrot.lane.b32.xlu0 %v1797, 48
      %v1887 = vpop.permute.xlu0 %1886
      %1888 = vrot.lane.b32.xlu0 %v1798, 48
      %v1889 = vpop.permute.xlu0 %1888
      %1890 = vrot.lane.b32.xlu0 %v1799, 48
      %v1891 = vpop.permute.xlu0 %1890
      %1892 = vrot.lane.b32.xlu0 %v1800, 48
      %v1893 = vpop.permute.xlu0 %1892
      %1894 = vrot.lane.b32.xlu0 %v1801, 48
      %v1895 = vpop.permute.xlu0 %1894
      %1896 = vrot.lane.b32.xlu0 %v1802, 48
      %v1897 = vpop.permute.xlu0 %1896
      %1898 = vrot.lane.b32.xlu0 %v1803, 48
      %v1899 = vpop.permute.xlu0 %1898
      %vm1932 = vcmask 454016
      %1933 = vst.msk [vmem:[#allocation3] sm:$0xf] %vm1932, %v1837
      %1934 = vst.msk [vmem:[#allocation3 + $0x4] sm:$0xf] %vm1932, %v1839
      %1935 = vst.msk [vmem:[#allocation3 + $0x8] sm:$0xf] %vm1932, %v1841
      %1936 = vst.msk [vmem:[#allocation3 + $0xc] sm:$0xf] %vm1932, %v1843
      %1937 = vst.msk [vmem:[#allocation3 + $0x10] sm:$0xf] %vm1932, %v1845
      %1938 = vst.msk [vmem:[#allocation3 + $0x14] sm:$0xf] %vm1932, %v1847
      %1939 = vst.msk [vmem:[#allocation3 + $0x18] sm:$0xf] %vm1932, %v1849
      %1940 = vst.msk [vmem:[#allocation3 + $0x1c] sm:$0xf] %vm1932, %v1851
      %1941 = vst.msk [vmem:[#allocation3 + $0x20] sm:$0xf] %vm1932, %v1853
      %1942 = vst.msk [vmem:[#allocation3 + $0x24] sm:$0xf] %vm1932, %v1855
      %1943 = vst.msk [vmem:[#allocation3 + $0x28] sm:$0xf] %vm1932, %v1857
      %1944 = vst.msk [vmem:[#allocation3 + $0x2c] sm:$0xf] %vm1932, %v1859
      %1945 = vst.msk [vmem:[#allocation3 + $0x30] sm:$0xf] %vm1932, %v1861
      %1946 = vst.msk [vmem:[#allocation3 + $0x34] sm:$0xf] %vm1932, %v1863
      %1947 = vst.msk [vmem:[#allocation3 + $0x38] sm:$0xf] %vm1932, %v1865
      %1948 = vst.msk [vmem:[#allocation3 + $0x3c] sm:$0xf] %vm1932, %v1867
      %1949 = vst.msk [vmem:[#allocation3 + $0x40] sm:$0xf] %vm1932, %v1869
      %1950 = vst.msk [vmem:[#allocation3 + $0x44] sm:$0xf] %vm1932, %v1871
      %1951 = vst.msk [vmem:[#allocation3 + $0x48] sm:$0xf] %vm1932, %v1873
      %1952 = vst.msk [vmem:[#allocation3 + $0x4c] sm:$0xf] %vm1932, %v1875
      %1953 = vst.msk [vmem:[#allocation3 + $0x50] sm:$0xf] %vm1932, %v1877
      %1954 = vst.msk [vmem:[#allocation3 + $0x54] sm:$0xf] %vm1932, %v1879
      %1955 = vst.msk [vmem:[#allocation3 + $0x58] sm:$0xf] %vm1932, %v1881
      %1956 = vst.msk [vmem:[#allocation3 + $0x5c] sm:$0xf] %vm1932, %v1883
      %1957 = vst.msk [vmem:[#allocation3 + $0x60] sm:$0xf] %vm1932, %v1885
      %1958 = vst.msk [vmem:[#allocation3 + $0x64] sm:$0xf] %vm1932, %v1887
      %1959 = vst.msk [vmem:[#allocation3 + $0x68] sm:$0xf] %vm1932, %v1889
      %1960 = vst.msk [vmem:[#allocation3 + $0x6c] sm:$0xf] %vm1932, %v1891
      %1961 = vst.msk [vmem:[#allocation3 + $0x70] sm:$0xf] %vm1932, %v1893
      %1962 = vst.msk [vmem:[#allocation3 + $0x74] sm:$0xf] %vm1932, %v1895
      %1963 = vst.msk [vmem:[#allocation3 + $0x78] sm:$0xf] %vm1932, %v1897
      %1964 = vst.msk [vmem:[#allocation3 + $0x7c] sm:$0xf] %vm1932, %v1899
      %v1965 = vld [vmem:[%s1739 + $0x1] sm:$0xff]
      %v1966 = vld [vmem:[%s1739 + $0x9] sm:$0xff]
      %v1967 = vld [vmem:[%s1739 + $0x19] sm:$0xff]
      %v1968 = vld [vmem:[%s1739 + $0x21] sm:$0xff]
      %v1969 = vld [vmem:[%s1739 + $0x31] sm:$0xff]
      %v1970 = vld [vmem:[%s1739 + $0x39] sm:$0xff]
      %v1971 = vld [vmem:[%s1739 + $0x49] sm:$0xff]
      %v1972 = vld [vmem:[%s1739 + $0x51] sm:$0xff]
      %v1973 = vld [vmem:[%s1739 + $0x61] sm:$0xff]
      %v1974 = vld [vmem:[%s1739 + $0x69] sm:$0xff]
      %v1975 = vld [vmem:[%s1739 + $0x79] sm:$0xff]
      %v1976 = vld [vmem:[%s1739 + $0x81] sm:$0xff]
      %v1977 = vld [vmem:[%s1739 + $0x91] sm:$0xff]
      %v1978 = vld [vmem:[%s1739 + $0x99] sm:$0xff]
      %v1979 = vld [vmem:[%s1739 + $0xa9] sm:$0xff]
      %v1980 = vld [vmem:[%s1739 + $0xb1] sm:$0xff]
      %v1981 = vld [vmem:[%s1739 + $0xc1] sm:$0xff]
      %v1982 = vld [vmem:[%s1739 + $0xc9] sm:$0xff]
      %v1983 = vld [vmem:[%s1739 + $0xd9] sm:$0xff]
      %v1984 = vld [vmem:[%s1739 + $0xe1] sm:$0xff]
      %v1985 = vld [vmem:[%s1739 + $0xf1] sm:$0xff]
      %v1986 = vld [vmem:[%s1739 + $0xf9] sm:$0xff]
      %v1987 = vld [vmem:[%s1739 + $0x109] sm:$0xff]
      %v1988 = vld [vmem:[%s1739 + $0x111] sm:$0xff]
      %v1989 = vld [vmem:[%s1739 + $0x121] sm:$0xff]
      %v1990 = vld [vmem:[%s1739 + $0x129] sm:$0xff]
      %v1991 = vld [vmem:[%s1739 + $0x139] sm:$0xff]
      %v1992 = vld [vmem:[%s1739 + $0x141] sm:$0xff]
      %v1993 = vld [vmem:[%s1739 + $0x151] sm:$0xff]
      %v1994 = vld [vmem:[%s1739 + $0x159] sm:$0xff]
      %v1995 = vld [vmem:[%s1739 + $0x169] sm:$0xff]
      %v1996 = vld [vmem:[%s1739 + $0x171] sm:$0xff]
      %v1997 = vpack.c.bf16 %v1965, %v1965
      %v1998 = vpack.c.bf16 %v1966, %v1966
      %v1999 = vpack.c.bf16 %v1967, %v1967
      %v2000 = vpack.c.bf16 %v1968, %v1968
      %v2001 = vpack.c.bf16 %v1969, %v1969
      %v2002 = vpack.c.bf16 %v1970, %v1970
      %v2003 = vpack.c.bf16 %v1971, %v1971
      %v2004 = vpack.c.bf16 %v1972, %v1972
      %v2005 = vpack.c.bf16 %v1973, %v1973
      %v2006 = vpack.c.bf16 %v1974, %v1974
      %v2007 = vpack.c.bf16 %v1975, %v1975
      %v2008 = vpack.c.bf16 %v1976, %v1976
      %v2009 = vpack.c.bf16 %v1977, %v1977
      %v2010 = vpack.c.bf16 %v1978, %v1978
      %v2011 = vpack.c.bf16 %v1979, %v1979
      %v2012 = vpack.c.bf16 %v1980, %v1980
      %v2013 = vpack.c.bf16 %v1981, %v1981
      %v2014 = vpack.c.bf16 %v1982, %v1982
      %v2015 = vpack.c.bf16 %v1983, %v1983
      %v2016 = vpack.c.bf16 %v1984, %v1984
      %v2017 = vpack.c.bf16 %v1985, %v1985
      %v2018 = vpack.c.bf16 %v1986, %v1986
      %v2019 = vpack.c.bf16 %v1987, %v1987
      %v2020 = vpack.c.bf16 %v1988, %v1988
      %v2021 = vpack.c.bf16 %v1989, %v1989
      %v2022 = vpack.c.bf16 %v1990, %v1990
      %v2023 = vpack.c.bf16 %v1991, %v1991
      %v2024 = vpack.c.bf16 %v1992, %v1992
      %v2025 = vpack.c.bf16 %v1993, %v1993
      %v2026 = vpack.c.bf16 %v1994, %v1994
      %v2027 = vpack.c.bf16 %v1995, %v1995
      %v2028 = vpack.c.bf16 %v1996, %v1996
      %2061 = vrot.lane.b32.xlu0 %v1997, 56
      %v2062 = vpop.permute.xlu0 %2061
      %2063 = vrot.lane.b32.xlu0 %v1998, 56
      %v2064 = vpop.permute.xlu0 %2063
      %2065 = vrot.lane.b32.xlu0 %v1999, 56
      %v2066 = vpop.permute.xlu0 %2065
      %2067 = vrot.lane.b32.xlu0 %v2000, 56
      %v2068 = vpop.permute.xlu0 %2067
      %2069 = vrot.lane.b32.xlu0 %v2001, 56
      %v2070 = vpop.permute.xlu0 %2069
      %2071 = vrot.lane.b32.xlu0 %v2002, 56
      %v2072 = vpop.permute.xlu0 %2071
      %2073 = vrot.lane.b32.xlu0 %v2003, 56
      %v2074 = vpop.permute.xlu0 %2073
      %2075 = vrot.lane.b32.xlu0 %v2004, 56
      %v2076 = vpop.permute.xlu0 %2075
      %2077 = vrot.lane.b32.xlu0 %v2005, 56
      %v2078 = vpop.permute.xlu0 %2077
      %2079 = vrot.lane.b32.xlu0 %v2006, 56
      %v2080 = vpop.permute.xlu0 %2079
      %2081 = vrot.lane.b32.xlu0 %v2007, 56
      %v2082 = vpop.permute.xlu0 %2081
      %2083 = vrot.lane.b32.xlu0 %v2008, 56
      %v2084 = vpop.permute.xlu0 %2083
      %2085 = vrot.lane.b32.xlu0 %v2009, 56
      %v2086 = vpop.permute.xlu0 %2085
      %2087 = vrot.lane.b32.xlu0 %v2010, 56
      %v2088 = vpop.permute.xlu0 %2087
      %2089 = vrot.lane.b32.xlu0 %v2011, 56
      %v2090 = vpop.permute.xlu0 %2089
      %2091 = vrot.lane.b32.xlu0 %v2012, 56
      %v2092 = vpop.permute.xlu0 %2091
      %2093 = vrot.lane.b32.xlu0 %v2013, 56
      %v2094 = vpop.permute.xlu0 %2093
      %2095 = vrot.lane.b32.xlu0 %v2014, 56
      %v2096 = vpop.permute.xlu0 %2095
      %2097 = vrot.lane.b32.xlu0 %v2015, 56
      %v2098 = vpop.permute.xlu0 %2097
      %2099 = vrot.lane.b32.xlu0 %v2016, 56
      %v2100 = vpop.permute.xlu0 %2099
      %2101 = vrot.lane.b32.xlu0 %v2017, 56
      %v2102 = vpop.permute.xlu0 %2101
      %2103 = vrot.lane.b32.xlu0 %v2018, 56
      %v2104 = vpop.permute.xlu0 %2103
      %2105 = vrot.lane.b32.xlu0 %v2019, 56
      %v2106 = vpop.permute.xlu0 %2105
      %2107 = vrot.lane.b32.xlu0 %v2020, 56
      %v2108 = vpop.permute.xlu0 %2107
      %2109 = vrot.lane.b32.xlu0 %v2021, 56
      %v2110 = vpop.permute.xlu0 %2109
      %2111 = vrot.lane.b32.xlu0 %v2022, 56
      %v2112 = vpop.permute.xlu0 %2111
      %2113 = vrot.lane.b32.xlu0 %v2023, 56
      %v2114 = vpop.permute.xlu0 %2113
      %2115 = vrot.lane.b32.xlu0 %v2024, 56
      %v2116 = vpop.permute.xlu0 %2115
      %2117 = vrot.lane.b32.xlu0 %v2025, 56
      %v2118 = vpop.permute.xlu0 %2117
      %2119 = vrot.lane.b32.xlu0 %v2026, 56
      %v2120 = vpop.permute.xlu0 %2119
      %2121 = vrot.lane.b32.xlu0 %v2027, 56
      %v2122 = vpop.permute.xlu0 %2121
      %2123 = vrot.lane.b32.xlu0 %v2028, 56
      %v2124 = vpop.permute.xlu0 %2123
      %vm2157 = vcmask 519616
      %2158 = vst.msk [vmem:[#allocation3] sm:$0xf] %vm2157, %v2062
      %2159 = vst.msk [vmem:[#allocation3 + $0x4] sm:$0xf] %vm2157, %v2064
      %2160 = vst.msk [vmem:[#allocation3 + $0x8] sm:$0xf] %vm2157, %v2066
      %2161 = vst.msk [vmem:[#allocation3 + $0xc] sm:$0xf] %vm2157, %v2068
      %2162 = vst.msk [vmem:[#allocation3 + $0x10] sm:$0xf] %vm2157, %v2070
      %2163 = vst.msk [vmem:[#allocation3 + $0x14] sm:$0xf] %vm2157, %v2072
      %2164 = vst.msk [vmem:[#allocation3 + $0x18] sm:$0xf] %vm2157, %v2074
      %2165 = vst.msk [vmem:[#allocation3 + $0x1c] sm:$0xf] %vm2157, %v2076
      %2166 = vst.msk [vmem:[#allocation3 + $0x20] sm:$0xf] %vm2157, %v2078
      %2167 = vst.msk [vmem:[#allocation3 + $0x24] sm:$0xf] %vm2157, %v2080
      %2168 = vst.msk [vmem:[#allocation3 + $0x28] sm:$0xf] %vm2157, %v2082
      %2169 = vst.msk [vmem:[#allocation3 + $0x2c] sm:$0xf] %vm2157, %v2084
      %2170 = vst.msk [vmem:[#allocation3 + $0x30] sm:$0xf] %vm2157, %v2086
      %2171 = vst.msk [vmem:[#allocation3 + $0x34] sm:$0xf] %vm2157, %v2088
      %2172 = vst.msk [vmem:[#allocation3 + $0x38] sm:$0xf] %vm2157, %v2090
      %2173 = vst.msk [vmem:[#allocation3 + $0x3c] sm:$0xf] %vm2157, %v2092
      %2174 = vst.msk [vmem:[#allocation3 + $0x40] sm:$0xf] %vm2157, %v2094
      %2175 = vst.msk [vmem:[#allocation3 + $0x44] sm:$0xf] %vm2157, %v2096
      %2176 = vst.msk [vmem:[#allocation3 + $0x48] sm:$0xf] %vm2157, %v2098
      %2177 = vst.msk [vmem:[#allocation3 + $0x4c] sm:$0xf] %vm2157, %v2100
      %2178 = vst.msk [vmem:[#allocation3 + $0x50] sm:$0xf] %vm2157, %v2102
      %2179 = vst.msk [vmem:[#allocation3 + $0x54] sm:$0xf] %vm2157, %v2104
      %2180 = vst.msk [vmem:[#allocation3 + $0x58] sm:$0xf] %vm2157, %v2106
      %2181 = vst.msk [vmem:[#allocation3 + $0x5c] sm:$0xf] %vm2157, %v2108
      %2182 = vst.msk [vmem:[#allocation3 + $0x60] sm:$0xf] %vm2157, %v2110
      %2183 = vst.msk [vmem:[#allocation3 + $0x64] sm:$0xf] %vm2157, %v2112
      %2184 = vst.msk [vmem:[#allocation3 + $0x68] sm:$0xf] %vm2157, %v2114
      %2185 = vst.msk [vmem:[#allocation3 + $0x6c] sm:$0xf] %vm2157, %v2116
      %2186 = vst.msk [vmem:[#allocation3 + $0x70] sm:$0xf] %vm2157, %v2118
      %2187 = vst.msk [vmem:[#allocation3 + $0x74] sm:$0xf] %vm2157, %v2120
      %2188 = vst.msk [vmem:[#allocation3 + $0x78] sm:$0xf] %vm2157, %v2122
      %2189 = vst.msk [vmem:[#allocation3 + $0x7c] sm:$0xf] %vm2157, %v2124
      %v2190 = vld [vmem:[%s1739 + $0x2] sm:$0xff]
      %v2191 = vld [vmem:[%s1739 + $0xa] sm:$0xff]
      %v2192 = vld [vmem:[%s1739 + $0x1a] sm:$0xff]
      %v2193 = vld [vmem:[%s1739 + $0x22] sm:$0xff]
      %v2194 = vld [vmem:[%s1739 + $0x32] sm:$0xff]
      %v2195 = vld [vmem:[%s1739 + $0x3a] sm:$0xff]
      %v2196 = vld [vmem:[%s1739 + $0x4a] sm:$0xff]
      %v2197 = vld [vmem:[%s1739 + $0x52] sm:$0xff]
      %v2198 = vld [vmem:[%s1739 + $0x62] sm:$0xff]
      %v2199 = vld [vmem:[%s1739 + $0x6a] sm:$0xff]
      %v2200 = vld [vmem:[%s1739 + $0x7a] sm:$0xff]
      %v2201 = vld [vmem:[%s1739 + $0x82] sm:$0xff]
      %v2202 = vld [vmem:[%s1739 + $0x92] sm:$0xff]
      %v2203 = vld [vmem:[%s1739 + $0x9a] sm:$0xff]
      %v2204 = vld [vmem:[%s1739 + $0xaa] sm:$0xff]
      %v2205 = vld [vmem:[%s1739 + $0xb2] sm:$0xff]
      %v2206 = vld [vmem:[%s1739 + $0xc2] sm:$0xff]
      %v2207 = vld [vmem:[%s1739 + $0xca] sm:$0xff]
      %v2208 = vld [vmem:[%s1739 + $0xda] sm:$0xff]
      %v2209 = vld [vmem:[%s1739 + $0xe2] sm:$0xff]
      %v2210 = vld [vmem:[%s1739 + $0xf2] sm:$0xff]
      %v2211 = vld [vmem:[%s1739 + $0xfa] sm:$0xff]
      %v2212 = vld [vmem:[%s1739 + $0x10a] sm:$0xff]
      %v2213 = vld [vmem:[%s1739 + $0x112] sm:$0xff]
      %v2214 = vld [vmem:[%s1739 + $0x122] sm:$0xff]
      %v2215 = vld [vmem:[%s1739 + $0x12a] sm:$0xff]
      %v2216 = vld [vmem:[%s1739 + $0x13a] sm:$0xff]
      %v2217 = vld [vmem:[%s1739 + $0x142] sm:$0xff]
      %v2218 = vld [vmem:[%s1739 + $0x152] sm:$0xff]
      %v2219 = vld [vmem:[%s1739 + $0x15a] sm:$0xff]
      %v2220 = vld [vmem:[%s1739 + $0x16a] sm:$0xff]
      %v2221 = vld [vmem:[%s1739 + $0x172] sm:$0xff]
      %v2222 = vpack.c.bf16 %v2190, %v2190
      %v2223 = vpack.c.bf16 %v2191, %v2191
      %v2224 = vpack.c.bf16 %v2192, %v2192
      %v2225 = vpack.c.bf16 %v2193, %v2193
      %v2226 = vpack.c.bf16 %v2194, %v2194
      %v2227 = vpack.c.bf16 %v2195, %v2195
      %v2228 = vpack.c.bf16 %v2196, %v2196
      %v2229 = vpack.c.bf16 %v2197, %v2197
      %v2230 = vpack.c.bf16 %v2198, %v2198
      %v2231 = vpack.c.bf16 %v2199, %v2199
      %v2232 = vpack.c.bf16 %v2200, %v2200
      %v2233 = vpack.c.bf16 %v2201, %v2201
      %v2234 = vpack.c.bf16 %v2202, %v2202
      %v2235 = vpack.c.bf16 %v2203, %v2203
      %v2236 = vpack.c.bf16 %v2204, %v2204
      %v2237 = vpack.c.bf16 %v2205, %v2205
      %v2238 = vpack.c.bf16 %v2206, %v2206
      %v2239 = vpack.c.bf16 %v2207, %v2207
      %v2240 = vpack.c.bf16 %v2208, %v2208
      %v2241 = vpack.c.bf16 %v2209, %v2209
      %v2242 = vpack.c.bf16 %v2210, %v2210
      %v2243 = vpack.c.bf16 %v2211, %v2211
      %v2244 = vpack.c.bf16 %v2212, %v2212
      %v2245 = vpack.c.bf16 %v2213, %v2213
      %v2246 = vpack.c.bf16 %v2214, %v2214
      %v2247 = vpack.c.bf16 %v2215, %v2215
      %v2248 = vpack.c.bf16 %v2216, %v2216
      %v2249 = vpack.c.bf16 %v2217, %v2217
      %v2250 = vpack.c.bf16 %v2218, %v2218
      %v2251 = vpack.c.bf16 %v2219, %v2219
      %v2252 = vpack.c.bf16 %v2220, %v2220
      %v2253 = vpack.c.bf16 %v2221, %v2221
      %2286 = vrot.lane.b32.xlu0 %v2222, 64
      %v2287 = vpop.permute.xlu0 %2286
      %2288 = vrot.lane.b32.xlu0 %v2223, 64
      %v2289 = vpop.permute.xlu0 %2288
      %2290 = vrot.lane.b32.xlu0 %v2224, 64
      %v2291 = vpop.permute.xlu0 %2290
      %2292 = vrot.lane.b32.xlu0 %v2225, 64
      %v2293 = vpop.permute.xlu0 %2292
      %2294 = vrot.lane.b32.xlu0 %v2226, 64
      %v2295 = vpop.permute.xlu0 %2294
      %2296 = vrot.lane.b32.xlu0 %v2227, 64
      %v2297 = vpop.permute.xlu0 %2296
      %2298 = vrot.lane.b32.xlu0 %v2228, 64
      %v2299 = vpop.permute.xlu0 %2298
      %2300 = vrot.lane.b32.xlu0 %v2229, 64
      %v2301 = vpop.permute.xlu0 %2300
      %2302 = vrot.lane.b32.xlu0 %v2230, 64
      %v2303 = vpop.permute.xlu0 %2302
      %2304 = vrot.lane.b32.xlu0 %v2231, 64
      %v2305 = vpop.permute.xlu0 %2304
      %2306 = vrot.lane.b32.xlu0 %v2232, 64
      %v2307 = vpop.permute.xlu0 %2306
      %2308 = vrot.lane.b32.xlu0 %v2233, 64
      %v2309 = vpop.permute.xlu0 %2308
      %2310 = vrot.lane.b32.xlu0 %v2234, 64
      %v2311 = vpop.permute.xlu0 %2310
      %2312 = vrot.lane.b32.xlu0 %v2235, 64
      %v2313 = vpop.permute.xlu0 %2312
      %2314 = vrot.lane.b32.xlu0 %v2236, 64
      %v2315 = vpop.permute.xlu0 %2314
      %2316 = vrot.lane.b32.xlu0 %v2237, 64
      %v2317 = vpop.permute.xlu0 %2316
      %2318 = vrot.lane.b32.xlu0 %v2238, 64
      %v2319 = vpop.permute.xlu0 %2318
      %2320 = vrot.lane.b32.xlu0 %v2239, 64
      %v2321 = vpop.permute.xlu0 %2320
      %2322 = vrot.lane.b32.xlu0 %v2240, 64
      %v2323 = vpop.permute.xlu0 %2322
      %2324 = vrot.lane.b32.xlu0 %v2241, 64
      %v2325 = vpop.permute.xlu0 %2324
      %2326 = vrot.lane.b32.xlu0 %v2242, 64
      %v2327 = vpop.permute.xlu0 %2326
      %2328 = vrot.lane.b32.xlu0 %v2243, 64
      %v2329 = vpop.permute.xlu0 %2328
      %2330 = vrot.lane.b32.xlu0 %v2244, 64
      %v2331 = vpop.permute.xlu0 %2330
      %2332 = vrot.lane.b32.xlu0 %v2245, 64
      %v2333 = vpop.permute.xlu0 %2332
      %2334 = vrot.lane.b32.xlu0 %v2246, 64
      %v2335 = vpop.permute.xlu0 %2334
      %2336 = vrot.lane.b32.xlu0 %v2247, 64
      %v2337 = vpop.permute.xlu0 %2336
      %2338 = vrot.lane.b32.xlu0 %v2248, 64
      %v2339 = vpop.permute.xlu0 %2338
      %2340 = vrot.lane.b32.xlu0 %v2249, 64
      %v2341 = vpop.permute.xlu0 %2340
      %2342 = vrot.lane.b32.xlu0 %v2250, 64
      %v2343 = vpop.permute.xlu0 %2342
      %2344 = vrot.lane.b32.xlu0 %v2251, 64
      %v2345 = vpop.permute.xlu0 %2344
      %2346 = vrot.lane.b32.xlu0 %v2252, 64
      %v2347 = vpop.permute.xlu0 %2346
      %2348 = vrot.lane.b32.xlu0 %v2253, 64
      %v2349 = vpop.permute.xlu0 %2348
      %vm2382 = vcmask 585216
      %2383 = vst.msk [vmem:[#allocation3] sm:$0xf] %vm2382, %v2287
      %2384 = vst.msk [vmem:[#allocation3 + $0x4] sm:$0xf] %vm2382, %v2289
      %2385 = vst.msk [vmem:[#allocation3 + $0x8] sm:$0xf] %vm2382, %v2291
      %2386 = vst.msk [vmem:[#allocation3 + $0xc] sm:$0xf] %vm2382, %v2293
      %2387 = vst.msk [vmem:[#allocation3 + $0x10] sm:$0xf] %vm2382, %v2295
      %2388 = vst.msk [vmem:[#allocation3 + $0x14] sm:$0xf] %vm2382, %v2297
      %2389 = vst.msk [vmem:[#allocation3 + $0x18] sm:$0xf] %vm2382, %v2299
      %2390 = vst.msk [vmem:[#allocation3 + $0x1c] sm:$0xf] %vm2382, %v2301
      %2391 = vst.msk [vmem:[#allocation3 + $0x20] sm:$0xf] %vm2382, %v2303
      %2392 = vst.msk [vmem:[#allocation3 + $0x24] sm:$0xf] %vm2382, %v2305
      %2393 = vst.msk [vmem:[#allocation3 + $0x28] sm:$0xf] %vm2382, %v2307
      %2394 = vst.msk [vmem:[#allocation3 + $0x2c] sm:$0xf] %vm2382, %v2309
      %2395 = vst.msk [vmem:[#allocation3 + $0x30] sm:$0xf] %vm2382, %v2311
      %2396 = vst.msk [vmem:[#allocation3 + $0x34] sm:$0xf] %vm2382, %v2313
      %2397 = vst.msk [vmem:[#allocation3 + $0x38] sm:$0xf] %vm2382, %v2315
      %2398 = vst.msk [vmem:[#allocation3 + $0x3c] sm:$0xf] %vm2382, %v2317
      %2399 = vst.msk [vmem:[#allocation3 + $0x40] sm:$0xf] %vm2382, %v2319
      %2400 = vst.msk [vmem:[#allocation3 + $0x44] sm:$0xf] %vm2382, %v2321
      %2401 = vst.msk [vmem:[#allocation3 + $0x48] sm:$0xf] %vm2382, %v2323
      %2402 = vst.msk [vmem:[#allocation3 + $0x4c] sm:$0xf] %vm2382, %v2325
      %2403 = vst.msk [vmem:[#allocation3 + $0x50] sm:$0xf] %vm2382, %v2327
      %2404 = vst.msk [vmem:[#allocation3 + $0x54] sm:$0xf] %vm2382, %v2329
      %2405 = vst.msk [vmem:[#allocation3 + $0x58] sm:$0xf] %vm2382, %v2331
      %2406 = vst.msk [vmem:[#allocation3 + $0x5c] sm:$0xf] %vm2382, %v2333
      %2407 = vst.msk [vmem:[#allocation3 + $0x60] sm:$0xf] %vm2382, %v2335
      %2408 = vst.msk [vmem:[#allocation3 + $0x64] sm:$0xf] %vm2382, %v2337
      %2409 = vst.msk [vmem:[#allocation3 + $0x68] sm:$0xf] %vm2382, %v2339
      %2410 = vst.msk [vmem:[#allocation3 + $0x6c] sm:$0xf] %vm2382, %v2341
      %2411 = vst.msk [vmem:[#allocation3 + $0x70] sm:$0xf] %vm2382, %v2343
      %2412 = vst.msk [vmem:[#allocation3 + $0x74] sm:$0xf] %vm2382, %v2345
      %2413 = vst.msk [vmem:[#allocation3 + $0x78] sm:$0xf] %vm2382, %v2347
      %2414 = vst.msk [vmem:[#allocation3 + $0x7c] sm:$0xf] %vm2382, %v2349
      %v2415 = vld [vmem:[#allocation3] sm:$0xf]
      %v2416 = vld [vmem:[#allocation3 + $0x4] sm:$0xf]
      %v2417 = vld [vmem:[#allocation3 + $0x8] sm:$0xf]
      %v2418 = vld [vmem:[#allocation3 + $0xc] sm:$0xf]
      %v2419 = vld [vmem:[#allocation3 + $0x10] sm:$0xf]
      %v2420 = vld [vmem:[#allocation3 + $0x14] sm:$0xf]
      %v2421 = vld [vmem:[#allocation3 + $0x18] sm:$0xf]
      %v2422 = vld [vmem:[#allocation3 + $0x1c] sm:$0xf]
      %v2423 = vld [vmem:[#allocation3 + $0x20] sm:$0xf]
      %v2424 = vld [vmem:[#allocation3 + $0x24] sm:$0xf]
      %v2425 = vld [vmem:[#allocation3 + $0x28] sm:$0xf]
      %v2426 = vld [vmem:[#allocation3 + $0x2c] sm:$0xf]
      %v2427 = vld [vmem:[#allocation3 + $0x30] sm:$0xf]
      %v2428 = vld [vmem:[#allocation3 + $0x34] sm:$0xf]
      %v2429 = vld [vmem:[#allocation3 + $0x38] sm:$0xf]
      %v2430 = vld [vmem:[#allocation3 + $0x3c] sm:$0xf]
      %v2431 = vld [vmem:[#allocation3 + $0x40] sm:$0xf]
      %v2432 = vld [vmem:[#allocation3 + $0x44] sm:$0xf]
      %v2433 = vld [vmem:[#allocation3 + $0x48] sm:$0xf]
      %v2434 = vld [vmem:[#allocation3 + $0x4c] sm:$0xf]
      %v2435 = vld [vmem:[#allocation3 + $0x50] sm:$0xf]
      %v2436 = vld [vmem:[#allocation3 + $0x54] sm:$0xf]
      %v2437 = vld [vmem:[#allocation3 + $0x58] sm:$0xf]
      %v2438 = vld [vmem:[#allocation3 + $0x5c] sm:$0xf]
      %v2439 = vld [vmem:[#allocation3 + $0x60] sm:$0xf]
      %v2440 = vld [vmem:[#allocation3 + $0x64] sm:$0xf]
      %v2441 = vld [vmem:[#allocation3 + $0x68] sm:$0xf]
      %v2442 = vld [vmem:[#allocation3 + $0x6c] sm:$0xf]
      %v2443 = vld [vmem:[#allocation3 + $0x70] sm:$0xf]
      %v2444 = vld [vmem:[#allocation3 + $0x74] sm:$0xf]
      %v2445 = vld [vmem:[#allocation3 + $0x78] sm:$0xf]
      %v2446 = vld [vmem:[#allocation3 + $0x7c] sm:$0xf]
      %v2447 = vld [vmem:[%s3] sm:$0xf]
      %v2448 = vld [vmem:[%s3 + $0x4] sm:$0xf]
      %v2449 = vld [vmem:[%s3 + $0x8] sm:$0xf]
      %v2450 = vld [vmem:[%s3 + $0xc] sm:$0xf]
      %v2451 = vld [vmem:[%s3 + $0x10] sm:$0xf]
      %v2452 = vld [vmem:[%s3 + $0x14] sm:$0xf]
      %v2453 = vld [vmem:[%s3 + $0x18] sm:$0xf]
      %v2454 = vld [vmem:[%s3 + $0x1c] sm:$0xf]
      %v2455 = vld [vmem:[%s3 + $0x20] sm:$0xf]
      %v2488 = vunpack.c.l.b16 %v2415
      %v2489 = vunpack.c.l.b16 %v2416
      %v2490 = vunpack.c.l.b16 %v2417
      %v2491 = vunpack.c.l.b16 %v2418
      %v2492 = vunpack.c.l.b16 %v2419
      %v2493 = vunpack.c.l.b16 %v2420
      %v2494 = vunpack.c.l.b16 %v2421
      %v2495 = vunpack.c.l.b16 %v2422
      %v2496 = vunpack.c.l.b16 %v2423
      %v2497 = vunpack.c.l.b16 %v2424
      %v2498 = vunpack.c.l.b16 %v2425
      %v2499 = vunpack.c.l.b16 %v2426
      %v2500 = vunpack.c.l.b16 %v2427
      %v2501 = vunpack.c.l.b16 %v2428
      %v2502 = vunpack.c.l.b16 %v2429
      %v2503 = vunpack.c.l.b16 %v2430
      %v2504 = vunpack.c.l.b16 %v2431
      %v2505 = vunpack.c.l.b16 %v2432
      %v2506 = vunpack.c.l.b16 %v2433
      %v2507 = vunpack.c.l.b16 %v2434
      %v2508 = vunpack.c.l.b16 %v2435
      %v2509 = vunpack.c.l.b16 %v2436
      %v2510 = vunpack.c.l.b16 %v2437
      %v2511 = vunpack.c.l.b16 %v2438
      %v2512 = vunpack.c.l.b16 %v2439
      %v2513 = vunpack.c.l.b16 %v2440
      %v2514 = vunpack.c.l.b16 %v2441
      %v2515 = vunpack.c.l.b16 %v2442
      %v2516 = vunpack.c.l.b16 %v2443
      %v2517 = vunpack.c.l.b16 %v2444
      %v2518 = vunpack.c.l.b16 %v2445
      %v2519 = vunpack.c.l.b16 %v2446
      %v2520 = vpack.c.b16 %v2489, %v2488
      %v2521 = vpack.c.b16 %v2491, %v2490
      %v2522 = vpack.c.b16 %v2493, %v2492
      %v2523 = vpack.c.b16 %v2495, %v2494
      %v2524 = vpack.c.b16 %v2497, %v2496
      %v2525 = vpack.c.b16 %v2499, %v2498
      %v2526 = vpack.c.b16 %v2501, %v2500
      %v2527 = vpack.c.b16 %v2503, %v2502
      %v2528 = vpack.c.b16 %v2505, %v2504
      %v2529 = vpack.c.b16 %v2507, %v2506
      %v2530 = vpack.c.b16 %v2509, %v2508
      %v2531 = vpack.c.b16 %v2511, %v2510
      %v2532 = vpack.c.b16 %v2513, %v2512
      %v2533 = vpack.c.b16 %v2515, %v2514
      %v2534 = vpack.c.b16 %v2517, %v2516
      %v2535 = vpack.c.b16 %v2519, %v2518
      %v2545 = vunpack.c.l.b16 %v2447
      %v2546 = vunpack.c.l.b16 %v2448
      %v2547 = vunpack.c.l.b16 %v2449
      %v2548 = vunpack.c.l.b16 %v2450
      %v2549 = vunpack.c.l.b16 %v2451
      %v2550 = vunpack.c.l.b16 %v2452
      %v2551 = vunpack.c.l.b16 %v2453
      %v2552 = vunpack.c.l.b16 %v2454
      %v2553 = vunpack.c.l.b16 %v2455
      %v2554 = vpack.c.b16 %v2546, %v2545
      %v2555 = vpack.c.b16 %v2548, %v2547
      %v2556 = vpack.c.b16 %v2550, %v2549
      %v2557 = vpack.c.b16 %v2552, %v2551
      %v2558 = vpack.c.b16 %v2553, %v2553
      %vm2563 = vcmask 588800
      %v2565 = vsel %vm2563, %v2520, 0
      %v2568 = vsel %vm2563, %v2521, 0
      %v2571 = vsel %vm2563, %v2522, 0
      %v2574 = vsel %vm2563, %v2523, 0
      %v2577 = vsel %vm2563, %v2524, 0
      %v2580 = vsel %vm2563, %v2525, 0
      %v2583 = vsel %vm2563, %v2526, 0
      %v2586 = vsel %vm2563, %v2527, 0
      %v2589 = vsel %vm2563, %v2528, 0
      %v2592 = vsel %vm2563, %v2529, 0
      %v2595 = vsel %vm2563, %v2530, 0
      %v2598 = vsel %vm2563, %v2531, 0
      %v2601 = vsel %vm2563, %v2532, 0
      %v2604 = vsel %vm2563, %v2533, 0
      %v2607 = vsel %vm2563, %v2534, 0
      %v2610 = vsel %vm2563, %v2535, 0
      %vm2612 = vcmask 1043456
      %v2614 = vsel %vm2612, %v2558, 0
      %2616 = vmatpush.bf16.msra.mxu0 0
      %2617 = vmatpush.bf16.msra.mxu0 0
      %2618 = vmatpush.bf16.msra.mxu0 0
      %2619 = vmatpush.bf16.msra.mxu0 %v2614
      %2620 = vmatpush.bf16.msra.mxu0 %v2557
      %2621 = vmatpush.bf16.msra.mxu0 %v2556
      %2622 = vmatpush.bf16.msra.mxu0 %v2555
      %2623 = vmatpush.bf16.msra.mxu0 %v2554
      %2624 = vmatmul.bf16.gmra.mxu0 %v2565
      %v2625 = vpop.f32.mrf.mxu0
      %v2626 = vadd.f32 0.0, %v2625
      %v2627 = vpop.f32.mrf.mxu0
      %v2628 = vadd.f32 0.0, %v2627
      %2629 = vmatmul.bf16.gmra.mxu0 %v2568
      %v2630 = vpop.f32.mrf.mxu0
      %v2631 = vadd.f32 0.0, %v2630
      %v2632 = vpop.f32.mrf.mxu0
      %v2633 = vadd.f32 0.0, %v2632
      %2634 = vmatmul.bf16.gmra.mxu0 %v2571
      %v2635 = vpop.f32.mrf.mxu0
      %v2636 = vadd.f32 0.0, %v2635
      %v2637 = vpop.f32.mrf.mxu0
      %v2638 = vadd.f32 0.0, %v2637
      %2639 = vmatmul.bf16.gmra.mxu0 %v2574
      %v2640 = vpop.f32.mrf.mxu0
      %v2641 = vadd.f32 0.0, %v2640
      %v2642 = vpop.f32.mrf.mxu0
      %v2643 = vadd.f32 0.0, %v2642
      %2644 = vmatmul.bf16.gmra.mxu0 %v2577
      %v2645 = vpop.f32.mrf.mxu0
      %v2646 = vadd.f32 0.0, %v2645
      %v2647 = vpop.f32.mrf.mxu0
      %v2648 = vadd.f32 0.0, %v2647
      %2649 = vmatmul.bf16.gmra.mxu0 %v2580
      %v2650 = vpop.f32.mrf.mxu0
      %v2651 = vadd.f32 0.0, %v2650
      %v2652 = vpop.f32.mrf.mxu0
      %v2653 = vadd.f32 0.0, %v2652
      %2654 = vmatmul.bf16.gmra.mxu0 %v2583
      %v2655 = vpop.f32.mrf.mxu0
      %v2656 = vadd.f32 0.0, %v2655
      %v2657 = vpop.f32.mrf.mxu0
      %v2658 = vadd.f32 0.0, %v2657
      %2659 = vmatmul.bf16.gmra.mxu0 %v2586
      %v2660 = vpop.f32.mrf.mxu0
      %v2661 = vadd.f32 0.0, %v2660
      %v2662 = vpop.f32.mrf.mxu0
      %v2663 = vadd.f32 0.0, %v2662
      %2664 = vmatmul.bf16.gmra.mxu0 %v2589
      %v2665 = vpop.f32.mrf.mxu0
      %v2666 = vadd.f32 0.0, %v2665
      %v2667 = vpop.f32.mrf.mxu0
      %v2668 = vadd.f32 0.0, %v2667
      %2669 = vmatmul.bf16.gmra.mxu0 %v2592
      %v2670 = vpop.f32.mrf.mxu0
      %v2671 = vadd.f32 0.0, %v2670
      %v2672 = vpop.f32.mrf.mxu0
      %v2673 = vadd.f32 0.0, %v2672
      %2674 = vmatmul.bf16.gmra.mxu0 %v2595
      %v2675 = vpop.f32.mrf.mxu0
      %v2676 = vadd.f32 0.0, %v2675
      %v2677 = vpop.f32.mrf.mxu0
      %v2678 = vadd.f32 0.0, %v2677
      %2679 = vmatmul.bf16.gmra.mxu0 %v2598
      %v2680 = vpop.f32.mrf.mxu0
      %v2681 = vadd.f32 0.0, %v2680
      %v2682 = vpop.f32.mrf.mxu0
      %v2683 = vadd.f32 0.0, %v2682
      %2684 = vmatmul.bf16.gmra.mxu0 %v2601
      %v2685 = vpop.f32.mrf.mxu0
      %v2686 = vadd.f32 0.0, %v2685
      %v2687 = vpop.f32.mrf.mxu0
      %v2688 = vadd.f32 0.0, %v2687
      %2689 = vmatmul.bf16.gmra.mxu0 %v2604
      %v2690 = vpop.f32.mrf.mxu0
      %v2691 = vadd.f32 0.0, %v2690
      %v2692 = vpop.f32.mrf.mxu0
      %v2693 = vadd.f32 0.0, %v2692
      %2694 = vmatmul.bf16.gmra.mxu0 %v2607
      %v2695 = vpop.f32.mrf.mxu0
      %v2696 = vadd.f32 0.0, %v2695
      %v2697 = vpop.f32.mrf.mxu0
      %v2698 = vadd.f32 0.0, %v2697
      %2699 = vmatmul.bf16.gmra.mxu0 %v2610
      %v2700 = vpop.f32.mrf.mxu0
      %v2701 = vadd.f32 0.0, %v2700
      %v2702 = vpop.f32.mrf.mxu0
      %v2703 = vadd.f32 0.0, %v2702
      %2704 = vdwg.mxu0
      %v2705 = vpack.c.bf16 %v2626, %v2626
      %v2706 = vpack.c.bf16 %v2628, %v2628
      %v2707 = vpack.c.bf16 %v2631, %v2631
      %v2708 = vpack.c.bf16 %v2633, %v2633
      %v2709 = vpack.c.bf16 %v2636, %v2636
      %v2710 = vpack.c.bf16 %v2638, %v2638
      %v2711 = vpack.c.bf16 %v2641, %v2641
      %v2712 = vpack.c.bf16 %v2643, %v2643
      %v2713 = vpack.c.bf16 %v2646, %v2646
      %v2714 = vpack.c.bf16 %v2648, %v2648
      %v2715 = vpack.c.bf16 %v2651, %v2651
      %v2716 = vpack.c.bf16 %v2653, %v2653
      %v2717 = vpack.c.bf16 %v2656, %v2656
      %v2718 = vpack.c.bf16 %v2658, %v2658
      %v2719 = vpack.c.bf16 %v2661, %v2661
      %v2720 = vpack.c.bf16 %v2663, %v2663
      %v2721 = vpack.c.bf16 %v2666, %v2666
      %v2722 = vpack.c.bf16 %v2668, %v2668
      %v2723 = vpack.c.bf16 %v2671, %v2671
      %v2724 = vpack.c.bf16 %v2673, %v2673
      %v2725 = vpack.c.bf16 %v2676, %v2676
      %v2726 = vpack.c.bf16 %v2678, %v2678
      %v2727 = vpack.c.bf16 %v2681, %v2681
      %v2728 = vpack.c.bf16 %v2683, %v2683
      %v2729 = vpack.c.bf16 %v2686, %v2686
      %v2730 = vpack.c.bf16 %v2688, %v2688
      %v2731 = vpack.c.bf16 %v2691, %v2691
      %v2732 = vpack.c.bf16 %v2693, %v2693
      %v2733 = vpack.c.bf16 %v2696, %v2696
      %v2734 = vpack.c.bf16 %v2698, %v2698
      %v2735 = vpack.c.bf16 %v2701, %v2701
      %v2736 = vpack.c.bf16 %v2703, %v2703
      %2737 = vst.msk [vmem:[%s262] sm:$0xf] %vm581, %v2705
      %2738 = vst.msk [vmem:[%s262 + $0x4] sm:$0xf] %vm581, %v2706
      %2739 = vst.msk [vmem:[%s262 + $0x8] sm:$0xf] %vm581, %v2707
      %2740 = vst.msk [vmem:[%s262 + $0xc] sm:$0xf] %vm581, %v2708
      %2741 = vst.msk [vmem:[%s262 + $0x10] sm:$0xf] %vm581, %v2709
      %2742 = vst.msk [vmem:[%s262 + $0x14] sm:$0xf] %vm581, %v2710
      %2743 = vst.msk [vmem:[%s262 + $0x18] sm:$0xf] %vm581, %v2711
      %2744 = vst.msk [vmem:[%s262 + $0x1c] sm:$0xf] %vm581, %v2712
      %2745 = vst.msk [vmem:[%s262 + $0x20] sm:$0xf] %vm581, %v2713
      %2746 = vst.msk [vmem:[%s262 + $0x24] sm:$0xf] %vm581, %v2714
      %2747 = vst.msk [vmem:[%s262 + $0x28] sm:$0xf] %vm581, %v2715
      %2748 = vst.msk [vmem:[%s262 + $0x2c] sm:$0xf] %vm581, %v2716
      %2749 = vst.msk [vmem:[%s262 + $0x30] sm:$0xf] %vm581, %v2717
      %2750 = vst.msk [vmem:[%s262 + $0x34] sm:$0xf] %vm581, %v2718
      %2751 = vst.msk [vmem:[%s262 + $0x38] sm:$0xf] %vm581, %v2719
      %2752 = vst.msk [vmem:[%s262 + $0x3c] sm:$0xf] %vm581, %v2720
      %2753 = vst.msk [vmem:[%s262 + $0x40] sm:$0xf] %vm581, %v2721
      %2754 = vst.msk [vmem:[%s262 + $0x44] sm:$0xf] %vm581, %v2722
      %2755 = vst.msk [vmem:[%s262 + $0x48] sm:$0xf] %vm581, %v2723
      %2756 = vst.msk [vmem:[%s262 + $0x4c] sm:$0xf] %vm581, %v2724
      %2757 = vst.msk [vmem:[%s262 + $0x50] sm:$0xf] %vm581, %v2725
      %2758 = vst.msk [vmem:[%s262 + $0x54] sm:$0xf] %vm581, %v2726
      %2759 = vst.msk [vmem:[%s262 + $0x58] sm:$0xf] %vm581, %v2727
      %2760 = vst.msk [vmem:[%s262 + $0x5c] sm:$0xf] %vm581, %v2728
      %2761 = vst.msk [vmem:[%s262 + $0x60] sm:$0xf] %vm581, %v2729
      %2762 = vst.msk [vmem:[%s262 + $0x64] sm:$0xf] %vm581, %v2730
      %2763 = vst.msk [vmem:[%s262 + $0x68] sm:$0xf] %vm581, %v2731
      %2764 = vst.msk [vmem:[%s262 + $0x6c] sm:$0xf] %vm581, %v2732
      %2765 = vst.msk [vmem:[%s262 + $0x70] sm:$0xf] %vm581, %v2733
      %2766 = vst.msk [vmem:[%s262 + $0x74] sm:$0xf] %vm581, %v2734
      %2767 = vst.msk [vmem:[%s262 + $0x78] sm:$0xf] %vm581, %v2735
      %2768 = vst.msk [vmem:[%s262 + $0x7c] sm:$0xf] %vm581, %v2736
      %v2769 = vsel %vm438, %v2626, 0.0
      %v2770 = vsel %vm438, %v2628, 0.0
      %v2771 = vadd.f32 %v2769, %v2770
      %v2772 = vsel %vm438, %v2631, 0.0
      %v2773 = vadd.f32 %v2771, %v2772
      %v2774 = vsel %vm438, %v2633, 0.0
      %v2775 = vadd.f32 %v2773, %v2774
      %v2776 = vsel %vm438, %v2636, 0.0
      %v2777 = vadd.f32 %v2775, %v2776
      %v2778 = vsel %vm438, %v2638, 0.0
      %v2779 = vadd.f32 %v2777, %v2778
      %v2780 = vsel %vm438, %v2641, 0.0
      %v2781 = vadd.f32 %v2779, %v2780
      %v2782 = vsel %vm438, %v2643, 0.0
      %v2783 = vadd.f32 %v2781, %v2782
      %v2784 = vsel %vm438, %v2646, 0.0
      %v2785 = vadd.f32 %v2783, %v2784
      %v2786 = vsel %vm438, %v2648, 0.0
      %v2787 = vadd.f32 %v2785, %v2786
      %v2788 = vsel %vm438, %v2651, 0.0
      %v2789 = vadd.f32 %v2787, %v2788
      %v2790 = vsel %vm438, %v2653, 0.0
      %v2791 = vadd.f32 %v2789, %v2790
      %v2792 = vsel %vm438, %v2656, 0.0
      %v2793 = vadd.f32 %v2791, %v2792
      %v2794 = vsel %vm438, %v2658, 0.0
      %v2795 = vadd.f32 %v2793, %v2794
      %v2796 = vsel %vm438, %v2661, 0.0
      %v2797 = vadd.f32 %v2795, %v2796
      %v2798 = vsel %vm438, %v2663, 0.0
      %v2799 = vadd.f32 %v2797, %v2798
      %v2800 = vsel %vm438, %v2666, 0.0
      %v2801 = vadd.f32 %v2799, %v2800
      %v2802 = vsel %vm438, %v2668, 0.0
      %v2803 = vadd.f32 %v2801, %v2802
      %v2804 = vsel %vm438, %v2671, 0.0
      %v2805 = vadd.f32 %v2803, %v2804
      %v2806 = vsel %vm438, %v2673, 0.0
      %v2807 = vadd.f32 %v2805, %v2806
      %v2808 = vsel %vm438, %v2676, 0.0
      %v2809 = vadd.f32 %v2807, %v2808
      %v2810 = vsel %vm438, %v2678, 0.0
      %v2811 = vadd.f32 %v2809, %v2810
      %v2812 = vsel %vm438, %v2681, 0.0
      %v2813 = vadd.f32 %v2811, %v2812
      %v2814 = vsel %vm438, %v2683, 0.0
      %v2815 = vadd.f32 %v2813, %v2814
      %v2816 = vsel %vm438, %v2686, 0.0
      %v2817 = vadd.f32 %v2815, %v2816
      %v2818 = vsel %vm438, %v2688, 0.0
      %v2819 = vadd.f32 %v2817, %v2818
      %v2820 = vsel %vm438, %v2691, 0.0
      %v2821 = vadd.f32 %v2819, %v2820
      %v2822 = vsel %vm438, %v2693, 0.0
      %v2823 = vadd.f32 %v2821, %v2822
      %v2824 = vsel %vm438, %v2696, 0.0
      %v2825 = vadd.f32 %v2823, %v2824
      %v2826 = vsel %vm438, %v2698, 0.0
      %v2827 = vadd.f32 %v2825, %v2826
      %v2828 = vsel %vm438, %v2701, 0.0
      %v2829 = vadd.f32 %v2827, %v2828
      %v2830 = vsel %vm438, %v2703, 0.0
      %v2831 = vadd.f32 %v2829, %v2830
      %v2832 = vrot.slane %v2831, 4
      %v2833 = vadd.f32 %v2831, %v2832
      %v2834 = vrot.slane %v2833, 2
      %v2835 = vadd.f32 %v2833, %v2834
      %v2836 = vrot.slane %v2835, 1
      %v2837 = vadd.f32 %v2835, %v2836
      %2838 = vst.msk [vmem:[%s265] sm:$0x1] %vm447, %v2837
      %v2839 = vmul.f32 %v2626, %v2626
      %v2840 = vmul.f32 %v2628, %v2628
      %v2841 = vmul.f32 %v2631, %v2631
      %v2842 = vmul.f32 %v2633, %v2633
      %v2843 = vmul.f32 %v2636, %v2636
      %v2844 = vmul.f32 %v2638, %v2638
      %v2845 = vmul.f32 %v2641, %v2641
      %v2846 = vmul.f32 %v2643, %v2643
      %v2847 = vmul.f32 %v2646, %v2646
      %v2848 = vmul.f32 %v2648, %v2648
      %v2849 = vmul.f32 %v2651, %v2651
      %v2850 = vmul.f32 %v2653, %v2653
      %v2851 = vmul.f32 %v2656, %v2656
      %v2852 = vmul.f32 %v2658, %v2658
      %v2853 = vmul.f32 %v2661, %v2661
      %v2854 = vmul.f32 %v2663, %v2663
      %v2855 = vmul.f32 %v2666, %v2666
      %v2856 = vmul.f32 %v2668, %v2668
      %v2857 = vmul.f32 %v2671, %v2671
      %v2858 = vmul.f32 %v2673, %v2673
      %v2859 = vmul.f32 %v2676, %v2676
      %v2860 = vmul.f32 %v2678, %v2678
      %v2861 = vmul.f32 %v2681, %v2681
      %v2862 = vmul.f32 %v2683, %v2683
      %v2863 = vmul.f32 %v2686, %v2686
      %v2864 = vmul.f32 %v2688, %v2688
      %v2865 = vmul.f32 %v2691, %v2691
      %v2866 = vmul.f32 %v2693, %v2693
      %v2867 = vmul.f32 %v2696, %v2696
      %v2868 = vmul.f32 %v2698, %v2698
      %v2869 = vmul.f32 %v2701, %v2701
      %v2870 = vmul.f32 %v2703, %v2703
      %v2871 = vsel %vm438, %v2839, 0.0
      %v2872 = vsel %vm438, %v2840, 0.0
      %v2873 = vadd.f32 %v2871, %v2872
      %v2874 = vsel %vm438, %v2841, 0.0
      %v2875 = vadd.f32 %v2873, %v2874
      %v2876 = vsel %vm438, %v2842, 0.0
      %v2877 = vadd.f32 %v2875, %v2876
      %v2878 = vsel %vm438, %v2843, 0.0
      %v2879 = vadd.f32 %v2877, %v2878
      %v2880 = vsel %vm438, %v2844, 0.0
      %v2881 = vadd.f32 %v2879, %v2880
      %v2882 = vsel %vm438, %v2845, 0.0
      %v2883 = vadd.f32 %v2881, %v2882
      %v2884 = vsel %vm438, %v2846, 0.0
      %v2885 = vadd.f32 %v2883, %v2884
      %v2886 = vsel %vm438, %v2847, 0.0
      %v2887 = vadd.f32 %v2885, %v2886
      %v2888 = vsel %vm438, %v2848, 0.0
      %v2889 = vadd.f32 %v2887, %v2888
      %v2890 = vsel %vm438, %v2849, 0.0
      %v2891 = vadd.f32 %v2889, %v2890
      %v2892 = vsel %vm438, %v2850, 0.0
      %v2893 = vadd.f32 %v2891, %v2892
      %v2894 = vsel %vm438, %v2851, 0.0
      %v2895 = vadd.f32 %v2893, %v2894
      %v2896 = vsel %vm438, %v2852, 0.0
      %v2897 = vadd.f32 %v2895, %v2896
      %v2898 = vsel %vm438, %v2853, 0.0
      %v2899 = vadd.f32 %v2897, %v2898
      %v2900 = vsel %vm438, %v2854, 0.0
      %v2901 = vadd.f32 %v2899, %v2900
      %v2902 = vsel %vm438, %v2855, 0.0
      %v2903 = vadd.f32 %v2901, %v2902
      %v2904 = vsel %vm438, %v2856, 0.0
      %v2905 = vadd.f32 %v2903, %v2904
      %v2906 = vsel %vm438, %v2857, 0.0
      %v2907 = vadd.f32 %v2905, %v2906
      %v2908 = vsel %vm438, %v2858, 0.0
      %v2909 = vadd.f32 %v2907, %v2908
      %v2910 = vsel %vm438, %v2859, 0.0
      %v2911 = vadd.f32 %v2909, %v2910
      %v2912 = vsel %vm438, %v2860, 0.0
      %v2913 = vadd.f32 %v2911, %v2912
      %v2914 = vsel %vm438, %v2861, 0.0
      %v2915 = vadd.f32 %v2913, %v2914
      %v2916 = vsel %vm438, %v2862, 0.0
      %v2917 = vadd.f32 %v2915, %v2916
      %v2918 = vsel %vm438, %v2863, 0.0
      %v2919 = vadd.f32 %v2917, %v2918
      %v2920 = vsel %vm438, %v2864, 0.0
      %v2921 = vadd.f32 %v2919, %v2920
      %v2922 = vsel %vm438, %v2865, 0.0
      %v2923 = vadd.f32 %v2921, %v2922
      %v2924 = vsel %vm438, %v2866, 0.0
      %v2925 = vadd.f32 %v2923, %v2924
      %v2926 = vsel %vm438, %v2867, 0.0
      %v2927 = vadd.f32 %v2925, %v2926
      %v2928 = vsel %vm438, %v2868, 0.0
      %v2929 = vadd.f32 %v2927, %v2928
      %v2930 = vsel %vm438, %v2869, 0.0
      %v2931 = vadd.f32 %v2929, %v2930
      %v2932 = vsel %vm438, %v2870, 0.0
      %v2933 = vadd.f32 %v2931, %v2932
      %v2934 = vrot.slane %v2933, 4
      %v2935 = vadd.f32 %v2933, %v2934
      %v2936 = vrot.slane %v2935, 2
      %v2937 = vadd.f32 %v2935, %v2936
      %v2938 = vrot.slane %v2937, 1
      %v2939 = vadd.f32 %v2937, %v2938
      %2940 = vst.msk [vmem:[%s268] sm:$0x1] %vm447, %v2939
      %p2941 = scmp.lt.s32.totalorder %s18, 1
      %s2942 = scalar_select %p2941, %s18, 1
      %s2943 = smul.addr %s2942, 32
      %s2944 = smul.addr %s2943, 4
      %s2945 = scalar_lea.vmem %s4, %s2944
      %p2946 = scmp.lt.s32.totalorder %s18, 1
      %s2947 = scalar_select %p2946, %s18, 1
      %s2948 = scalar_lea.vmem %s5, %s2947
      %p2949 = scmp.lt.s32.totalorder %s18, 1
      %s2950 = scalar_select %p2949, %s18, 1
      %s2951 = scalar_lea.vmem %s6, %s2950
      // Predicated region
      $region37: #{restnet_basic_block.4} parent=35 // pred_check
        %p2952 = pneg %p125
      $region38: #{restnet_basic_block.4} parent=35 // pred_check_branch
        %2954 = sbr.rel (%p2952) target = $region40
      $region39: #{restnet_basic_block.4} parent=35 // pred_region
        _
      $region40: #{restnet_basic_block.4} parent=35 // pred_fallthru
        _
      // Predicated region
      $region41: #{restnet_basic_block.4} parent=35 // pred_check
        %p2955 = pneg %p151
      $region42: #{restnet_basic_block.4} parent=35 // pred_check_branch
        %2957 = sbr.rel (%p2955) target = $region44
      $region43: #{restnet_basic_block.4} parent=35 // pred_region
        _
      $region44: #{restnet_basic_block.4} parent=35 // pred_fallthru
        _
      // Predicated region
      $region45: #{restnet_basic_block.4} parent=35 // pred_check
        %p2958 = pneg %p177
      $region46: #{restnet_basic_block.4} parent=35 // pred_check_branch
        %2960 = sbr.rel (%p2958) target = $region48
      $region47: #{restnet_basic_block.4} parent=35 // pred_region
        _
      $region48: #{restnet_basic_block.4} parent=35 // pred_fallthru
        _
    $region36: #{restnet_basic_block.4} parent=5 // pred_fallthru
      _
    %p2961 = scmp.le.s32.totalorder 2, %s13
    // Predicated region
    $region49: #{restnet_basic_block.4} parent=5 // pred_check
      %p2962 = pneg %p2961
    $region50: #{restnet_basic_block.4} parent=5 // pred_check_branch
      %2964 = sbr.rel (%p2962) target = $region52
    $region51: #{restnet_basic_block.4} parent=5 // pred_region
      %s2965 = ssub.s32 %s13, 2
      // Predicated region
      $region53: #{restnet_basic_block.4} parent=51 // pred_check
        %p2966 = pneg %p131
      $region54: #{restnet_basic_block.4} parent=51 // pred_check_branch
        %2968 = sbr.rel (%p2966) target = $region56
      $region55: #{restnet_basic_block.4} parent=51 // pred_region
        %p2969 = scmp.lt.s32.totalorder %s19, 1
        %s2970 = scalar_select %p2969, %s19, 1
        %s2971 = smul.addr %s2970, 32
        %s2972 = smul.addr %s2971, 4
        %s2973 = scalar_lea.vmem %s4, %s2972
      $region56: #{restnet_basic_block.4} parent=51 // pred_fallthru
        _
      // Predicated region
      $region57: #{restnet_basic_block.4} parent=51 // pred_check
        %p2974 = pneg %p157
      $region58: #{restnet_basic_block.4} parent=51 // pred_check_branch
        %2976 = sbr.rel (%p2974) target = $region60
      $region59: #{restnet_basic_block.4} parent=51 // pred_region
        %p2977 = scmp.lt.s32.totalorder %s19, 1
        %s2978 = scalar_select %p2977, %s19, 1
        %s2979 = scalar_lea.vmem %s5, %s2978
      $region60: #{restnet_basic_block.4} parent=51 // pred_fallthru
        _
      // Predicated region
      $region61: #{restnet_basic_block.4} parent=51 // pred_check
        %p2980 = pneg %p183
      $region62: #{restnet_basic_block.4} parent=51 // pred_check_branch
        %2982 = sbr.rel (%p2980) target = $region64
      $region63: #{restnet_basic_block.4} parent=51 // pred_region
        %p2983 = scmp.lt.s32.totalorder %s19, 1
        %s2984 = scalar_select %p2983, %s19, 1
        %s2985 = scalar_lea.vmem %s6, %s2984
      $region64: #{restnet_basic_block.4} parent=51 // pred_fallthru
        _
    $region52: #{restnet_basic_block.4} parent=5 // pred_fallthru
      _
  $region6: #{restnet_basic_block.4} parent=0 // loop_footer
    %s17 = sadd.s32 1, %s13
  $region7: #{restnet_basic_block.4} parent=0 // loop_footer_branch
    %12 = sbr.rel target = $region3
  $region8: #{restnet_basic_block.4} parent=0 // loop_exit
    _

</llo_original>
